<compile_context>
chip_gen: v7x
topology: tpu7x:2x2x1
jax: 0.10.0
libtpu: 0.0.40
codegen_flags: <defaults>
</compile_context>

<pallas_src>
import functools

import jax
import jax.numpy as jnp
from jax.experimental import pallas as pl
from jax.experimental.pallas import tpu as pltpu  # noqa: F401  (TPU target)

CH_SCALE = 0.042      # channel_attention_scale
SP_SCALE = 0.0625     # spatial_attention_scale
SKIP_SCALE = 1.0      # SkipLayerBias scale (default)
BN_EPS = 1e-5


def _sigmoid(z):
    # numerically stable sigmoid built only from exp / where / div (EUP/VPU)
    ez = jnp.exp(-jnp.abs(z))
    return jnp.where(z >= 0, 1.0 / (1.0 + ez), ez / (1.0 + ez))


def _swish(z):
    return z * _sigmoid(z)


# ----------------------------------------------------------------------------
# Single fused kernel: first conv -> L skip layers -> policy conv -> head.
# All weights are tiny and fully resident in VMEM; layers are statically
# unrolled (L, N are Python ints).
# ----------------------------------------------------------------------------
def _hex_forward_kernel(x0p_ref, w0_ref, b0_ref, S3c_ref, wl_ref, bnsc_ref,
                        bnsh_ref, fc1_ref, fc2_ref, spa_ref, spm_ref,
                        Spolc_ref, wpol_ref, aind_ref, bmat_ref, xsum_ref,
                        bias_ref, out_ref, *, layers, C, N, HW, KK3, KKP,
                        export_mode):
    NL = N * HW
    f32 = jnp.float32

    # ---- first conv: (C, 2*K*K) @ (2*K*K, N*HW) + bias ------------------
    h = jnp.dot(w0_ref[...], x0p_ref[...], preferred_element_type=f32) + b0_ref[...]

    bmat = bmat_ref[...]                 # (N, NL) 0/1 batch-block indicator rows

    # ---- skip layers (statically unrolled) -------------------------------
    for l in range(layers):
        residual = h

        # 3x3 conv, pad 1, no bias: one wide shift-dot + 9 lane-aligned dots
        hbig = jnp.dot(h, S3c_ref[...], preferred_element_type=f32)   # (C, 9*NL)
        y = None
        for s in range(KK3):
            t = jnp.dot(wl_ref[l, s], hbig[:, s * NL:(s + 1) * NL],
                        preferred_element_type=f32)                   # (C, NL)
            y = t if y is None else y + t

        # inference BatchNorm folded into scale/shift
        xb = y * bnsc_ref[l] + bnsh_ref[l]                            # (C, NL)

        fc1 = fc1_ref[l]      # (C//8, C)
        fc2 = fc2_ref[l]      # (C, C//8)

        def _mlp(v):
            hh = jnp.maximum(jnp.dot(fc1, v, preferred_element_type=f32), 0.0)
            return jnp.dot(fc2, hh, preferred_element_type=f32)

        # channel attention: per-batch global pooling, batched application
        ca_full = None
        for n in range(N):    # N tiny and static; unrolled
            xn = xb[:, n * HW:(n + 1) * HW]                           # (C, HW)
            gavg = jnp.mean(xn, axis=1, keepdims=True)                # (C, 1)
            gmax = jnp.max(xn, axis=1, keepdims=True)                 # (C, 1)
            ca_n = _sigmoid(_mlp(gavg) + _mlp(gmax))                  # (C, 1)
            t = ca_n * bmat[n:n + 1, :]                               # (C, NL)
            ca_full = t if ca_full is None else ca_full + t
        xc = xb * (1.0 + CH_SCALE * (ca_full - 1.0))                  # (C, NL)

        # spatial attention: 7x7 conv folded into block-diag matrices, batched
        avg_map = jnp.mean(xc, axis=0, keepdims=True)                 # (1, NL)
        max_map = jnp.max(xc, axis=0, keepdims=True)                  # (1, NL)
        sp = (jnp.dot(avg_map, spa_ref[l], preferred_element_type=f32)
              + jnp.dot(max_map, spm_ref[l], preferred_element_type=f32))
        sa = _sigmoid(sp)                                             # (1, NL)
        xsp = xc * (1.0 + SP_SCALE * (sa - 1.0))

        # residual + swish, fully batched / lane-dense
        h = _swish(residual + SKIP_SCALE * xsp)

    # ---- policy conv (kernel K, pad reach, no bias) ----------------------
    hbig = jnp.dot(h, Spolc_ref[...], preferred_element_type=f32)     # (C, KKP*NL)
    pol = None
    for s in range(KKP):
        t = jnp.dot(wpol_ref[s], hbig[:, s * NL:(s + 1) * NL],
                    preferred_element_type=f32)                       # (1, NL)
        pol = t if pol is None else pol + t
    pol = pol + bias_ref[...]                                         # (1, NL)

    if export_mode:
        out_ref[...] = pol
    else:
        xsum = xsum_ref[...]                                          # (1, NL)
        totals = jnp.dot(xsum, aind_ref[...], preferred_element_type=f32)  # (1, N)
        factor = jnp.exp(jnp.tanh((totals - 1.0) * 1000.0) * 10.0)    # (1, N)
        factor_full = jnp.dot(factor, bmat, preferred_element_type=f32)    # (1, NL)
        out_ref[...] = pol - xsum * (factor_full - 1.0)


# ----------------------------------------------------------------------------
# Wrapper-side constant / weight preparation (pure JAX, tiny, fused by XLA).
# ----------------------------------------------------------------------------
def _shift_matrices(bs, K, pad, N):
    """0/1 matrices S_s (s = dh*K + dw): S_s[p, q] = 1 iff flat input position p
    feeds flat output position q for kernel offset (dh, dw) of a KxK conv with
    `pad` zero padding on a bs x bs image; block-diagonal over the batch."""
    HW = bs * bs
    idx = jnp.arange(HW)
    qi, qj = idx // bs, idx % bs
    p = idx
    mats = []
    for dh in range(K):
        for dw in range(K):
            si = qi + dh - pad
            sj = qj + dw - pad
            valid = (si >= 0) & (si < bs) & (sj >= 0) & (sj < bs)
            src = si * bs + sj
            m = (p[:, None] == src[None, :]) & valid[None, :]
            mats.append(m.astype(jnp.float32))
    S = jnp.stack(mats, axis=0)                                   # (K*K, HW, HW)
    eye_n = jnp.eye(N, dtype=jnp.float32)
    return jnp.einsum('kpq,nm->knpmq', S, eye_n).reshape(K * K, N * HW, N * HW)


def _spconv_matrices(w, bs):
    """Fold a (2, k, k) 2->1 channel conv with 'same' padding into two dense
    (HW, HW) matrices (one per input map) acting on flattened maps."""
    k = w.shape[-1]
    pad = (k - 1) // 2
    HW = bs * bs
    idx = jnp.arange(HW)
    gi, gj = idx // bs, idx % bs
    dh = gi[:, None] - gi[None, :] + pad          # rows = source p, cols = dest q
    dw = gj[:, None] - gj[None, :] + pad
    valid = (dh >= 0) & (dh < k) & (dw >= 0) & (dw < k)
    gathered = w[:, jnp.clip(dh, 0, k - 1), jnp.clip(dw, 0, k - 1)]   # (2, HW, HW)
    return jnp.where(valid[None], gathered, 0.0)


def _bdiag(M, N):
    """(P, Q) per-image operator -> (N*P, N*Q) block-diagonal over batch."""
    P, Q = M.shape
    eye_n = jnp.eye(N, dtype=M.dtype)
    return jnp.einsum('nm,pq->npmq', eye_n, M).reshape(N * P, N * Q)


def _first_conv_patches(x, K, pad, bs):
    """im2col of the network input for the first conv, laid out (Cin*K*K, N*HW)."""
    N, Cin = x.shape[0], x.shape[1]
    xp = jnp.pad(x, ((0, 0), (0, 0), (pad, pad), (pad, pad)))
    cols = [xp[:, :, dh:dh + bs, dw:dw + bs] for dh in range(K) for dw in range(K)]
    pat = jnp.stack(cols, axis=2)                       # (N, Cin, K*K, bs, bs)
    pat = pat.transpose(1, 2, 0, 3, 4)                  # (Cin, K*K, N, bs, bs)
    return pat.reshape(Cin * K * K, N * bs * bs)


def init_params(key, board_size, layers, C, reach):
    K = 2 * reach + 1
    C8 = max(C // 8, 1)
    keys = jax.random.split(key, 3 + max(layers, 1))
    p = {
        'conv0_w': 0.1 * jax.random.normal(keys[0], (C, 2, K, K), jnp.float32),
        'conv0_b': 0.05 * jax.random.normal(keys[1], (C,), jnp.float32),
        'policy_w': 0.1 * jax.random.normal(keys[2], (1, C, K, K), jnp.float32),
        'bias': jnp.zeros((board_size ** 2,), jnp.float32),
        'skip': [],
    }
    for l in range(layers):
        sk = jax.random.split(keys[3 + l], 8)
        p['skip'].append(dict(
            conv_w=0.1 * jax.random.normal(sk[0], (C, C, 3, 3), jnp.float32),
            bn_gamma=1.0 + 0.1 * jax.random.normal(sk[1], (C,), jnp.float32),
            bn_beta=0.1 * jax.random.normal(sk[2], (C,), jnp.float32),
            bn_mean=0.1 * jax.random.normal(sk[3], (C,), jnp.float32),
            bn_var=1.0 + 0.1 * jnp.abs(jax.random.normal(sk[4], (C,), jnp.float32)),
            fc1_w=0.2 * jax.random.normal(sk[5], (C8, C), jnp.float32),
            fc2_w=0.2 * jax.random.normal(sk[6], (C, C8), jnp.float32),
            spconv_w=0.1 * jax.random.normal(sk[7], (1, 2, 7, 7), jnp.float32),
        ))
    return p


def conv_forward(x, params, board_size, reach, export_mode=False):
    N = x.shape[0]
    bs = board_size
    HW = bs * bs
    NL = N * HW
    K = 2 * reach + 1
    KK = K * K
    C = params['conv0_w'].shape[0]
    C8 = max(C // 8, 1)
    L = len(params['skip'])

    # first-conv patches, weights & constants
    x0p = _first_conv_patches(x, K, reach - 1, bs)                 # (2*KK, NL)
    w0 = params['conv0_w'].reshape(C, 2 * KK)
    b0 = params['conv0_b'].reshape(C, 1)

    S3 = _shift_matrices(bs, 3, 1, N)                              # (9, NL, NL)
    S3cat = S3.transpose(1, 0, 2).reshape(NL, 9 * NL)              # (NL, 9*NL)
    Spol = _shift_matrices(bs, K, reach, N)                        # (KK, NL, NL)
    Spolcat = Spol.transpose(1, 0, 2).reshape(NL, KK * NL)         # (NL, KK*NL)

    if L > 0:
        wl = jnp.stack([lp['conv_w'].transpose(2, 3, 0, 1).reshape(9, C, C)
                        for lp in params['skip']])                 # (L, 9, C, C)
        scales = [lp['bn_gamma'] / jnp.sqrt(lp['bn_var'] + BN_EPS)
                  for lp in params['skip']]
        bnsc = jnp.stack([s.reshape(C, 1) for s in scales])        # (L, C, 1)
        bnsh = jnp.stack([(lp['bn_beta'] - lp['bn_mean'] * s).reshape(C, 1)
                          for lp, s in zip(params['skip'], scales)])
        fc1 = jnp.stack([lp['fc1_w'] for lp in params['skip']])    # (L, C//8, C)
        fc2 = jnp.stack([lp['fc2_w'] for lp in params['skip']])    # (L, C, C//8)
        sp_mats = [_spconv_matrices(lp['spconv_w'][0], bs) for lp in params['skip']]
        spa = jnp.stack([_bdiag(m[0], N) for m in sp_mats])        # (L, NL, NL)
        spm = jnp.stack([_bdiag(m[1], N) for m in sp_mats])        # (L, NL, NL)
    else:  # dummy (unused) stacks so the pallas_call signature stays fixed
        wl = jnp.zeros((1, 9, C, C), jnp.float32)
        bnsc = jnp.ones((1, C, 1), jnp.float32)
        bnsh = jnp.zeros((1, C, 1), jnp.float32)
        fc1 = jnp.zeros((1, C8, C), jnp.float32)
        fc2 = jnp.zeros((1, C, C8), jnp.float32)
        spa = jnp.zeros((1, NL, NL), jnp.float32)
        spm = jnp.zeros((1, NL, NL), jnp.float32)

    wpol = params['policy_w'].transpose(2, 3, 0, 1).reshape(KK, 1, C)

    # batch-block indicator matrices (for batched pooling / broadcasting)
    rows = jnp.arange(NL) // HW
    aind = (rows[:, None] == jnp.arange(N)[None, :]).astype(jnp.float32)  # (NL, N)
    bmat = aind.T                                                         # (N, NL)

    xsum = jnp.sum(x[:, :, 1:-1, 1:-1], axis=1).reshape(1, NL)
    bias_t = jnp.tile(params['bias'], (N,)).reshape(1, NL)

    kernel = functools.partial(_hex_forward_kernel, layers=L, C=C, N=N, HW=HW,
                               KK3=9, KKP=KK, export_mode=export_mode)
    out = pl.pallas_call(
        kernel,
        out_shape=jax.ShapeDtypeStruct((1, NL), jnp.float32),
    )(x0p, w0, b0, S3cat, wl, bnsc, bnsh, fc1, fc2, spa, spm, Spolcat,
      wpol, aind, bmat, xsum, bias_t)
    return out.reshape(N, HW)


if __name__ == "__main__":
    board_size, layers, intermediate_channels, reach = 8, 2, 16, 1
    key = jax.random.PRNGKey(0)
    kx, kp = jax.random.split(key)

    # input: (batch, 2, board_size+2, board_size+2) — padded Hex board planes
    x = jax.random.uniform(kx, (2, 2, board_size + 2, board_size + 2),
                           dtype=jnp.float32)
    params = init_params(kp, board_size, layers, intermediate_channels, reach)

    fwd = jax.jit(functools.partial(conv_forward, board_size=board_size,
                                    reach=reach, export_mode=False))
    out = jax.block_until_ready(fwd(x, params))
    assert out.shape == (2, board_size ** 2)
    assert bool(jnp.all(jnp.isfinite(out)))
    print("KERNEL_OK")
</pallas_src>

<mosaic_0001>
module attributes {stable_mosaic.version = 11 : i64} {
  func.func @_hex_forward_kernel(%arg0: memref<18x128xf32, #tpu.memory_space<vmem>>, %arg1: memref<16x18xf32, #tpu.memory_space<vmem>>, %arg2: memref<16x1xf32, #tpu.memory_space<vmem>>, %arg3: memref<128x1152xf32, #tpu.memory_space<vmem>>, %arg4: memref<2x9x16x16xf32, #tpu.memory_space<vmem>>, %arg5: memref<2x16x1xf32, #tpu.memory_space<vmem>>, %arg6: memref<2x16x1xf32, #tpu.memory_space<vmem>>, %arg7: memref<2x2x16xf32, #tpu.memory_space<vmem>>, %arg8: memref<2x16x2xf32, #tpu.memory_space<vmem>>, %arg9: memref<2x128x128xf32, #tpu.memory_space<vmem>>, %arg10: memref<2x128x128xf32, #tpu.memory_space<vmem>>, %arg11: memref<128x1152xf32, #tpu.memory_space<vmem>>, %arg12: memref<9x1x16xf32, #tpu.memory_space<vmem>>, %arg13: memref<128x2xf32, #tpu.memory_space<vmem>>, %arg14: memref<2x128xf32, #tpu.memory_space<vmem>>, %arg15: memref<1x128xf32, #tpu.memory_space<vmem>>, %arg16: memref<1x128xf32, #tpu.memory_space<vmem>>, %arg17: memref<1x128xf32, #tpu.memory_space<vmem>>) attributes {dimension_semantics = [], scalar_prefetch = 0 : i64, scratch_operands = 0 : i64, tpu.core_type = #tpu.core_type<tc>} {
    %c0 = arith.constant 0 : index
    %c0_0 = arith.constant 0 : index
    %0 = vector.load %arg1[%c0, %c0_0] : memref<16x18xf32, #tpu.memory_space<vmem>>, vector<16x18xf32>
    %c0_1 = arith.constant 0 : index
    %c0_2 = arith.constant 0 : index
    %1 = vector.load %arg0[%c0_1, %c0_2] : memref<18x128xf32, #tpu.memory_space<vmem>>, vector<18x128xf32>
    %cst = arith.constant dense<0.000000e+00> : vector<16x128xf32>
    %2 = tpu.matmul %0, %1, %cst {dimension_numbers = #tpu.dot_dimension_numbers<[1], [0], [0], [1], [0, 0, 1, 1], [], []>} : vector<16x18xf32>, vector<18x128xf32>, vector<16x128xf32> -> vector<16x128xf32>
    %c0_3 = arith.constant 0 : index
    %c0_4 = arith.constant 0 : index
    %3 = vector.load %arg2[%c0_3, %c0_4] : memref<16x1xf32, #tpu.memory_space<vmem>>, vector<16x1xf32>
    %4 = vector.broadcast %3 : vector<16x1xf32> to vector<16x128xf32>
    %5 = arith.addf %2, %4 : vector<16x128xf32>
    %c0_5 = arith.constant 0 : index
    %c0_6 = arith.constant 0 : index
    %6 = vector.load %arg14[%c0_5, %c0_6] : memref<2x128xf32, #tpu.memory_space<vmem>>, vector<2x128xf32>
    %c0_7 = arith.constant 0 : index
    %c0_8 = arith.constant 0 : index
    %7 = vector.load %arg3[%c0_7, %c0_8] : memref<128x1152xf32, #tpu.memory_space<vmem>>, vector<128x1152xf32>
    %cst_9 = arith.constant dense<0.000000e+00> : vector<16x1152xf32>
    %8 = tpu.matmul %5, %7, %cst_9 {dimension_numbers = #tpu.dot_dimension_numbers<[1], [0], [0], [1], [0, 0, 1, 1], [], []>} : vector<16x128xf32>, vector<128x1152xf32>, vector<16x1152xf32> -> vector<16x1152xf32>
    %c0_10 = arith.constant 0 : index
    %c0_11 = arith.constant 0 : index
    %c0_12 = arith.constant 0 : index
    %c0_13 = arith.constant 0 : index
    %9 = vector.load %arg4[%c0_10, %c0_11, %c0_12, %c0_13] : memref<2x9x16x16xf32, #tpu.memory_space<vmem>>, vector<1x1x16x16xf32>
    %10 = vector.shape_cast %9 : vector<1x1x16x16xf32> to vector<16x16xf32>
    %11 = vector.extract_strided_slice %8 {offsets = [0, 0], sizes = [16, 128], strides = [1, 1]} : vector<16x1152xf32> to vector<16x128xf32>
    %cst_14 = arith.constant dense<0.000000e+00> : vector<16x128xf32>
    %12 = tpu.matmul %10, %11, %cst_14 {dimension_numbers = #tpu.dot_dimension_numbers<[1], [0], [0], [1], [0, 0, 1, 1], [], []>} : vector<16x16xf32>, vector<16x128xf32>, vector<16x128xf32> -> vector<16x128xf32>
    %c0_15 = arith.constant 0 : index
    %c1 = arith.constant 1 : index
    %c0_16 = arith.constant 0 : index
    %c0_17 = arith.constant 0 : index
    %13 = vector.load %arg4[%c0_15, %c1, %c0_16, %c0_17] : memref<2x9x16x16xf32, #tpu.memory_space<vmem>>, vector<1x1x16x16xf32>
    %14 = vector.shape_cast %13 : vector<1x1x16x16xf32> to vector<16x16xf32>
    %15 = vector.extract_strided_slice %8 {offsets = [0, 128], sizes = [16, 128], strides = [1, 1]} : vector<16x1152xf32> to vector<16x128xf32>
    %cst_18 = arith.constant dense<0.000000e+00> : vector<16x128xf32>
    %16 = tpu.matmul %14, %15, %cst_18 {dimension_numbers = #tpu.dot_dimension_numbers<[1], [0], [0], [1], [0, 0, 1, 1], [], []>} : vector<16x16xf32>, vector<16x128xf32>, vector<16x128xf32> -> vector<16x128xf32>
    %17 = arith.addf %12, %16 : vector<16x128xf32>
    %c0_19 = arith.constant 0 : index
    %c2 = arith.constant 2 : index
    %c0_20 = arith.constant 0 : index
    %c0_21 = arith.constant 0 : index
    %18 = vector.load %arg4[%c0_19, %c2, %c0_20, %c0_21] : memref<2x9x16x16xf32, #tpu.memory_space<vmem>>, vector<1x1x16x16xf32>
    %19 = vector.shape_cast %18 : vector<1x1x16x16xf32> to vector<16x16xf32>
    %20 = vector.extract_strided_slice %8 {offsets = [0, 256], sizes = [16, 128], strides = [1, 1]} : vector<16x1152xf32> to vector<16x128xf32>
    %cst_22 = arith.constant dense<0.000000e+00> : vector<16x128xf32>
    %21 = tpu.matmul %19, %20, %cst_22 {dimension_numbers = #tpu.dot_dimension_numbers<[1], [0], [0], [1], [0, 0, 1, 1], [], []>} : vector<16x16xf32>, vector<16x128xf32>, vector<16x128xf32> -> vector<16x128xf32>
    %22 = arith.addf %17, %21 : vector<16x128xf32>
    %c0_23 = arith.constant 0 : index
    %c3 = arith.constant 3 : index
    %c0_24 = arith.constant 0 : index
    %c0_25 = arith.constant 0 : index
    %23 = vector.load %arg4[%c0_23, %c3, %c0_24, %c0_25] : memref<2x9x16x16xf32, #tpu.memory_space<vmem>>, vector<1x1x16x16xf32>
    %24 = vector.shape_cast %23 : vector<1x1x16x16xf32> to vector<16x16xf32>
    %25 = vector.extract_strided_slice %8 {offsets = [0, 384], sizes = [16, 128], strides = [1, 1]} : vector<16x1152xf32> to vector<16x128xf32>
    %cst_26 = arith.constant dense<0.000000e+00> : vector<16x128xf32>
    %26 = tpu.matmul %24, %25, %cst_26 {dimension_numbers = #tpu.dot_dimension_numbers<[1], [0], [0], [1], [0, 0, 1, 1], [], []>} : vector<16x16xf32>, vector<16x128xf32>, vector<16x128xf32> -> vector<16x128xf32>
    %27 = arith.addf %22, %26 : vector<16x128xf32>
    %c0_27 = arith.constant 0 : index
    %c4 = arith.constant 4 : index
    %c0_28 = arith.constant 0 : index
    %c0_29 = arith.constant 0 : index
    %28 = vector.load %arg4[%c0_27, %c4, %c0_28, %c0_29] : memref<2x9x16x16xf32, #tpu.memory_space<vmem>>, vector<1x1x16x16xf32>
    %29 = vector.shape_cast %28 : vector<1x1x16x16xf32> to vector<16x16xf32>
    %30 = vector.extract_strided_slice %8 {offsets = [0, 512], sizes = [16, 128], strides = [1, 1]} : vector<16x1152xf32> to vector<16x128xf32>
    %cst_30 = arith.constant dense<0.000000e+00> : vector<16x128xf32>
    %31 = tpu.matmul %29, %30, %cst_30 {dimension_numbers = #tpu.dot_dimension_numbers<[1], [0], [0], [1], [0, 0, 1, 1], [], []>} : vector<16x16xf32>, vector<16x128xf32>, vector<16x128xf32> -> vector<16x128xf32>
    %32 = arith.addf %27, %31 : vector<16x128xf32>
    %c0_31 = arith.constant 0 : index
    %c5 = arith.constant 5 : index
    %c0_32 = arith.constant 0 : index
    %c0_33 = arith.constant 0 : index
    %33 = vector.load %arg4[%c0_31, %c5, %c0_32, %c0_33] : memref<2x9x16x16xf32, #tpu.memory_space<vmem>>, vector<1x1x16x16xf32>
    %34 = vector.shape_cast %33 : vector<1x1x16x16xf32> to vector<16x16xf32>
    %35 = vector.extract_strided_slice %8 {offsets = [0, 640], sizes = [16, 128], strides = [1, 1]} : vector<16x1152xf32> to vector<16x128xf32>
    %cst_34 = arith.constant dense<0.000000e+00> : vector<16x128xf32>
    %36 = tpu.matmul %34, %35, %cst_34 {dimension_numbers = #tpu.dot_dimension_numbers<[1], [0], [0], [1], [0, 0, 1, 1], [], []>} : vector<16x16xf32>, vector<16x128xf32>, vector<16x128xf32> -> vector<16x128xf32>
    %37 = arith.addf %32, %36 : vector<16x128xf32>
    %c0_35 = arith.constant 0 : index
    %c6 = arith.constant 6 : index
    %c0_36 = arith.constant 0 : index
    %c0_37 = arith.constant 0 : index
    %38 = vector.load %arg4[%c0_35, %c6, %c0_36, %c0_37] : memref<2x9x16x16xf32, #tpu.memory_space<vmem>>, vector<1x1x16x16xf32>
    %39 = vector.shape_cast %38 : vector<1x1x16x16xf32> to vector<16x16xf32>
    %40 = vector.extract_strided_slice %8 {offsets = [0, 768], sizes = [16, 128], strides = [1, 1]} : vector<16x1152xf32> to vector<16x128xf32>
    %cst_38 = arith.constant dense<0.000000e+00> : vector<16x128xf32>
    %41 = tpu.matmul %39, %40, %cst_38 {dimension_numbers = #tpu.dot_dimension_numbers<[1], [0], [0], [1], [0, 0, 1, 1], [], []>} : vector<16x16xf32>, vector<16x128xf32>, vector<16x128xf32> -> vector<16x128xf32>
    %42 = arith.addf %37, %41 : vector<16x128xf32>
    %c0_39 = arith.constant 0 : index
    %c7 = arith.constant 7 : index
    %c0_40 = arith.constant 0 : index
    %c0_41 = arith.constant 0 : index
    %43 = vector.load %arg4[%c0_39, %c7, %c0_40, %c0_41] : memref<2x9x16x16xf32, #tpu.memory_space<vmem>>, vector<1x1x16x16xf32>
    %44 = vector.shape_cast %43 : vector<1x1x16x16xf32> to vector<16x16xf32>
    %45 = vector.extract_strided_slice %8 {offsets = [0, 896], sizes = [16, 128], strides = [1, 1]} : vector<16x1152xf32> to vector<16x128xf32>
    %cst_42 = arith.constant dense<0.000000e+00> : vector<16x128xf32>
    %46 = tpu.matmul %44, %45, %cst_42 {dimension_numbers = #tpu.dot_dimension_numbers<[1], [0], [0], [1], [0, 0, 1, 1], [], []>} : vector<16x16xf32>, vector<16x128xf32>, vector<16x128xf32> -> vector<16x128xf32>
    %47 = arith.addf %42, %46 : vector<16x128xf32>
    %c0_43 = arith.constant 0 : index
    %c8 = arith.constant 8 : index
    %c0_44 = arith.constant 0 : index
    %c0_45 = arith.constant 0 : index
    %48 = vector.load %arg4[%c0_43, %c8, %c0_44, %c0_45] : memref<2x9x16x16xf32, #tpu.memory_space<vmem>>, vector<1x1x16x16xf32>
    %49 = vector.shape_cast %48 : vector<1x1x16x16xf32> to vector<16x16xf32>
    %50 = vector.extract_strided_slice %8 {offsets = [0, 1024], sizes = [16, 128], strides = [1, 1]} : vector<16x1152xf32> to vector<16x128xf32>
    %cst_46 = arith.constant dense<0.000000e+00> : vector<16x128xf32>
    %51 = tpu.matmul %49, %50, %cst_46 {dimension_numbers = #tpu.dot_dimension_numbers<[1], [0], [0], [1], [0, 0, 1, 1], [], []>} : vector<16x16xf32>, vector<16x128xf32>, vector<16x128xf32> -> vector<16x128xf32>
    %52 = arith.addf %47, %51 : vector<16x128xf32>
    %c0_47 = arith.constant 0 : index
    %c0_48 = arith.constant 0 : index
    %c0_49 = arith.constant 0 : index
    %53 = vector.load %arg5[%c0_47, %c0_48, %c0_49] : memref<2x16x1xf32, #tpu.memory_space<vmem>>, vector<1x16x1xf32>
    %54 = vector.shape_cast %53 : vector<1x16x1xf32> to vector<16x1xf32>
    %55 = vector.broadcast %54 : vector<16x1xf32> to vector<16x128xf32>
    %56 = arith.mulf %52, %55 : vector<16x128xf32>
    %c0_50 = arith.constant 0 : index
    %c0_51 = arith.constant 0 : index
    %c0_52 = arith.constant 0 : index
    %57 = vector.load %arg6[%c0_50, %c0_51, %c0_52] : memref<2x16x1xf32, #tpu.memory_space<vmem>>, vector<1x16x1xf32>
    %58 = vector.shape_cast %57 : vector<1x16x1xf32> to vector<16x1xf32>
    %59 = vector.broadcast %58 : vector<16x1xf32> to vector<16x128xf32>
    %60 = arith.addf %56, %59 : vector<16x128xf32>
    %c0_53 = arith.constant 0 : index
    %c0_54 = arith.constant 0 : index
    %c0_55 = arith.constant 0 : index
    %61 = vector.load %arg7[%c0_53, %c0_54, %c0_55] : memref<2x2x16xf32, #tpu.memory_space<vmem>>, vector<1x2x16xf32>
    %62 = vector.shape_cast %61 : vector<1x2x16xf32> to vector<2x16xf32>
    %c0_56 = arith.constant 0 : index
    %c0_57 = arith.constant 0 : index
    %c0_58 = arith.constant 0 : index
    %63 = vector.load %arg8[%c0_56, %c0_57, %c0_58] : memref<2x16x2xf32, #tpu.memory_space<vmem>>, vector<1x16x2xf32>
    %64 = vector.shape_cast %63 : vector<1x16x2xf32> to vector<16x2xf32>
    %65 = vector.extract_strided_slice %60 {offsets = [0, 0], sizes = [16, 64], strides = [1, 1]} : vector<16x128xf32> to vector<16x64xf32>
    %cst_59 = arith.constant dense<0.000000e+00> : vector<16xf32>
    %66 = vector.multi_reduction <add>, %65, %cst_59 [1] : vector<16x64xf32> to vector<16xf32>
    %67 = vector.shape_cast %66 : vector<16xf32> to vector<16x1xf32>
    %cst_60 = arith.constant 6.400000e+01 : f32
    %68 = vector.broadcast %cst_60 : f32 to vector<16x1xf32>
    %69 = arith.divf %67, %68 : vector<16x1xf32>
    %cst_61 = arith.constant dense<0xFF800000> : vector<16xf32>
    %70 = vector.multi_reduction <maximumf>, %65, %cst_61 [1] : vector<16x64xf32> to vector<16xf32>
    %71 = vector.shape_cast %70 : vector<16xf32> to vector<16x1xf32>
    %cst_62 = arith.constant dense<0.000000e+00> : vector<2x1xf32>
    %72 = tpu.matmul %62, %69, %cst_62 {dimension_numbers = #tpu.dot_dimension_numbers<[1], [0], [0], [1], [0, 0, 1, 1], [], []>} : vector<2x16xf32>, vector<16x1xf32>, vector<2x1xf32> -> vector<2x1xf32>
    %cst_63 = arith.constant 0.000000e+00 : f32
    %73 = vector.broadcast %cst_63 : f32 to vector<2x1xf32>
    %74 = arith.maximumf %72, %73 : vector<2x1xf32>
    %cst_64 = arith.constant dense<0.000000e+00> : vector<16x1xf32>
    %75 = tpu.matmul %64, %74, %cst_64 {dimension_numbers = #tpu.dot_dimension_numbers<[1], [0], [0], [1], [0, 0, 1, 1], [], []>} : vector<16x2xf32>, vector<2x1xf32>, vector<16x1xf32> -> vector<16x1xf32>
    %cst_65 = arith.constant dense<0.000000e+00> : vector<2x1xf32>
    %76 = tpu.matmul %62, %71, %cst_65 {dimension_numbers = #tpu.dot_dimension_numbers<[1], [0], [0], [1], [0, 0, 1, 1], [], []>} : vector<2x16xf32>, vector<16x1xf32>, vector<2x1xf32> -> vector<2x1xf32>
    %cst_66 = arith.constant 0.000000e+00 : f32
    %77 = vector.broadcast %cst_66 : f32 to vector<2x1xf32>
    %78 = arith.maximumf %76, %77 : vector<2x1xf32>
    %cst_67 = arith.constant dense<0.000000e+00> : vector<16x1xf32>
    %79 = tpu.matmul %64, %78, %cst_67 {dimension_numbers = #tpu.dot_dimension_numbers<[1], [0], [0], [1], [0, 0, 1, 1], [], []>} : vector<16x2xf32>, vector<2x1xf32>, vector<16x1xf32> -> vector<16x1xf32>
    %80 = arith.addf %75, %79 : vector<16x1xf32>
    %81 = math.absf %80 : vector<16x1xf32>
    %cst_68 = arith.constant 0.000000e+00 : f32
    %82 = vector.broadcast %cst_68 : f32 to vector<16x1xf32>
    %83 = arith.subf %82, %81 : vector<16x1xf32>
    %84 = math.exp %83 : vector<16x1xf32>
    %cst_69 = arith.constant 0.000000e+00 : f32
    %85 = vector.broadcast %cst_69 : f32 to vector<16x1xf32>
    %86 = arith.cmpf oge, %80, %85 : vector<16x1xf32>
    %cst_70 = arith.constant 1.000000e+00 : f32
    %87 = vector.broadcast %cst_70 : f32 to vector<16x1xf32>
    %88 = arith.addf %87, %84 : vector<16x1xf32>
    %cst_71 = arith.constant 1.000000e+00 : f32
    %89 = vector.broadcast %cst_71 : f32 to vector<16x1xf32>
    %90 = arith.divf %89, %88 : vector<16x1xf32>
    %cst_72 = arith.constant 1.000000e+00 : f32
    %91 = vector.broadcast %cst_72 : f32 to vector<16x1xf32>
    %92 = arith.addf %91, %84 : vector<16x1xf32>
    %93 = arith.divf %84, %92 : vector<16x1xf32>
    %94 = arith.select %86, %90, %93 : vector<16x1xi1>, vector<16x1xf32>
    %95 = vector.extract_strided_slice %6 {offsets = [0, 0], sizes = [1, 128], strides = [1, 1]} : vector<2x128xf32> to vector<1x128xf32>
    %96 = vector.broadcast %94 : vector<16x1xf32> to vector<16x128xf32>
    %97 = vector.broadcast %95 : vector<1x128xf32> to vector<16x128xf32>
    %98 = arith.mulf %96, %97 : vector<16x128xf32>
    %99 = vector.extract_strided_slice %60 {offsets = [0, 64], sizes = [16, 64], strides = [1, 1]} : vector<16x128xf32> to vector<16x64xf32>
    %cst_73 = arith.constant dense<0.000000e+00> : vector<16xf32>
    %100 = vector.multi_reduction <add>, %99, %cst_73 [1] : vector<16x64xf32> to vector<16xf32>
    %101 = vector.shape_cast %100 : vector<16xf32> to vector<16x1xf32>
    %cst_74 = arith.constant 6.400000e+01 : f32
    %102 = vector.broadcast %cst_74 : f32 to vector<16x1xf32>
    %103 = arith.divf %101, %102 : vector<16x1xf32>
    %cst_75 = arith.constant dense<0xFF800000> : vector<16xf32>
    %104 = vector.multi_reduction <maximumf>, %99, %cst_75 [1] : vector<16x64xf32> to vector<16xf32>
    %105 = vector.shape_cast %104 : vector<16xf32> to vector<16x1xf32>
    %cst_76 = arith.constant dense<0.000000e+00> : vector<2x1xf32>
    %106 = tpu.matmul %62, %103, %cst_76 {dimension_numbers = #tpu.dot_dimension_numbers<[1], [0], [0], [1], [0, 0, 1, 1], [], []>} : vector<2x16xf32>, vector<16x1xf32>, vector<2x1xf32> -> vector<2x1xf32>
    %cst_77 = arith.constant 0.000000e+00 : f32
    %107 = vector.broadcast %cst_77 : f32 to vector<2x1xf32>
    %108 = arith.maximumf %106, %107 : vector<2x1xf32>
    %cst_78 = arith.constant dense<0.000000e+00> : vector<16x1xf32>
    %109 = tpu.matmul %64, %108, %cst_78 {dimension_numbers = #tpu.dot_dimension_numbers<[1], [0], [0], [1], [0, 0, 1, 1], [], []>} : vector<16x2xf32>, vector<2x1xf32>, vector<16x1xf32> -> vector<16x1xf32>
    %cst_79 = arith.constant dense<0.000000e+00> : vector<2x1xf32>
    %110 = tpu.matmul %62, %105, %cst_79 {dimension_numbers = #tpu.dot_dimension_numbers<[1], [0], [0], [1], [0, 0, 1, 1], [], []>} : vector<2x16xf32>, vector<16x1xf32>, vector<2x1xf32> -> vector<2x1xf32>
    %cst_80 = arith.constant 0.000000e+00 : f32
    %111 = vector.broadcast %cst_80 : f32 to vector<2x1xf32>
    %112 = arith.maximumf %110, %111 : vector<2x1xf32>
    %cst_81 = arith.constant dense<0.000000e+00> : vector<16x1xf32>
    %113 = tpu.matmul %64, %112, %cst_81 {dimension_numbers = #tpu.dot_dimension_numbers<[1], [0], [0], [1], [0, 0, 1, 1], [], []>} : vector<16x2xf32>, vector<2x1xf32>, vector<16x1xf32> -> vector<16x1xf32>
    %114 = arith.addf %109, %113 : vector<16x1xf32>
    %115 = math.absf %114 : vector<16x1xf32>
    %cst_82 = arith.constant 0.000000e+00 : f32
    %116 = vector.broadcast %cst_82 : f32 to vector<16x1xf32>
    %117 = arith.subf %116, %115 : vector<16x1xf32>
    %118 = math.exp %117 : vector<16x1xf32>
    %cst_83 = arith.constant 0.000000e+00 : f32
    %119 = vector.broadcast %cst_83 : f32 to vector<16x1xf32>
    %120 = arith.cmpf oge, %114, %119 : vector<16x1xf32>
    %cst_84 = arith.constant 1.000000e+00 : f32
    %121 = vector.broadcast %cst_84 : f32 to vector<16x1xf32>
    %122 = arith.addf %121, %118 : vector<16x1xf32>
    %cst_85 = arith.constant 1.000000e+00 : f32
    %123 = vector.broadcast %cst_85 : f32 to vector<16x1xf32>
    %124 = arith.divf %123, %122 : vector<16x1xf32>
    %cst_86 = arith.constant 1.000000e+00 : f32
    %125 = vector.broadcast %cst_86 : f32 to vector<16x1xf32>
    %126 = arith.addf %125, %118 : vector<16x1xf32>
    %127 = arith.divf %118, %126 : vector<16x1xf32>
    %128 = arith.select %120, %124, %127 : vector<16x1xi1>, vector<16x1xf32>
    %129 = vector.extract_strided_slice %6 {offsets = [1, 0], sizes = [1, 128], strides = [1, 1]} : vector<2x128xf32> to vector<1x128xf32>
    %130 = vector.broadcast %128 : vector<16x1xf32> to vector<16x128xf32>
    %131 = vector.broadcast %129 : vector<1x128xf32> to vector<16x128xf32>
    %132 = arith.mulf %130, %131 : vector<16x128xf32>
    %133 = arith.addf %98, %132 : vector<16x128xf32>
    %cst_87 = arith.constant 1.000000e+00 : f32
    %134 = vector.broadcast %cst_87 : f32 to vector<16x128xf32>
    %135 = arith.subf %133, %134 : vector<16x128xf32>
    %cst_88 = arith.constant 4.200000e-02 : f32
    %136 = vector.broadcast %cst_88 : f32 to vector<16x128xf32>
    %137 = arith.mulf %136, %135 : vector<16x128xf32>
    %cst_89 = arith.constant 1.000000e+00 : f32
    %138 = vector.broadcast %cst_89 : f32 to vector<16x128xf32>
    %139 = arith.addf %138, %137 : vector<16x128xf32>
    %140 = arith.mulf %60, %139 : vector<16x128xf32>
    %cst_90 = arith.constant dense<0.000000e+00> : vector<128xf32>
    %141 = vector.multi_reduction <add>, %140, %cst_90 [0] : vector<16x128xf32> to vector<128xf32>
    %142 = vector.shape_cast %141 : vector<128xf32> to vector<1x128xf32>
    %cst_91 = arith.constant 1.600000e+01 : f32
    %143 = vector.broadcast %cst_91 : f32 to vector<1x128xf32>
    %144 = arith.divf %142, %143 : vector<1x128xf32>
    %cst_92 = arith.constant dense<0xFF800000> : vector<128xf32>
    %145 = vector.multi_reduction <maximumf>, %140, %cst_92 [0] : vector<16x128xf32> to vector<128xf32>
    %146 = vector.shape_cast %145 : vector<128xf32> to vector<1x128xf32>
    %c0_93 = arith.constant 0 : index
    %c0_94 = arith.constant 0 : index
    %c0_95 = arith.constant 0 : index
    %147 = vector.load %arg9[%c0_93, %c0_94, %c0_95] : memref<2x128x128xf32, #tpu.memory_space<vmem>>, vector<1x128x128xf32>
    %148 = vector.shape_cast %147 : vector<1x128x128xf32> to vector<128x128xf32>
    %cst_96 = arith.constant dense<0.000000e+00> : vector<1x128xf32>
    %149 = tpu.matmul %144, %148, %cst_96 {dimension_numbers = #tpu.dot_dimension_numbers<[1], [0], [0], [1], [0, 0, 1, 1], [], []>} : vector<1x128xf32>, vector<128x128xf32>, vector<1x128xf32> -> vector<1x128xf32>
    %c0_97 = arith.constant 0 : index
    %c0_98 = arith.constant 0 : index
    %c0_99 = arith.constant 0 : index
    %150 = vector.load %arg10[%c0_97, %c0_98, %c0_99] : memref<2x128x128xf32, #tpu.memory_space<vmem>>, vector<1x128x128xf32>
    %151 = vector.shape_cast %150 : vector<1x128x128xf32> to vector<128x128xf32>
    %cst_100 = arith.constant dense<0.000000e+00> : vector<1x128xf32>
    %152 = tpu.matmul %146, %151, %cst_100 {dimension_numbers = #tpu.dot_dimension_numbers<[1], [0], [0], [1], [0, 0, 1, 1], [], []>} : vector<1x128xf32>, vector<128x128xf32>, vector<1x128xf32> -> vector<1x128xf32>
    %153 = arith.addf %149, %152 : vector<1x128xf32>
    %154 = math.absf %153 : vector<1x128xf32>
    %cst_101 = arith.constant 0.000000e+00 : f32
    %155 = vector.broadcast %cst_101 : f32 to vector<1x128xf32>
    %156 = arith.subf %155, %154 : vector<1x128xf32>
    %157 = math.exp %156 : vector<1x128xf32>
    %cst_102 = arith.constant 0.000000e+00 : f32
    %158 = vector.broadcast %cst_102 : f32 to vector<1x128xf32>
    %159 = arith.cmpf oge, %153, %158 : vector<1x128xf32>
    %cst_103 = arith.constant 1.000000e+00 : f32
    %160 = vector.broadcast %cst_103 : f32 to vector<1x128xf32>
    %161 = arith.addf %160, %157 : vector<1x128xf32>
    %cst_104 = arith.constant 1.000000e+00 : f32
    %162 = vector.broadcast %cst_104 : f32 to vector<1x128xf32>
    %163 = arith.divf %162, %161 : vector<1x128xf32>
    %cst_105 = arith.constant 1.000000e+00 : f32
    %164 = vector.broadcast %cst_105 : f32 to vector<1x128xf32>
    %165 = arith.addf %164, %157 : vector<1x128xf32>
    %166 = arith.divf %157, %165 : vector<1x128xf32>
    %167 = arith.select %159, %163, %166 : vector<1x128xi1>, vector<1x128xf32>
    %cst_106 = arith.constant 1.000000e+00 : f32
    %168 = vector.broadcast %cst_106 : f32 to vector<1x128xf32>
    %169 = arith.subf %167, %168 : vector<1x128xf32>
    %cst_107 = arith.constant 6.250000e-02 : f32
    %170 = vector.broadcast %cst_107 : f32 to vector<1x128xf32>
    %171 = arith.mulf %170, %169 : vector<1x128xf32>
    %cst_108 = arith.constant 1.000000e+00 : f32
    %172 = vector.broadcast %cst_108 : f32 to vector<1x128xf32>
    %173 = arith.addf %172, %171 : vector<1x128xf32>
    %174 = vector.broadcast %173 : vector<1x128xf32> to vector<16x128xf32>
    %175 = arith.mulf %140, %174 : vector<16x128xf32>
    %cst_109 = arith.constant 1.000000e+00 : f32
    %176 = vector.broadcast %cst_109 : f32 to vector<16x128xf32>
    %177 = arith.mulf %176, %175 : vector<16x128xf32>
    %178 = arith.addf %5, %177 : vector<16x128xf32>
    %179 = math.absf %178 : vector<16x128xf32>
    %cst_110 = arith.constant 0.000000e+00 : f32
    %180 = vector.broadcast %cst_110 : f32 to vector<16x128xf32>
    %181 = arith.subf %180, %179 : vector<16x128xf32>
    %182 = math.exp %181 : vector<16x128xf32>
    %cst_111 = arith.constant 0.000000e+00 : f32
    %183 = vector.broadcast %cst_111 : f32 to vector<16x128xf32>
    %184 = arith.cmpf oge, %178, %183 : vector<16x128xf32>
    %cst_112 = arith.constant 1.000000e+00 : f32
    %185 = vector.broadcast %cst_112 : f32 to vector<16x128xf32>
    %186 = arith.addf %185, %182 : vector<16x128xf32>
    %cst_113 = arith.constant 1.000000e+00 : f32
    %187 = vector.broadcast %cst_113 : f32 to vector<16x128xf32>
    %188 = arith.divf %187, %186 : vector<16x128xf32>
    %cst_114 = arith.constant 1.000000e+00 : f32
    %189 = vector.broadcast %cst_114 : f32 to vector<16x128xf32>
    %190 = arith.addf %189, %182 : vector<16x128xf32>
    %191 = arith.divf %182, %190 : vector<16x128xf32>
    %192 = arith.select %184, %188, %191 : vector<16x128xi1>, vector<16x128xf32>
    %193 = arith.mulf %178, %192 : vector<16x128xf32>
    %c0_115 = arith.constant 0 : index
    %c0_116 = arith.constant 0 : index
    %194 = vector.load %arg3[%c0_115, %c0_116] : memref<128x1152xf32, #tpu.memory_space<vmem>>, vector<128x1152xf32>
    %cst_117 = arith.constant dense<0.000000e+00> : vector<16x1152xf32>
    %195 = tpu.matmul %193, %194, %cst_117 {dimension_numbers = #tpu.dot_dimension_numbers<[1], [0], [0], [1], [0, 0, 1, 1], [], []>} : vector<16x128xf32>, vector<128x1152xf32>, vector<16x1152xf32> -> vector<16x1152xf32>
    %c1_118 = arith.constant 1 : index
    %c0_119 = arith.constant 0 : index
    %c0_120 = arith.constant 0 : index
    %c0_121 = arith.constant 0 : index
    %196 = vector.load %arg4[%c1_118, %c0_119, %c0_120, %c0_121] : memref<2x9x16x16xf32, #tpu.memory_space<vmem>>, vector<1x1x16x16xf32>
    %197 = vector.shape_cast %196 : vector<1x1x16x16xf32> to vector<16x16xf32>
    %198 = vector.extract_strided_slice %195 {offsets = [0, 0], sizes = [16, 128], strides = [1, 1]} : vector<16x1152xf32> to vector<16x128xf32>
    %cst_122 = arith.constant dense<0.000000e+00> : vector<16x128xf32>
    %199 = tpu.matmul %197, %198, %cst_122 {dimension_numbers = #tpu.dot_dimension_numbers<[1], [0], [0], [1], [0, 0, 1, 1], [], []>} : vector<16x16xf32>, vector<16x128xf32>, vector<16x128xf32> -> vector<16x128xf32>
    %c1_123 = arith.constant 1 : index
    %c1_124 = arith.constant 1 : index
    %c0_125 = arith.constant 0 : index
    %c0_126 = arith.constant 0 : index
    %200 = vector.load %arg4[%c1_123, %c1_124, %c0_125, %c0_126] : memref<2x9x16x16xf32, #tpu.memory_space<vmem>>, vector<1x1x16x16xf32>
    %201 = vector.shape_cast %200 : vector<1x1x16x16xf32> to vector<16x16xf32>
    %202 = vector.extract_strided_slice %195 {offsets = [0, 128], sizes = [16, 128], strides = [1, 1]} : vector<16x1152xf32> to vector<16x128xf32>
    %cst_127 = arith.constant dense<0.000000e+00> : vector<16x128xf32>
    %203 = tpu.matmul %201, %202, %cst_127 {dimension_numbers = #tpu.dot_dimension_numbers<[1], [0], [0], [1], [0, 0, 1, 1], [], []>} : vector<16x16xf32>, vector<16x128xf32>, vector<16x128xf32> -> vector<16x128xf32>
    %204 = arith.addf %199, %203 : vector<16x128xf32>
    %c1_128 = arith.constant 1 : index
    %c2_129 = arith.constant 2 : index
    %c0_130 = arith.constant 0 : index
    %c0_131 = arith.constant 0 : index
    %205 = vector.load %arg4[%c1_128, %c2_129, %c0_130, %c0_131] : memref<2x9x16x16xf32, #tpu.memory_space<vmem>>, vector<1x1x16x16xf32>
    %206 = vector.shape_cast %205 : vector<1x1x16x16xf32> to vector<16x16xf32>
    %207 = vector.extract_strided_slice %195 {offsets = [0, 256], sizes = [16, 128], strides = [1, 1]} : vector<16x1152xf32> to vector<16x128xf32>
    %cst_132 = arith.constant dense<0.000000e+00> : vector<16x128xf32>
    %208 = tpu.matmul %206, %207, %cst_132 {dimension_numbers = #tpu.dot_dimension_numbers<[1], [0], [0], [1], [0, 0, 1, 1], [], []>} : vector<16x16xf32>, vector<16x128xf32>, vector<16x128xf32> -> vector<16x128xf32>
    %209 = arith.addf %204, %208 : vector<16x128xf32>
    %c1_133 = arith.constant 1 : index
    %c3_134 = arith.constant 3 : index
    %c0_135 = arith.constant 0 : index
    %c0_136 = arith.constant 0 : index
    %210 = vector.load %arg4[%c1_133, %c3_134, %c0_135, %c0_136] : memref<2x9x16x16xf32, #tpu.memory_space<vmem>>, vector<1x1x16x16xf32>
    %211 = vector.shape_cast %210 : vector<1x1x16x16xf32> to vector<16x16xf32>
    %212 = vector.extract_strided_slice %195 {offsets = [0, 384], sizes = [16, 128], strides = [1, 1]} : vector<16x1152xf32> to vector<16x128xf32>
    %cst_137 = arith.constant dense<0.000000e+00> : vector<16x128xf32>
    %213 = tpu.matmul %211, %212, %cst_137 {dimension_numbers = #tpu.dot_dimension_numbers<[1], [0], [0], [1], [0, 0, 1, 1], [], []>} : vector<16x16xf32>, vector<16x128xf32>, vector<16x128xf32> -> vector<16x128xf32>
    %214 = arith.addf %209, %213 : vector<16x128xf32>
    %c1_138 = arith.constant 1 : index
    %c4_139 = arith.constant 4 : index
    %c0_140 = arith.constant 0 : index
    %c0_141 = arith.constant 0 : index
    %215 = vector.load %arg4[%c1_138, %c4_139, %c0_140, %c0_141] : memref<2x9x16x16xf32, #tpu.memory_space<vmem>>, vector<1x1x16x16xf32>
    %216 = vector.shape_cast %215 : vector<1x1x16x16xf32> to vector<16x16xf32>
    %217 = vector.extract_strided_slice %195 {offsets = [0, 512], sizes = [16, 128], strides = [1, 1]} : vector<16x1152xf32> to vector<16x128xf32>
    %cst_142 = arith.constant dense<0.000000e+00> : vector<16x128xf32>
    %218 = tpu.matmul %216, %217, %cst_142 {dimension_numbers = #tpu.dot_dimension_numbers<[1], [0], [0], [1], [0, 0, 1, 1], [], []>} : vector<16x16xf32>, vector<16x128xf32>, vector<16x128xf32> -> vector<16x128xf32>
    %219 = arith.addf %214, %218 : vector<16x128xf32>
    %c1_143 = arith.constant 1 : index
    %c5_144 = arith.constant 5 : index
    %c0_145 = arith.constant 0 : index
    %c0_146 = arith.constant 0 : index
    %220 = vector.load %arg4[%c1_143, %c5_144, %c0_145, %c0_146] : memref<2x9x16x16xf32, #tpu.memory_space<vmem>>, vector<1x1x16x16xf32>
    %221 = vector.shape_cast %220 : vector<1x1x16x16xf32> to vector<16x16xf32>
    %222 = vector.extract_strided_slice %195 {offsets = [0, 640], sizes = [16, 128], strides = [1, 1]} : vector<16x1152xf32> to vector<16x128xf32>
    %cst_147 = arith.constant dense<0.000000e+00> : vector<16x128xf32>
    %223 = tpu.matmul %221, %222, %cst_147 {dimension_numbers = #tpu.dot_dimension_numbers<[1], [0], [0], [1], [0, 0, 1, 1], [], []>} : vector<16x16xf32>, vector<16x128xf32>, vector<16x128xf32> -> vector<16x128xf32>
    %224 = arith.addf %219, %223 : vector<16x128xf32>
    %c1_148 = arith.constant 1 : index
    %c6_149 = arith.constant 6 : index
    %c0_150 = arith.constant 0 : index
    %c0_151 = arith.constant 0 : index
    %225 = vector.load %arg4[%c1_148, %c6_149, %c0_150, %c0_151] : memref<2x9x16x16xf32, #tpu.memory_space<vmem>>, vector<1x1x16x16xf32>
    %226 = vector.shape_cast %225 : vector<1x1x16x16xf32> to vector<16x16xf32>
    %227 = vector.extract_strided_slice %195 {offsets = [0, 768], sizes = [16, 128], strides = [1, 1]} : vector<16x1152xf32> to vector<16x128xf32>
    %cst_152 = arith.constant dense<0.000000e+00> : vector<16x128xf32>
    %228 = tpu.matmul %226, %227, %cst_152 {dimension_numbers = #tpu.dot_dimension_numbers<[1], [0], [0], [1], [0, 0, 1, 1], [], []>} : vector<16x16xf32>, vector<16x128xf32>, vector<16x128xf32> -> vector<16x128xf32>
    %229 = arith.addf %224, %228 : vector<16x128xf32>
    %c1_153 = arith.constant 1 : index
    %c7_154 = arith.constant 7 : index
    %c0_155 = arith.constant 0 : index
    %c0_156 = arith.constant 0 : index
    %230 = vector.load %arg4[%c1_153, %c7_154, %c0_155, %c0_156] : memref<2x9x16x16xf32, #tpu.memory_space<vmem>>, vector<1x1x16x16xf32>
    %231 = vector.shape_cast %230 : vector<1x1x16x16xf32> to vector<16x16xf32>
    %232 = vector.extract_strided_slice %195 {offsets = [0, 896], sizes = [16, 128], strides = [1, 1]} : vector<16x1152xf32> to vector<16x128xf32>
    %cst_157 = arith.constant dense<0.000000e+00> : vector<16x128xf32>
    %233 = tpu.matmul %231, %232, %cst_157 {dimension_numbers = #tpu.dot_dimension_numbers<[1], [0], [0], [1], [0, 0, 1, 1], [], []>} : vector<16x16xf32>, vector<16x128xf32>, vector<16x128xf32> -> vector<16x128xf32>
    %234 = arith.addf %229, %233 : vector<16x128xf32>
    %c1_158 = arith.constant 1 : index
    %c8_159 = arith.constant 8 : index
    %c0_160 = arith.constant 0 : index
    %c0_161 = arith.constant 0 : index
    %235 = vector.load %arg4[%c1_158, %c8_159, %c0_160, %c0_161] : memref<2x9x16x16xf32, #tpu.memory_space<vmem>>, vector<1x1x16x16xf32>
    %236 = vector.shape_cast %235 : vector<1x1x16x16xf32> to vector<16x16xf32>
    %237 = vector.extract_strided_slice %195 {offsets = [0, 1024], sizes = [16, 128], strides = [1, 1]} : vector<16x1152xf32> to vector<16x128xf32>
    %cst_162 = arith.constant dense<0.000000e+00> : vector<16x128xf32>
    %238 = tpu.matmul %236, %237, %cst_162 {dimension_numbers = #tpu.dot_dimension_numbers<[1], [0], [0], [1], [0, 0, 1, 1], [], []>} : vector<16x16xf32>, vector<16x128xf32>, vector<16x128xf32> -> vector<16x128xf32>
    %239 = arith.addf %234, %238 : vector<16x128xf32>
    %c1_163 = arith.constant 1 : index
    %c0_164 = arith.constant 0 : index
    %c0_165 = arith.constant 0 : index
    %240 = vector.load %arg5[%c1_163, %c0_164, %c0_165] : memref<2x16x1xf32, #tpu.memory_space<vmem>>, vector<1x16x1xf32>
    %241 = vector.shape_cast %240 : vector<1x16x1xf32> to vector<16x1xf32>
    %242 = vector.broadcast %241 : vector<16x1xf32> to vector<16x128xf32>
    %243 = arith.mulf %239, %242 : vector<16x128xf32>
    %c1_166 = arith.constant 1 : index
    %c0_167 = arith.constant 0 : index
    %c0_168 = arith.constant 0 : index
    %244 = vector.load %arg6[%c1_166, %c0_167, %c0_168] : memref<2x16x1xf32, #tpu.memory_space<vmem>>, vector<1x16x1xf32>
    %245 = vector.shape_cast %244 : vector<1x16x1xf32> to vector<16x1xf32>
    %246 = vector.broadcast %245 : vector<16x1xf32> to vector<16x128xf32>
    %247 = arith.addf %243, %246 : vector<16x128xf32>
    %c1_169 = arith.constant 1 : index
    %c0_170 = arith.constant 0 : index
    %c0_171 = arith.constant 0 : index
    %248 = vector.load %arg7[%c1_169, %c0_170, %c0_171] : memref<2x2x16xf32, #tpu.memory_space<vmem>>, vector<1x2x16xf32>
    %249 = vector.shape_cast %248 : vector<1x2x16xf32> to vector<2x16xf32>
    %c1_172 = arith.constant 1 : index
    %c0_173 = arith.constant 0 : index
    %c0_174 = arith.constant 0 : index
    %250 = vector.load %arg8[%c1_172, %c0_173, %c0_174] : memref<2x16x2xf32, #tpu.memory_space<vmem>>, vector<1x16x2xf32>
    %251 = vector.shape_cast %250 : vector<1x16x2xf32> to vector<16x2xf32>
    %252 = vector.extract_strided_slice %247 {offsets = [0, 0], sizes = [16, 64], strides = [1, 1]} : vector<16x128xf32> to vector<16x64xf32>
    %cst_175 = arith.constant dense<0.000000e+00> : vector<16xf32>
    %253 = vector.multi_reduction <add>, %252, %cst_175 [1] : vector<16x64xf32> to vector<16xf32>
    %254 = vector.shape_cast %253 : vector<16xf32> to vector<16x1xf32>
    %cst_176 = arith.constant 6.400000e+01 : f32
    %255 = vector.broadcast %cst_176 : f32 to vector<16x1xf32>
    %256 = arith.divf %254, %255 : vector<16x1xf32>
    %cst_177 = arith.constant dense<0xFF800000> : vector<16xf32>
    %257 = vector.multi_reduction <maximumf>, %252, %cst_177 [1] : vector<16x64xf32> to vector<16xf32>
    %258 = vector.shape_cast %257 : vector<16xf32> to vector<16x1xf32>
    %cst_178 = arith.constant dense<0.000000e+00> : vector<2x1xf32>
    %259 = tpu.matmul %249, %256, %cst_178 {dimension_numbers = #tpu.dot_dimension_numbers<[1], [0], [0], [1], [0, 0, 1, 1], [], []>} : vector<2x16xf32>, vector<16x1xf32>, vector<2x1xf32> -> vector<2x1xf32>
    %cst_179 = arith.constant 0.000000e+00 : f32
    %260 = vector.broadcast %cst_179 : f32 to vector<2x1xf32>
    %261 = arith.maximumf %259, %260 : vector<2x1xf32>
    %cst_180 = arith.constant dense<0.000000e+00> : vector<16x1xf32>
    %262 = tpu.matmul %251, %261, %cst_180 {dimension_numbers = #tpu.dot_dimension_numbers<[1], [0], [0], [1], [0, 0, 1, 1], [], []>} : vector<16x2xf32>, vector<2x1xf32>, vector<16x1xf32> -> vector<16x1xf32>
    %cst_181 = arith.constant dense<0.000000e+00> : vector<2x1xf32>
    %263 = tpu.matmul %249, %258, %cst_181 {dimension_numbers = #tpu.dot_dimension_numbers<[1], [0], [0], [1], [0, 0, 1, 1], [], []>} : vector<2x16xf32>, vector<16x1xf32>, vector<2x1xf32> -> vector<2x1xf32>
    %cst_182 = arith.constant 0.000000e+00 : f32
    %264 = vector.broadcast %cst_182 : f32 to vector<2x1xf32>
    %265 = arith.maximumf %263, %264 : vector<2x1xf32>
    %cst_183 = arith.constant dense<0.000000e+00> : vector<16x1xf32>
    %266 = tpu.matmul %251, %265, %cst_183 {dimension_numbers = #tpu.dot_dimension_numbers<[1], [0], [0], [1], [0, 0, 1, 1], [], []>} : vector<16x2xf32>, vector<2x1xf32>, vector<16x1xf32> -> vector<16x1xf32>
    %267 = arith.addf %262, %266 : vector<16x1xf32>
    %268 = math.absf %267 : vector<16x1xf32>
    %cst_184 = arith.constant 0.000000e+00 : f32
    %269 = vector.broadcast %cst_184 : f32 to vector<16x1xf32>
    %270 = arith.subf %269, %268 : vector<16x1xf32>
    %271 = math.exp %270 : vector<16x1xf32>
    %cst_185 = arith.constant 0.000000e+00 : f32
    %272 = vector.broadcast %cst_185 : f32 to vector<16x1xf32>
    %273 = arith.cmpf oge, %267, %272 : vector<16x1xf32>
    %cst_186 = arith.constant 1.000000e+00 : f32
    %274 = vector.broadcast %cst_186 : f32 to vector<16x1xf32>
    %275 = arith.addf %274, %271 : vector<16x1xf32>
    %cst_187 = arith.constant 1.000000e+00 : f32
    %276 = vector.broadcast %cst_187 : f32 to vector<16x1xf32>
    %277 = arith.divf %276, %275 : vector<16x1xf32>
    %cst_188 = arith.constant 1.000000e+00 : f32
    %278 = vector.broadcast %cst_188 : f32 to vector<16x1xf32>
    %279 = arith.addf %278, %271 : vector<16x1xf32>
    %280 = arith.divf %271, %279 : vector<16x1xf32>
    %281 = arith.select %273, %277, %280 : vector<16x1xi1>, vector<16x1xf32>
    %282 = vector.extract_strided_slice %6 {offsets = [0, 0], sizes = [1, 128], strides = [1, 1]} : vector<2x128xf32> to vector<1x128xf32>
    %283 = vector.broadcast %281 : vector<16x1xf32> to vector<16x128xf32>
    %284 = vector.broadcast %282 : vector<1x128xf32> to vector<16x128xf32>
    %285 = arith.mulf %283, %284 : vector<16x128xf32>
    %286 = vector.extract_strided_slice %247 {offsets = [0, 64], sizes = [16, 64], strides = [1, 1]} : vector<16x128xf32> to vector<16x64xf32>
    %cst_189 = arith.constant dense<0.000000e+00> : vector<16xf32>
    %287 = vector.multi_reduction <add>, %286, %cst_189 [1] : vector<16x64xf32> to vector<16xf32>
    %288 = vector.shape_cast %287 : vector<16xf32> to vector<16x1xf32>
    %cst_190 = arith.constant 6.400000e+01 : f32
    %289 = vector.broadcast %cst_190 : f32 to vector<16x1xf32>
    %290 = arith.divf %288, %289 : vector<16x1xf32>
    %cst_191 = arith.constant dense<0xFF800000> : vector<16xf32>
    %291 = vector.multi_reduction <maximumf>, %286, %cst_191 [1] : vector<16x64xf32> to vector<16xf32>
    %292 = vector.shape_cast %291 : vector<16xf32> to vector<16x1xf32>
    %cst_192 = arith.constant dense<0.000000e+00> : vector<2x1xf32>
    %293 = tpu.matmul %249, %290, %cst_192 {dimension_numbers = #tpu.dot_dimension_numbers<[1], [0], [0], [1], [0, 0, 1, 1], [], []>} : vector<2x16xf32>, vector<16x1xf32>, vector<2x1xf32> -> vector<2x1xf32>
    %cst_193 = arith.constant 0.000000e+00 : f32
    %294 = vector.broadcast %cst_193 : f32 to vector<2x1xf32>
    %295 = arith.maximumf %293, %294 : vector<2x1xf32>
    %cst_194 = arith.constant dense<0.000000e+00> : vector<16x1xf32>
    %296 = tpu.matmul %251, %295, %cst_194 {dimension_numbers = #tpu.dot_dimension_numbers<[1], [0], [0], [1], [0, 0, 1, 1], [], []>} : vector<16x2xf32>, vector<2x1xf32>, vector<16x1xf32> -> vector<16x1xf32>
    %cst_195 = arith.constant dense<0.000000e+00> : vector<2x1xf32>
    %297 = tpu.matmul %249, %292, %cst_195 {dimension_numbers = #tpu.dot_dimension_numbers<[1], [0], [0], [1], [0, 0, 1, 1], [], []>} : vector<2x16xf32>, vector<16x1xf32>, vector<2x1xf32> -> vector<2x1xf32>
    %cst_196 = arith.constant 0.000000e+00 : f32
    %298 = vector.broadcast %cst_196 : f32 to vector<2x1xf32>
    %299 = arith.maximumf %297, %298 : vector<2x1xf32>
    %cst_197 = arith.constant dense<0.000000e+00> : vector<16x1xf32>
    %300 = tpu.matmul %251, %299, %cst_197 {dimension_numbers = #tpu.dot_dimension_numbers<[1], [0], [0], [1], [0, 0, 1, 1], [], []>} : vector<16x2xf32>, vector<2x1xf32>, vector<16x1xf32> -> vector<16x1xf32>
    %301 = arith.addf %296, %300 : vector<16x1xf32>
    %302 = math.absf %301 : vector<16x1xf32>
    %cst_198 = arith.constant 0.000000e+00 : f32
    %303 = vector.broadcast %cst_198 : f32 to vector<16x1xf32>
    %304 = arith.subf %303, %302 : vector<16x1xf32>
    %305 = math.exp %304 : vector<16x1xf32>
    %cst_199 = arith.constant 0.000000e+00 : f32
    %306 = vector.broadcast %cst_199 : f32 to vector<16x1xf32>
    %307 = arith.cmpf oge, %301, %306 : vector<16x1xf32>
    %cst_200 = arith.constant 1.000000e+00 : f32
    %308 = vector.broadcast %cst_200 : f32 to vector<16x1xf32>
    %309 = arith.addf %308, %305 : vector<16x1xf32>
    %cst_201 = arith.constant 1.000000e+00 : f32
    %310 = vector.broadcast %cst_201 : f32 to vector<16x1xf32>
    %311 = arith.divf %310, %309 : vector<16x1xf32>
    %cst_202 = arith.constant 1.000000e+00 : f32
    %312 = vector.broadcast %cst_202 : f32 to vector<16x1xf32>
    %313 = arith.addf %312, %305 : vector<16x1xf32>
    %314 = arith.divf %305, %313 : vector<16x1xf32>
    %315 = arith.select %307, %311, %314 : vector<16x1xi1>, vector<16x1xf32>
    %316 = vector.extract_strided_slice %6 {offsets = [1, 0], sizes = [1, 128], strides = [1, 1]} : vector<2x128xf32> to vector<1x128xf32>
    %317 = vector.broadcast %315 : vector<16x1xf32> to vector<16x128xf32>
    %318 = vector.broadcast %316 : vector<1x128xf32> to vector<16x128xf32>
    %319 = arith.mulf %317, %318 : vector<16x128xf32>
    %320 = arith.addf %285, %319 : vector<16x128xf32>
    %cst_203 = arith.constant 1.000000e+00 : f32
    %321 = vector.broadcast %cst_203 : f32 to vector<16x128xf32>
    %322 = arith.subf %320, %321 : vector<16x128xf32>
    %cst_204 = arith.constant 4.200000e-02 : f32
    %323 = vector.broadcast %cst_204 : f32 to vector<16x128xf32>
    %324 = arith.mulf %323, %322 : vector<16x128xf32>
    %cst_205 = arith.constant 1.000000e+00 : f32
    %325 = vector.broadcast %cst_205 : f32 to vector<16x128xf32>
    %326 = arith.addf %325, %324 : vector<16x128xf32>
    %327 = arith.mulf %247, %326 : vector<16x128xf32>
    %cst_206 = arith.constant dense<0.000000e+00> : vector<128xf32>
    %328 = vector.multi_reduction <add>, %327, %cst_206 [0] : vector<16x128xf32> to vector<128xf32>
    %329 = vector.shape_cast %328 : vector<128xf32> to vector<1x128xf32>
    %cst_207 = arith.constant 1.600000e+01 : f32
    %330 = vector.broadcast %cst_207 : f32 to vector<1x128xf32>
    %331 = arith.divf %329, %330 : vector<1x128xf32>
    %cst_208 = arith.constant dense<0xFF800000> : vector<128xf32>
    %332 = vector.multi_reduction <maximumf>, %327, %cst_208 [0] : vector<16x128xf32> to vector<128xf32>
    %333 = vector.shape_cast %332 : vector<128xf32> to vector<1x128xf32>
    %c1_209 = arith.constant 1 : index
    %c0_210 = arith.constant 0 : index
    %c0_211 = arith.constant 0 : index
    %334 = vector.load %arg9[%c1_209, %c0_210, %c0_211] : memref<2x128x128xf32, #tpu.memory_space<vmem>>, vector<1x128x128xf32>
    %335 = vector.shape_cast %334 : vector<1x128x128xf32> to vector<128x128xf32>
    %cst_212 = arith.constant dense<0.000000e+00> : vector<1x128xf32>
    %336 = tpu.matmul %331, %335, %cst_212 {dimension_numbers = #tpu.dot_dimension_numbers<[1], [0], [0], [1], [0, 0, 1, 1], [], []>} : vector<1x128xf32>, vector<128x128xf32>, vector<1x128xf32> -> vector<1x128xf32>
    %c1_213 = arith.constant 1 : index
    %c0_214 = arith.constant 0 : index
    %c0_215 = arith.constant 0 : index
    %337 = vector.load %arg10[%c1_213, %c0_214, %c0_215] : memref<2x128x128xf32, #tpu.memory_space<vmem>>, vector<1x128x128xf32>
    %338 = vector.shape_cast %337 : vector<1x128x128xf32> to vector<128x128xf32>
    %cst_216 = arith.constant dense<0.000000e+00> : vector<1x128xf32>
    %339 = tpu.matmul %333, %338, %cst_216 {dimension_numbers = #tpu.dot_dimension_numbers<[1], [0], [0], [1], [0, 0, 1, 1], [], []>} : vector<1x128xf32>, vector<128x128xf32>, vector<1x128xf32> -> vector<1x128xf32>
    %340 = arith.addf %336, %339 : vector<1x128xf32>
    %341 = math.absf %340 : vector<1x128xf32>
    %cst_217 = arith.constant 0.000000e+00 : f32
    %342 = vector.broadcast %cst_217 : f32 to vector<1x128xf32>
    %343 = arith.subf %342, %341 : vector<1x128xf32>
    %344 = math.exp %343 : vector<1x128xf32>
    %cst_218 = arith.constant 0.000000e+00 : f32
    %345 = vector.broadcast %cst_218 : f32 to vector<1x128xf32>
    %346 = arith.cmpf oge, %340, %345 : vector<1x128xf32>
    %cst_219 = arith.constant 1.000000e+00 : f32
    %347 = vector.broadcast %cst_219 : f32 to vector<1x128xf32>
    %348 = arith.addf %347, %344 : vector<1x128xf32>
    %cst_220 = arith.constant 1.000000e+00 : f32
    %349 = vector.broadcast %cst_220 : f32 to vector<1x128xf32>
    %350 = arith.divf %349, %348 : vector<1x128xf32>
    %cst_221 = arith.constant 1.000000e+00 : f32
    %351 = vector.broadcast %cst_221 : f32 to vector<1x128xf32>
    %352 = arith.addf %351, %344 : vector<1x128xf32>
    %353 = arith.divf %344, %352 : vector<1x128xf32>
    %354 = arith.select %346, %350, %353 : vector<1x128xi1>, vector<1x128xf32>
    %cst_222 = arith.constant 1.000000e+00 : f32
    %355 = vector.broadcast %cst_222 : f32 to vector<1x128xf32>
    %356 = arith.subf %354, %355 : vector<1x128xf32>
    %cst_223 = arith.constant 6.250000e-02 : f32
    %357 = vector.broadcast %cst_223 : f32 to vector<1x128xf32>
    %358 = arith.mulf %357, %356 : vector<1x128xf32>
    %cst_224 = arith.constant 1.000000e+00 : f32
    %359 = vector.broadcast %cst_224 : f32 to vector<1x128xf32>
    %360 = arith.addf %359, %358 : vector<1x128xf32>
    %361 = vector.broadcast %360 : vector<1x128xf32> to vector<16x128xf32>
    %362 = arith.mulf %327, %361 : vector<16x128xf32>
    %cst_225 = arith.constant 1.000000e+00 : f32
    %363 = vector.broadcast %cst_225 : f32 to vector<16x128xf32>
    %364 = arith.mulf %363, %362 : vector<16x128xf32>
    %365 = arith.addf %193, %364 : vector<16x128xf32>
    %366 = math.absf %365 : vector<16x128xf32>
    %cst_226 = arith.constant 0.000000e+00 : f32
    %367 = vector.broadcast %cst_226 : f32 to vector<16x128xf32>
    %368 = arith.subf %367, %366 : vector<16x128xf32>
    %369 = math.exp %368 : vector<16x128xf32>
    %cst_227 = arith.constant 0.000000e+00 : f32
    %370 = vector.broadcast %cst_227 : f32 to vector<16x128xf32>
    %371 = arith.cmpf oge, %365, %370 : vector<16x128xf32>
    %cst_228 = arith.constant 1.000000e+00 : f32
    %372 = vector.broadcast %cst_228 : f32 to vector<16x128xf32>
    %373 = arith.addf %372, %369 : vector<16x128xf32>
    %cst_229 = arith.constant 1.000000e+00 : f32
    %374 = vector.broadcast %cst_229 : f32 to vector<16x128xf32>
    %375 = arith.divf %374, %373 : vector<16x128xf32>
    %cst_230 = arith.constant 1.000000e+00 : f32
    %376 = vector.broadcast %cst_230 : f32 to vector<16x128xf32>
    %377 = arith.addf %376, %369 : vector<16x128xf32>
    %378 = arith.divf %369, %377 : vector<16x128xf32>
    %379 = arith.select %371, %375, %378 : vector<16x128xi1>, vector<16x128xf32>
    %380 = arith.mulf %365, %379 : vector<16x128xf32>
    %c0_231 = arith.constant 0 : index
    %c0_232 = arith.constant 0 : index
    %381 = vector.load %arg11[%c0_231, %c0_232] : memref<128x1152xf32, #tpu.memory_space<vmem>>, vector<128x1152xf32>
    %cst_233 = arith.constant dense<0.000000e+00> : vector<16x1152xf32>
    %382 = tpu.matmul %380, %381, %cst_233 {dimension_numbers = #tpu.dot_dimension_numbers<[1], [0], [0], [1], [0, 0, 1, 1], [], []>} : vector<16x128xf32>, vector<128x1152xf32>, vector<16x1152xf32> -> vector<16x1152xf32>
    %c0_234 = arith.constant 0 : index
    %c0_235 = arith.constant 0 : index
    %c0_236 = arith.constant 0 : index
    %383 = vector.load %arg12[%c0_234, %c0_235, %c0_236] : memref<9x1x16xf32, #tpu.memory_space<vmem>>, vector<1x1x16xf32>
    %384 = vector.shape_cast %383 : vector<1x1x16xf32> to vector<1x16xf32>
    %385 = vector.extract_strided_slice %382 {offsets = [0, 0], sizes = [16, 128], strides = [1, 1]} : vector<16x1152xf32> to vector<16x128xf32>
    %cst_237 = arith.constant dense<0.000000e+00> : vector<1x128xf32>
    %386 = tpu.matmul %384, %385, %cst_237 {dimension_numbers = #tpu.dot_dimension_numbers<[1], [0], [0], [1], [0, 0, 1, 1], [], []>} : vector<1x16xf32>, vector<16x128xf32>, vector<1x128xf32> -> vector<1x128xf32>
    %c1_238 = arith.constant 1 : index
    %c0_239 = arith.constant 0 : index
    %c0_240 = arith.constant 0 : index
    %387 = vector.load %arg12[%c1_238, %c0_239, %c0_240] : memref<9x1x16xf32, #tpu.memory_space<vmem>>, vector<1x1x16xf32>
    %388 = vector.shape_cast %387 : vector<1x1x16xf32> to vector<1x16xf32>
    %389 = vector.extract_strided_slice %382 {offsets = [0, 128], sizes = [16, 128], strides = [1, 1]} : vector<16x1152xf32> to vector<16x128xf32>
    %cst_241 = arith.constant dense<0.000000e+00> : vector<1x128xf32>
    %390 = tpu.matmul %388, %389, %cst_241 {dimension_numbers = #tpu.dot_dimension_numbers<[1], [0], [0], [1], [0, 0, 1, 1], [], []>} : vector<1x16xf32>, vector<16x128xf32>, vector<1x128xf32> -> vector<1x128xf32>
    %391 = arith.addf %386, %390 : vector<1x128xf32>
    %c2_242 = arith.constant 2 : index
    %c0_243 = arith.constant 0 : index
    %c0_244 = arith.constant 0 : index
    %392 = vector.load %arg12[%c2_242, %c0_243, %c0_244] : memref<9x1x16xf32, #tpu.memory_space<vmem>>, vector<1x1x16xf32>
    %393 = vector.shape_cast %392 : vector<1x1x16xf32> to vector<1x16xf32>
    %394 = vector.extract_strided_slice %382 {offsets = [0, 256], sizes = [16, 128], strides = [1, 1]} : vector<16x1152xf32> to vector<16x128xf32>
    %cst_245 = arith.constant dense<0.000000e+00> : vector<1x128xf32>
    %395 = tpu.matmul %393, %394, %cst_245 {dimension_numbers = #tpu.dot_dimension_numbers<[1], [0], [0], [1], [0, 0, 1, 1], [], []>} : vector<1x16xf32>, vector<16x128xf32>, vector<1x128xf32> -> vector<1x128xf32>
    %396 = arith.addf %391, %395 : vector<1x128xf32>
    %c3_246 = arith.constant 3 : index
    %c0_247 = arith.constant 0 : index
    %c0_248 = arith.constant 0 : index
    %397 = vector.load %arg12[%c3_246, %c0_247, %c0_248] : memref<9x1x16xf32, #tpu.memory_space<vmem>>, vector<1x1x16xf32>
    %398 = vector.shape_cast %397 : vector<1x1x16xf32> to vector<1x16xf32>
    %399 = vector.extract_strided_slice %382 {offsets = [0, 384], sizes = [16, 128], strides = [1, 1]} : vector<16x1152xf32> to vector<16x128xf32>
    %cst_249 = arith.constant dense<0.000000e+00> : vector<1x128xf32>
    %400 = tpu.matmul %398, %399, %cst_249 {dimension_numbers = #tpu.dot_dimension_numbers<[1], [0], [0], [1], [0, 0, 1, 1], [], []>} : vector<1x16xf32>, vector<16x128xf32>, vector<1x128xf32> -> vector<1x128xf32>
    %401 = arith.addf %396, %400 : vector<1x128xf32>
    %c4_250 = arith.constant 4 : index
    %c0_251 = arith.constant 0 : index
    %c0_252 = arith.constant 0 : index
    %402 = vector.load %arg12[%c4_250, %c0_251, %c0_252] : memref<9x1x16xf32, #tpu.memory_space<vmem>>, vector<1x1x16xf32>
    %403 = vector.shape_cast %402 : vector<1x1x16xf32> to vector<1x16xf32>
    %404 = vector.extract_strided_slice %382 {offsets = [0, 512], sizes = [16, 128], strides = [1, 1]} : vector<16x1152xf32> to vector<16x128xf32>
    %cst_253 = arith.constant dense<0.000000e+00> : vector<1x128xf32>
    %405 = tpu.matmul %403, %404, %cst_253 {dimension_numbers = #tpu.dot_dimension_numbers<[1], [0], [0], [1], [0, 0, 1, 1], [], []>} : vector<1x16xf32>, vector<16x128xf32>, vector<1x128xf32> -> vector<1x128xf32>
    %406 = arith.addf %401, %405 : vector<1x128xf32>
    %c5_254 = arith.constant 5 : index
    %c0_255 = arith.constant 0 : index
    %c0_256 = arith.constant 0 : index
    %407 = vector.load %arg12[%c5_254, %c0_255, %c0_256] : memref<9x1x16xf32, #tpu.memory_space<vmem>>, vector<1x1x16xf32>
    %408 = vector.shape_cast %407 : vector<1x1x16xf32> to vector<1x16xf32>
    %409 = vector.extract_strided_slice %382 {offsets = [0, 640], sizes = [16, 128], strides = [1, 1]} : vector<16x1152xf32> to vector<16x128xf32>
    %cst_257 = arith.constant dense<0.000000e+00> : vector<1x128xf32>
    %410 = tpu.matmul %408, %409, %cst_257 {dimension_numbers = #tpu.dot_dimension_numbers<[1], [0], [0], [1], [0, 0, 1, 1], [], []>} : vector<1x16xf32>, vector<16x128xf32>, vector<1x128xf32> -> vector<1x128xf32>
    %411 = arith.addf %406, %410 : vector<1x128xf32>
    %c6_258 = arith.constant 6 : index
    %c0_259 = arith.constant 0 : index
    %c0_260 = arith.constant 0 : index
    %412 = vector.load %arg12[%c6_258, %c0_259, %c0_260] : memref<9x1x16xf32, #tpu.memory_space<vmem>>, vector<1x1x16xf32>
    %413 = vector.shape_cast %412 : vector<1x1x16xf32> to vector<1x16xf32>
    %414 = vector.extract_strided_slice %382 {offsets = [0, 768], sizes = [16, 128], strides = [1, 1]} : vector<16x1152xf32> to vector<16x128xf32>
    %cst_261 = arith.constant dense<0.000000e+00> : vector<1x128xf32>
    %415 = tpu.matmul %413, %414, %cst_261 {dimension_numbers = #tpu.dot_dimension_numbers<[1], [0], [0], [1], [0, 0, 1, 1], [], []>} : vector<1x16xf32>, vector<16x128xf32>, vector<1x128xf32> -> vector<1x128xf32>
    %416 = arith.addf %411, %415 : vector<1x128xf32>
    %c7_262 = arith.constant 7 : index
    %c0_263 = arith.constant 0 : index
    %c0_264 = arith.constant 0 : index
    %417 = vector.load %arg12[%c7_262, %c0_263, %c0_264] : memref<9x1x16xf32, #tpu.memory_space<vmem>>, vector<1x1x16xf32>
    %418 = vector.shape_cast %417 : vector<1x1x16xf32> to vector<1x16xf32>
    %419 = vector.extract_strided_slice %382 {offsets = [0, 896], sizes = [16, 128], strides = [1, 1]} : vector<16x1152xf32> to vector<16x128xf32>
    %cst_265 = arith.constant dense<0.000000e+00> : vector<1x128xf32>
    %420 = tpu.matmul %418, %419, %cst_265 {dimension_numbers = #tpu.dot_dimension_numbers<[1], [0], [0], [1], [0, 0, 1, 1], [], []>} : vector<1x16xf32>, vector<16x128xf32>, vector<1x128xf32> -> vector<1x128xf32>
    %421 = arith.addf %416, %420 : vector<1x128xf32>
    %c8_266 = arith.constant 8 : index
    %c0_267 = arith.constant 0 : index
    %c0_268 = arith.constant 0 : index
    %422 = vector.load %arg12[%c8_266, %c0_267, %c0_268] : memref<9x1x16xf32, #tpu.memory_space<vmem>>, vector<1x1x16xf32>
    %423 = vector.shape_cast %422 : vector<1x1x16xf32> to vector<1x16xf32>
    %424 = vector.extract_strided_slice %382 {offsets = [0, 1024], sizes = [16, 128], strides = [1, 1]} : vector<16x1152xf32> to vector<16x128xf32>
    %cst_269 = arith.constant dense<0.000000e+00> : vector<1x128xf32>
    %425 = tpu.matmul %423, %424, %cst_269 {dimension_numbers = #tpu.dot_dimension_numbers<[1], [0], [0], [1], [0, 0, 1, 1], [], []>} : vector<1x16xf32>, vector<16x128xf32>, vector<1x128xf32> -> vector<1x128xf32>
    %426 = arith.addf %421, %425 : vector<1x128xf32>
    %c0_270 = arith.constant 0 : index
    %c0_271 = arith.constant 0 : index
    %427 = vector.load %arg16[%c0_270, %c0_271] : memref<1x128xf32, #tpu.memory_space<vmem>>, vector<1x128xf32>
    %428 = arith.addf %426, %427 : vector<1x128xf32>
    %c0_272 = arith.constant 0 : index
    %c0_273 = arith.constant 0 : index
    %429 = vector.load %arg15[%c0_272, %c0_273] : memref<1x128xf32, #tpu.memory_space<vmem>>, vector<1x128xf32>
    %c0_274 = arith.constant 0 : index
    %c0_275 = arith.constant 0 : index
    %430 = vector.load %arg13[%c0_274, %c0_275] : memref<128x2xf32, #tpu.memory_space<vmem>>, vector<128x2xf32>
    %cst_276 = arith.constant dense<0.000000e+00> : vector<1x2xf32>
    %431 = tpu.matmul %429, %430, %cst_276 {dimension_numbers = #tpu.dot_dimension_numbers<[1], [0], [0], [1], [0, 0, 1, 1], [], []>} : vector<1x128xf32>, vector<128x2xf32>, vector<1x2xf32> -> vector<1x2xf32>
    %cst_277 = arith.constant 1.000000e+00 : f32
    %432 = vector.broadcast %cst_277 : f32 to vector<1x2xf32>
    %433 = arith.subf %431, %432 : vector<1x2xf32>
    %cst_278 = arith.constant 1.000000e+03 : f32
    %434 = vector.broadcast %cst_278 : f32 to vector<1x2xf32>
    %435 = arith.mulf %433, %434 : vector<1x2xf32>
    %436 = math.tanh %435 : vector<1x2xf32>
    %cst_279 = arith.constant 1.000000e+01 : f32
    %437 = vector.broadcast %cst_279 : f32 to vector<1x2xf32>
    %438 = arith.mulf %436, %437 : vector<1x2xf32>
    %439 = math.exp %438 : vector<1x2xf32>
    %cst_280 = arith.constant dense<0.000000e+00> : vector<1x128xf32>
    %440 = tpu.matmul %439, %6, %cst_280 {dimension_numbers = #tpu.dot_dimension_numbers<[1], [0], [0], [1], [0, 0, 1, 1], [], []>} : vector<1x2xf32>, vector<2x128xf32>, vector<1x128xf32> -> vector<1x128xf32>
    %cst_281 = arith.constant 1.000000e+00 : f32
    %441 = vector.broadcast %cst_281 : f32 to vector<1x128xf32>
    %442 = arith.subf %440, %441 : vector<1x128xf32>
    %443 = arith.mulf %429, %442 : vector<1x128xf32>
    %444 = arith.subf %428, %443 : vector<1x128xf32>
    %c0_282 = arith.constant 0 : index
    %c0_283 = arith.constant 0 : index
    %445 = vector.load %arg17[%c0_282, %c0_283] : memref<1x128xf32, #tpu.memory_space<vmem>>, vector<1x128xf32>
    tpu.vector_store %arg17[%c0_282, %c0_283], %444 {strides = array<i32>} : memref<1x128xf32, #tpu.memory_space<vmem>>, vector<1x128xf32>,
    return
  }
}

</mosaic_0001>

<llo_original>
// kernel: tile.8
$region0: #{tile.8}
  #allocation0 [shape = 's32[1]{0}', space=sflag, size = 0x4, scoped, tag = 'scoped memory for tile.8']
  %s0 = inlined_call_operand.vmem [shape: f32[64], index: 0, kind: input, shape index: {}]
  %s1 = inlined_call_operand.vmem [shape: f32[2,64], index: 1, kind: output, shape index: {}]
  // Predicated region
  $region2: #{tile.8} parent=0 // pred_check
    _
  $region3: #{tile.8} parent=0 // pred_check_branch
    %3 = sbr.rel (0) target = $region5
  $region4: #{tile.8} parent=0 // pred_region
    _
  $region5: #{tile.8} parent=0 // pred_fallthru
    _
  %v4 = vld [vmem:[%s0] ss:$0 sm:$0xff]
  %5 = vst [vmem:[%s1] sm:$0x3] %v4

// kernel: tile.9
$region0: #{tile.9}
  %s0 = inlined_call_operand.vmem [shape: f32[2,64], index: 0, kind: input, shape index: {}]
  %s1 = inlined_call_operand.vmem [shape: f32[1,128], index: 1, kind: output, shape index: {}]
  $region1: #{tile.9} parent=0
    #allocation0 [shape = 'u8[4096]{0}', space=vmem, size = 0x1000, scoped, tag = 'scoped mem for output reshape']
    #allocation1 [shape = 'u8[4096]{0}', space=vmem, size = 0x1000, scoped, tag = 'scoped mem for input reshape']
    %s3 = sshllo.u32 0, 2
    %v4 = vld [vmem:[%s0] sm:%s3]
    %5 = vst [vmem:[#allocation1] sm:%s3] %v4
    %v6 = vld [vmem:[#allocation1] sm:$0x1]
    %vm7 = vcmask 523264
    %8 = vst.msk [vmem:[#allocation0] sm:$0x1] %vm7, %v6
    %s9 = scalar_lea.vmem [#allocation1], 1
    %v10 = vld [vmem:[%s9] sm:$0x1]
    %11 = vrot.lane.b32.xlu0 %v10, 64
    %v12 = vpop.permute.xlu0 %11
    %vm13 = vcmask 1048064
    %14 = vst.msk [vmem:[#allocation0] sm:$0x1] %vm13, %v12
    %s16 = sshllo.u32 0, 1
    %v18 = vld [vmem:[#allocation0] sm:%s16]
    %s19 = sshllo.u32 0, 1
    %20 = vst [vmem:[%s1] sm:%s19] %v18

// kernel: conv_forward.1
$region0: #{conv_forward.1}
  #allocation0 [shape = 'u32[]', space=smem, size = 0x4, offset = 0x4, fixed_abs, tag = 'smem constant byte address 0x4 - core index']
  #allocation1 [shape = 'u32[144,128]{1,0:T(1,128)}', space=vmem, size = 0x12000, scoped, tag = 'internal scratch']
  %s0 = inlined_call_operand.vmem [shape: f32[18,128], index: 0, kind: input, shape index: {}]
  %s1 = inlined_call_operand.vmem [shape: f32[16,18], index: 1, kind: input, shape index: {}]
  %s2 = inlined_call_operand.vmem [shape: f32[16,1], index: 2, kind: input, shape index: {}]
  %s3 = inlined_call_operand.vmem [shape: f32[128,1152], index: 3, kind: input, shape index: {}, may-alias: {3,11}]
  %s4 = inlined_call_operand.vmem [shape: f32[2,9,16,16], index: 4, kind: input, shape index: {}]
  %s5 = inlined_call_operand.vmem [shape: f32[2,16,1], index: 5, kind: input, shape index: {}]
  %s6 = inlined_call_operand.vmem [shape: f32[2,16,1], index: 6, kind: input, shape index: {}]
  %s7 = inlined_call_operand.vmem [shape: f32[2,2,16], index: 7, kind: input, shape index: {}]
  %s8 = inlined_call_operand.vmem [shape: f32[2,16,2], index: 8, kind: input, shape index: {}]
  %s9 = inlined_call_operand.vmem [shape: f32[2,128,128], index: 9, kind: input, shape index: {}]
  %s10 = inlined_call_operand.vmem [shape: f32[2,128,128], index: 10, kind: input, shape index: {}]
  %s11 = inlined_call_operand.vmem [shape: f32[128,1152], index: 11, kind: input, shape index: {}, may-alias: {3,11}]
  %s12 = inlined_call_operand.vmem [shape: f32[9,1,16], index: 12, kind: input, shape index: {}]
  %s13 = inlined_call_operand.vmem [shape: f32[128,2], index: 13, kind: input, shape index: {}]
  %s14 = inlined_call_operand.vmem [shape: f32[2,128], index: 14, kind: input, shape index: {}]
  %s15 = inlined_call_operand.vmem [shape: f32[1,128], index: 15, kind: input, shape index: {}]
  %s16 = inlined_call_operand.vmem [shape: f32[1,128], index: 16, kind: input, shape index: {}]
  %s17 = inlined_call_operand.vmem [shape: f32[1,128], index: 17, kind: output, shape index: {}]
  %s18 = sld [smem:[#allocation0]]
  $region78: #{conv_forward.1} parent=0
    _
  %s20 = ssub.s32 1, %s18
  %s21 = scalar_select 0, %s20, %s18
  // Predicated region
  $region2: #{conv_forward.1} parent=0 // pred_check
    _
  $region3: #{conv_forward.1} parent=0 // pred_check_branch
    %23 = sbr.rel (0) target = $region5
  $region4: #{conv_forward.1} parent=0 // pred_region
    _
  $region5: #{conv_forward.1} parent=0 // pred_fallthru
    _
  // Predicated region
  $region6: #{conv_forward.1} parent=0 // pred_check
    _
  $region7: #{conv_forward.1} parent=0 // pred_check_branch
    %25 = sbr.rel (0) target = $region9
  $region8: #{conv_forward.1} parent=0 // pred_region
    _
  $region9: #{conv_forward.1} parent=0 // pred_fallthru
    _
  // Predicated region
  $region10: #{conv_forward.1} parent=0 // pred_check
    _
  $region11: #{conv_forward.1} parent=0 // pred_check_branch
    %27 = sbr.rel (0) target = $region13
  $region12: #{conv_forward.1} parent=0 // pred_region
    _
  $region13: #{conv_forward.1} parent=0 // pred_fallthru
    _
  // Predicated region
  $region14: #{conv_forward.1} parent=0 // pred_check
    _
  $region15: #{conv_forward.1} parent=0 // pred_check_branch
    %29 = sbr.rel (0) target = $region17
  $region16: #{conv_forward.1} parent=0 // pred_region
    _
  $region17: #{conv_forward.1} parent=0 // pred_fallthru
    _
  // Predicated region
  $region18: #{conv_forward.1} parent=0 // pred_check
    _
  $region19: #{conv_forward.1} parent=0 // pred_check_branch
    %31 = sbr.rel (0) target = $region21
  $region20: #{conv_forward.1} parent=0 // pred_region
    _
  $region21: #{conv_forward.1} parent=0 // pred_fallthru
    _
  // Predicated region
  $region22: #{conv_forward.1} parent=0 // pred_check
    _
  $region23: #{conv_forward.1} parent=0 // pred_check_branch
    %33 = sbr.rel (0) target = $region25
  $region24: #{conv_forward.1} parent=0 // pred_region
    _
  $region25: #{conv_forward.1} parent=0 // pred_fallthru
    _
  // Predicated region
  $region26: #{conv_forward.1} parent=0 // pred_check
    _
  $region27: #{conv_forward.1} parent=0 // pred_check_branch
    %35 = sbr.rel (0) target = $region29
  $region28: #{conv_forward.1} parent=0 // pred_region
    _
  $region29: #{conv_forward.1} parent=0 // pred_fallthru
    _
  // Predicated region
  $region30: #{conv_forward.1} parent=0 // pred_check
    _
  $region31: #{conv_forward.1} parent=0 // pred_check_branch
    %37 = sbr.rel (0) target = $region33
  $region32: #{conv_forward.1} parent=0 // pred_region
    _
  $region33: #{conv_forward.1} parent=0 // pred_fallthru
    _
  // Predicated region
  $region34: #{conv_forward.1} parent=0 // pred_check
    _
  $region35: #{conv_forward.1} parent=0 // pred_check_branch
    %39 = sbr.rel (0) target = $region37
  $region36: #{conv_forward.1} parent=0 // pred_region
    _
  $region37: #{conv_forward.1} parent=0 // pred_fallthru
    _
  // Predicated region
  $region38: #{conv_forward.1} parent=0 // pred_check
    _
  $region39: #{conv_forward.1} parent=0 // pred_check_branch
    %41 = sbr.rel (0) target = $region41
  $region40: #{conv_forward.1} parent=0 // pred_region
    _
  $region41: #{conv_forward.1} parent=0 // pred_fallthru
    _
  // Predicated region
  $region42: #{conv_forward.1} parent=0 // pred_check
    _
  $region43: #{conv_forward.1} parent=0 // pred_check_branch
    %43 = sbr.rel (0) target = $region45
  $region44: #{conv_forward.1} parent=0 // pred_region
    _
  $region45: #{conv_forward.1} parent=0 // pred_fallthru
    _
  // Predicated region
  $region46: #{conv_forward.1} parent=0 // pred_check
    _
  $region47: #{conv_forward.1} parent=0 // pred_check_branch
    %45 = sbr.rel (0) target = $region49
  $region48: #{conv_forward.1} parent=0 // pred_region
    _
  $region49: #{conv_forward.1} parent=0 // pred_fallthru
    _
  // Predicated region
  $region50: #{conv_forward.1} parent=0 // pred_check
    _
  $region51: #{conv_forward.1} parent=0 // pred_check_branch
    %47 = sbr.rel (0) target = $region53
  $region52: #{conv_forward.1} parent=0 // pred_region
    _
  $region53: #{conv_forward.1} parent=0 // pred_fallthru
    _
  // Predicated region
  $region54: #{conv_forward.1} parent=0 // pred_check
    _
  $region55: #{conv_forward.1} parent=0 // pred_check_branch
    %49 = sbr.rel (0) target = $region57
  $region56: #{conv_forward.1} parent=0 // pred_region
    _
  $region57: #{conv_forward.1} parent=0 // pred_fallthru
    _
  // Predicated region
  $region58: #{conv_forward.1} parent=0 // pred_check
    _
  $region59: #{conv_forward.1} parent=0 // pred_check_branch
    %51 = sbr.rel (0) target = $region61
  $region60: #{conv_forward.1} parent=0 // pred_region
    _
  $region61: #{conv_forward.1} parent=0 // pred_fallthru
    _
  // Predicated region
  $region62: #{conv_forward.1} parent=0 // pred_check
    _
  $region63: #{conv_forward.1} parent=0 // pred_check_branch
    %53 = sbr.rel (0) target = $region65
  $region64: #{conv_forward.1} parent=0 // pred_region
    _
  $region65: #{conv_forward.1} parent=0 // pred_fallthru
    _
  // Predicated region
  $region66: #{conv_forward.1} parent=0 // pred_check
    _
  $region67: #{conv_forward.1} parent=0 // pred_check_branch
    %55 = sbr.rel (0) target = $region69
  $region68: #{conv_forward.1} parent=0 // pred_region
    _
  $region69: #{conv_forward.1} parent=0 // pred_fallthru
    _
  %v56 = vld [vmem:[%s1] sm:$0xff]
  %v57 = vld [vmem:[%s1 + $0x8] sm:$0xff]
  %v58 = vld [vmem:[%s0] sm:$0xff]
  %v59 = vld [vmem:[%s0 + $0x8] sm:$0xff]
  %v60 = vld [vmem:[%s0 + $0x10] sm:$0x3]
  %v61 = vld [vmem:[%s2] sm:$0xff]
  %v62 = vld [vmem:[%s2 + $0x8] sm:$0xff]
  %64 = vset.pattern.permute.xlu0 0
  %65 = vperm.xlu0 %64, %v61
  %v66 = vpop.permute.xlu0 %65
  %69 = vset.pattern.permute.xlu0 0
  %70 = vperm.xlu0 %69, %v62
  %v71 = vpop.permute.xlu0 %70
  %vm73 = vcmask 146432
  %v75 = vsel %vm73, %v56, 0
  %v78 = vsel %vm73, %v57, 0
  %vm80 = vcmask 1041408
  %v82 = vsel %vm80, %v60, 0
  %84 = vmatprep.subr.mxu0 0.0
  %85 = vmatpush1.msra.mxu0 %v58
  %86 = vmatprep.subr.mxu0 0.0
  %87 = vmatpush1.msra.mxu0 %v59
  %88 = vmatprep.subr.mxu0 0.0
  %89 = vmatpush1.msra.mxu0 %v82
  %90 = vmatprep.subr.mxu0 0.0
  %91 = vmatpush1.msra.mxu0 0.0
  %92 = vmatprep.subr.mxu0 0.0
  %93 = vmatpush1.msra.mxu0 0.0
  %94 = vmatprep.subr.mxu0 0.0
  %95 = vmatpush1.msra.mxu0 0.0
  %96 = vmatprep.subr.mxu0 0.0
  %97 = vmatpush1.msra.mxu0 0.0
  %98 = vmatprep.subr.mxu0 0.0
  %99 = vmatpush1.msra.mxu0 0.0
  %100 = vmatprep.subr.mxu0 0.0
  %101 = vmatpush1.msra.mxu0 0.0
  %102 = vmatprep.subr.mxu0 0.0
  %103 = vmatpush1.msra.mxu0 0.0
  %104 = vmatprep.subr.mxu0 0.0
  %105 = vmatpush1.msra.mxu0 0.0
  %106 = vmatprep.subr.mxu0 0.0
  %107 = vmatpush1.msra.mxu0 0.0
  %108 = vmatprep.subr.mxu0 0.0
  %109 = vmatpush1.msra.mxu0 0.0
  %110 = vmatprep.subr.mxu0 0.0
  %111 = vmatpush1.msra.mxu0 0.0
  %112 = vmatprep.subr.mxu0 0.0
  %113 = vmatpush1.msra.mxu0 0.0
  %114 = vmatprep.subr.mxu0 0.0
  %115 = vmatpush1.msra.mxu0 0.0
  %116 = vmatprep.subr.mxu0 0.0
  %117 = vmatpush1.msra.mxu0 0.0
  %118 = vmatprep.subr.mxu0 0.0
  %119 = vmatpush1.msra.mxu0 0.0
  %120 = vmatprep.subr.mxu0 0.0
  %121 = vmatpush1.msra.mxu0 0.0
  %122 = vmatprep.subr.mxu0 0.0
  %123 = vmatpush1.msra.mxu0 0.0
  %124 = vmatprep.subr.mxu0 0.0
  %125 = vmatpush1.msra.mxu0 0.0
  %126 = vmatprep.subr.mxu0 0.0
  %127 = vmatpush1.msra.mxu0 0.0
  %128 = vmatprep.subr.mxu0 0.0
  %129 = vmatpush1.msra.mxu0 0.0
  %130 = vmatprep.subr.mxu0 0.0
  %131 = vmatpush1.msra.mxu0 0.0
  %132 = vmatprep.subr.mxu0 0.0
  %133 = vmatpush1.msra.mxu0 0.0
  %134 = vmatprep.subr.mxu0 0.0
  %135 = vmatpush1.msra.mxu0 0.0
  %136 = vmatprep.subr.mxu0 0.0
  %137 = vmatpush1.msra.mxu0 0.0
  %138 = vmatprep.subr.mxu0 0.0
  %139 = vmatpush1.msra.mxu0 0.0
  %140 = vmatprep.subr.mxu0 0.0
  %141 = vmatpush1.msra.mxu0 0.0
  %142 = vmatprep.subr.mxu0 0.0
  %143 = vmatpush1.msra.mxu0 0.0
  %144 = vmatprep.subr.mxu0 0.0
  %145 = vmatpush1.msra.mxu0 0.0
  %146 = vmatprep.subr.mxu0 0.0
  %147 = vmatpush1.msra.mxu0 0.0
  %148 = vmatprep.mubr.f32.mxu0 0.0
  %149 = vmatmul.mubr.f32.gmra.mrb[0].mxu0 %v75
  %v150 = vpop.f32.mrb[0].mxu0
  %v151 = vadd.f32 %v66, %v150
  %v152 = vpop.f32.mrb[0].mxu0
  %153 = vmatprep.mubr.f32.mxu0 0.0
  %154 = vmatmul.mubr.f32.gmra.mrb[0].mxu0 %v78
  %v155 = vpop.f32.mrb[0].mxu0
  %v156 = vadd.f32 %v71, %v155
  %v157 = vpop.f32.mrb[0].mxu0
  %158 = vdwg.mxu0
  %v159 = vld [vmem:[%s14] sm:$0x3]
  %v160 = vld [vmem:[%s3] sm:$0xff]
  %v161 = vld [vmem:[%s3 + $0x8] sm:$0xff]
  %v162 = vld [vmem:[%s3 + $0x10] sm:$0xff]
  %v163 = vld [vmem:[%s3 + $0x18] sm:$0xff]
  %v164 = vld [vmem:[%s3 + $0x20] sm:$0xff]
  %v165 = vld [vmem:[%s3 + $0x28] sm:$0xff]
  %v166 = vld [vmem:[%s3 + $0x30] sm:$0xff]
  %v167 = vld [vmem:[%s3 + $0x38] sm:$0xff]
  %v168 = vld [vmem:[%s3 + $0x40] sm:$0xff]
  %v169 = vld [vmem:[%s3 + $0x48] sm:$0xff]
  %v170 = vld [vmem:[%s3 + $0x50] sm:$0xff]
  %v171 = vld [vmem:[%s3 + $0x58] sm:$0xff]
  %v172 = vld [vmem:[%s3 + $0x60] sm:$0xff]
  %v173 = vld [vmem:[%s3 + $0x68] sm:$0xff]
  %v174 = vld [vmem:[%s3 + $0x70] sm:$0xff]
  %v175 = vld [vmem:[%s3 + $0x78] sm:$0xff]
  %v176 = vld [vmem:[%s3 + $0x80] sm:$0xff]
  %v177 = vld [vmem:[%s3 + $0x88] sm:$0xff]
  %v178 = vld [vmem:[%s3 + $0x90] sm:$0xff]
  %v179 = vld [vmem:[%s3 + $0x98] sm:$0xff]
  %v180 = vld [vmem:[%s3 + $0xa0] sm:$0xff]
  %v181 = vld [vmem:[%s3 + $0xa8] sm:$0xff]
  %v182 = vld [vmem:[%s3 + $0xb0] sm:$0xff]
  %v183 = vld [vmem:[%s3 + $0xb8] sm:$0xff]
  %v184 = vld [vmem:[%s3 + $0xc0] sm:$0xff]
  %v185 = vld [vmem:[%s3 + $0xc8] sm:$0xff]
  %v186 = vld [vmem:[%s3 + $0xd0] sm:$0xff]
  %v187 = vld [vmem:[%s3 + $0xd8] sm:$0xff]
  %v188 = vld [vmem:[%s3 + $0xe0] sm:$0xff]
  %v189 = vld [vmem:[%s3 + $0xe8] sm:$0xff]
  %v190 = vld [vmem:[%s3 + $0xf0] sm:$0xff]
  %v191 = vld [vmem:[%s3 + $0xf8] sm:$0xff]
  %v192 = vld [vmem:[%s3 + $0x100] sm:$0xff]
  %v193 = vld [vmem:[%s3 + $0x108] sm:$0xff]
  %v194 = vld [vmem:[%s3 + $0x110] sm:$0xff]
  %v195 = vld [vmem:[%s3 + $0x118] sm:$0xff]
  %v196 = vld [vmem:[%s3 + $0x120] sm:$0xff]
  %v197 = vld [vmem:[%s3 + $0x128] sm:$0xff]
  %v198 = vld [vmem:[%s3 + $0x130] sm:$0xff]
  %v199 = vld [vmem:[%s3 + $0x138] sm:$0xff]
  %v200 = vld [vmem:[%s3 + $0x140] sm:$0xff]
  %v201 = vld [vmem:[%s3 + $0x148] sm:$0xff]
  %v202 = vld [vmem:[%s3 + $0x150] sm:$0xff]
  %v203 = vld [vmem:[%s3 + $0x158] sm:$0xff]
  %v204 = vld [vmem:[%s3 + $0x160] sm:$0xff]
  %v205 = vld [vmem:[%s3 + $0x168] sm:$0xff]
  %v206 = vld [vmem:[%s3 + $0x170] sm:$0xff]
  %v207 = vld [vmem:[%s3 + $0x178] sm:$0xff]
  %v208 = vld [vmem:[%s3 + $0x180] sm:$0xff]
  %v209 = vld [vmem:[%s3 + $0x188] sm:$0xff]
  %v210 = vld [vmem:[%s3 + $0x190] sm:$0xff]
  %v211 = vld [vmem:[%s3 + $0x198] sm:$0xff]
  %v212 = vld [vmem:[%s3 + $0x1a0] sm:$0xff]
  %v213 = vld [vmem:[%s3 + $0x1a8] sm:$0xff]
  %v214 = vld [vmem:[%s3 + $0x1b0] sm:$0xff]
  %v215 = vld [vmem:[%s3 + $0x1b8] sm:$0xff]
  %v216 = vld [vmem:[%s3 + $0x1c0] sm:$0xff]
  %v217 = vld [vmem:[%s3 + $0x1c8] sm:$0xff]
  %v218 = vld [vmem:[%s3 + $0x1d0] sm:$0xff]
  %v219 = vld [vmem:[%s3 + $0x1d8] sm:$0xff]
  %v220 = vld [vmem:[%s3 + $0x1e0] sm:$0xff]
  %v221 = vld [vmem:[%s3 + $0x1e8] sm:$0xff]
  %v222 = vld [vmem:[%s3 + $0x1f0] sm:$0xff]
  %v223 = vld [vmem:[%s3 + $0x1f8] sm:$0xff]
  %v224 = vld [vmem:[%s3 + $0x200] sm:$0xff]
  %v225 = vld [vmem:[%s3 + $0x208] sm:$0xff]
  %v226 = vld [vmem:[%s3 + $0x210] sm:$0xff]
  %v227 = vld [vmem:[%s3 + $0x218] sm:$0xff]
  %v228 = vld [vmem:[%s3 + $0x220] sm:$0xff]
  %v229 = vld [vmem:[%s3 + $0x228] sm:$0xff]
  %v230 = vld [vmem:[%s3 + $0x230] sm:$0xff]
  %v231 = vld [vmem:[%s3 + $0x238] sm:$0xff]
  %v232 = vld [vmem:[%s3 + $0x240] sm:$0xff]
  %v233 = vld [vmem:[%s3 + $0x248] sm:$0xff]
  %v234 = vld [vmem:[%s3 + $0x250] sm:$0xff]
  %v235 = vld [vmem:[%s3 + $0x258] sm:$0xff]
  %v236 = vld [vmem:[%s3 + $0x260] sm:$0xff]
  %v237 = vld [vmem:[%s3 + $0x268] sm:$0xff]
  %v238 = vld [vmem:[%s3 + $0x270] sm:$0xff]
  %v239 = vld [vmem:[%s3 + $0x278] sm:$0xff]
  %v240 = vld [vmem:[%s3 + $0x280] sm:$0xff]
  %v241 = vld [vmem:[%s3 + $0x288] sm:$0xff]
  %v242 = vld [vmem:[%s3 + $0x290] sm:$0xff]
  %v243 = vld [vmem:[%s3 + $0x298] sm:$0xff]
  %v244 = vld [vmem:[%s3 + $0x2a0] sm:$0xff]
  %v245 = vld [vmem:[%s3 + $0x2a8] sm:$0xff]
  %v246 = vld [vmem:[%s3 + $0x2b0] sm:$0xff]
  %v247 = vld [vmem:[%s3 + $0x2b8] sm:$0xff]
  %v248 = vld [vmem:[%s3 + $0x2c0] sm:$0xff]
  %v249 = vld [vmem:[%s3 + $0x2c8] sm:$0xff]
  %v250 = vld [vmem:[%s3 + $0x2d0] sm:$0xff]
  %v251 = vld [vmem:[%s3 + $0x2d8] sm:$0xff]
  %v252 = vld [vmem:[%s3 + $0x2e0] sm:$0xff]
  %v253 = vld [vmem:[%s3 + $0x2e8] sm:$0xff]
  %v254 = vld [vmem:[%s3 + $0x2f0] sm:$0xff]
  %v255 = vld [vmem:[%s3 + $0x2f8] sm:$0xff]
  %v256 = vld [vmem:[%s3 + $0x300] sm:$0xff]
  %v257 = vld [vmem:[%s3 + $0x308] sm:$0xff]
  %v258 = vld [vmem:[%s3 + $0x310] sm:$0xff]
  %v259 = vld [vmem:[%s3 + $0x318] sm:$0xff]
  %v260 = vld [vmem:[%s3 + $0x320] sm:$0xff]
  %v261 = vld [vmem:[%s3 + $0x328] sm:$0xff]
  %v262 = vld [vmem:[%s3 + $0x330] sm:$0xff]
  %v263 = vld [vmem:[%s3 + $0x338] sm:$0xff]
  %v264 = vld [vmem:[%s3 + $0x340] sm:$0xff]
  %v265 = vld [vmem:[%s3 + $0x348] sm:$0xff]
  %v266 = vld [vmem:[%s3 + $0x350] sm:$0xff]
  %v267 = vld [vmem:[%s3 + $0x358] sm:$0xff]
  %v268 = vld [vmem:[%s3 + $0x360] sm:$0xff]
  %v269 = vld [vmem:[%s3 + $0x368] sm:$0xff]
  %v270 = vld [vmem:[%s3 + $0x370] sm:$0xff]
  %v271 = vld [vmem:[%s3 + $0x378] sm:$0xff]
  %v272 = vld [vmem:[%s3 + $0x380] sm:$0xff]
  %v273 = vld [vmem:[%s3 + $0x388] sm:$0xff]
  %v274 = vld [vmem:[%s3 + $0x390] sm:$0xff]
  %v275 = vld [vmem:[%s3 + $0x398] sm:$0xff]
  %v276 = vld [vmem:[%s3 + $0x3a0] sm:$0xff]
  %v277 = vld [vmem:[%s3 + $0x3a8] sm:$0xff]
  %v278 = vld [vmem:[%s3 + $0x3b0] sm:$0xff]
  %v279 = vld [vmem:[%s3 + $0x3b8] sm:$0xff]
  %v280 = vld [vmem:[%s3 + $0x3c0] sm:$0xff]
  %v281 = vld [vmem:[%s3 + $0x3c8] sm:$0xff]
  %v282 = vld [vmem:[%s3 + $0x3d0] sm:$0xff]
  %v283 = vld [vmem:[%s3 + $0x3d8] sm:$0xff]
  %v284 = vld [vmem:[%s3 + $0x3e0] sm:$0xff]
  %v285 = vld [vmem:[%s3 + $0x3e8] sm:$0xff]
  %v286 = vld [vmem:[%s3 + $0x3f0] sm:$0xff]
  %v287 = vld [vmem:[%s3 + $0x3f8] sm:$0xff]
  %v288 = vld [vmem:[%s3 + $0x400] sm:$0xff]
  %v289 = vld [vmem:[%s3 + $0x408] sm:$0xff]
  %v290 = vld [vmem:[%s3 + $0x410] sm:$0xff]
  %v291 = vld [vmem:[%s3 + $0x418] sm:$0xff]
  %v292 = vld [vmem:[%s3 + $0x420] sm:$0xff]
  %v293 = vld [vmem:[%s3 + $0x428] sm:$0xff]
  %v294 = vld [vmem:[%s3 + $0x430] sm:$0xff]
  %v295 = vld [vmem:[%s3 + $0x438] sm:$0xff]
  %v296 = vld [vmem:[%s3 + $0x440] sm:$0xff]
  %v297 = vld [vmem:[%s3 + $0x448] sm:$0xff]
  %v298 = vld [vmem:[%s3 + $0x450] sm:$0xff]
  %v299 = vld [vmem:[%s3 + $0x458] sm:$0xff]
  %v300 = vld [vmem:[%s3 + $0x460] sm:$0xff]
  %v301 = vld [vmem:[%s3 + $0x468] sm:$0xff]
  %v302 = vld [vmem:[%s3 + $0x470] sm:$0xff]
  %v303 = vld [vmem:[%s3 + $0x478] sm:$0xff]
  %304 = vmatprep.subr.mxu0 %v161
  %305 = vmatpush1.msra.mxu0 %v160
  %306 = vmatprep.subr.mxu0 %v170
  %307 = vmatpush1.msra.mxu0 %v169
  %308 = vmatprep.subr.mxu0 %v179
  %309 = vmatpush1.msra.mxu0 %v178
  %310 = vmatprep.subr.mxu0 %v188
  %311 = vmatpush1.msra.mxu0 %v187
  %312 = vmatprep.subr.mxu0 %v197
  %313 = vmatpush1.msra.mxu0 %v196
  %314 = vmatprep.subr.mxu0 %v206
  %315 = vmatpush1.msra.mxu0 %v205
  %316 = vmatprep.subr.mxu0 %v215
  %317 = vmatpush1.msra.mxu0 %v214
  %318 = vmatprep.subr.mxu0 %v224
  %319 = vmatpush1.msra.mxu0 %v223
  %320 = vmatprep.subr.mxu0 %v233
  %321 = vmatpush1.msra.mxu0 %v232
  %322 = vmatprep.subr.mxu0 %v242
  %323 = vmatpush1.msra.mxu0 %v241
  %324 = vmatprep.subr.mxu0 %v251
  %325 = vmatpush1.msra.mxu0 %v250
  %326 = vmatprep.subr.mxu0 %v260
  %327 = vmatpush1.msra.mxu0 %v259
  %328 = vmatprep.subr.mxu0 %v269
  %329 = vmatpush1.msra.mxu0 %v268
  %330 = vmatprep.subr.mxu0 %v278
  %331 = vmatpush1.msra.mxu0 %v277
  %332 = vmatprep.subr.mxu0 %v287
  %333 = vmatpush1.msra.mxu0 %v286
  %334 = vmatprep.subr.mxu0 %v296
  %335 = vmatpush1.msra.mxu0 %v295
  %336 = vmatprep.subr.mxu0 0.0
  %337 = vmatpush1.msra.mxu0 0.0
  %338 = vmatprep.subr.mxu0 0.0
  %339 = vmatpush1.msra.mxu0 0.0
  %340 = vmatprep.subr.mxu0 0.0
  %341 = vmatpush1.msra.mxu0 0.0
  %342 = vmatprep.subr.mxu0 0.0
  %343 = vmatpush1.msra.mxu0 0.0
  %344 = vmatprep.subr.mxu0 0.0
  %345 = vmatpush1.msra.mxu0 0.0
  %346 = vmatprep.subr.mxu0 0.0
  %347 = vmatpush1.msra.mxu0 0.0
  %348 = vmatprep.subr.mxu0 0.0
  %349 = vmatpush1.msra.mxu0 0.0
  %350 = vmatprep.subr.mxu0 0.0
  %351 = vmatpush1.msra.mxu0 0.0
  %352 = vmatprep.subr.mxu0 0.0
  %353 = vmatpush1.msra.mxu0 0.0
  %354 = vmatprep.subr.mxu0 0.0
  %355 = vmatpush1.msra.mxu0 0.0
  %356 = vmatprep.subr.mxu0 0.0
  %357 = vmatpush1.msra.mxu0 0.0
  %358 = vmatprep.subr.mxu0 0.0
  %359 = vmatpush1.msra.mxu0 0.0
  %360 = vmatprep.subr.mxu0 0.0
  %361 = vmatpush1.msra.mxu0 0.0
  %362 = vmatprep.subr.mxu0 0.0
  %363 = vmatpush1.msra.mxu0 0.0
  %364 = vmatprep.subr.mxu0 0.0
  %365 = vmatpush1.msra.mxu0 0.0
  %366 = vmatprep.subr.mxu0 0.0
  %367 = vmatpush1.msra.mxu0 0.0
  %368 = vmatprep.mubr.f32.mxu0 0.0
  %369 = vmatmul.mubr.f32.gmra.mrb[0].mxu0 %v151
  %v370 = vpop.f32.mrb[0].mxu0
  %v371 = vadd.f32 0.0, %v370
  %v372 = vpop.f32.mrb[0].mxu0
  %v373 = vadd.f32 0.0, %v372
  %374 = vmatprep.mubr.f32.mxu0 0.0
  %375 = vmatmul.mubr.f32.gmra.mrb[0].mxu0 %v156
  %v376 = vpop.f32.mrb[0].mxu0
  %v377 = vadd.f32 0.0, %v376
  %v378 = vpop.f32.mrb[0].mxu0
  %v379 = vadd.f32 0.0, %v378
  %380 = vdwg.mxu0
  %381 = vmatprep.subr.mxu0 %v163
  %382 = vmatpush1.msra.mxu0 %v162
  %383 = vmatprep.subr.mxu0 %v172
  %384 = vmatpush1.msra.mxu0 %v171
  %385 = vmatprep.subr.mxu0 %v181
  %386 = vmatpush1.msra.mxu0 %v180
  %387 = vmatprep.subr.mxu0 %v190
  %388 = vmatpush1.msra.mxu0 %v189
  %389 = vmatprep.subr.mxu0 %v199
  %390 = vmatpush1.msra.mxu0 %v198
  %391 = vmatprep.subr.mxu0 %v208
  %392 = vmatpush1.msra.mxu0 %v207
  %393 = vmatprep.subr.mxu0 %v217
  %394 = vmatpush1.msra.mxu0 %v216
  %395 = vmatprep.subr.mxu0 %v226
  %396 = vmatpush1.msra.mxu0 %v225
  %397 = vmatprep.subr.mxu0 %v235
  %398 = vmatpush1.msra.mxu0 %v234
  %399 = vmatprep.subr.mxu0 %v244
  %400 = vmatpush1.msra.mxu0 %v243
  %401 = vmatprep.subr.mxu0 %v253
  %402 = vmatpush1.msra.mxu0 %v252
  %403 = vmatprep.subr.mxu0 %v262
  %404 = vmatpush1.msra.mxu0 %v261
  %405 = vmatprep.subr.mxu0 %v271
  %406 = vmatpush1.msra.mxu0 %v270
  %407 = vmatprep.subr.mxu0 %v280
  %408 = vmatpush1.msra.mxu0 %v279
  %409 = vmatprep.subr.mxu0 %v289
  %410 = vmatpush1.msra.mxu0 %v288
  %411 = vmatprep.subr.mxu0 %v298
  %412 = vmatpush1.msra.mxu0 %v297
  %413 = vmatprep.subr.mxu0 0.0
  %414 = vmatpush1.msra.mxu0 0.0
  %415 = vmatprep.subr.mxu0 0.0
  %416 = vmatpush1.msra.mxu0 0.0
  %417 = vmatprep.subr.mxu0 0.0
  %418 = vmatpush1.msra.mxu0 0.0
  %419 = vmatprep.subr.mxu0 0.0
  %420 = vmatpush1.msra.mxu0 0.0
  %421 = vmatprep.subr.mxu0 0.0
  %422 = vmatpush1.msra.mxu0 0.0
  %423 = vmatprep.subr.mxu0 0.0
  %424 = vmatpush1.msra.mxu0 0.0
  %425 = vmatprep.subr.mxu0 0.0
  %426 = vmatpush1.msra.mxu0 0.0
  %427 = vmatprep.subr.mxu0 0.0
  %428 = vmatpush1.msra.mxu0 0.0
  %429 = vmatprep.subr.mxu0 0.0
  %430 = vmatpush1.msra.mxu0 0.0
  %431 = vmatprep.subr.mxu0 0.0
  %432 = vmatpush1.msra.mxu0 0.0
  %433 = vmatprep.subr.mxu0 0.0
  %434 = vmatpush1.msra.mxu0 0.0
  %435 = vmatprep.subr.mxu0 0.0
  %436 = vmatpush1.msra.mxu0 0.0
  %437 = vmatprep.subr.mxu0 0.0
  %438 = vmatpush1.msra.mxu0 0.0
  %439 = vmatprep.subr.mxu0 0.0
  %440 = vmatpush1.msra.mxu0 0.0
  %441 = vmatprep.subr.mxu0 0.0
  %442 = vmatpush1.msra.mxu0 0.0
  %443 = vmatprep.subr.mxu0 0.0
  %444 = vmatpush1.msra.mxu0 0.0
  %445 = vmatprep.mubr.f32.mxu0 0.0
  %446 = vmatmul.mubr.f32.gmra.mrb[0].mxu0 %v151
  %v447 = vpop.f32.mrb[0].mxu0
  %v448 = vadd.f32 0.0, %v447
  %v449 = vpop.f32.mrb[0].mxu0
  %v450 = vadd.f32 0.0, %v449
  %451 = vmatprep.mubr.f32.mxu0 0.0
  %452 = vmatmul.mubr.f32.gmra.mrb[0].mxu0 %v156
  %v453 = vpop.f32.mrb[0].mxu0
  %v454 = vadd.f32 0.0, %v453
  %v455 = vpop.f32.mrb[0].mxu0
  %v456 = vadd.f32 0.0, %v455
  %457 = vdwg.mxu0
  %458 = vmatprep.subr.mxu0 %v165
  %459 = vmatpush1.msra.mxu0 %v164
  %460 = vmatprep.subr.mxu0 %v174
  %461 = vmatpush1.msra.mxu0 %v173
  %462 = vmatprep.subr.mxu0 %v183
  %463 = vmatpush1.msra.mxu0 %v182
  %464 = vmatprep.subr.mxu0 %v192
  %465 = vmatpush1.msra.mxu0 %v191
  %466 = vmatprep.subr.mxu0 %v201
  %467 = vmatpush1.msra.mxu0 %v200
  %468 = vmatprep.subr.mxu0 %v210
  %469 = vmatpush1.msra.mxu0 %v209
  %470 = vmatprep.subr.mxu0 %v219
  %471 = vmatpush1.msra.mxu0 %v218
  %472 = vmatprep.subr.mxu0 %v228
  %473 = vmatpush1.msra.mxu0 %v227
  %474 = vmatprep.subr.mxu0 %v237
  %475 = vmatpush1.msra.mxu0 %v236
  %476 = vmatprep.subr.mxu0 %v246
  %477 = vmatpush1.msra.mxu0 %v245
  %478 = vmatprep.subr.mxu0 %v255
  %479 = vmatpush1.msra.mxu0 %v254
  %480 = vmatprep.subr.mxu0 %v264
  %481 = vmatpush1.msra.mxu0 %v263
  %482 = vmatprep.subr.mxu0 %v273
  %483 = vmatpush1.msra.mxu0 %v272
  %484 = vmatprep.subr.mxu0 %v282
  %485 = vmatpush1.msra.mxu0 %v281
  %486 = vmatprep.subr.mxu0 %v291
  %487 = vmatpush1.msra.mxu0 %v290
  %488 = vmatprep.subr.mxu0 %v300
  %489 = vmatpush1.msra.mxu0 %v299
  %490 = vmatprep.subr.mxu0 0.0
  %491 = vmatpush1.msra.mxu0 0.0
  %492 = vmatprep.subr.mxu0 0.0
  %493 = vmatpush1.msra.mxu0 0.0
  %494 = vmatprep.subr.mxu0 0.0
  %495 = vmatpush1.msra.mxu0 0.0
  %496 = vmatprep.subr.mxu0 0.0
  %497 = vmatpush1.msra.mxu0 0.0
  %498 = vmatprep.subr.mxu0 0.0
  %499 = vmatpush1.msra.mxu0 0.0
  %500 = vmatprep.subr.mxu0 0.0
  %501 = vmatpush1.msra.mxu0 0.0
  %502 = vmatprep.subr.mxu0 0.0
  %503 = vmatpush1.msra.mxu0 0.0
  %504 = vmatprep.subr.mxu0 0.0
  %505 = vmatpush1.msra.mxu0 0.0
  %506 = vmatprep.subr.mxu0 0.0
  %507 = vmatpush1.msra.mxu0 0.0
  %508 = vmatprep.subr.mxu0 0.0
  %509 = vmatpush1.msra.mxu0 0.0
  %510 = vmatprep.subr.mxu0 0.0
  %511 = vmatpush1.msra.mxu0 0.0
  %512 = vmatprep.subr.mxu0 0.0
  %513 = vmatpush1.msra.mxu0 0.0
  %514 = vmatprep.subr.mxu0 0.0
  %515 = vmatpush1.msra.mxu0 0.0
  %516 = vmatprep.subr.mxu0 0.0
  %517 = vmatpush1.msra.mxu0 0.0
  %518 = vmatprep.subr.mxu0 0.0
  %519 = vmatpush1.msra.mxu0 0.0
  %520 = vmatprep.subr.mxu0 0.0
  %521 = vmatpush1.msra.mxu0 0.0
  %522 = vmatprep.mubr.f32.mxu0 0.0
  %523 = vmatmul.mubr.f32.gmra.mrb[0].mxu0 %v151
  %v524 = vpop.f32.mrb[0].mxu0
  %v525 = vadd.f32 0.0, %v524
  %v526 = vpop.f32.mrb[0].mxu0
  %v527 = vadd.f32 0.0, %v526
  %528 = vmatprep.mubr.f32.mxu0 0.0
  %529 = vmatmul.mubr.f32.gmra.mrb[0].mxu0 %v156
  %v530 = vpop.f32.mrb[0].mxu0
  %v531 = vadd.f32 0.0, %v530
  %v532 = vpop.f32.mrb[0].mxu0
  %v533 = vadd.f32 0.0, %v532
  %534 = vdwg.mxu0
  %535 = vmatprep.subr.mxu0 %v167
  %536 = vmatpush1.msra.mxu0 %v166
  %537 = vmatprep.subr.mxu0 %v176
  %538 = vmatpush1.msra.mxu0 %v175
  %539 = vmatprep.subr.mxu0 %v185
  %540 = vmatpush1.msra.mxu0 %v184
  %541 = vmatprep.subr.mxu0 %v194
  %542 = vmatpush1.msra.mxu0 %v193
  %543 = vmatprep.subr.mxu0 %v203
  %544 = vmatpush1.msra.mxu0 %v202
  %545 = vmatprep.subr.mxu0 %v212
  %546 = vmatpush1.msra.mxu0 %v211
  %547 = vmatprep.subr.mxu0 %v221
  %548 = vmatpush1.msra.mxu0 %v220
  %549 = vmatprep.subr.mxu0 %v230
  %550 = vmatpush1.msra.mxu0 %v229
  %551 = vmatprep.subr.mxu0 %v239
  %552 = vmatpush1.msra.mxu0 %v238
  %553 = vmatprep.subr.mxu0 %v248
  %554 = vmatpush1.msra.mxu0 %v247
  %555 = vmatprep.subr.mxu0 %v257
  %556 = vmatpush1.msra.mxu0 %v256
  %557 = vmatprep.subr.mxu0 %v266
  %558 = vmatpush1.msra.mxu0 %v265
  %559 = vmatprep.subr.mxu0 %v275
  %560 = vmatpush1.msra.mxu0 %v274
  %561 = vmatprep.subr.mxu0 %v284
  %562 = vmatpush1.msra.mxu0 %v283
  %563 = vmatprep.subr.mxu0 %v293
  %564 = vmatpush1.msra.mxu0 %v292
  %565 = vmatprep.subr.mxu0 %v302
  %566 = vmatpush1.msra.mxu0 %v301
  %567 = vmatprep.subr.mxu0 0.0
  %568 = vmatpush1.msra.mxu0 0.0
  %569 = vmatprep.subr.mxu0 0.0
  %570 = vmatpush1.msra.mxu0 0.0
  %571 = vmatprep.subr.mxu0 0.0
  %572 = vmatpush1.msra.mxu0 0.0
  %573 = vmatprep.subr.mxu0 0.0
  %574 = vmatpush1.msra.mxu0 0.0
  %575 = vmatprep.subr.mxu0 0.0
  %576 = vmatpush1.msra.mxu0 0.0
  %577 = vmatprep.subr.mxu0 0.0
  %578 = vmatpush1.msra.mxu0 0.0
  %579 = vmatprep.subr.mxu0 0.0
  %580 = vmatpush1.msra.mxu0 0.0
  %581 = vmatprep.subr.mxu0 0.0
  %582 = vmatpush1.msra.mxu0 0.0
  %583 = vmatprep.subr.mxu0 0.0
  %584 = vmatpush1.msra.mxu0 0.0
  %585 = vmatprep.subr.mxu0 0.0
  %586 = vmatpush1.msra.mxu0 0.0
  %587 = vmatprep.subr.mxu0 0.0
  %588 = vmatpush1.msra.mxu0 0.0
  %589 = vmatprep.subr.mxu0 0.0
  %590 = vmatpush1.msra.mxu0 0.0
  %591 = vmatprep.subr.mxu0 0.0
  %592 = vmatpush1.msra.mxu0 0.0
  %593 = vmatprep.subr.mxu0 0.0
  %594 = vmatpush1.msra.mxu0 0.0
  %595 = vmatprep.subr.mxu0 0.0
  %596 = vmatpush1.msra.mxu0 0.0
  %597 = vmatprep.subr.mxu0 0.0
  %598 = vmatpush1.msra.mxu0 0.0
  %599 = vmatprep.mubr.f32.mxu0 0.0
  %600 = vmatmul.mubr.f32.gmra.mrb[0].mxu0 %v151
  %v601 = vpop.f32.mrb[0].mxu0
  %v602 = vadd.f32 0.0, %v601
  %v603 = vpop.f32.mrb[0].mxu0
  %v604 = vadd.f32 0.0, %v603
  %605 = vmatprep.mubr.f32.mxu0 0.0
  %606 = vmatmul.mubr.f32.gmra.mrb[0].mxu0 %v156
  %v607 = vpop.f32.mrb[0].mxu0
  %v608 = vadd.f32 0.0, %v607
  %v609 = vpop.f32.mrb[0].mxu0
  %v610 = vadd.f32 0.0, %v609
  %611 = vdwg.mxu0
  %612 = vmatprep.subr.mxu0 0.0
  %613 = vmatpush1.msra.mxu0 %v168
  %614 = vmatprep.subr.mxu0 0.0
  %615 = vmatpush1.msra.mxu0 %v177
  %616 = vmatprep.subr.mxu0 0.0
  %617 = vmatpush1.msra.mxu0 %v186
  %618 = vmatprep.subr.mxu0 0.0
  %619 = vmatpush1.msra.mxu0 %v195
  %620 = vmatprep.subr.mxu0 0.0
  %621 = vmatpush1.msra.mxu0 %v204
  %622 = vmatprep.subr.mxu0 0.0
  %623 = vmatpush1.msra.mxu0 %v213
  %624 = vmatprep.subr.mxu0 0.0
  %625 = vmatpush1.msra.mxu0 %v222
  %626 = vmatprep.subr.mxu0 0.0
  %627 = vmatpush1.msra.mxu0 %v231
  %628 = vmatprep.subr.mxu0 0.0
  %629 = vmatpush1.msra.mxu0 %v240
  %630 = vmatprep.subr.mxu0 0.0
  %631 = vmatpush1.msra.mxu0 %v249
  %632 = vmatprep.subr.mxu0 0.0
  %633 = vmatpush1.msra.mxu0 %v258
  %634 = vmatprep.subr.mxu0 0.0
  %635 = vmatpush1.msra.mxu0 %v267
  %636 = vmatprep.subr.mxu0 0.0
  %637 = vmatpush1.msra.mxu0 %v276
  %638 = vmatprep.subr.mxu0 0.0
  %639 = vmatpush1.msra.mxu0 %v285
  %640 = vmatprep.subr.mxu0 0.0
  %641 = vmatpush1.msra.mxu0 %v294
  %642 = vmatprep.subr.mxu0 0.0
  %643 = vmatpush1.msra.mxu0 %v303
  %644 = vmatprep.subr.mxu0 0.0
  %645 = vmatpush1.msra.mxu0 0.0
  %646 = vmatprep.subr.mxu0 0.0
  %647 = vmatpush1.msra.mxu0 0.0
  %648 = vmatprep.subr.mxu0 0.0
  %649 = vmatpush1.msra.mxu0 0.0
  %650 = vmatprep.subr.mxu0 0.0
  %651 = vmatpush1.msra.mxu0 0.0
  %652 = vmatprep.subr.mxu0 0.0
  %653 = vmatpush1.msra.mxu0 0.0
  %654 = vmatprep.subr.mxu0 0.0
  %655 = vmatpush1.msra.mxu0 0.0
  %656 = vmatprep.subr.mxu0 0.0
  %657 = vmatpush1.msra.mxu0 0.0
  %658 = vmatprep.subr.mxu0 0.0
  %659 = vmatpush1.msra.mxu0 0.0
  %660 = vmatprep.subr.mxu0 0.0
  %661 = vmatpush1.msra.mxu0 0.0
  %662 = vmatprep.subr.mxu0 0.0
  %663 = vmatpush1.msra.mxu0 0.0
  %664 = vmatprep.subr.mxu0 0.0
  %665 = vmatpush1.msra.mxu0 0.0
  %666 = vmatprep.subr.mxu0 0.0
  %667 = vmatpush1.msra.mxu0 0.0
  %668 = vmatprep.subr.mxu0 0.0
  %669 = vmatpush1.msra.mxu0 0.0
  %670 = vmatprep.subr.mxu0 0.0
  %671 = vmatpush1.msra.mxu0 0.0
  %672 = vmatprep.subr.mxu0 0.0
  %673 = vmatpush1.msra.mxu0 0.0
  %674 = vmatprep.subr.mxu0 0.0
  %675 = vmatpush1.msra.mxu0 0.0
  %676 = vmatprep.mubr.f32.mxu0 0.0
  %677 = vmatmul.mubr.f32.gmra.mrb[0].mxu0 %v151
  %v678 = vpop.f32.mrb[0].mxu0
  %v679 = vadd.f32 0.0, %v678
  %v680 = vpop.f32.mrb[0].mxu0
  %681 = vmatprep.mubr.f32.mxu0 0.0
  %682 = vmatmul.mubr.f32.gmra.mrb[0].mxu0 %v156
  %v683 = vpop.f32.mrb[0].mxu0
  %v684 = vadd.f32 0.0, %v683
  %v685 = vpop.f32.mrb[0].mxu0
  %686 = vdwg.mxu0
  %v687 = vld [vmem:[%s4] sm:$0xff]
  %v688 = vld [vmem:[%s4 + $0x8] sm:$0xff]
  %s689 = scalar_lea.vmem %s4, 16
  %v690 = vld [vmem:[%s689] sm:$0xff]
  %v691 = vld [vmem:[%s689 + $0x8] sm:$0xff]
  %vm692 = vcmask 130048
  %v694 = vsel %vm692, %v690, 0
  %v697 = vsel %vm692, %v691, 0
  %699 = vmatprep.subr.mxu0 0.0
  %700 = vmatpush1.msra.mxu0 %v373
  %701 = vmatprep.subr.mxu0 0.0
  %702 = vmatpush1.msra.mxu0 %v379
  %703 = vmatprep.subr.mxu0 0.0
  %704 = vmatpush1.msra.mxu0 0.0
  %705 = vmatprep.subr.mxu0 0.0
  %706 = vmatpush1.msra.mxu0 0.0
  %707 = vmatprep.subr.mxu0 0.0
  %708 = vmatpush1.msra.mxu0 0.0
  %709 = vmatprep.subr.mxu0 0.0
  %710 = vmatpush1.msra.mxu0 0.0
  %711 = vmatprep.subr.mxu0 0.0
  %712 = vmatpush1.msra.mxu0 0.0
  %713 = vmatprep.subr.mxu0 0.0
  %714 = vmatpush1.msra.mxu0 0.0
  %715 = vmatprep.subr.mxu0 0.0
  %716 = vmatpush1.msra.mxu0 0.0
  %717 = vmatprep.subr.mxu0 0.0
  %718 = vmatpush1.msra.mxu0 0.0
  %719 = vmatprep.subr.mxu0 0.0
  %720 = vmatpush1.msra.mxu0 0.0
  %721 = vmatprep.subr.mxu0 0.0
  %722 = vmatpush1.msra.mxu0 0.0
  %723 = vmatprep.subr.mxu0 0.0
  %724 = vmatpush1.msra.mxu0 0.0
  %725 = vmatprep.subr.mxu0 0.0
  %726 = vmatpush1.msra.mxu0 0.0
  %727 = vmatprep.subr.mxu0 0.0
  %728 = vmatpush1.msra.mxu0 0.0
  %729 = vmatprep.subr.mxu0 0.0
  %730 = vmatpush1.msra.mxu0 0.0
  %731 = vmatprep.subr.mxu0 0.0
  %732 = vmatpush1.msra.mxu0 0.0
  %733 = vmatprep.subr.mxu0 0.0
  %734 = vmatpush1.msra.mxu0 0.0
  %735 = vmatprep.subr.mxu0 0.0
  %736 = vmatpush1.msra.mxu0 0.0
  %737 = vmatprep.subr.mxu0 0.0
  %738 = vmatpush1.msra.mxu0 0.0
  %739 = vmatprep.subr.mxu0 0.0
  %740 = vmatpush1.msra.mxu0 0.0
  %741 = vmatprep.subr.mxu0 0.0
  %742 = vmatpush1.msra.mxu0 0.0
  %743 = vmatprep.subr.mxu0 0.0
  %744 = vmatpush1.msra.mxu0 0.0
  %745 = vmatprep.subr.mxu0 0.0
  %746 = vmatpush1.msra.mxu0 0.0
  %747 = vmatprep.subr.mxu0 0.0
  %748 = vmatpush1.msra.mxu0 0.0
  %749 = vmatprep.subr.mxu0 0.0
  %750 = vmatpush1.msra.mxu0 0.0
  %751 = vmatprep.subr.mxu0 0.0
  %752 = vmatpush1.msra.mxu0 0.0
  %753 = vmatprep.subr.mxu0 0.0
  %754 = vmatpush1.msra.mxu0 0.0
  %755 = vmatprep.subr.mxu0 0.0
  %756 = vmatpush1.msra.mxu0 0.0
  %757 = vmatprep.subr.mxu0 0.0
  %758 = vmatpush1.msra.mxu0 0.0
  %759 = vmatprep.subr.mxu0 0.0
  %760 = vmatpush1.msra.mxu0 0.0
  %761 = vmatprep.subr.mxu0 0.0
  %762 = vmatpush1.msra.mxu0 0.0
  %763 = vmatprep.mubr.f32.mxu0 0.0
  %764 = vmatmul.mubr.f32.gmra.mrb[0].mxu0 %v694
  %v765 = vpop.f32.mrb[0].mxu0
  %v766 = vadd.f32 0.0, %v765
  %v767 = vpop.f32.mrb[0].mxu0
  %768 = vmatprep.mubr.f32.mxu0 0.0
  %769 = vmatmul.mubr.f32.gmra.mrb[0].mxu0 %v697
  %v770 = vpop.f32.mrb[0].mxu0
  %v771 = vadd.f32 0.0, %v770
  %v772 = vpop.f32.mrb[0].mxu0
  %773 = vdwg.mxu0
  %v775 = vsel %vm692, %v687, 0
  %v778 = vsel %vm692, %v688, 0
  %780 = vmatprep.subr.mxu0 0.0
  %781 = vmatpush1.msra.mxu0 %v371
  %782 = vmatprep.subr.mxu0 0.0
  %783 = vmatpush1.msra.mxu0 %v377
  %784 = vmatprep.subr.mxu0 0.0
  %785 = vmatpush1.msra.mxu0 0.0
  %786 = vmatprep.subr.mxu0 0.0
  %787 = vmatpush1.msra.mxu0 0.0
  %788 = vmatprep.subr.mxu0 0.0
  %789 = vmatpush1.msra.mxu0 0.0
  %790 = vmatprep.subr.mxu0 0.0
  %791 = vmatpush1.msra.mxu0 0.0
  %792 = vmatprep.subr.mxu0 0.0
  %793 = vmatpush1.msra.mxu0 0.0
  %794 = vmatprep.subr.mxu0 0.0
  %795 = vmatpush1.msra.mxu0 0.0
  %796 = vmatprep.subr.mxu0 0.0
  %797 = vmatpush1.msra.mxu0 0.0
  %798 = vmatprep.subr.mxu0 0.0
  %799 = vmatpush1.msra.mxu0 0.0
  %800 = vmatprep.subr.mxu0 0.0
  %801 = vmatpush1.msra.mxu0 0.0
  %802 = vmatprep.subr.mxu0 0.0
  %803 = vmatpush1.msra.mxu0 0.0
  %804 = vmatprep.subr.mxu0 0.0
  %805 = vmatpush1.msra.mxu0 0.0
  %806 = vmatprep.subr.mxu0 0.0
  %807 = vmatpush1.msra.mxu0 0.0
  %808 = vmatprep.subr.mxu0 0.0
  %809 = vmatpush1.msra.mxu0 0.0
  %810 = vmatprep.subr.mxu0 0.0
  %811 = vmatpush1.msra.mxu0 0.0
  %812 = vmatprep.subr.mxu0 0.0
  %813 = vmatpush1.msra.mxu0 0.0
  %814 = vmatprep.subr.mxu0 0.0
  %815 = vmatpush1.msra.mxu0 0.0
  %816 = vmatprep.subr.mxu0 0.0
  %817 = vmatpush1.msra.mxu0 0.0
  %818 = vmatprep.subr.mxu0 0.0
  %819 = vmatpush1.msra.mxu0 0.0
  %820 = vmatprep.subr.mxu0 0.0
  %821 = vmatpush1.msra.mxu0 0.0
  %822 = vmatprep.subr.mxu0 0.0
  %823 = vmatpush1.msra.mxu0 0.0
  %824 = vmatprep.subr.mxu0 0.0
  %825 = vmatpush1.msra.mxu0 0.0
  %826 = vmatprep.subr.mxu0 0.0
  %827 = vmatpush1.msra.mxu0 0.0
  %828 = vmatprep.subr.mxu0 0.0
  %829 = vmatpush1.msra.mxu0 0.0
  %830 = vmatprep.subr.mxu0 0.0
  %831 = vmatpush1.msra.mxu0 0.0
  %832 = vmatprep.subr.mxu0 0.0
  %833 = vmatpush1.msra.mxu0 0.0
  %834 = vmatprep.subr.mxu0 0.0
  %835 = vmatpush1.msra.mxu0 0.0
  %836 = vmatprep.subr.mxu0 0.0
  %837 = vmatpush1.msra.mxu0 0.0
  %838 = vmatprep.subr.mxu0 0.0
  %839 = vmatpush1.msra.mxu0 0.0
  %840 = vmatprep.subr.mxu0 0.0
  %841 = vmatpush1.msra.mxu0 0.0
  %842 = vmatprep.subr.mxu0 0.0
  %843 = vmatpush1.msra.mxu0 0.0
  %844 = vmatprep.mubr.f32.mxu0 0.0
  %845 = vmatmul.mubr.f32.gmra.mrb[0].mxu0 %v775
  %v846 = vpop.f32.mrb[0].mxu0
  %v847 = vadd.f32 %v766, %v846
  %v848 = vpop.f32.mrb[0].mxu0
  %849 = vmatprep.mubr.f32.mxu0 0.0
  %850 = vmatmul.mubr.f32.gmra.mrb[0].mxu0 %v778
  %v851 = vpop.f32.mrb[0].mxu0
  %v852 = vadd.f32 %v771, %v851
  %v853 = vpop.f32.mrb[0].mxu0
  %854 = vdwg.mxu0
  %s855 = scalar_lea.vmem %s4, 32
  %v856 = vld [vmem:[%s855] sm:$0xff]
  %v857 = vld [vmem:[%s855 + $0x8] sm:$0xff]
  %v859 = vsel %vm692, %v856, 0
  %v862 = vsel %vm692, %v857, 0
  %864 = vmatprep.subr.mxu0 0.0
  %865 = vmatpush1.msra.mxu0 %v448
  %866 = vmatprep.subr.mxu0 0.0
  %867 = vmatpush1.msra.mxu0 %v454
  %868 = vmatprep.subr.mxu0 0.0
  %869 = vmatpush1.msra.mxu0 0.0
  %870 = vmatprep.subr.mxu0 0.0
  %871 = vmatpush1.msra.mxu0 0.0
  %872 = vmatprep.subr.mxu0 0.0
  %873 = vmatpush1.msra.mxu0 0.0
  %874 = vmatprep.subr.mxu0 0.0
  %875 = vmatpush1.msra.mxu0 0.0
  %876 = vmatprep.subr.mxu0 0.0
  %877 = vmatpush1.msra.mxu0 0.0
  %878 = vmatprep.subr.mxu0 0.0
  %879 = vmatpush1.msra.mxu0 0.0
  %880 = vmatprep.subr.mxu0 0.0
  %881 = vmatpush1.msra.mxu0 0.0
  %882 = vmatprep.subr.mxu0 0.0
  %883 = vmatpush1.msra.mxu0 0.0
  %884 = vmatprep.subr.mxu0 0.0
  %885 = vmatpush1.msra.mxu0 0.0
  %886 = vmatprep.subr.mxu0 0.0
  %887 = vmatpush1.msra.mxu0 0.0
  %888 = vmatprep.subr.mxu0 0.0
  %889 = vmatpush1.msra.mxu0 0.0
  %890 = vmatprep.subr.mxu0 0.0
  %891 = vmatpush1.msra.mxu0 0.0
  %892 = vmatprep.subr.mxu0 0.0
  %893 = vmatpush1.msra.mxu0 0.0
  %894 = vmatprep.subr.mxu0 0.0
  %895 = vmatpush1.msra.mxu0 0.0
  %896 = vmatprep.subr.mxu0 0.0
  %897 = vmatpush1.msra.mxu0 0.0
  %898 = vmatprep.subr.mxu0 0.0
  %899 = vmatpush1.msra.mxu0 0.0
  %900 = vmatprep.subr.mxu0 0.0
  %901 = vmatpush1.msra.mxu0 0.0
  %902 = vmatprep.subr.mxu0 0.0
  %903 = vmatpush1.msra.mxu0 0.0
  %904 = vmatprep.subr.mxu0 0.0
  %905 = vmatpush1.msra.mxu0 0.0
  %906 = vmatprep.subr.mxu0 0.0
  %907 = vmatpush1.msra.mxu0 0.0
  %908 = vmatprep.subr.mxu0 0.0
  %909 = vmatpush1.msra.mxu0 0.0
  %910 = vmatprep.subr.mxu0 0.0
  %911 = vmatpush1.msra.mxu0 0.0
  %912 = vmatprep.subr.mxu0 0.0
  %913 = vmatpush1.msra.mxu0 0.0
  %914 = vmatprep.subr.mxu0 0.0
  %915 = vmatpush1.msra.mxu0 0.0
  %916 = vmatprep.subr.mxu0 0.0
  %917 = vmatpush1.msra.mxu0 0.0
  %918 = vmatprep.subr.mxu0 0.0
  %919 = vmatpush1.msra.mxu0 0.0
  %920 = vmatprep.subr.mxu0 0.0
  %921 = vmatpush1.msra.mxu0 0.0
  %922 = vmatprep.subr.mxu0 0.0
  %923 = vmatpush1.msra.mxu0 0.0
  %924 = vmatprep.subr.mxu0 0.0
  %925 = vmatpush1.msra.mxu0 0.0
  %926 = vmatprep.subr.mxu0 0.0
  %927 = vmatpush1.msra.mxu0 0.0
  %928 = vmatprep.mubr.f32.mxu0 0.0
  %929 = vmatmul.mubr.f32.gmra.mrb[0].mxu0 %v859
  %v930 = vpop.f32.mrb[0].mxu0
  %v931 = vadd.f32 0.0, %v930
  %v932 = vpop.f32.mrb[0].mxu0
  %933 = vmatprep.mubr.f32.mxu0 0.0
  %934 = vmatmul.mubr.f32.gmra.mrb[0].mxu0 %v862
  %v935 = vpop.f32.mrb[0].mxu0
  %v936 = vadd.f32 0.0, %v935
  %v937 = vpop.f32.mrb[0].mxu0
  %938 = vdwg.mxu0
  %v939 = vadd.f32 %v847, %v931
  %v940 = vadd.f32 %v852, %v936
  %s941 = scalar_lea.vmem %s4, 48
  %v942 = vld [vmem:[%s941] sm:$0xff]
  %v943 = vld [vmem:[%s941 + $0x8] sm:$0xff]
  %v945 = vsel %vm692, %v942, 0
  %v948 = vsel %vm692, %v943, 0
  %950 = vmatprep.subr.mxu0 0.0
  %951 = vmatpush1.msra.mxu0 %v450
  %952 = vmatprep.subr.mxu0 0.0
  %953 = vmatpush1.msra.mxu0 %v456
  %954 = vmatprep.subr.mxu0 0.0
  %955 = vmatpush1.msra.mxu0 0.0
  %956 = vmatprep.subr.mxu0 0.0
  %957 = vmatpush1.msra.mxu0 0.0
  %958 = vmatprep.subr.mxu0 0.0
  %959 = vmatpush1.msra.mxu0 0.0
  %960 = vmatprep.subr.mxu0 0.0
  %961 = vmatpush1.msra.mxu0 0.0
  %962 = vmatprep.subr.mxu0 0.0
  %963 = vmatpush1.msra.mxu0 0.0
  %964 = vmatprep.subr.mxu0 0.0
  %965 = vmatpush1.msra.mxu0 0.0
  %966 = vmatprep.subr.mxu0 0.0
  %967 = vmatpush1.msra.mxu0 0.0
  %968 = vmatprep.subr.mxu0 0.0
  %969 = vmatpush1.msra.mxu0 0.0
  %970 = vmatprep.subr.mxu0 0.0
  %971 = vmatpush1.msra.mxu0 0.0
  %972 = vmatprep.subr.mxu0 0.0
  %973 = vmatpush1.msra.mxu0 0.0
  %974 = vmatprep.subr.mxu0 0.0
  %975 = vmatpush1.msra.mxu0 0.0
  %976 = vmatprep.subr.mxu0 0.0
  %977 = vmatpush1.msra.mxu0 0.0
  %978 = vmatprep.subr.mxu0 0.0
  %979 = vmatpush1.msra.mxu0 0.0
  %980 = vmatprep.subr.mxu0 0.0
  %981 = vmatpush1.msra.mxu0 0.0
  %982 = vmatprep.subr.mxu0 0.0
  %983 = vmatpush1.msra.mxu0 0.0
  %984 = vmatprep.subr.mxu0 0.0
  %985 = vmatpush1.msra.mxu0 0.0
  %986 = vmatprep.subr.mxu0 0.0
  %987 = vmatpush1.msra.mxu0 0.0
  %988 = vmatprep.subr.mxu0 0.0
  %989 = vmatpush1.msra.mxu0 0.0
  %990 = vmatprep.subr.mxu0 0.0
  %991 = vmatpush1.msra.mxu0 0.0
  %992 = vmatprep.subr.mxu0 0.0
  %993 = vmatpush1.msra.mxu0 0.0
  %994 = vmatprep.subr.mxu0 0.0
  %995 = vmatpush1.msra.mxu0 0.0
  %996 = vmatprep.subr.mxu0 0.0
  %997 = vmatpush1.msra.mxu0 0.0
  %998 = vmatprep.subr.mxu0 0.0
  %999 = vmatpush1.msra.mxu0 0.0
  %1000 = vmatprep.subr.mxu0 0.0
  %1001 = vmatpush1.msra.mxu0 0.0
  %1002 = vmatprep.subr.mxu0 0.0
  %1003 = vmatpush1.msra.mxu0 0.0
  %1004 = vmatprep.subr.mxu0 0.0
  %1005 = vmatpush1.msra.mxu0 0.0
  %1006 = vmatprep.subr.mxu0 0.0
  %1007 = vmatpush1.msra.mxu0 0.0
  %1008 = vmatprep.subr.mxu0 0.0
  %1009 = vmatpush1.msra.mxu0 0.0
  %1010 = vmatprep.subr.mxu0 0.0
  %1011 = vmatpush1.msra.mxu0 0.0
  %1012 = vmatprep.subr.mxu0 0.0
  %1013 = vmatpush1.msra.mxu0 0.0
  %1014 = vmatprep.mubr.f32.mxu0 0.0
  %1015 = vmatmul.mubr.f32.gmra.mrb[0].mxu0 %v945
  %v1016 = vpop.f32.mrb[0].mxu0
  %v1017 = vadd.f32 0.0, %v1016
  %v1018 = vpop.f32.mrb[0].mxu0
  %1019 = vmatprep.mubr.f32.mxu0 0.0
  %1020 = vmatmul.mubr.f32.gmra.mrb[0].mxu0 %v948
  %v1021 = vpop.f32.mrb[0].mxu0
  %v1022 = vadd.f32 0.0, %v1021
  %v1023 = vpop.f32.mrb[0].mxu0
  %1024 = vdwg.mxu0
  %v1025 = vadd.f32 %v939, %v1017
  %v1026 = vadd.f32 %v940, %v1022
  %s1027 = scalar_lea.vmem %s4, 64
  %v1028 = vld [vmem:[%s1027] sm:$0xff]
  %v1029 = vld [vmem:[%s1027 + $0x8] sm:$0xff]
  %v1031 = vsel %vm692, %v1028, 0
  %v1034 = vsel %vm692, %v1029, 0
  %1036 = vmatprep.subr.mxu0 0.0
  %1037 = vmatpush1.msra.mxu0 %v525
  %1038 = vmatprep.subr.mxu0 0.0
  %1039 = vmatpush1.msra.mxu0 %v531
  %1040 = vmatprep.subr.mxu0 0.0
  %1041 = vmatpush1.msra.mxu0 0.0
  %1042 = vmatprep.subr.mxu0 0.0
  %1043 = vmatpush1.msra.mxu0 0.0
  %1044 = vmatprep.subr.mxu0 0.0
  %1045 = vmatpush1.msra.mxu0 0.0
  %1046 = vmatprep.subr.mxu0 0.0
  %1047 = vmatpush1.msra.mxu0 0.0
  %1048 = vmatprep.subr.mxu0 0.0
  %1049 = vmatpush1.msra.mxu0 0.0
  %1050 = vmatprep.subr.mxu0 0.0
  %1051 = vmatpush1.msra.mxu0 0.0
  %1052 = vmatprep.subr.mxu0 0.0
  %1053 = vmatpush1.msra.mxu0 0.0
  %1054 = vmatprep.subr.mxu0 0.0
  %1055 = vmatpush1.msra.mxu0 0.0
  %1056 = vmatprep.subr.mxu0 0.0
  %1057 = vmatpush1.msra.mxu0 0.0
  %1058 = vmatprep.subr.mxu0 0.0
  %1059 = vmatpush1.msra.mxu0 0.0
  %1060 = vmatprep.subr.mxu0 0.0
  %1061 = vmatpush1.msra.mxu0 0.0
  %1062 = vmatprep.subr.mxu0 0.0
  %1063 = vmatpush1.msra.mxu0 0.0
  %1064 = vmatprep.subr.mxu0 0.0
  %1065 = vmatpush1.msra.mxu0 0.0
  %1066 = vmatprep.subr.mxu0 0.0
  %1067 = vmatpush1.msra.mxu0 0.0
  %1068 = vmatprep.subr.mxu0 0.0
  %1069 = vmatpush1.msra.mxu0 0.0
  %1070 = vmatprep.subr.mxu0 0.0
  %1071 = vmatpush1.msra.mxu0 0.0
  %1072 = vmatprep.subr.mxu0 0.0
  %1073 = vmatpush1.msra.mxu0 0.0
  %1074 = vmatprep.subr.mxu0 0.0
  %1075 = vmatpush1.msra.mxu0 0.0
  %1076 = vmatprep.subr.mxu0 0.0
  %1077 = vmatpush1.msra.mxu0 0.0
  %1078 = vmatprep.subr.mxu0 0.0
  %1079 = vmatpush1.msra.mxu0 0.0
  %1080 = vmatprep.subr.mxu0 0.0
  %1081 = vmatpush1.msra.mxu0 0.0
  %1082 = vmatprep.subr.mxu0 0.0
  %1083 = vmatpush1.msra.mxu0 0.0
  %1084 = vmatprep.subr.mxu0 0.0
  %1085 = vmatpush1.msra.mxu0 0.0
  %1086 = vmatprep.subr.mxu0 0.0
  %1087 = vmatpush1.msra.mxu0 0.0
  %1088 = vmatprep.subr.mxu0 0.0
  %1089 = vmatpush1.msra.mxu0 0.0
  %1090 = vmatprep.subr.mxu0 0.0
  %1091 = vmatpush1.msra.mxu0 0.0
  %1092 = vmatprep.subr.mxu0 0.0
  %1093 = vmatpush1.msra.mxu0 0.0
  %1094 = vmatprep.subr.mxu0 0.0
  %1095 = vmatpush1.msra.mxu0 0.0
  %1096 = vmatprep.subr.mxu0 0.0
  %1097 = vmatpush1.msra.mxu0 0.0
  %1098 = vmatprep.subr.mxu0 0.0
  %1099 = vmatpush1.msra.mxu0 0.0
  %1100 = vmatprep.mubr.f32.mxu0 0.0
  %1101 = vmatmul.mubr.f32.gmra.mrb[0].mxu0 %v1031
  %v1102 = vpop.f32.mrb[0].mxu0
  %v1103 = vadd.f32 0.0, %v1102
  %v1104 = vpop.f32.mrb[0].mxu0
  %1105 = vmatprep.mubr.f32.mxu0 0.0
  %1106 = vmatmul.mubr.f32.gmra.mrb[0].mxu0 %v1034
  %v1107 = vpop.f32.mrb[0].mxu0
  %v1108 = vadd.f32 0.0, %v1107
  %v1109 = vpop.f32.mrb[0].mxu0
  %1110 = vdwg.mxu0
  %v1111 = vadd.f32 %v1025, %v1103
  %v1112 = vadd.f32 %v1026, %v1108
  %s1113 = scalar_lea.vmem %s4, 80
  %v1114 = vld [vmem:[%s1113] sm:$0xff]
  %v1115 = vld [vmem:[%s1113 + $0x8] sm:$0xff]
  %v1117 = vsel %vm692, %v1114, 0
  %v1120 = vsel %vm692, %v1115, 0
  %1122 = vmatprep.subr.mxu0 0.0
  %1123 = vmatpush1.msra.mxu0 %v527
  %1124 = vmatprep.subr.mxu0 0.0
  %1125 = vmatpush1.msra.mxu0 %v533
  %1126 = vmatprep.subr.mxu0 0.0
  %1127 = vmatpush1.msra.mxu0 0.0
  %1128 = vmatprep.subr.mxu0 0.0
  %1129 = vmatpush1.msra.mxu0 0.0
  %1130 = vmatprep.subr.mxu0 0.0
  %1131 = vmatpush1.msra.mxu0 0.0
  %1132 = vmatprep.subr.mxu0 0.0
  %1133 = vmatpush1.msra.mxu0 0.0
  %1134 = vmatprep.subr.mxu0 0.0
  %1135 = vmatpush1.msra.mxu0 0.0
  %1136 = vmatprep.subr.mxu0 0.0
  %1137 = vmatpush1.msra.mxu0 0.0
  %1138 = vmatprep.subr.mxu0 0.0
  %1139 = vmatpush1.msra.mxu0 0.0
  %1140 = vmatprep.subr.mxu0 0.0
  %1141 = vmatpush1.msra.mxu0 0.0
  %1142 = vmatprep.subr.mxu0 0.0
  %1143 = vmatpush1.msra.mxu0 0.0
  %1144 = vmatprep.subr.mxu0 0.0
  %1145 = vmatpush1.msra.mxu0 0.0
  %1146 = vmatprep.subr.mxu0 0.0
  %1147 = vmatpush1.msra.mxu0 0.0
  %1148 = vmatprep.subr.mxu0 0.0
  %1149 = vmatpush1.msra.mxu0 0.0
  %1150 = vmatprep.subr.mxu0 0.0
  %1151 = vmatpush1.msra.mxu0 0.0
  %1152 = vmatprep.subr.mxu0 0.0
  %1153 = vmatpush1.msra.mxu0 0.0
  %1154 = vmatprep.subr.mxu0 0.0
  %1155 = vmatpush1.msra.mxu0 0.0
  %1156 = vmatprep.subr.mxu0 0.0
  %1157 = vmatpush1.msra.mxu0 0.0
  %1158 = vmatprep.subr.mxu0 0.0
  %1159 = vmatpush1.msra.mxu0 0.0
  %1160 = vmatprep.subr.mxu0 0.0
  %1161 = vmatpush1.msra.mxu0 0.0
  %1162 = vmatprep.subr.mxu0 0.0
  %1163 = vmatpush1.msra.mxu0 0.0
  %1164 = vmatprep.subr.mxu0 0.0
  %1165 = vmatpush1.msra.mxu0 0.0
  %1166 = vmatprep.subr.mxu0 0.0
  %1167 = vmatpush1.msra.mxu0 0.0
  %1168 = vmatprep.subr.mxu0 0.0
  %1169 = vmatpush1.msra.mxu0 0.0
  %1170 = vmatprep.subr.mxu0 0.0
  %1171 = vmatpush1.msra.mxu0 0.0
  %1172 = vmatprep.subr.mxu0 0.0
  %1173 = vmatpush1.msra.mxu0 0.0
  %1174 = vmatprep.subr.mxu0 0.0
  %1175 = vmatpush1.msra.mxu0 0.0
  %1176 = vmatprep.subr.mxu0 0.0
  %1177 = vmatpush1.msra.mxu0 0.0
  %1178 = vmatprep.subr.mxu0 0.0
  %1179 = vmatpush1.msra.mxu0 0.0
  %1180 = vmatprep.subr.mxu0 0.0
  %1181 = vmatpush1.msra.mxu0 0.0
  %1182 = vmatprep.subr.mxu0 0.0
  %1183 = vmatpush1.msra.mxu0 0.0
  %1184 = vmatprep.subr.mxu0 0.0
  %1185 = vmatpush1.msra.mxu0 0.0
  %1186 = vmatprep.mubr.f32.mxu0 0.0
  %1187 = vmatmul.mubr.f32.gmra.mrb[0].mxu0 %v1117
  %v1188 = vpop.f32.mrb[0].mxu0
  %v1189 = vadd.f32 0.0, %v1188
  %v1190 = vpop.f32.mrb[0].mxu0
  %1191 = vmatprep.mubr.f32.mxu0 0.0
  %1192 = vmatmul.mubr.f32.gmra.mrb[0].mxu0 %v1120
  %v1193 = vpop.f32.mrb[0].mxu0
  %v1194 = vadd.f32 0.0, %v1193
  %v1195 = vpop.f32.mrb[0].mxu0
  %1196 = vdwg.mxu0
  %v1197 = vadd.f32 %v1111, %v1189
  %v1198 = vadd.f32 %v1112, %v1194
  %s1199 = scalar_lea.vmem %s4, 96
  %v1200 = vld [vmem:[%s1199] sm:$0xff]
  %v1201 = vld [vmem:[%s1199 + $0x8] sm:$0xff]
  %v1203 = vsel %vm692, %v1200, 0
  %v1206 = vsel %vm692, %v1201, 0
  %1208 = vmatprep.subr.mxu0 0.0
  %1209 = vmatpush1.msra.mxu0 %v602
  %1210 = vmatprep.subr.mxu0 0.0
  %1211 = vmatpush1.msra.mxu0 %v608
  %1212 = vmatprep.subr.mxu0 0.0
  %1213 = vmatpush1.msra.mxu0 0.0
  %1214 = vmatprep.subr.mxu0 0.0
  %1215 = vmatpush1.msra.mxu0 0.0
  %1216 = vmatprep.subr.mxu0 0.0
  %1217 = vmatpush1.msra.mxu0 0.0
  %1218 = vmatprep.subr.mxu0 0.0
  %1219 = vmatpush1.msra.mxu0 0.0
  %1220 = vmatprep.subr.mxu0 0.0
  %1221 = vmatpush1.msra.mxu0 0.0
  %1222 = vmatprep.subr.mxu0 0.0
  %1223 = vmatpush1.msra.mxu0 0.0
  %1224 = vmatprep.subr.mxu0 0.0
  %1225 = vmatpush1.msra.mxu0 0.0
  %1226 = vmatprep.subr.mxu0 0.0
  %1227 = vmatpush1.msra.mxu0 0.0
  %1228 = vmatprep.subr.mxu0 0.0
  %1229 = vmatpush1.msra.mxu0 0.0
  %1230 = vmatprep.subr.mxu0 0.0
  %1231 = vmatpush1.msra.mxu0 0.0
  %1232 = vmatprep.subr.mxu0 0.0
  %1233 = vmatpush1.msra.mxu0 0.0
  %1234 = vmatprep.subr.mxu0 0.0
  %1235 = vmatpush1.msra.mxu0 0.0
  %1236 = vmatprep.subr.mxu0 0.0
  %1237 = vmatpush1.msra.mxu0 0.0
  %1238 = vmatprep.subr.mxu0 0.0
  %1239 = vmatpush1.msra.mxu0 0.0
  %1240 = vmatprep.subr.mxu0 0.0
  %1241 = vmatpush1.msra.mxu0 0.0
  %1242 = vmatprep.subr.mxu0 0.0
  %1243 = vmatpush1.msra.mxu0 0.0
  %1244 = vmatprep.subr.mxu0 0.0
  %1245 = vmatpush1.msra.mxu0 0.0
  %1246 = vmatprep.subr.mxu0 0.0
  %1247 = vmatpush1.msra.mxu0 0.0
  %1248 = vmatprep.subr.mxu0 0.0
  %1249 = vmatpush1.msra.mxu0 0.0
  %1250 = vmatprep.subr.mxu0 0.0
  %1251 = vmatpush1.msra.mxu0 0.0
  %1252 = vmatprep.subr.mxu0 0.0
  %1253 = vmatpush1.msra.mxu0 0.0
  %1254 = vmatprep.subr.mxu0 0.0
  %1255 = vmatpush1.msra.mxu0 0.0
  %1256 = vmatprep.subr.mxu0 0.0
  %1257 = vmatpush1.msra.mxu0 0.0
  %1258 = vmatprep.subr.mxu0 0.0
  %1259 = vmatpush1.msra.mxu0 0.0
  %1260 = vmatprep.subr.mxu0 0.0
  %1261 = vmatpush1.msra.mxu0 0.0
  %1262 = vmatprep.subr.mxu0 0.0
  %1263 = vmatpush1.msra.mxu0 0.0
  %1264 = vmatprep.subr.mxu0 0.0
  %1265 = vmatpush1.msra.mxu0 0.0
  %1266 = vmatprep.subr.mxu0 0.0
  %1267 = vmatpush1.msra.mxu0 0.0
  %1268 = vmatprep.subr.mxu0 0.0
  %1269 = vmatpush1.msra.mxu0 0.0
  %1270 = vmatprep.subr.mxu0 0.0
  %1271 = vmatpush1.msra.mxu0 0.0
  %1272 = vmatprep.mubr.f32.mxu0 0.0
  %1273 = vmatmul.mubr.f32.gmra.mrb[0].mxu0 %v1203
  %v1274 = vpop.f32.mrb[0].mxu0
  %v1275 = vadd.f32 0.0, %v1274
  %v1276 = vpop.f32.mrb[0].mxu0
  %1277 = vmatprep.mubr.f32.mxu0 0.0
  %1278 = vmatmul.mubr.f32.gmra.mrb[0].mxu0 %v1206
  %v1279 = vpop.f32.mrb[0].mxu0
  %v1280 = vadd.f32 0.0, %v1279
  %v1281 = vpop.f32.mrb[0].mxu0
  %1282 = vdwg.mxu0
  %v1283 = vadd.f32 %v1197, %v1275
  %v1284 = vadd.f32 %v1198, %v1280
  %s1285 = scalar_lea.vmem %s4, 112
  %v1286 = vld [vmem:[%s1285] sm:$0xff]
  %v1287 = vld [vmem:[%s1285 + $0x8] sm:$0xff]
  %v1289 = vsel %vm692, %v1286, 0
  %v1292 = vsel %vm692, %v1287, 0
  %1294 = vmatprep.subr.mxu0 0.0
  %1295 = vmatpush1.msra.mxu0 %v604
  %1296 = vmatprep.subr.mxu0 0.0
  %1297 = vmatpush1.msra.mxu0 %v610
  %1298 = vmatprep.subr.mxu0 0.0
  %1299 = vmatpush1.msra.mxu0 0.0
  %1300 = vmatprep.subr.mxu0 0.0
  %1301 = vmatpush1.msra.mxu0 0.0
  %1302 = vmatprep.subr.mxu0 0.0
  %1303 = vmatpush1.msra.mxu0 0.0
  %1304 = vmatprep.subr.mxu0 0.0
  %1305 = vmatpush1.msra.mxu0 0.0
  %1306 = vmatprep.subr.mxu0 0.0
  %1307 = vmatpush1.msra.mxu0 0.0
  %1308 = vmatprep.subr.mxu0 0.0
  %1309 = vmatpush1.msra.mxu0 0.0
  %1310 = vmatprep.subr.mxu0 0.0
  %1311 = vmatpush1.msra.mxu0 0.0
  %1312 = vmatprep.subr.mxu0 0.0
  %1313 = vmatpush1.msra.mxu0 0.0
  %1314 = vmatprep.subr.mxu0 0.0
  %1315 = vmatpush1.msra.mxu0 0.0
  %1316 = vmatprep.subr.mxu0 0.0
  %1317 = vmatpush1.msra.mxu0 0.0
  %1318 = vmatprep.subr.mxu0 0.0
  %1319 = vmatpush1.msra.mxu0 0.0
  %1320 = vmatprep.subr.mxu0 0.0
  %1321 = vmatpush1.msra.mxu0 0.0
  %1322 = vmatprep.subr.mxu0 0.0
  %1323 = vmatpush1.msra.mxu0 0.0
  %1324 = vmatprep.subr.mxu0 0.0
  %1325 = vmatpush1.msra.mxu0 0.0
  %1326 = vmatprep.subr.mxu0 0.0
  %1327 = vmatpush1.msra.mxu0 0.0
  %1328 = vmatprep.subr.mxu0 0.0
  %1329 = vmatpush1.msra.mxu0 0.0
  %1330 = vmatprep.subr.mxu0 0.0
  %1331 = vmatpush1.msra.mxu0 0.0
  %1332 = vmatprep.subr.mxu0 0.0
  %1333 = vmatpush1.msra.mxu0 0.0
  %1334 = vmatprep.subr.mxu0 0.0
  %1335 = vmatpush1.msra.mxu0 0.0
  %1336 = vmatprep.subr.mxu0 0.0
  %1337 = vmatpush1.msra.mxu0 0.0
  %1338 = vmatprep.subr.mxu0 0.0
  %1339 = vmatpush1.msra.mxu0 0.0
  %1340 = vmatprep.subr.mxu0 0.0
  %1341 = vmatpush1.msra.mxu0 0.0
  %1342 = vmatprep.subr.mxu0 0.0
  %1343 = vmatpush1.msra.mxu0 0.0
  %1344 = vmatprep.subr.mxu0 0.0
  %1345 = vmatpush1.msra.mxu0 0.0
  %1346 = vmatprep.subr.mxu0 0.0
  %1347 = vmatpush1.msra.mxu0 0.0
  %1348 = vmatprep.subr.mxu0 0.0
  %1349 = vmatpush1.msra.mxu0 0.0
  %1350 = vmatprep.subr.mxu0 0.0
  %1351 = vmatpush1.msra.mxu0 0.0
  %1352 = vmatprep.subr.mxu0 0.0
  %1353 = vmatpush1.msra.mxu0 0.0
  %1354 = vmatprep.subr.mxu0 0.0
  %1355 = vmatpush1.msra.mxu0 0.0
  %1356 = vmatprep.subr.mxu0 0.0
  %1357 = vmatpush1.msra.mxu0 0.0
  %1358 = vmatprep.mubr.f32.mxu0 0.0
  %1359 = vmatmul.mubr.f32.gmra.mrb[0].mxu0 %v1289
  %v1360 = vpop.f32.mrb[0].mxu0
  %v1361 = vadd.f32 0.0, %v1360
  %v1362 = vpop.f32.mrb[0].mxu0
  %1363 = vmatprep.mubr.f32.mxu0 0.0
  %1364 = vmatmul.mubr.f32.gmra.mrb[0].mxu0 %v1292
  %v1365 = vpop.f32.mrb[0].mxu0
  %v1366 = vadd.f32 0.0, %v1365
  %v1367 = vpop.f32.mrb[0].mxu0
  %1368 = vdwg.mxu0
  %v1369 = vadd.f32 %v1283, %v1361
  %v1370 = vadd.f32 %v1284, %v1366
  %s1371 = scalar_lea.vmem %s4, 128
  %v1372 = vld [vmem:[%s1371] sm:$0xff]
  %v1373 = vld [vmem:[%s1371 + $0x8] sm:$0xff]
  %v1375 = vsel %vm692, %v1372, 0
  %v1378 = vsel %vm692, %v1373, 0
  %1380 = vmatprep.subr.mxu0 0.0
  %1381 = vmatpush1.msra.mxu0 %v679
  %1382 = vmatprep.subr.mxu0 0.0
  %1383 = vmatpush1.msra.mxu0 %v684
  %1384 = vmatprep.subr.mxu0 0.0
  %1385 = vmatpush1.msra.mxu0 0.0
  %1386 = vmatprep.subr.mxu0 0.0
  %1387 = vmatpush1.msra.mxu0 0.0
  %1388 = vmatprep.subr.mxu0 0.0
  %1389 = vmatpush1.msra.mxu0 0.0
  %1390 = vmatprep.subr.mxu0 0.0
  %1391 = vmatpush1.msra.mxu0 0.0
  %1392 = vmatprep.subr.mxu0 0.0
  %1393 = vmatpush1.msra.mxu0 0.0
  %1394 = vmatprep.subr.mxu0 0.0
  %1395 = vmatpush1.msra.mxu0 0.0
  %1396 = vmatprep.subr.mxu0 0.0
  %1397 = vmatpush1.msra.mxu0 0.0
  %1398 = vmatprep.subr.mxu0 0.0
  %1399 = vmatpush1.msra.mxu0 0.0
  %1400 = vmatprep.subr.mxu0 0.0
  %1401 = vmatpush1.msra.mxu0 0.0
  %1402 = vmatprep.subr.mxu0 0.0
  %1403 = vmatpush1.msra.mxu0 0.0
  %1404 = vmatprep.subr.mxu0 0.0
  %1405 = vmatpush1.msra.mxu0 0.0
  %1406 = vmatprep.subr.mxu0 0.0
  %1407 = vmatpush1.msra.mxu0 0.0
  %1408 = vmatprep.subr.mxu0 0.0
  %1409 = vmatpush1.msra.mxu0 0.0
  %1410 = vmatprep.subr.mxu0 0.0
  %1411 = vmatpush1.msra.mxu0 0.0
  %1412 = vmatprep.subr.mxu0 0.0
  %1413 = vmatpush1.msra.mxu0 0.0
  %1414 = vmatprep.subr.mxu0 0.0
  %1415 = vmatpush1.msra.mxu0 0.0
  %1416 = vmatprep.subr.mxu0 0.0
  %1417 = vmatpush1.msra.mxu0 0.0
  %1418 = vmatprep.subr.mxu0 0.0
  %1419 = vmatpush1.msra.mxu0 0.0
  %1420 = vmatprep.subr.mxu0 0.0
  %1421 = vmatpush1.msra.mxu0 0.0
  %1422 = vmatprep.subr.mxu0 0.0
  %1423 = vmatpush1.msra.mxu0 0.0
  %1424 = vmatprep.subr.mxu0 0.0
  %1425 = vmatpush1.msra.mxu0 0.0
  %1426 = vmatprep.subr.mxu0 0.0
  %1427 = vmatpush1.msra.mxu0 0.0
  %1428 = vmatprep.subr.mxu0 0.0
  %1429 = vmatpush1.msra.mxu0 0.0
  %1430 = vmatprep.subr.mxu0 0.0
  %1431 = vmatpush1.msra.mxu0 0.0
  %1432 = vmatprep.subr.mxu0 0.0
  %1433 = vmatpush1.msra.mxu0 0.0
  %1434 = vmatprep.subr.mxu0 0.0
  %1435 = vmatpush1.msra.mxu0 0.0
  %1436 = vmatprep.subr.mxu0 0.0
  %1437 = vmatpush1.msra.mxu0 0.0
  %1438 = vmatprep.subr.mxu0 0.0
  %1439 = vmatpush1.msra.mxu0 0.0
  %1440 = vmatprep.subr.mxu0 0.0
  %1441 = vmatpush1.msra.mxu0 0.0
  %1442 = vmatprep.subr.mxu0 0.0
  %1443 = vmatpush1.msra.mxu0 0.0
  %1444 = vmatprep.mubr.f32.mxu0 0.0
  %1445 = vmatmul.mubr.f32.gmra.mrb[0].mxu0 %v1375
  %v1446 = vpop.f32.mrb[0].mxu0
  %v1447 = vadd.f32 0.0, %v1446
  %v1448 = vpop.f32.mrb[0].mxu0
  %1449 = vmatprep.mubr.f32.mxu0 0.0
  %1450 = vmatmul.mubr.f32.gmra.mrb[0].mxu0 %v1378
  %v1451 = vpop.f32.mrb[0].mxu0
  %v1452 = vadd.f32 0.0, %v1451
  %v1453 = vpop.f32.mrb[0].mxu0
  %1454 = vdwg.mxu0
  %v1455 = vadd.f32 %v1369, %v1447
  %v1456 = vadd.f32 %v1370, %v1452
  %v1457 = vld [vmem:[%s5] sm:$0xff]
  %v1458 = vld [vmem:[%s5 + $0x8] sm:$0xff]
  %1460 = vset.pattern.permute.xlu0 0
  %1461 = vperm.xlu0 %1460, %v1457
  %v1462 = vpop.permute.xlu0 %1461
  %1465 = vset.pattern.permute.xlu0 0
  %1466 = vperm.xlu0 %1465, %v1458
  %v1467 = vpop.permute.xlu0 %1466
  %v1469 = vmul.f32 %v1455, %v1462
  %v1470 = vmul.f32 %v1456, %v1467
  %v1471 = vld [vmem:[%s6] sm:$0xff]
  %v1472 = vld [vmem:[%s6 + $0x8] sm:$0xff]
  %1474 = vset.pattern.permute.xlu0 0
  %1475 = vperm.xlu0 %1474, %v1471
  %v1476 = vpop.permute.xlu0 %1475
  %1479 = vset.pattern.permute.xlu0 0
  %1480 = vperm.xlu0 %1479, %v1472
  %v1481 = vpop.permute.xlu0 %1480
  %v1483 = vadd.f32 %v1469, %v1476
  %v1484 = vadd.f32 %v1470, %v1481
  %v1485 = vld [vmem:[%s7] sm:$0x3]
  %v1486 = vld [vmem:[%s8] sm:$0xff]
  %v1487 = vld [vmem:[%s8 + $0x8] sm:$0xff]
  %vm1488 = vcmask 523264
  %v1489 = vsel %vm1488, %v1483, 0.0
  %1490 = vadd.xlane.f32.xlu0 %v1489
  %v1491 = vpop.xlane.xlu0 %1490
  %v1492 = vsel %vm1488, %v1484, 0.0
  %1493 = vadd.xlane.f32.xlu0 %v1492
  %v1494 = vpop.xlane.xlu0 %1493
  %v1495 = vrcp.pop 64.0
  %v1496 = vmul.f32 %v1491, %v1495
  %v1497 = vmul.f32 %v1494, %v1495
  %v1498 = vsel %vm1488, %v1483, -inf
  %1499 = vmax.xlane.f32.xlu0 %v1498
  %v1500 = vpop.xlane.xlu0 %1499
  %v1501 = vsel %vm1488, %v1484, -inf
  %1502 = vmax.xlane.f32.xlu0 %v1501
  %v1503 = vpop.xlane.xlu0 %1502
  %v1505 = vsel %vm692, %v1485, 0
  %1507 = vmatprep.subr.mxu0 0.0
  %1508 = vmatpush1.msra.mxu0 %v1496
  %1509 = vmatprep.subr.mxu0 0.0
  %1510 = vmatpush1.msra.mxu0 %v1497
  %1511 = vmatprep.subr.mxu0 0.0
  %1512 = vmatpush1.msra.mxu0 0.0
  %1513 = vmatprep.subr.mxu0 0.0
  %1514 = vmatpush1.msra.mxu0 0.0
  %1515 = vmatprep.subr.mxu0 0.0
  %1516 = vmatpush1.msra.mxu0 0.0
  %1517 = vmatprep.subr.mxu0 0.0
  %1518 = vmatpush1.msra.mxu0 0.0
  %1519 = vmatprep.subr.mxu0 0.0
  %1520 = vmatpush1.msra.mxu0 0.0
  %1521 = vmatprep.subr.mxu0 0.0
  %1522 = vmatpush1.msra.mxu0 0.0
  %1523 = vmatprep.subr.mxu0 0.0
  %1524 = vmatpush1.msra.mxu0 0.0
  %1525 = vmatprep.subr.mxu0 0.0
  %1526 = vmatpush1.msra.mxu0 0.0
  %1527 = vmatprep.subr.mxu0 0.0
  %1528 = vmatpush1.msra.mxu0 0.0
  %1529 = vmatprep.subr.mxu0 0.0
  %1530 = vmatpush1.msra.mxu0 0.0
  %1531 = vmatprep.subr.mxu0 0.0
  %1532 = vmatpush1.msra.mxu0 0.0
  %1533 = vmatprep.subr.mxu0 0.0
  %1534 = vmatpush1.msra.mxu0 0.0
  %1535 = vmatprep.subr.mxu0 0.0
  %1536 = vmatpush1.msra.mxu0 0.0
  %1537 = vmatprep.subr.mxu0 0.0
  %1538 = vmatpush1.msra.mxu0 0.0
  %1539 = vmatprep.subr.mxu0 0.0
  %1540 = vmatpush1.msra.mxu0 0.0
  %1541 = vmatprep.subr.mxu0 0.0
  %1542 = vmatpush1.msra.mxu0 0.0
  %1543 = vmatprep.subr.mxu0 0.0
  %1544 = vmatpush1.msra.mxu0 0.0
  %1545 = vmatprep.subr.mxu0 0.0
  %1546 = vmatpush1.msra.mxu0 0.0
  %1547 = vmatprep.subr.mxu0 0.0
  %1548 = vmatpush1.msra.mxu0 0.0
  %1549 = vmatprep.subr.mxu0 0.0
  %1550 = vmatpush1.msra.mxu0 0.0
  %1551 = vmatprep.subr.mxu0 0.0
  %1552 = vmatpush1.msra.mxu0 0.0
  %1553 = vmatprep.subr.mxu0 0.0
  %1554 = vmatpush1.msra.mxu0 0.0
  %1555 = vmatprep.subr.mxu0 0.0
  %1556 = vmatpush1.msra.mxu0 0.0
  %1557 = vmatprep.subr.mxu0 0.0
  %1558 = vmatpush1.msra.mxu0 0.0
  %1559 = vmatprep.subr.mxu0 0.0
  %1560 = vmatpush1.msra.mxu0 0.0
  %1561 = vmatprep.subr.mxu0 0.0
  %1562 = vmatpush1.msra.mxu0 0.0
  %1563 = vmatprep.subr.mxu0 0.0
  %1564 = vmatpush1.msra.mxu0 0.0
  %1565 = vmatprep.subr.mxu0 0.0
  %1566 = vmatpush1.msra.mxu0 0.0
  %1567 = vmatprep.subr.mxu0 0.0
  %1568 = vmatpush1.msra.mxu0 0.0
  %1569 = vmatprep.subr.mxu0 0.0
  %1570 = vmatpush1.msra.mxu0 0.0
  %1571 = vmatprep.mubr.f32.mxu0 0.0
  %1572 = vmatmul.mubr.f32.gmra.mrb[0].mxu0 %v1505
  %v1573 = vpop.f32.mrb[0].mxu0
  %v1574 = vadd.f32 0.0, %v1573
  %v1575 = vpop.f32.mrb[0].mxu0
  %1576 = vdwg.mxu0
  %v1577 = vmax.f32 %v1574, 0.0
  %1578 = vmatprep.subr.mxu0 0.0
  %1579 = vmatpush1.msra.mxu0 %v1500
  %1580 = vmatprep.subr.mxu0 0.0
  %1581 = vmatpush1.msra.mxu0 %v1503
  %1582 = vmatprep.subr.mxu0 0.0
  %1583 = vmatpush1.msra.mxu0 0.0
  %1584 = vmatprep.subr.mxu0 0.0
  %1585 = vmatpush1.msra.mxu0 0.0
  %1586 = vmatprep.subr.mxu0 0.0
  %1587 = vmatpush1.msra.mxu0 0.0
  %1588 = vmatprep.subr.mxu0 0.0
  %1589 = vmatpush1.msra.mxu0 0.0
  %1590 = vmatprep.subr.mxu0 0.0
  %1591 = vmatpush1.msra.mxu0 0.0
  %1592 = vmatprep.subr.mxu0 0.0
  %1593 = vmatpush1.msra.mxu0 0.0
  %1594 = vmatprep.subr.mxu0 0.0
  %1595 = vmatpush1.msra.mxu0 0.0
  %1596 = vmatprep.subr.mxu0 0.0
  %1597 = vmatpush1.msra.mxu0 0.0
  %1598 = vmatprep.subr.mxu0 0.0
  %1599 = vmatpush1.msra.mxu0 0.0
  %1600 = vmatprep.subr.mxu0 0.0
  %1601 = vmatpush1.msra.mxu0 0.0
  %1602 = vmatprep.subr.mxu0 0.0
  %1603 = vmatpush1.msra.mxu0 0.0
  %1604 = vmatprep.subr.mxu0 0.0
  %1605 = vmatpush1.msra.mxu0 0.0
  %1606 = vmatprep.subr.mxu0 0.0
  %1607 = vmatpush1.msra.mxu0 0.0
  %1608 = vmatprep.subr.mxu0 0.0
  %1609 = vmatpush1.msra.mxu0 0.0
  %1610 = vmatprep.subr.mxu0 0.0
  %1611 = vmatpush1.msra.mxu0 0.0
  %1612 = vmatprep.subr.mxu0 0.0
  %1613 = vmatpush1.msra.mxu0 0.0
  %1614 = vmatprep.subr.mxu0 0.0
  %1615 = vmatpush1.msra.mxu0 0.0
  %1616 = vmatprep.subr.mxu0 0.0
  %1617 = vmatpush1.msra.mxu0 0.0
  %1618 = vmatprep.subr.mxu0 0.0
  %1619 = vmatpush1.msra.mxu0 0.0
  %1620 = vmatprep.subr.mxu0 0.0
  %1621 = vmatpush1.msra.mxu0 0.0
  %1622 = vmatprep.subr.mxu0 0.0
  %1623 = vmatpush1.msra.mxu0 0.0
  %1624 = vmatprep.subr.mxu0 0.0
  %1625 = vmatpush1.msra.mxu0 0.0
  %1626 = vmatprep.subr.mxu0 0.0
  %1627 = vmatpush1.msra.mxu0 0.0
  %1628 = vmatprep.subr.mxu0 0.0
  %1629 = vmatpush1.msra.mxu0 0.0
  %1630 = vmatprep.subr.mxu0 0.0
  %1631 = vmatpush1.msra.mxu0 0.0
  %1632 = vmatprep.subr.mxu0 0.0
  %1633 = vmatpush1.msra.mxu0 0.0
  %1634 = vmatprep.subr.mxu0 0.0
  %1635 = vmatpush1.msra.mxu0 0.0
  %1636 = vmatprep.subr.mxu0 0.0
  %1637 = vmatpush1.msra.mxu0 0.0
  %1638 = vmatprep.subr.mxu0 0.0
  %1639 = vmatpush1.msra.mxu0 0.0
  %1640 = vmatprep.subr.mxu0 0.0
  %1641 = vmatpush1.msra.mxu0 0.0
  %1642 = vmatprep.mubr.f32.mxu0 0.0
  %1643 = vmatmul.mubr.f32.gmra.mrb[0].mxu0 %v1505
  %v1644 = vpop.f32.mrb[0].mxu0
  %v1645 = vadd.f32 0.0, %v1644
  %v1646 = vpop.f32.mrb[0].mxu0
  %1647 = vdwg.mxu0
  %v1648 = vmax.f32 %v1645, 0.0
  %vm1649 = vcmask 15360
  %v1651 = vsel %vm1649, %v1486, 0
  %v1654 = vsel %vm1649, %v1487, 0
  %v1657 = vsel %vm80, %v1648, 0
  %1659 = vmatprep.subr.mxu0 0.0
  %1660 = vmatpush1.msra.mxu0 %v1657
  %1661 = vmatprep.subr.mxu0 0.0
  %1662 = vmatpush1.msra.mxu0 0.0
  %1663 = vmatprep.subr.mxu0 0.0
  %1664 = vmatpush1.msra.mxu0 0.0
  %1665 = vmatprep.subr.mxu0 0.0
  %1666 = vmatpush1.msra.mxu0 0.0
  %1667 = vmatprep.subr.mxu0 0.0
  %1668 = vmatpush1.msra.mxu0 0.0
  %1669 = vmatprep.subr.mxu0 0.0
  %1670 = vmatpush1.msra.mxu0 0.0
  %1671 = vmatprep.subr.mxu0 0.0
  %1672 = vmatpush1.msra.mxu0 0.0
  %1673 = vmatprep.subr.mxu0 0.0
  %1674 = vmatpush1.msra.mxu0 0.0
  %1675 = vmatprep.subr.mxu0 0.0
  %1676 = vmatpush1.msra.mxu0 0.0
  %1677 = vmatprep.subr.mxu0 0.0
  %1678 = vmatpush1.msra.mxu0 0.0
  %1679 = vmatprep.subr.mxu0 0.0
  %1680 = vmatpush1.msra.mxu0 0.0
  %1681 = vmatprep.subr.mxu0 0.0
  %1682 = vmatpush1.msra.mxu0 0.0
  %1683 = vmatprep.subr.mxu0 0.0
  %1684 = vmatpush1.msra.mxu0 0.0
  %1685 = vmatprep.subr.mxu0 0.0
  %1686 = vmatpush1.msra.mxu0 0.0
  %1687 = vmatprep.subr.mxu0 0.0
  %1688 = vmatpush1.msra.mxu0 0.0
  %1689 = vmatprep.subr.mxu0 0.0
  %1690 = vmatpush1.msra.mxu0 0.0
  %1691 = vmatprep.subr.mxu0 0.0
  %1692 = vmatpush1.msra.mxu0 0.0
  %1693 = vmatprep.subr.mxu0 0.0
  %1694 = vmatpush1.msra.mxu0 0.0
  %1695 = vmatprep.subr.mxu0 0.0
  %1696 = vmatpush1.msra.mxu0 0.0
  %1697 = vmatprep.subr.mxu0 0.0
  %1698 = vmatpush1.msra.mxu0 0.0
  %1699 = vmatprep.subr.mxu0 0.0
  %1700 = vmatpush1.msra.mxu0 0.0
  %1701 = vmatprep.subr.mxu0 0.0
  %1702 = vmatpush1.msra.mxu0 0.0
  %1703 = vmatprep.subr.mxu0 0.0
  %1704 = vmatpush1.msra.mxu0 0.0
  %1705 = vmatprep.subr.mxu0 0.0
  %1706 = vmatpush1.msra.mxu0 0.0
  %1707 = vmatprep.subr.mxu0 0.0
  %1708 = vmatpush1.msra.mxu0 0.0
  %1709 = vmatprep.subr.mxu0 0.0
  %1710 = vmatpush1.msra.mxu0 0.0
  %1711 = vmatprep.subr.mxu0 0.0
  %1712 = vmatpush1.msra.mxu0 0.0
  %1713 = vmatprep.subr.mxu0 0.0
  %1714 = vmatpush1.msra.mxu0 0.0
  %1715 = vmatprep.subr.mxu0 0.0
  %1716 = vmatpush1.msra.mxu0 0.0
  %1717 = vmatprep.subr.mxu0 0.0
  %1718 = vmatpush1.msra.mxu0 0.0
  %1719 = vmatprep.subr.mxu0 0.0
  %1720 = vmatpush1.msra.mxu0 0.0
  %1721 = vmatprep.subr.mxu0 0.0
  %1722 = vmatpush1.msra.mxu0 0.0
  %1723 = vmatprep.mubr.f32.mxu0 0.0
  %1724 = vmatmul.mubr.f32.gmra.mrb[0].mxu0 %v1651
  %v1725 = vpop.f32.mrb[0].mxu0
  %v1726 = vadd.f32 0.0, %v1725
  %v1727 = vpop.f32.mrb[0].mxu0
  %1728 = vmatprep.mubr.f32.mxu0 0.0
  %1729 = vmatmul.mubr.f32.gmra.mrb[0].mxu0 %v1654
  %v1730 = vpop.f32.mrb[0].mxu0
  %v1731 = vadd.f32 0.0, %v1730
  %v1732 = vpop.f32.mrb[0].mxu0
  %1733 = vdwg.mxu0
  %v1735 = vsel %vm80, %v1577, 0
  %1737 = vmatprep.subr.mxu0 0.0
  %1738 = vmatpush1.msra.mxu0 %v1735
  %1739 = vmatprep.subr.mxu0 0.0
  %1740 = vmatpush1.msra.mxu0 0.0
  %1741 = vmatprep.subr.mxu0 0.0
  %1742 = vmatpush1.msra.mxu0 0.0
  %1743 = vmatprep.subr.mxu0 0.0
  %1744 = vmatpush1.msra.mxu0 0.0
  %1745 = vmatprep.subr.mxu0 0.0
  %1746 = vmatpush1.msra.mxu0 0.0
  %1747 = vmatprep.subr.mxu0 0.0
  %1748 = vmatpush1.msra.mxu0 0.0
  %1749 = vmatprep.subr.mxu0 0.0
  %1750 = vmatpush1.msra.mxu0 0.0
  %1751 = vmatprep.subr.mxu0 0.0
  %1752 = vmatpush1.msra.mxu0 0.0
  %1753 = vmatprep.subr.mxu0 0.0
  %1754 = vmatpush1.msra.mxu0 0.0
  %1755 = vmatprep.subr.mxu0 0.0
  %1756 = vmatpush1.msra.mxu0 0.0
  %1757 = vmatprep.subr.mxu0 0.0
  %1758 = vmatpush1.msra.mxu0 0.0
  %1759 = vmatprep.subr.mxu0 0.0
  %1760 = vmatpush1.msra.mxu0 0.0
  %1761 = vmatprep.subr.mxu0 0.0
  %1762 = vmatpush1.msra.mxu0 0.0
  %1763 = vmatprep.subr.mxu0 0.0
  %1764 = vmatpush1.msra.mxu0 0.0
  %1765 = vmatprep.subr.mxu0 0.0
  %1766 = vmatpush1.msra.mxu0 0.0
  %1767 = vmatprep.subr.mxu0 0.0
  %1768 = vmatpush1.msra.mxu0 0.0
  %1769 = vmatprep.subr.mxu0 0.0
  %1770 = vmatpush1.msra.mxu0 0.0
  %1771 = vmatprep.subr.mxu0 0.0
  %1772 = vmatpush1.msra.mxu0 0.0
  %1773 = vmatprep.subr.mxu0 0.0
  %1774 = vmatpush1.msra.mxu0 0.0
  %1775 = vmatprep.subr.mxu0 0.0
  %1776 = vmatpush1.msra.mxu0 0.0
  %1777 = vmatprep.subr.mxu0 0.0
  %1778 = vmatpush1.msra.mxu0 0.0
  %1779 = vmatprep.subr.mxu0 0.0
  %1780 = vmatpush1.msra.mxu0 0.0
  %1781 = vmatprep.subr.mxu0 0.0
  %1782 = vmatpush1.msra.mxu0 0.0
  %1783 = vmatprep.subr.mxu0 0.0
  %1784 = vmatpush1.msra.mxu0 0.0
  %1785 = vmatprep.subr.mxu0 0.0
  %1786 = vmatpush1.msra.mxu0 0.0
  %1787 = vmatprep.subr.mxu0 0.0
  %1788 = vmatpush1.msra.mxu0 0.0
  %1789 = vmatprep.subr.mxu0 0.0
  %1790 = vmatpush1.msra.mxu0 0.0
  %1791 = vmatprep.subr.mxu0 0.0
  %1792 = vmatpush1.msra.mxu0 0.0
  %1793 = vmatprep.subr.mxu0 0.0
  %1794 = vmatpush1.msra.mxu0 0.0
  %1795 = vmatprep.subr.mxu0 0.0
  %1796 = vmatpush1.msra.mxu0 0.0
  %1797 = vmatprep.subr.mxu0 0.0
  %1798 = vmatpush1.msra.mxu0 0.0
  %1799 = vmatprep.subr.mxu0 0.0
  %1800 = vmatpush1.msra.mxu0 0.0
  %1801 = vmatprep.mubr.f32.mxu0 0.0
  %1802 = vmatmul.mubr.f32.gmra.mrb[0].mxu0 %v1651
  %v1803 = vpop.f32.mrb[0].mxu0
  %v1804 = vadd.f32 %v1726, %v1803
  %v1805 = vpop.f32.mrb[0].mxu0
  %1806 = vmatprep.mubr.f32.mxu0 0.0
  %1807 = vmatmul.mubr.f32.gmra.mrb[0].mxu0 %v1654
  %v1808 = vpop.f32.mrb[0].mxu0
  %v1809 = vadd.f32 %v1731, %v1808
  %v1810 = vpop.f32.mrb[0].mxu0
  %1811 = vdwg.mxu0
  %v1812 = vand.u32 2147483647, %v1804
  %v1813 = vand.u32 2147483647, %v1809
  %v1814 = vsub.f32 0.0, %v1812
  %v1815 = vsub.f32 0.0, %v1813
  %v1816 = vmul.f32 %v1814, 1.442695
  %v1817 = vpow.pop %v1816
  %v1818 = vmul.f32 %v1815, 1.442695
  %v1819 = vpow.pop %v1818
  %vm1820 = vcmp.ge.f32.partialorder %v1804, 0.0
  %vm1821 = vcmp.ge.f32.partialorder %v1809, 0.0
  %v1822 = vadd.f32 %v1817, 1.0
  %v1823 = vadd.f32 %v1819, 1.0
  %v1824 = vrcp.pop %v1822
  %v1825 = vmul.f32 1.0, %v1824
  %v1826 = vrcp.pop %v1823
  %v1827 = vmul.f32 1.0, %v1826
  %v1828 = vmul.f32 %v1817, %v1824
  %v1829 = vmul.f32 %v1819, %v1826
  %v1830 = vsel %vm1820, %v1825, %v1828
  %v1831 = vsel %vm1821, %v1827, %v1829
  %1833 = vset.pattern.permute.xlu0 0
  %1834 = vperm.xlu0 %1833, %v1830
  %v1835 = vpop.permute.xlu0 %1834
  %1838 = vset.pattern.permute.xlu0 0
  %1839 = vperm.xlu0 %1838, %v1831
  %v1840 = vpop.permute.xlu0 %1839
  %v1842 = vlaneseq
  %v1843 = vshrl.u32 %v1842, 7
  %v1844 = vsub.s32 0, %v1843
  %v1845 = vrot.slane %v159, %v1844
  %v1846 = vmul.f32 %v1835, %v1845
  %v1847 = vmul.f32 %v1840, %v1845
  %1850 = vrot.lane.b32.xlu0 %v1483, 64
  %v1851 = vpop.permute.xlu0 %1850
  %1852 = vrot.lane.b32.xlu0 %v1484, 64
  %v1853 = vpop.permute.xlu0 %1852
  %v1856 = vsel %vm1488, %v1851, 0.0
  %1857 = vadd.xlane.f32.xlu0 %v1856
  %v1858 = vpop.xlane.xlu0 %1857
  %v1859 = vsel %vm1488, %v1853, 0.0
  %1860 = vadd.xlane.f32.xlu0 %v1859
  %v1861 = vpop.xlane.xlu0 %1860
  %v1862 = vmul.f32 %v1858, %v1495
  %v1863 = vmul.f32 %v1861, %v1495
  %vm1864 = vcmask 1048064
  %v1865 = vsel %vm1864, %v1483, -inf
  %1866 = vmax.xlane.f32.xlu0 %v1865
  %v1867 = vpop.xlane.xlu0 %1866
  %v1868 = vsel %vm1864, %v1484, -inf
  %1869 = vmax.xlane.f32.xlu0 %v1868
  %v1870 = vpop.xlane.xlu0 %1869
  %1871 = vmatprep.subr.mxu0 0.0
  %1872 = vmatpush1.msra.mxu0 %v1862
  %1873 = vmatprep.subr.mxu0 0.0
  %1874 = vmatpush1.msra.mxu0 %v1863
  %1875 = vmatprep.subr.mxu0 0.0
  %1876 = vmatpush1.msra.mxu0 0.0
  %1877 = vmatprep.subr.mxu0 0.0
  %1878 = vmatpush1.msra.mxu0 0.0
  %1879 = vmatprep.subr.mxu0 0.0
  %1880 = vmatpush1.msra.mxu0 0.0
  %1881 = vmatprep.subr.mxu0 0.0
  %1882 = vmatpush1.msra.mxu0 0.0
  %1883 = vmatprep.subr.mxu0 0.0
  %1884 = vmatpush1.msra.mxu0 0.0
  %1885 = vmatprep.subr.mxu0 0.0
  %1886 = vmatpush1.msra.mxu0 0.0
  %1887 = vmatprep.subr.mxu0 0.0
  %1888 = vmatpush1.msra.mxu0 0.0
  %1889 = vmatprep.subr.mxu0 0.0
  %1890 = vmatpush1.msra.mxu0 0.0
  %1891 = vmatprep.subr.mxu0 0.0
  %1892 = vmatpush1.msra.mxu0 0.0
  %1893 = vmatprep.subr.mxu0 0.0
  %1894 = vmatpush1.msra.mxu0 0.0
  %1895 = vmatprep.subr.mxu0 0.0
  %1896 = vmatpush1.msra.mxu0 0.0
  %1897 = vmatprep.subr.mxu0 0.0
  %1898 = vmatpush1.msra.mxu0 0.0
  %1899 = vmatprep.subr.mxu0 0.0
  %1900 = vmatpush1.msra.mxu0 0.0
  %1901 = vmatprep.subr.mxu0 0.0
  %1902 = vmatpush1.msra.mxu0 0.0
  %1903 = vmatprep.subr.mxu0 0.0
  %1904 = vmatpush1.msra.mxu0 0.0
  %1905 = vmatprep.subr.mxu0 0.0
  %1906 = vmatpush1.msra.mxu0 0.0
  %1907 = vmatprep.subr.mxu0 0.0
  %1908 = vmatpush1.msra.mxu0 0.0
  %1909 = vmatprep.subr.mxu0 0.0
  %1910 = vmatpush1.msra.mxu0 0.0
  %1911 = vmatprep.subr.mxu0 0.0
  %1912 = vmatpush1.msra.mxu0 0.0
  %1913 = vmatprep.subr.mxu0 0.0
  %1914 = vmatpush1.msra.mxu0 0.0
  %1915 = vmatprep.subr.mxu0 0.0
  %1916 = vmatpush1.msra.mxu0 0.0
  %1917 = vmatprep.subr.mxu0 0.0
  %1918 = vmatpush1.msra.mxu0 0.0
  %1919 = vmatprep.subr.mxu0 0.0
  %1920 = vmatpush1.msra.mxu0 0.0
  %1921 = vmatprep.subr.mxu0 0.0
  %1922 = vmatpush1.msra.mxu0 0.0
  %1923 = vmatprep.subr.mxu0 0.0
  %1924 = vmatpush1.msra.mxu0 0.0
  %1925 = vmatprep.subr.mxu0 0.0
  %1926 = vmatpush1.msra.mxu0 0.0
  %1927 = vmatprep.subr.mxu0 0.0
  %1928 = vmatpush1.msra.mxu0 0.0
  %1929 = vmatprep.subr.mxu0 0.0
  %1930 = vmatpush1.msra.mxu0 0.0
  %1931 = vmatprep.subr.mxu0 0.0
  %1932 = vmatpush1.msra.mxu0 0.0
  %1933 = vmatprep.subr.mxu0 0.0
  %1934 = vmatpush1.msra.mxu0 0.0
  %1935 = vmatprep.mubr.f32.mxu0 0.0
  %1936 = vmatmul.mubr.f32.gmra.mrb[0].mxu0 %v1505
  %v1937 = vpop.f32.mrb[0].mxu0
  %v1938 = vadd.f32 0.0, %v1937
  %v1939 = vpop.f32.mrb[0].mxu0
  %1940 = vdwg.mxu0
  %v1941 = vmax.f32 %v1938, 0.0
  %1942 = vmatprep.subr.mxu0 0.0
  %1943 = vmatpush1.msra.mxu0 %v1867
  %1944 = vmatprep.subr.mxu0 0.0
  %1945 = vmatpush1.msra.mxu0 %v1870
  %1946 = vmatprep.subr.mxu0 0.0
  %1947 = vmatpush1.msra.mxu0 0.0
  %1948 = vmatprep.subr.mxu0 0.0
  %1949 = vmatpush1.msra.mxu0 0.0
  %1950 = vmatprep.subr.mxu0 0.0
  %1951 = vmatpush1.msra.mxu0 0.0
  %1952 = vmatprep.subr.mxu0 0.0
  %1953 = vmatpush1.msra.mxu0 0.0
  %1954 = vmatprep.subr.mxu0 0.0
  %1955 = vmatpush1.msra.mxu0 0.0
  %1956 = vmatprep.subr.mxu0 0.0
  %1957 = vmatpush1.msra.mxu0 0.0
  %1958 = vmatprep.subr.mxu0 0.0
  %1959 = vmatpush1.msra.mxu0 0.0
  %1960 = vmatprep.subr.mxu0 0.0
  %1961 = vmatpush1.msra.mxu0 0.0
  %1962 = vmatprep.subr.mxu0 0.0
  %1963 = vmatpush1.msra.mxu0 0.0
  %1964 = vmatprep.subr.mxu0 0.0
  %1965 = vmatpush1.msra.mxu0 0.0
  %1966 = vmatprep.subr.mxu0 0.0
  %1967 = vmatpush1.msra.mxu0 0.0
  %1968 = vmatprep.subr.mxu0 0.0
  %1969 = vmatpush1.msra.mxu0 0.0
  %1970 = vmatprep.subr.mxu0 0.0
  %1971 = vmatpush1.msra.mxu0 0.0
  %1972 = vmatprep.subr.mxu0 0.0
  %1973 = vmatpush1.msra.mxu0 0.0
  %1974 = vmatprep.subr.mxu0 0.0
  %1975 = vmatpush1.msra.mxu0 0.0
  %1976 = vmatprep.subr.mxu0 0.0
  %1977 = vmatpush1.msra.mxu0 0.0
  %1978 = vmatprep.subr.mxu0 0.0
  %1979 = vmatpush1.msra.mxu0 0.0
  %1980 = vmatprep.subr.mxu0 0.0
  %1981 = vmatpush1.msra.mxu0 0.0
  %1982 = vmatprep.subr.mxu0 0.0
  %1983 = vmatpush1.msra.mxu0 0.0
  %1984 = vmatprep.subr.mxu0 0.0
  %1985 = vmatpush1.msra.mxu0 0.0
  %1986 = vmatprep.subr.mxu0 0.0
  %1987 = vmatpush1.msra.mxu0 0.0
  %1988 = vmatprep.subr.mxu0 0.0
  %1989 = vmatpush1.msra.mxu0 0.0
  %1990 = vmatprep.subr.mxu0 0.0
  %1991 = vmatpush1.msra.mxu0 0.0
  %1992 = vmatprep.subr.mxu0 0.0
  %1993 = vmatpush1.msra.mxu0 0.0
  %1994 = vmatprep.subr.mxu0 0.0
  %1995 = vmatpush1.msra.mxu0 0.0
  %1996 = vmatprep.subr.mxu0 0.0
  %1997 = vmatpush1.msra.mxu0 0.0
  %1998 = vmatprep.subr.mxu0 0.0
  %1999 = vmatpush1.msra.mxu0 0.0
  %2000 = vmatprep.subr.mxu0 0.0
  %2001 = vmatpush1.msra.mxu0 0.0
  %2002 = vmatprep.subr.mxu0 0.0
  %2003 = vmatpush1.msra.mxu0 0.0
  %2004 = vmatprep.subr.mxu0 0.0
  %2005 = vmatpush1.msra.mxu0 0.0
  %2006 = vmatprep.mubr.f32.mxu0 0.0
  %2007 = vmatmul.mubr.f32.gmra.mrb[0].mxu0 %v1505
  %v2008 = vpop.f32.mrb[0].mxu0
  %v2009 = vadd.f32 0.0, %v2008
  %v2010 = vpop.f32.mrb[0].mxu0
  %2011 = vdwg.mxu0
  %v2012 = vmax.f32 %v2009, 0.0
  %v2014 = vsel %vm80, %v2012, 0
  %2016 = vmatprep.subr.mxu0 0.0
  %2017 = vmatpush1.msra.mxu0 %v2014
  %2018 = vmatprep.subr.mxu0 0.0
  %2019 = vmatpush1.msra.mxu0 0.0
  %2020 = vmatprep.subr.mxu0 0.0
  %2021 = vmatpush1.msra.mxu0 0.0
  %2022 = vmatprep.subr.mxu0 0.0
  %2023 = vmatpush1.msra.mxu0 0.0
  %2024 = vmatprep.subr.mxu0 0.0
  %2025 = vmatpush1.msra.mxu0 0.0
  %2026 = vmatprep.subr.mxu0 0.0
  %2027 = vmatpush1.msra.mxu0 0.0
  %2028 = vmatprep.subr.mxu0 0.0
  %2029 = vmatpush1.msra.mxu0 0.0
  %2030 = vmatprep.subr.mxu0 0.0
  %2031 = vmatpush1.msra.mxu0 0.0
  %2032 = vmatprep.subr.mxu0 0.0
  %2033 = vmatpush1.msra.mxu0 0.0
  %2034 = vmatprep.subr.mxu0 0.0
  %2035 = vmatpush1.msra.mxu0 0.0
  %2036 = vmatprep.subr.mxu0 0.0
  %2037 = vmatpush1.msra.mxu0 0.0
  %2038 = vmatprep.subr.mxu0 0.0
  %2039 = vmatpush1.msra.mxu0 0.0
  %2040 = vmatprep.subr.mxu0 0.0
  %2041 = vmatpush1.msra.mxu0 0.0
  %2042 = vmatprep.subr.mxu0 0.0
  %2043 = vmatpush1.msra.mxu0 0.0
  %2044 = vmatprep.subr.mxu0 0.0
  %2045 = vmatpush1.msra.mxu0 0.0
  %2046 = vmatprep.subr.mxu0 0.0
  %2047 = vmatpush1.msra.mxu0 0.0
  %2048 = vmatprep.subr.mxu0 0.0
  %2049 = vmatpush1.msra.mxu0 0.0
  %2050 = vmatprep.subr.mxu0 0.0
  %2051 = vmatpush1.msra.mxu0 0.0
  %2052 = vmatprep.subr.mxu0 0.0
  %2053 = vmatpush1.msra.mxu0 0.0
  %2054 = vmatprep.subr.mxu0 0.0
  %2055 = vmatpush1.msra.mxu0 0.0
  %2056 = vmatprep.subr.mxu0 0.0
  %2057 = vmatpush1.msra.mxu0 0.0
  %2058 = vmatprep.subr.mxu0 0.0
  %2059 = vmatpush1.msra.mxu0 0.0
  %2060 = vmatprep.subr.mxu0 0.0
  %2061 = vmatpush1.msra.mxu0 0.0
  %2062 = vmatprep.subr.mxu0 0.0
  %2063 = vmatpush1.msra.mxu0 0.0
  %2064 = vmatprep.subr.mxu0 0.0
  %2065 = vmatpush1.msra.mxu0 0.0
  %2066 = vmatprep.subr.mxu0 0.0
  %2067 = vmatpush1.msra.mxu0 0.0
  %2068 = vmatprep.subr.mxu0 0.0
  %2069 = vmatpush1.msra.mxu0 0.0
  %2070 = vmatprep.subr.mxu0 0.0
  %2071 = vmatpush1.msra.mxu0 0.0
  %2072 = vmatprep.subr.mxu0 0.0
  %2073 = vmatpush1.msra.mxu0 0.0
  %2074 = vmatprep.subr.mxu0 0.0
  %2075 = vmatpush1.msra.mxu0 0.0
  %2076 = vmatprep.subr.mxu0 0.0
  %2077 = vmatpush1.msra.mxu0 0.0
  %2078 = vmatprep.subr.mxu0 0.0
  %2079 = vmatpush1.msra.mxu0 0.0
  %2080 = vmatprep.mubr.f32.mxu0 0.0
  %2081 = vmatmul.mubr.f32.gmra.mrb[0].mxu0 %v1651
  %v2082 = vpop.f32.mrb[0].mxu0
  %v2083 = vadd.f32 0.0, %v2082
  %v2084 = vpop.f32.mrb[0].mxu0
  %2085 = vmatprep.mubr.f32.mxu0 0.0
  %2086 = vmatmul.mubr.f32.gmra.mrb[0].mxu0 %v1654
  %v2087 = vpop.f32.mrb[0].mxu0
  %v2088 = vadd.f32 0.0, %v2087
  %v2089 = vpop.f32.mrb[0].mxu0
  %2090 = vdwg.mxu0
  %v2092 = vsel %vm80, %v1941, 0
  %2094 = vmatprep.subr.mxu0 0.0
  %2095 = vmatpush1.msra.mxu0 %v2092
  %2096 = vmatprep.subr.mxu0 0.0
  %2097 = vmatpush1.msra.mxu0 0.0
  %2098 = vmatprep.subr.mxu0 0.0
  %2099 = vmatpush1.msra.mxu0 0.0
  %2100 = vmatprep.subr.mxu0 0.0
  %2101 = vmatpush1.msra.mxu0 0.0
  %2102 = vmatprep.subr.mxu0 0.0
  %2103 = vmatpush1.msra.mxu0 0.0
  %2104 = vmatprep.subr.mxu0 0.0
  %2105 = vmatpush1.msra.mxu0 0.0
  %2106 = vmatprep.subr.mxu0 0.0
  %2107 = vmatpush1.msra.mxu0 0.0
  %2108 = vmatprep.subr.mxu0 0.0
  %2109 = vmatpush1.msra.mxu0 0.0
  %2110 = vmatprep.subr.mxu0 0.0
  %2111 = vmatpush1.msra.mxu0 0.0
  %2112 = vmatprep.subr.mxu0 0.0
  %2113 = vmatpush1.msra.mxu0 0.0
  %2114 = vmatprep.subr.mxu0 0.0
  %2115 = vmatpush1.msra.mxu0 0.0
  %2116 = vmatprep.subr.mxu0 0.0
  %2117 = vmatpush1.msra.mxu0 0.0
  %2118 = vmatprep.subr.mxu0 0.0
  %2119 = vmatpush1.msra.mxu0 0.0
  %2120 = vmatprep.subr.mxu0 0.0
  %2121 = vmatpush1.msra.mxu0 0.0
  %2122 = vmatprep.subr.mxu0 0.0
  %2123 = vmatpush1.msra.mxu0 0.0
  %2124 = vmatprep.subr.mxu0 0.0
  %2125 = vmatpush1.msra.mxu0 0.0
  %2126 = vmatprep.subr.mxu0 0.0
  %2127 = vmatpush1.msra.mxu0 0.0
  %2128 = vmatprep.subr.mxu0 0.0
  %2129 = vmatpush1.msra.mxu0 0.0
  %2130 = vmatprep.subr.mxu0 0.0
  %2131 = vmatpush1.msra.mxu0 0.0
  %2132 = vmatprep.subr.mxu0 0.0
  %2133 = vmatpush1.msra.mxu0 0.0
  %2134 = vmatprep.subr.mxu0 0.0
  %2135 = vmatpush1.msra.mxu0 0.0
  %2136 = vmatprep.subr.mxu0 0.0
  %2137 = vmatpush1.msra.mxu0 0.0
  %2138 = vmatprep.subr.mxu0 0.0
  %2139 = vmatpush1.msra.mxu0 0.0
  %2140 = vmatprep.subr.mxu0 0.0
  %2141 = vmatpush1.msra.mxu0 0.0
  %2142 = vmatprep.subr.mxu0 0.0
  %2143 = vmatpush1.msra.mxu0 0.0
  %2144 = vmatprep.subr.mxu0 0.0
  %2145 = vmatpush1.msra.mxu0 0.0
  %2146 = vmatprep.subr.mxu0 0.0
  %2147 = vmatpush1.msra.mxu0 0.0
  %2148 = vmatprep.subr.mxu0 0.0
  %2149 = vmatpush1.msra.mxu0 0.0
  %2150 = vmatprep.subr.mxu0 0.0
  %2151 = vmatpush1.msra.mxu0 0.0
  %2152 = vmatprep.subr.mxu0 0.0
  %2153 = vmatpush1.msra.mxu0 0.0
  %2154 = vmatprep.subr.mxu0 0.0
  %2155 = vmatpush1.msra.mxu0 0.0
  %2156 = vmatprep.subr.mxu0 0.0
  %2157 = vmatpush1.msra.mxu0 0.0
  %2158 = vmatprep.mubr.f32.mxu0 0.0
  %2159 = vmatmul.mubr.f32.gmra.mrb[0].mxu0 %v1651
  %v2160 = vpop.f32.mrb[0].mxu0
  %v2161 = vadd.f32 %v2083, %v2160
  %v2162 = vpop.f32.mrb[0].mxu0
  %2163 = vmatprep.mubr.f32.mxu0 0.0
  %2164 = vmatmul.mubr.f32.gmra.mrb[0].mxu0 %v1654
  %v2165 = vpop.f32.mrb[0].mxu0
  %v2166 = vadd.f32 %v2088, %v2165
  %v2167 = vpop.f32.mrb[0].mxu0
  %2168 = vdwg.mxu0
  %v2169 = vand.u32 2147483647, %v2161
  %v2170 = vand.u32 2147483647, %v2166
  %v2171 = vsub.f32 0.0, %v2169
  %v2172 = vsub.f32 0.0, %v2170
  %v2173 = vmul.f32 %v2171, 1.442695
  %v2174 = vpow.pop %v2173
  %v2175 = vmul.f32 %v2172, 1.442695
  %v2176 = vpow.pop %v2175
  %vm2177 = vcmp.ge.f32.partialorder %v2161, 0.0
  %vm2178 = vcmp.ge.f32.partialorder %v2166, 0.0
  %v2179 = vadd.f32 %v2174, 1.0
  %v2180 = vadd.f32 %v2176, 1.0
  %v2181 = vrcp.pop %v2179
  %v2182 = vmul.f32 1.0, %v2181
  %v2183 = vrcp.pop %v2180
  %v2184 = vmul.f32 1.0, %v2183
  %v2185 = vmul.f32 %v2174, %v2181
  %v2186 = vmul.f32 %v2176, %v2183
  %v2187 = vsel %vm2177, %v2182, %v2185
  %v2188 = vsel %vm2178, %v2184, %v2186
  %2190 = vset.pattern.permute.xlu0 0
  %2191 = vperm.xlu0 %2190, %v2187
  %v2192 = vpop.permute.xlu0 %2191
  %2195 = vset.pattern.permute.xlu0 0
  %2196 = vperm.xlu0 %2195, %v2188
  %v2197 = vpop.permute.xlu0 %2196
  %v2199 = vlaneseq
  %v2200 = vshrl.u32 %v2199, 7
  %v2201 = vsub.s32 1, %v2200
  %v2202 = vrot.slane %v159, %v2201
  %v2203 = vmul.f32 %v2192, %v2202
  %v2204 = vmul.f32 %v2197, %v2202
  %v2205 = vadd.f32 %v1846, %v2203
  %v2206 = vadd.f32 %v1847, %v2204
  %v2207 = vsub.f32 %v2205, 1.0
  %v2208 = vsub.f32 %v2206, 1.0
  %v2209 = vmul.f32 %v2207, 0.042
  %v2210 = vmul.f32 %v2208, 0.042
  %v2211 = vadd.f32 %v2209, 1.0
  %v2212 = vadd.f32 %v2210, 1.0
  %v2213 = vmul.f32 %v1483, %v2211
  %v2214 = vmul.f32 %v1484, %v2212
  %v2215 = vadd.f32 %v2213, %v2214
  %v2216 = vrot.slane %v2215, 4
  %v2217 = vadd.f32 %v2215, %v2216
  %v2218 = vrot.slane %v2217, 2
  %v2219 = vadd.f32 %v2217, %v2218
  %v2220 = vrot.slane %v2219, 1
  %v2221 = vadd.f32 %v2219, %v2220
  %v2222 = vrcp.pop 16.0
  %v2223 = vmul.f32 %v2221, %v2222
  %v2224 = vmax.f32 %v2213, %v2214
  %v2225 = vrot.slane %v2224, 4
  %v2226 = vmax.f32 %v2224, %v2225
  %v2227 = vrot.slane %v2226, 2
  %v2228 = vmax.f32 %v2226, %v2227
  %v2229 = vrot.slane %v2228, 1
  %v2230 = vmax.f32 %v2228, %v2229
  %v2231 = vld [vmem:[%s9] sm:$0xff]
  %v2232 = vld [vmem:[%s9 + $0x8] sm:$0xff]
  %v2233 = vld [vmem:[%s9 + $0x10] sm:$0xff]
  %v2234 = vld [vmem:[%s9 + $0x18] sm:$0xff]
  %v2235 = vld [vmem:[%s9 + $0x20] sm:$0xff]
  %v2236 = vld [vmem:[%s9 + $0x28] sm:$0xff]
  %v2237 = vld [vmem:[%s9 + $0x30] sm:$0xff]
  %v2238 = vld [vmem:[%s9 + $0x38] sm:$0xff]
  %v2239 = vld [vmem:[%s9 + $0x40] sm:$0xff]
  %v2240 = vld [vmem:[%s9 + $0x48] sm:$0xff]
  %v2241 = vld [vmem:[%s9 + $0x50] sm:$0xff]
  %v2242 = vld [vmem:[%s9 + $0x58] sm:$0xff]
  %v2243 = vld [vmem:[%s9 + $0x60] sm:$0xff]
  %v2244 = vld [vmem:[%s9 + $0x68] sm:$0xff]
  %v2245 = vld [vmem:[%s9 + $0x70] sm:$0xff]
  %v2246 = vld [vmem:[%s9 + $0x78] sm:$0xff]
  %v2247 = vld [vmem:[%s10] sm:$0xff]
  %v2248 = vld [vmem:[%s10 + $0x8] sm:$0xff]
  %v2249 = vld [vmem:[%s10 + $0x10] sm:$0xff]
  %v2250 = vld [vmem:[%s10 + $0x18] sm:$0xff]
  %v2251 = vld [vmem:[%s10 + $0x20] sm:$0xff]
  %v2252 = vld [vmem:[%s10 + $0x28] sm:$0xff]
  %v2253 = vld [vmem:[%s10 + $0x30] sm:$0xff]
  %v2254 = vld [vmem:[%s10 + $0x38] sm:$0xff]
  %v2255 = vld [vmem:[%s10 + $0x40] sm:$0xff]
  %v2256 = vld [vmem:[%s10 + $0x48] sm:$0xff]
  %v2257 = vld [vmem:[%s10 + $0x50] sm:$0xff]
  %v2258 = vld [vmem:[%s10 + $0x58] sm:$0xff]
  %v2259 = vld [vmem:[%s10 + $0x60] sm:$0xff]
  %v2260 = vld [vmem:[%s10 + $0x68] sm:$0xff]
  %v2261 = vld [vmem:[%s10 + $0x70] sm:$0xff]
  %v2262 = vld [vmem:[%s10 + $0x78] sm:$0xff]
  %2263 = vmatprep.subr.mxu0 0.0
  %2264 = vmatpush1.msra.mxu0 %v2247
  %2265 = vmatprep.subr.mxu0 0.0
  %2266 = vmatpush1.msra.mxu0 %v2248
  %2267 = vmatprep.subr.mxu0 0.0
  %2268 = vmatpush1.msra.mxu0 %v2249
  %2269 = vmatprep.subr.mxu0 0.0
  %2270 = vmatpush1.msra.mxu0 %v2250
  %2271 = vmatprep.subr.mxu0 0.0
  %2272 = vmatpush1.msra.mxu0 %v2251
  %2273 = vmatprep.subr.mxu0 0.0
  %2274 = vmatpush1.msra.mxu0 %v2252
  %2275 = vmatprep.subr.mxu0 0.0
  %2276 = vmatpush1.msra.mxu0 %v2253
  %2277 = vmatprep.subr.mxu0 0.0
  %2278 = vmatpush1.msra.mxu0 %v2254
  %2279 = vmatprep.subr.mxu0 0.0
  %2280 = vmatpush1.msra.mxu0 %v2255
  %2281 = vmatprep.subr.mxu0 0.0
  %2282 = vmatpush1.msra.mxu0 %v2256
  %2283 = vmatprep.subr.mxu0 0.0
  %2284 = vmatpush1.msra.mxu0 %v2257
  %2285 = vmatprep.subr.mxu0 0.0
  %2286 = vmatpush1.msra.mxu0 %v2258
  %2287 = vmatprep.subr.mxu0 0.0
  %2288 = vmatpush1.msra.mxu0 %v2259
  %2289 = vmatprep.subr.mxu0 0.0
  %2290 = vmatpush1.msra.mxu0 %v2260
  %2291 = vmatprep.subr.mxu0 0.0
  %2292 = vmatpush1.msra.mxu0 %v2261
  %2293 = vmatprep.subr.mxu0 0.0
  %2294 = vmatpush1.msra.mxu0 %v2262
  %2295 = vmatprep.subr.mxu0 0.0
  %2296 = vmatpush1.msra.mxu0 0.0
  %2297 = vmatprep.subr.mxu0 0.0
  %2298 = vmatpush1.msra.mxu0 0.0
  %2299 = vmatprep.subr.mxu0 0.0
  %2300 = vmatpush1.msra.mxu0 0.0
  %2301 = vmatprep.subr.mxu0 0.0
  %2302 = vmatpush1.msra.mxu0 0.0
  %2303 = vmatprep.subr.mxu0 0.0
  %2304 = vmatpush1.msra.mxu0 0.0
  %2305 = vmatprep.subr.mxu0 0.0
  %2306 = vmatpush1.msra.mxu0 0.0
  %2307 = vmatprep.subr.mxu0 0.0
  %2308 = vmatpush1.msra.mxu0 0.0
  %2309 = vmatprep.subr.mxu0 0.0
  %2310 = vmatpush1.msra.mxu0 0.0
  %2311 = vmatprep.subr.mxu0 0.0
  %2312 = vmatpush1.msra.mxu0 0.0
  %2313 = vmatprep.subr.mxu0 0.0
  %2314 = vmatpush1.msra.mxu0 0.0
  %2315 = vmatprep.subr.mxu0 0.0
  %2316 = vmatpush1.msra.mxu0 0.0
  %2317 = vmatprep.subr.mxu0 0.0
  %2318 = vmatpush1.msra.mxu0 0.0
  %2319 = vmatprep.subr.mxu0 0.0
  %2320 = vmatpush1.msra.mxu0 0.0
  %2321 = vmatprep.subr.mxu0 0.0
  %2322 = vmatpush1.msra.mxu0 0.0
  %2323 = vmatprep.subr.mxu0 0.0
  %2324 = vmatpush1.msra.mxu0 0.0
  %2325 = vmatprep.subr.mxu0 0.0
  %2326 = vmatpush1.msra.mxu0 0.0
  %2327 = vmatprep.mubr.f32.mxu0 0.0
  %2328 = vmatmul.mubr.f32.gmra.mrb[0].mxu0 %v2230
  %v2329 = vpop.f32.mrb[0].mxu0
  %v2330 = vadd.f32 0.0, %v2329
  %v2331 = vpop.f32.mrb[0].mxu0
  %2332 = vdwg.mxu0
  %2333 = vmatprep.subr.mxu0 0.0
  %2334 = vmatpush1.msra.mxu0 %v2231
  %2335 = vmatprep.subr.mxu0 0.0
  %2336 = vmatpush1.msra.mxu0 %v2232
  %2337 = vmatprep.subr.mxu0 0.0
  %2338 = vmatpush1.msra.mxu0 %v2233
  %2339 = vmatprep.subr.mxu0 0.0
  %2340 = vmatpush1.msra.mxu0 %v2234
  %2341 = vmatprep.subr.mxu0 0.0
  %2342 = vmatpush1.msra.mxu0 %v2235
  %2343 = vmatprep.subr.mxu0 0.0
  %2344 = vmatpush1.msra.mxu0 %v2236
  %2345 = vmatprep.subr.mxu0 0.0
  %2346 = vmatpush1.msra.mxu0 %v2237
  %2347 = vmatprep.subr.mxu0 0.0
  %2348 = vmatpush1.msra.mxu0 %v2238
  %2349 = vmatprep.subr.mxu0 0.0
  %2350 = vmatpush1.msra.mxu0 %v2239
  %2351 = vmatprep.subr.mxu0 0.0
  %2352 = vmatpush1.msra.mxu0 %v2240
  %2353 = vmatprep.subr.mxu0 0.0
  %2354 = vmatpush1.msra.mxu0 %v2241
  %2355 = vmatprep.subr.mxu0 0.0
  %2356 = vmatpush1.msra.mxu0 %v2242
  %2357 = vmatprep.subr.mxu0 0.0
  %2358 = vmatpush1.msra.mxu0 %v2243
  %2359 = vmatprep.subr.mxu0 0.0
  %2360 = vmatpush1.msra.mxu0 %v2244
  %2361 = vmatprep.subr.mxu0 0.0
  %2362 = vmatpush1.msra.mxu0 %v2245
  %2363 = vmatprep.subr.mxu0 0.0
  %2364 = vmatpush1.msra.mxu0 %v2246
  %2365 = vmatprep.subr.mxu0 0.0
  %2366 = vmatpush1.msra.mxu0 0.0
  %2367 = vmatprep.subr.mxu0 0.0
  %2368 = vmatpush1.msra.mxu0 0.0
  %2369 = vmatprep.subr.mxu0 0.0
  %2370 = vmatpush1.msra.mxu0 0.0
  %2371 = vmatprep.subr.mxu0 0.0
  %2372 = vmatpush1.msra.mxu0 0.0
  %2373 = vmatprep.subr.mxu0 0.0
  %2374 = vmatpush1.msra.mxu0 0.0
  %2375 = vmatprep.subr.mxu0 0.0
  %2376 = vmatpush1.msra.mxu0 0.0
  %2377 = vmatprep.subr.mxu0 0.0
  %2378 = vmatpush1.msra.mxu0 0.0
  %2379 = vmatprep.subr.mxu0 0.0
  %2380 = vmatpush1.msra.mxu0 0.0
  %2381 = vmatprep.subr.mxu0 0.0
  %2382 = vmatpush1.msra.mxu0 0.0
  %2383 = vmatprep.subr.mxu0 0.0
  %2384 = vmatpush1.msra.mxu0 0.0
  %2385 = vmatprep.subr.mxu0 0.0
  %2386 = vmatpush1.msra.mxu0 0.0
  %2387 = vmatprep.subr.mxu0 0.0
  %2388 = vmatpush1.msra.mxu0 0.0
  %2389 = vmatprep.subr.mxu0 0.0
  %2390 = vmatpush1.msra.mxu0 0.0
  %2391 = vmatprep.subr.mxu0 0.0
  %2392 = vmatpush1.msra.mxu0 0.0
  %2393 = vmatprep.subr.mxu0 0.0
  %2394 = vmatpush1.msra.mxu0 0.0
  %2395 = vmatprep.subr.mxu0 0.0
  %2396 = vmatpush1.msra.mxu0 0.0
  %2397 = vmatprep.mubr.f32.mxu0 0.0
  %2398 = vmatmul.mubr.f32.gmra.mrb[0].mxu0 %v2223
  %v2399 = vpop.f32.mrb[0].mxu0
  %v2400 = vadd.f32 %v2330, %v2399
  %v2401 = vpop.f32.mrb[0].mxu0
  %2402 = vdwg.mxu0
  %v2403 = vand.u32 2147483647, %v2400
  %v2404 = vsub.f32 0.0, %v2403
  %v2405 = vmul.f32 %v2404, 1.442695
  %v2406 = vpow.pop %v2405
  %vm2407 = vcmp.ge.f32.partialorder %v2400, 0.0
  %v2408 = vadd.f32 %v2406, 1.0
  %v2409 = vrcp.pop %v2408
  %v2410 = vmul.f32 1.0, %v2409
  %v2411 = vmul.f32 %v2406, %v2409
  %v2412 = vsel %vm2407, %v2410, %v2411
  %v2413 = vsub.f32 %v2412, 1.0
  %v2414 = vmul.f32 %v2413, 0.0625
  %v2415 = vadd.f32 %v2414, 1.0
  %v2416 = vlaneseq
  %v2417 = vshrl.u32 %v2416, 7
  %v2418 = vsub.s32 0, %v2417
  %v2419 = vrot.slane %v2415, %v2418
  %v2420 = vmul.f32 %v2213, %v2419
  %v2421 = vmul.f32 %v2214, %v2419
  %v2422 = vadd.f32 %v151, %v2420
  %v2423 = vadd.f32 %v156, %v2421
  %v2424 = vand.u32 2147483647, %v2422
  %v2425 = vand.u32 2147483647, %v2423
  %v2426 = vsub.f32 0.0, %v2424
  %v2427 = vsub.f32 0.0, %v2425
  %v2428 = vmul.f32 %v2426, 1.442695
  %v2429 = vpow.pop %v2428
  %v2430 = vmul.f32 %v2427, 1.442695
  %v2431 = vpow.pop %v2430
  %vm2432 = vcmp.ge.f32.partialorder %v2422, 0.0
  %vm2433 = vcmp.ge.f32.partialorder %v2423, 0.0
  %v2434 = vadd.f32 %v2429, 1.0
  %v2435 = vadd.f32 %v2431, 1.0
  %v2436 = vrcp.pop %v2434
  %v2437 = vmul.f32 1.0, %v2436
  %v2438 = vrcp.pop %v2435
  %v2439 = vmul.f32 1.0, %v2438
  %v2440 = vmul.f32 %v2429, %v2436
  %v2441 = vmul.f32 %v2431, %v2438
  %v2442 = vsel %vm2432, %v2437, %v2440
  %v2443 = vsel %vm2433, %v2439, %v2441
  %v2444 = vmul.f32 %v2422, %v2442
  %v2445 = vmul.f32 %v2423, %v2443
  %2446 = vmatprep.subr.mxu0 %v161
  %2447 = vmatpush1.msra.mxu0 %v160
  %2448 = vmatprep.subr.mxu0 %v170
  %2449 = vmatpush1.msra.mxu0 %v169
  %2450 = vmatprep.subr.mxu0 %v179
  %2451 = vmatpush1.msra.mxu0 %v178
  %2452 = vmatprep.subr.mxu0 %v188
  %2453 = vmatpush1.msra.mxu0 %v187
  %2454 = vmatprep.subr.mxu0 %v197
  %2455 = vmatpush1.msra.mxu0 %v196
  %2456 = vmatprep.subr.mxu0 %v206
  %2457 = vmatpush1.msra.mxu0 %v205
  %2458 = vmatprep.subr.mxu0 %v215
  %2459 = vmatpush1.msra.mxu0 %v214
  %2460 = vmatprep.subr.mxu0 %v224
  %2461 = vmatpush1.msra.mxu0 %v223
  %2462 = vmatprep.subr.mxu0 %v233
  %2463 = vmatpush1.msra.mxu0 %v232
  %2464 = vmatprep.subr.mxu0 %v242
  %2465 = vmatpush1.msra.mxu0 %v241
  %2466 = vmatprep.subr.mxu0 %v251
  %2467 = vmatpush1.msra.mxu0 %v250
  %2468 = vmatprep.subr.mxu0 %v260
  %2469 = vmatpush1.msra.mxu0 %v259
  %2470 = vmatprep.subr.mxu0 %v269
  %2471 = vmatpush1.msra.mxu0 %v268
  %2472 = vmatprep.subr.mxu0 %v278
  %2473 = vmatpush1.msra.mxu0 %v277
  %2474 = vmatprep.subr.mxu0 %v287
  %2475 = vmatpush1.msra.mxu0 %v286
  %2476 = vmatprep.subr.mxu0 %v296
  %2477 = vmatpush1.msra.mxu0 %v295
  %2478 = vmatprep.subr.mxu0 0.0
  %2479 = vmatpush1.msra.mxu0 0.0
  %2480 = vmatprep.subr.mxu0 0.0
  %2481 = vmatpush1.msra.mxu0 0.0
  %2482 = vmatprep.subr.mxu0 0.0
  %2483 = vmatpush1.msra.mxu0 0.0
  %2484 = vmatprep.subr.mxu0 0.0
  %2485 = vmatpush1.msra.mxu0 0.0
  %2486 = vmatprep.subr.mxu0 0.0
  %2487 = vmatpush1.msra.mxu0 0.0
  %2488 = vmatprep.subr.mxu0 0.0
  %2489 = vmatpush1.msra.mxu0 0.0
  %2490 = vmatprep.subr.mxu0 0.0
  %2491 = vmatpush1.msra.mxu0 0.0
  %2492 = vmatprep.subr.mxu0 0.0
  %2493 = vmatpush1.msra.mxu0 0.0
  %2494 = vmatprep.subr.mxu0 0.0
  %2495 = vmatpush1.msra.mxu0 0.0
  %2496 = vmatprep.subr.mxu0 0.0
  %2497 = vmatpush1.msra.mxu0 0.0
  %2498 = vmatprep.subr.mxu0 0.0
  %2499 = vmatpush1.msra.mxu0 0.0
  %2500 = vmatprep.subr.mxu0 0.0
  %2501 = vmatpush1.msra.mxu0 0.0
  %2502 = vmatprep.subr.mxu0 0.0
  %2503 = vmatpush1.msra.mxu0 0.0
  %2504 = vmatprep.subr.mxu0 0.0
  %2505 = vmatpush1.msra.mxu0 0.0
  %2506 = vmatprep.subr.mxu0 0.0
  %2507 = vmatpush1.msra.mxu0 0.0
  %2508 = vmatprep.subr.mxu0 0.0
  %2509 = vmatpush1.msra.mxu0 0.0
  %2510 = vmatprep.mubr.f32.mxu0 0.0
  %2511 = vmatmul.mubr.f32.gmra.mrb[0].mxu0 %v2444
  %v2512 = vpop.f32.mrb[0].mxu0
  %v2513 = vadd.f32 0.0, %v2512
  %v2514 = vpop.f32.mrb[0].mxu0
  %v2515 = vadd.f32 0.0, %v2514
  %2516 = vmatprep.mubr.f32.mxu0 0.0
  %2517 = vmatmul.mubr.f32.gmra.mrb[0].mxu0 %v2445
  %v2518 = vpop.f32.mrb[0].mxu0
  %v2519 = vadd.f32 0.0, %v2518
  %v2520 = vpop.f32.mrb[0].mxu0
  %v2521 = vadd.f32 0.0, %v2520
  %2522 = vdwg.mxu0
  %2523 = vmatprep.subr.mxu0 %v163
  %2524 = vmatpush1.msra.mxu0 %v162
  %2525 = vmatprep.subr.mxu0 %v172
  %2526 = vmatpush1.msra.mxu0 %v171
  %2527 = vmatprep.subr.mxu0 %v181
  %2528 = vmatpush1.msra.mxu0 %v180
  %2529 = vmatprep.subr.mxu0 %v190
  %2530 = vmatpush1.msra.mxu0 %v189
  %2531 = vmatprep.subr.mxu0 %v199
  %2532 = vmatpush1.msra.mxu0 %v198
  %2533 = vmatprep.subr.mxu0 %v208
  %2534 = vmatpush1.msra.mxu0 %v207
  %2535 = vmatprep.subr.mxu0 %v217
  %2536 = vmatpush1.msra.mxu0 %v216
  %2537 = vmatprep.subr.mxu0 %v226
  %2538 = vmatpush1.msra.mxu0 %v225
  %2539 = vmatprep.subr.mxu0 %v235
  %2540 = vmatpush1.msra.mxu0 %v234
  %2541 = vmatprep.subr.mxu0 %v244
  %2542 = vmatpush1.msra.mxu0 %v243
  %2543 = vmatprep.subr.mxu0 %v253
  %2544 = vmatpush1.msra.mxu0 %v252
  %2545 = vmatprep.subr.mxu0 %v262
  %2546 = vmatpush1.msra.mxu0 %v261
  %2547 = vmatprep.subr.mxu0 %v271
  %2548 = vmatpush1.msra.mxu0 %v270
  %2549 = vmatprep.subr.mxu0 %v280
  %2550 = vmatpush1.msra.mxu0 %v279
  %2551 = vmatprep.subr.mxu0 %v289
  %2552 = vmatpush1.msra.mxu0 %v288
  %2553 = vmatprep.subr.mxu0 %v298
  %2554 = vmatpush1.msra.mxu0 %v297
  %2555 = vmatprep.subr.mxu0 0.0
  %2556 = vmatpush1.msra.mxu0 0.0
  %2557 = vmatprep.subr.mxu0 0.0
  %2558 = vmatpush1.msra.mxu0 0.0
  %2559 = vmatprep.subr.mxu0 0.0
  %2560 = vmatpush1.msra.mxu0 0.0
  %2561 = vmatprep.subr.mxu0 0.0
  %2562 = vmatpush1.msra.mxu0 0.0
  %2563 = vmatprep.subr.mxu0 0.0
  %2564 = vmatpush1.msra.mxu0 0.0
  %2565 = vmatprep.subr.mxu0 0.0
  %2566 = vmatpush1.msra.mxu0 0.0
  %2567 = vmatprep.subr.mxu0 0.0
  %2568 = vmatpush1.msra.mxu0 0.0
  %2569 = vmatprep.subr.mxu0 0.0
  %2570 = vmatpush1.msra.mxu0 0.0
  %2571 = vmatprep.subr.mxu0 0.0
  %2572 = vmatpush1.msra.mxu0 0.0
  %2573 = vmatprep.subr.mxu0 0.0
  %2574 = vmatpush1.msra.mxu0 0.0
  %2575 = vmatprep.subr.mxu0 0.0
  %2576 = vmatpush1.msra.mxu0 0.0
  %2577 = vmatprep.subr.mxu0 0.0
  %2578 = vmatpush1.msra.mxu0 0.0
  %2579 = vmatprep.subr.mxu0 0.0
  %2580 = vmatpush1.msra.mxu0 0.0
  %2581 = vmatprep.subr.mxu0 0.0
  %2582 = vmatpush1.msra.mxu0 0.0
  %2583 = vmatprep.subr.mxu0 0.0
  %2584 = vmatpush1.msra.mxu0 0.0
  %2585 = vmatprep.subr.mxu0 0.0
  %2586 = vmatpush1.msra.mxu0 0.0
  %2587 = vmatprep.mubr.f32.mxu0 0.0
  %2588 = vmatmul.mubr.f32.gmra.mrb[0].mxu0 %v2444
  %v2589 = vpop.f32.mrb[0].mxu0
  %v2590 = vadd.f32 0.0, %v2589
  %v2591 = vpop.f32.mrb[0].mxu0
  %v2592 = vadd.f32 0.0, %v2591
  %2593 = vmatprep.mubr.f32.mxu0 0.0
  %2594 = vmatmul.mubr.f32.gmra.mrb[0].mxu0 %v2445
  %v2595 = vpop.f32.mrb[0].mxu0
  %v2596 = vadd.f32 0.0, %v2595
  %v2597 = vpop.f32.mrb[0].mxu0
  %v2598 = vadd.f32 0.0, %v2597
  %2599 = vdwg.mxu0
  %2600 = vmatprep.subr.mxu0 %v165
  %2601 = vmatpush1.msra.mxu0 %v164
  %2602 = vmatprep.subr.mxu0 %v174
  %2603 = vmatpush1.msra.mxu0 %v173
  %2604 = vmatprep.subr.mxu0 %v183
  %2605 = vmatpush1.msra.mxu0 %v182
  %2606 = vmatprep.subr.mxu0 %v192
  %2607 = vmatpush1.msra.mxu0 %v191
  %2608 = vmatprep.subr.mxu0 %v201
  %2609 = vmatpush1.msra.mxu0 %v200
  %2610 = vmatprep.subr.mxu0 %v210
  %2611 = vmatpush1.msra.mxu0 %v209
  %2612 = vmatprep.subr.mxu0 %v219
  %2613 = vmatpush1.msra.mxu0 %v218
  %2614 = vmatprep.subr.mxu0 %v228
  %2615 = vmatpush1.msra.mxu0 %v227
  %2616 = vmatprep.subr.mxu0 %v237
  %2617 = vmatpush1.msra.mxu0 %v236
  %2618 = vmatprep.subr.mxu0 %v246
  %2619 = vmatpush1.msra.mxu0 %v245
  %2620 = vmatprep.subr.mxu0 %v255
  %2621 = vmatpush1.msra.mxu0 %v254
  %2622 = vmatprep.subr.mxu0 %v264
  %2623 = vmatpush1.msra.mxu0 %v263
  %2624 = vmatprep.subr.mxu0 %v273
  %2625 = vmatpush1.msra.mxu0 %v272
  %2626 = vmatprep.subr.mxu0 %v282
  %2627 = vmatpush1.msra.mxu0 %v281
  %2628 = vmatprep.subr.mxu0 %v291
  %2629 = vmatpush1.msra.mxu0 %v290
  %2630 = vmatprep.subr.mxu0 %v300
  %2631 = vmatpush1.msra.mxu0 %v299
  %2632 = vmatprep.subr.mxu0 0.0
  %2633 = vmatpush1.msra.mxu0 0.0
  %2634 = vmatprep.subr.mxu0 0.0
  %2635 = vmatpush1.msra.mxu0 0.0
  %2636 = vmatprep.subr.mxu0 0.0
  %2637 = vmatpush1.msra.mxu0 0.0
  %2638 = vmatprep.subr.mxu0 0.0
  %2639 = vmatpush1.msra.mxu0 0.0
  %2640 = vmatprep.subr.mxu0 0.0
  %2641 = vmatpush1.msra.mxu0 0.0
  %2642 = vmatprep.subr.mxu0 0.0
  %2643 = vmatpush1.msra.mxu0 0.0
  %2644 = vmatprep.subr.mxu0 0.0
  %2645 = vmatpush1.msra.mxu0 0.0
  %2646 = vmatprep.subr.mxu0 0.0
  %2647 = vmatpush1.msra.mxu0 0.0
  %2648 = vmatprep.subr.mxu0 0.0
  %2649 = vmatpush1.msra.mxu0 0.0
  %2650 = vmatprep.subr.mxu0 0.0
  %2651 = vmatpush1.msra.mxu0 0.0
  %2652 = vmatprep.subr.mxu0 0.0
  %2653 = vmatpush1.msra.mxu0 0.0
  %2654 = vmatprep.subr.mxu0 0.0
  %2655 = vmatpush1.msra.mxu0 0.0
  %2656 = vmatprep.subr.mxu0 0.0
  %2657 = vmatpush1.msra.mxu0 0.0
  %2658 = vmatprep.subr.mxu0 0.0
  %2659 = vmatpush1.msra.mxu0 0.0
  %2660 = vmatprep.subr.mxu0 0.0
  %2661 = vmatpush1.msra.mxu0 0.0
  %2662 = vmatprep.subr.mxu0 0.0
  %2663 = vmatpush1.msra.mxu0 0.0
  %2664 = vmatprep.mubr.f32.mxu0 0.0
  %2665 = vmatmul.mubr.f32.gmra.mrb[0].mxu0 %v2444
  %v2666 = vpop.f32.mrb[0].mxu0
  %v2667 = vadd.f32 0.0, %v2666
  %v2668 = vpop.f32.mrb[0].mxu0
  %v2669 = vadd.f32 0.0, %v2668
  %2670 = vmatprep.mubr.f32.mxu0 0.0
  %2671 = vmatmul.mubr.f32.gmra.mrb[0].mxu0 %v2445
  %v2672 = vpop.f32.mrb[0].mxu0
  %v2673 = vadd.f32 0.0, %v2672
  %v2674 = vpop.f32.mrb[0].mxu0
  %v2675 = vadd.f32 0.0, %v2674
  %2676 = vdwg.mxu0
  %2677 = vmatprep.subr.mxu0 %v167
  %2678 = vmatpush1.msra.mxu0 %v166
  %2679 = vmatprep.subr.mxu0 %v176
  %2680 = vmatpush1.msra.mxu0 %v175
  %2681 = vmatprep.subr.mxu0 %v185
  %2682 = vmatpush1.msra.mxu0 %v184
  %2683 = vmatprep.subr.mxu0 %v194
  %2684 = vmatpush1.msra.mxu0 %v193
  %2685 = vmatprep.subr.mxu0 %v203
  %2686 = vmatpush1.msra.mxu0 %v202
  %2687 = vmatprep.subr.mxu0 %v212
  %2688 = vmatpush1.msra.mxu0 %v211
  %2689 = vmatprep.subr.mxu0 %v221
  %2690 = vmatpush1.msra.mxu0 %v220
  %2691 = vmatprep.subr.mxu0 %v230
  %2692 = vmatpush1.msra.mxu0 %v229
  %2693 = vmatprep.subr.mxu0 %v239
  %2694 = vmatpush1.msra.mxu0 %v238
  %2695 = vmatprep.subr.mxu0 %v248
  %2696 = vmatpush1.msra.mxu0 %v247
  %2697 = vmatprep.subr.mxu0 %v257
  %2698 = vmatpush1.msra.mxu0 %v256
  %2699 = vmatprep.subr.mxu0 %v266
  %2700 = vmatpush1.msra.mxu0 %v265
  %2701 = vmatprep.subr.mxu0 %v275
  %2702 = vmatpush1.msra.mxu0 %v274
  %2703 = vmatprep.subr.mxu0 %v284
  %2704 = vmatpush1.msra.mxu0 %v283
  %2705 = vmatprep.subr.mxu0 %v293
  %2706 = vmatpush1.msra.mxu0 %v292
  %2707 = vmatprep.subr.mxu0 %v302
  %2708 = vmatpush1.msra.mxu0 %v301
  %2709 = vmatprep.subr.mxu0 0.0
  %2710 = vmatpush1.msra.mxu0 0.0
  %2711 = vmatprep.subr.mxu0 0.0
  %2712 = vmatpush1.msra.mxu0 0.0
  %2713 = vmatprep.subr.mxu0 0.0
  %2714 = vmatpush1.msra.mxu0 0.0
  %2715 = vmatprep.subr.mxu0 0.0
  %2716 = vmatpush1.msra.mxu0 0.0
  %2717 = vmatprep.subr.mxu0 0.0
  %2718 = vmatpush1.msra.mxu0 0.0
  %2719 = vmatprep.subr.mxu0 0.0
  %2720 = vmatpush1.msra.mxu0 0.0
  %2721 = vmatprep.subr.mxu0 0.0
  %2722 = vmatpush1.msra.mxu0 0.0
  %2723 = vmatprep.subr.mxu0 0.0
  %2724 = vmatpush1.msra.mxu0 0.0
  %2725 = vmatprep.subr.mxu0 0.0
  %2726 = vmatpush1.msra.mxu0 0.0
  %2727 = vmatprep.subr.mxu0 0.0
  %2728 = vmatpush1.msra.mxu0 0.0
  %2729 = vmatprep.subr.mxu0 0.0
  %2730 = vmatpush1.msra.mxu0 0.0
  %2731 = vmatprep.subr.mxu0 0.0
  %2732 = vmatpush1.msra.mxu0 0.0
  %2733 = vmatprep.subr.mxu0 0.0
  %2734 = vmatpush1.msra.mxu0 0.0
  %2735 = vmatprep.subr.mxu0 0.0
  %2736 = vmatpush1.msra.mxu0 0.0
  %2737 = vmatprep.subr.mxu0 0.0
  %2738 = vmatpush1.msra.mxu0 0.0
  %2739 = vmatprep.subr.mxu0 0.0
  %2740 = vmatpush1.msra.mxu0 0.0
  %2741 = vmatprep.mubr.f32.mxu0 0.0
  %2742 = vmatmul.mubr.f32.gmra.mrb[0].mxu0 %v2444
  %v2743 = vpop.f32.mrb[0].mxu0
  %v2744 = vadd.f32 0.0, %v2743
  %v2745 = vpop.f32.mrb[0].mxu0
  %v2746 = vadd.f32 0.0, %v2745
  %2747 = vmatprep.mubr.f32.mxu0 0.0
  %2748 = vmatmul.mubr.f32.gmra.mrb[0].mxu0 %v2445
  %v2749 = vpop.f32.mrb[0].mxu0
  %v2750 = vadd.f32 0.0, %v2749
  %v2751 = vpop.f32.mrb[0].mxu0
  %v2752 = vadd.f32 0.0, %v2751
  %2753 = vdwg.mxu0
  %2754 = vmatprep.subr.mxu0 0.0
  %2755 = vmatpush1.msra.mxu0 %v168
  %2756 = vmatprep.subr.mxu0 0.0
  %2757 = vmatpush1.msra.mxu0 %v177
  %2758 = vmatprep.subr.mxu0 0.0
  %2759 = vmatpush1.msra.mxu0 %v186
  %2760 = vmatprep.subr.mxu0 0.0
  %2761 = vmatpush1.msra.mxu0 %v195
  %2762 = vmatprep.subr.mxu0 0.0
  %2763 = vmatpush1.msra.mxu0 %v204
  %2764 = vmatprep.subr.mxu0 0.0
  %2765 = vmatpush1.msra.mxu0 %v213
  %2766 = vmatprep.subr.mxu0 0.0
  %2767 = vmatpush1.msra.mxu0 %v222
  %2768 = vmatprep.subr.mxu0 0.0
  %2769 = vmatpush1.msra.mxu0 %v231
  %2770 = vmatprep.subr.mxu0 0.0
  %2771 = vmatpush1.msra.mxu0 %v240
  %2772 = vmatprep.subr.mxu0 0.0
  %2773 = vmatpush1.msra.mxu0 %v249
  %2774 = vmatprep.subr.mxu0 0.0
  %2775 = vmatpush1.msra.mxu0 %v258
  %2776 = vmatprep.subr.mxu0 0.0
  %2777 = vmatpush1.msra.mxu0 %v267
  %2778 = vmatprep.subr.mxu0 0.0
  %2779 = vmatpush1.msra.mxu0 %v276
  %2780 = vmatprep.subr.mxu0 0.0
  %2781 = vmatpush1.msra.mxu0 %v285
  %2782 = vmatprep.subr.mxu0 0.0
  %2783 = vmatpush1.msra.mxu0 %v294
  %2784 = vmatprep.subr.mxu0 0.0
  %2785 = vmatpush1.msra.mxu0 %v303
  %2786 = vmatprep.subr.mxu0 0.0
  %2787 = vmatpush1.msra.mxu0 0.0
  %2788 = vmatprep.subr.mxu0 0.0
  %2789 = vmatpush1.msra.mxu0 0.0
  %2790 = vmatprep.subr.mxu0 0.0
  %2791 = vmatpush1.msra.mxu0 0.0
  %2792 = vmatprep.subr.mxu0 0.0
  %2793 = vmatpush1.msra.mxu0 0.0
  %2794 = vmatprep.subr.mxu0 0.0
  %2795 = vmatpush1.msra.mxu0 0.0
  %2796 = vmatprep.subr.mxu0 0.0
  %2797 = vmatpush1.msra.mxu0 0.0
  %2798 = vmatprep.subr.mxu0 0.0
  %2799 = vmatpush1.msra.mxu0 0.0
  %2800 = vmatprep.subr.mxu0 0.0
  %2801 = vmatpush1.msra.mxu0 0.0
  %2802 = vmatprep.subr.mxu0 0.0
  %2803 = vmatpush1.msra.mxu0 0.0
  %2804 = vmatprep.subr.mxu0 0.0
  %2805 = vmatpush1.msra.mxu0 0.0
  %2806 = vmatprep.subr.mxu0 0.0
  %2807 = vmatpush1.msra.mxu0 0.0
  %2808 = vmatprep.subr.mxu0 0.0
  %2809 = vmatpush1.msra.mxu0 0.0
  %2810 = vmatprep.subr.mxu0 0.0
  %2811 = vmatpush1.msra.mxu0 0.0
  %2812 = vmatprep.subr.mxu0 0.0
  %2813 = vmatpush1.msra.mxu0 0.0
  %2814 = vmatprep.subr.mxu0 0.0
  %2815 = vmatpush1.msra.mxu0 0.0
  %2816 = vmatprep.subr.mxu0 0.0
  %2817 = vmatpush1.msra.mxu0 0.0
  %2818 = vmatprep.mubr.f32.mxu0 0.0
  %2819 = vmatmul.mubr.f32.gmra.mrb[0].mxu0 %v2444
  %v2820 = vpop.f32.mrb[0].mxu0
  %v2821 = vadd.f32 0.0, %v2820
  %v2822 = vpop.f32.mrb[0].mxu0
  %2823 = vmatprep.mubr.f32.mxu0 0.0
  %2824 = vmatmul.mubr.f32.gmra.mrb[0].mxu0 %v2445
  %v2825 = vpop.f32.mrb[0].mxu0
  %v2826 = vadd.f32 0.0, %v2825
  %v2827 = vpop.f32.mrb[0].mxu0
  %2828 = vdwg.mxu0
  %s2829 = scalar_lea.vmem %s4, 144
  %v2830 = vld [vmem:[%s2829] sm:$0xff]
  %v2831 = vld [vmem:[%s2829 + $0x8] sm:$0xff]
  %s2832 = scalar_lea.vmem %s4, 160
  %v2833 = vld [vmem:[%s2832] sm:$0xff]
  %v2834 = vld [vmem:[%s2832 + $0x8] sm:$0xff]
  %v2836 = vsel %vm692, %v2833, 0
  %v2839 = vsel %vm692, %v2834, 0
  %2841 = vmatprep.subr.mxu0 0.0
  %2842 = vmatpush1.msra.mxu0 %v2515
  %2843 = vmatprep.subr.mxu0 0.0
  %2844 = vmatpush1.msra.mxu0 %v2521
  %2845 = vmatprep.subr.mxu0 0.0
  %2846 = vmatpush1.msra.mxu0 0.0
  %2847 = vmatprep.subr.mxu0 0.0
  %2848 = vmatpush1.msra.mxu0 0.0
  %2849 = vmatprep.subr.mxu0 0.0
  %2850 = vmatpush1.msra.mxu0 0.0
  %2851 = vmatprep.subr.mxu0 0.0
  %2852 = vmatpush1.msra.mxu0 0.0
  %2853 = vmatprep.subr.mxu0 0.0
  %2854 = vmatpush1.msra.mxu0 0.0
  %2855 = vmatprep.subr.mxu0 0.0
  %2856 = vmatpush1.msra.mxu0 0.0
  %2857 = vmatprep.subr.mxu0 0.0
  %2858 = vmatpush1.msra.mxu0 0.0
  %2859 = vmatprep.subr.mxu0 0.0
  %2860 = vmatpush1.msra.mxu0 0.0
  %2861 = vmatprep.subr.mxu0 0.0
  %2862 = vmatpush1.msra.mxu0 0.0
  %2863 = vmatprep.subr.mxu0 0.0
  %2864 = vmatpush1.msra.mxu0 0.0
  %2865 = vmatprep.subr.mxu0 0.0
  %2866 = vmatpush1.msra.mxu0 0.0
  %2867 = vmatprep.subr.mxu0 0.0
  %2868 = vmatpush1.msra.mxu0 0.0
  %2869 = vmatprep.subr.mxu0 0.0
  %2870 = vmatpush1.msra.mxu0 0.0
  %2871 = vmatprep.subr.mxu0 0.0
  %2872 = vmatpush1.msra.mxu0 0.0
  %2873 = vmatprep.subr.mxu0 0.0
  %2874 = vmatpush1.msra.mxu0 0.0
  %2875 = vmatprep.subr.mxu0 0.0
  %2876 = vmatpush1.msra.mxu0 0.0
  %2877 = vmatprep.subr.mxu0 0.0
  %2878 = vmatpush1.msra.mxu0 0.0
  %2879 = vmatprep.subr.mxu0 0.0
  %2880 = vmatpush1.msra.mxu0 0.0
  %2881 = vmatprep.subr.mxu0 0.0
  %2882 = vmatpush1.msra.mxu0 0.0
  %2883 = vmatprep.subr.mxu0 0.0
  %2884 = vmatpush1.msra.mxu0 0.0
  %2885 = vmatprep.subr.mxu0 0.0
  %2886 = vmatpush1.msra.mxu0 0.0
  %2887 = vmatprep.subr.mxu0 0.0
  %2888 = vmatpush1.msra.mxu0 0.0
  %2889 = vmatprep.subr.mxu0 0.0
  %2890 = vmatpush1.msra.mxu0 0.0
  %2891 = vmatprep.subr.mxu0 0.0
  %2892 = vmatpush1.msra.mxu0 0.0
  %2893 = vmatprep.subr.mxu0 0.0
  %2894 = vmatpush1.msra.mxu0 0.0
  %2895 = vmatprep.subr.mxu0 0.0
  %2896 = vmatpush1.msra.mxu0 0.0
  %2897 = vmatprep.subr.mxu0 0.0
  %2898 = vmatpush1.msra.mxu0 0.0
  %2899 = vmatprep.subr.mxu0 0.0
  %2900 = vmatpush1.msra.mxu0 0.0
  %2901 = vmatprep.subr.mxu0 0.0
  %2902 = vmatpush1.msra.mxu0 0.0
  %2903 = vmatprep.subr.mxu0 0.0
  %2904 = vmatpush1.msra.mxu0 0.0
  %2905 = vmatprep.mubr.f32.mxu0 0.0
  %2906 = vmatmul.mubr.f32.gmra.mrb[0].mxu0 %v2836
  %v2907 = vpop.f32.mrb[0].mxu0
  %v2908 = vadd.f32 0.0, %v2907
  %v2909 = vpop.f32.mrb[0].mxu0
  %2910 = vmatprep.mubr.f32.mxu0 0.0
  %2911 = vmatmul.mubr.f32.gmra.mrb[0].mxu0 %v2839
  %v2912 = vpop.f32.mrb[0].mxu0
  %v2913 = vadd.f32 0.0, %v2912
  %v2914 = vpop.f32.mrb[0].mxu0
  %2915 = vdwg.mxu0
  %v2917 = vsel %vm692, %v2830, 0
  %v2920 = vsel %vm692, %v2831, 0
  %2922 = vmatprep.subr.mxu0 0.0
  %2923 = vmatpush1.msra.mxu0 %v2513
  %2924 = vmatprep.subr.mxu0 0.0
  %2925 = vmatpush1.msra.mxu0 %v2519
  %2926 = vmatprep.subr.mxu0 0.0
  %2927 = vmatpush1.msra.mxu0 0.0
  %2928 = vmatprep.subr.mxu0 0.0
  %2929 = vmatpush1.msra.mxu0 0.0
  %2930 = vmatprep.subr.mxu0 0.0
  %2931 = vmatpush1.msra.mxu0 0.0
  %2932 = vmatprep.subr.mxu0 0.0
  %2933 = vmatpush1.msra.mxu0 0.0
  %2934 = vmatprep.subr.mxu0 0.0
  %2935 = vmatpush1.msra.mxu0 0.0
  %2936 = vmatprep.subr.mxu0 0.0
  %2937 = vmatpush1.msra.mxu0 0.0
  %2938 = vmatprep.subr.mxu0 0.0
  %2939 = vmatpush1.msra.mxu0 0.0
  %2940 = vmatprep.subr.mxu0 0.0
  %2941 = vmatpush1.msra.mxu0 0.0
  %2942 = vmatprep.subr.mxu0 0.0
  %2943 = vmatpush1.msra.mxu0 0.0
  %2944 = vmatprep.subr.mxu0 0.0
  %2945 = vmatpush1.msra.mxu0 0.0
  %2946 = vmatprep.subr.mxu0 0.0
  %2947 = vmatpush1.msra.mxu0 0.0
  %2948 = vmatprep.subr.mxu0 0.0
  %2949 = vmatpush1.msra.mxu0 0.0
  %2950 = vmatprep.subr.mxu0 0.0
  %2951 = vmatpush1.msra.mxu0 0.0
  %2952 = vmatprep.subr.mxu0 0.0
  %2953 = vmatpush1.msra.mxu0 0.0
  %2954 = vmatprep.subr.mxu0 0.0
  %2955 = vmatpush1.msra.mxu0 0.0
  %2956 = vmatprep.subr.mxu0 0.0
  %2957 = vmatpush1.msra.mxu0 0.0
  %2958 = vmatprep.subr.mxu0 0.0
  %2959 = vmatpush1.msra.mxu0 0.0
  %2960 = vmatprep.subr.mxu0 0.0
  %2961 = vmatpush1.msra.mxu0 0.0
  %2962 = vmatprep.subr.mxu0 0.0
  %2963 = vmatpush1.msra.mxu0 0.0
  %2964 = vmatprep.subr.mxu0 0.0
  %2965 = vmatpush1.msra.mxu0 0.0
  %2966 = vmatprep.subr.mxu0 0.0
  %2967 = vmatpush1.msra.mxu0 0.0
  %2968 = vmatprep.subr.mxu0 0.0
  %2969 = vmatpush1.msra.mxu0 0.0
  %2970 = vmatprep.subr.mxu0 0.0
  %2971 = vmatpush1.msra.mxu0 0.0
  %2972 = vmatprep.subr.mxu0 0.0
  %2973 = vmatpush1.msra.mxu0 0.0
  %2974 = vmatprep.subr.mxu0 0.0
  %2975 = vmatpush1.msra.mxu0 0.0
  %2976 = vmatprep.subr.mxu0 0.0
  %2977 = vmatpush1.msra.mxu0 0.0
  %2978 = vmatprep.subr.mxu0 0.0
  %2979 = vmatpush1.msra.mxu0 0.0
  %2980 = vmatprep.subr.mxu0 0.0
  %2981 = vmatpush1.msra.mxu0 0.0
  %2982 = vmatprep.subr.mxu0 0.0
  %2983 = vmatpush1.msra.mxu0 0.0
  %2984 = vmatprep.subr.mxu0 0.0
  %2985 = vmatpush1.msra.mxu0 0.0
  %2986 = vmatprep.mubr.f32.mxu0 0.0
  %2987 = vmatmul.mubr.f32.gmra.mrb[0].mxu0 %v2917
  %v2988 = vpop.f32.mrb[0].mxu0
  %v2989 = vadd.f32 %v2908, %v2988
  %v2990 = vpop.f32.mrb[0].mxu0
  %2991 = vmatprep.mubr.f32.mxu0 0.0
  %2992 = vmatmul.mubr.f32.gmra.mrb[0].mxu0 %v2920
  %v2993 = vpop.f32.mrb[0].mxu0
  %v2994 = vadd.f32 %v2913, %v2993
  %v2995 = vpop.f32.mrb[0].mxu0
  %2996 = vdwg.mxu0
  %s2997 = scalar_lea.vmem %s4, 176
  %v2998 = vld [vmem:[%s2997] sm:$0xff]
  %v2999 = vld [vmem:[%s2997 + $0x8] sm:$0xff]
  %v3001 = vsel %vm692, %v2998, 0
  %v3004 = vsel %vm692, %v2999, 0
  %3006 = vmatprep.subr.mxu0 0.0
  %3007 = vmatpush1.msra.mxu0 %v2590
  %3008 = vmatprep.subr.mxu0 0.0
  %3009 = vmatpush1.msra.mxu0 %v2596
  %3010 = vmatprep.subr.mxu0 0.0
  %3011 = vmatpush1.msra.mxu0 0.0
  %3012 = vmatprep.subr.mxu0 0.0
  %3013 = vmatpush1.msra.mxu0 0.0
  %3014 = vmatprep.subr.mxu0 0.0
  %3015 = vmatpush1.msra.mxu0 0.0
  %3016 = vmatprep.subr.mxu0 0.0
  %3017 = vmatpush1.msra.mxu0 0.0
  %3018 = vmatprep.subr.mxu0 0.0
  %3019 = vmatpush1.msra.mxu0 0.0
  %3020 = vmatprep.subr.mxu0 0.0
  %3021 = vmatpush1.msra.mxu0 0.0
  %3022 = vmatprep.subr.mxu0 0.0
  %3023 = vmatpush1.msra.mxu0 0.0
  %3024 = vmatprep.subr.mxu0 0.0
  %3025 = vmatpush1.msra.mxu0 0.0
  %3026 = vmatprep.subr.mxu0 0.0
  %3027 = vmatpush1.msra.mxu0 0.0
  %3028 = vmatprep.subr.mxu0 0.0
  %3029 = vmatpush1.msra.mxu0 0.0
  %3030 = vmatprep.subr.mxu0 0.0
  %3031 = vmatpush1.msra.mxu0 0.0
  %3032 = vmatprep.subr.mxu0 0.0
  %3033 = vmatpush1.msra.mxu0 0.0
  %3034 = vmatprep.subr.mxu0 0.0
  %3035 = vmatpush1.msra.mxu0 0.0
  %3036 = vmatprep.subr.mxu0 0.0
  %3037 = vmatpush1.msra.mxu0 0.0
  %3038 = vmatprep.subr.mxu0 0.0
  %3039 = vmatpush1.msra.mxu0 0.0
  %3040 = vmatprep.subr.mxu0 0.0
  %3041 = vmatpush1.msra.mxu0 0.0
  %3042 = vmatprep.subr.mxu0 0.0
  %3043 = vmatpush1.msra.mxu0 0.0
  %3044 = vmatprep.subr.mxu0 0.0
  %3045 = vmatpush1.msra.mxu0 0.0
  %3046 = vmatprep.subr.mxu0 0.0
  %3047 = vmatpush1.msra.mxu0 0.0
  %3048 = vmatprep.subr.mxu0 0.0
  %3049 = vmatpush1.msra.mxu0 0.0
  %3050 = vmatprep.subr.mxu0 0.0
  %3051 = vmatpush1.msra.mxu0 0.0
  %3052 = vmatprep.subr.mxu0 0.0
  %3053 = vmatpush1.msra.mxu0 0.0
  %3054 = vmatprep.subr.mxu0 0.0
  %3055 = vmatpush1.msra.mxu0 0.0
  %3056 = vmatprep.subr.mxu0 0.0
  %3057 = vmatpush1.msra.mxu0 0.0
  %3058 = vmatprep.subr.mxu0 0.0
  %3059 = vmatpush1.msra.mxu0 0.0
  %3060 = vmatprep.subr.mxu0 0.0
  %3061 = vmatpush1.msra.mxu0 0.0
  %3062 = vmatprep.subr.mxu0 0.0
  %3063 = vmatpush1.msra.mxu0 0.0
  %3064 = vmatprep.subr.mxu0 0.0
  %3065 = vmatpush1.msra.mxu0 0.0
  %3066 = vmatprep.subr.mxu0 0.0
  %3067 = vmatpush1.msra.mxu0 0.0
  %3068 = vmatprep.subr.mxu0 0.0
  %3069 = vmatpush1.msra.mxu0 0.0
  %3070 = vmatprep.mubr.f32.mxu0 0.0
  %3071 = vmatmul.mubr.f32.gmra.mrb[0].mxu0 %v3001
  %v3072 = vpop.f32.mrb[0].mxu0
  %v3073 = vadd.f32 0.0, %v3072
  %v3074 = vpop.f32.mrb[0].mxu0
  %3075 = vmatprep.mubr.f32.mxu0 0.0
  %3076 = vmatmul.mubr.f32.gmra.mrb[0].mxu0 %v3004
  %v3077 = vpop.f32.mrb[0].mxu0
  %v3078 = vadd.f32 0.0, %v3077
  %v3079 = vpop.f32.mrb[0].mxu0
  %3080 = vdwg.mxu0
  %v3081 = vadd.f32 %v2989, %v3073
  %v3082 = vadd.f32 %v2994, %v3078
  %s3083 = scalar_lea.vmem %s4, 192
  %v3084 = vld [vmem:[%s3083] sm:$0xff]
  %v3085 = vld [vmem:[%s3083 + $0x8] sm:$0xff]
  %v3087 = vsel %vm692, %v3084, 0
  %v3090 = vsel %vm692, %v3085, 0
  %3092 = vmatprep.subr.mxu0 0.0
  %3093 = vmatpush1.msra.mxu0 %v2592
  %3094 = vmatprep.subr.mxu0 0.0
  %3095 = vmatpush1.msra.mxu0 %v2598
  %3096 = vmatprep.subr.mxu0 0.0
  %3097 = vmatpush1.msra.mxu0 0.0
  %3098 = vmatprep.subr.mxu0 0.0
  %3099 = vmatpush1.msra.mxu0 0.0
  %3100 = vmatprep.subr.mxu0 0.0
  %3101 = vmatpush1.msra.mxu0 0.0
  %3102 = vmatprep.subr.mxu0 0.0
  %3103 = vmatpush1.msra.mxu0 0.0
  %3104 = vmatprep.subr.mxu0 0.0
  %3105 = vmatpush1.msra.mxu0 0.0
  %3106 = vmatprep.subr.mxu0 0.0
  %3107 = vmatpush1.msra.mxu0 0.0
  %3108 = vmatprep.subr.mxu0 0.0
  %3109 = vmatpush1.msra.mxu0 0.0
  %3110 = vmatprep.subr.mxu0 0.0
  %3111 = vmatpush1.msra.mxu0 0.0
  %3112 = vmatprep.subr.mxu0 0.0
  %3113 = vmatpush1.msra.mxu0 0.0
  %3114 = vmatprep.subr.mxu0 0.0
  %3115 = vmatpush1.msra.mxu0 0.0
  %3116 = vmatprep.subr.mxu0 0.0
  %3117 = vmatpush1.msra.mxu0 0.0
  %3118 = vmatprep.subr.mxu0 0.0
  %3119 = vmatpush1.msra.mxu0 0.0
  %3120 = vmatprep.subr.mxu0 0.0
  %3121 = vmatpush1.msra.mxu0 0.0
  %3122 = vmatprep.subr.mxu0 0.0
  %3123 = vmatpush1.msra.mxu0 0.0
  %3124 = vmatprep.subr.mxu0 0.0
  %3125 = vmatpush1.msra.mxu0 0.0
  %3126 = vmatprep.subr.mxu0 0.0
  %3127 = vmatpush1.msra.mxu0 0.0
  %3128 = vmatprep.subr.mxu0 0.0
  %3129 = vmatpush1.msra.mxu0 0.0
  %3130 = vmatprep.subr.mxu0 0.0
  %3131 = vmatpush1.msra.mxu0 0.0
  %3132 = vmatprep.subr.mxu0 0.0
  %3133 = vmatpush1.msra.mxu0 0.0
  %3134 = vmatprep.subr.mxu0 0.0
  %3135 = vmatpush1.msra.mxu0 0.0
  %3136 = vmatprep.subr.mxu0 0.0
  %3137 = vmatpush1.msra.mxu0 0.0
  %3138 = vmatprep.subr.mxu0 0.0
  %3139 = vmatpush1.msra.mxu0 0.0
  %3140 = vmatprep.subr.mxu0 0.0
  %3141 = vmatpush1.msra.mxu0 0.0
  %3142 = vmatprep.subr.mxu0 0.0
  %3143 = vmatpush1.msra.mxu0 0.0
  %3144 = vmatprep.subr.mxu0 0.0
  %3145 = vmatpush1.msra.mxu0 0.0
  %3146 = vmatprep.subr.mxu0 0.0
  %3147 = vmatpush1.msra.mxu0 0.0
  %3148 = vmatprep.subr.mxu0 0.0
  %3149 = vmatpush1.msra.mxu0 0.0
  %3150 = vmatprep.subr.mxu0 0.0
  %3151 = vmatpush1.msra.mxu0 0.0
  %3152 = vmatprep.subr.mxu0 0.0
  %3153 = vmatpush1.msra.mxu0 0.0
  %3154 = vmatprep.subr.mxu0 0.0
  %3155 = vmatpush1.msra.mxu0 0.0
  %3156 = vmatprep.mubr.f32.mxu0 0.0
  %3157 = vmatmul.mubr.f32.gmra.mrb[0].mxu0 %v3087
  %v3158 = vpop.f32.mrb[0].mxu0
  %v3159 = vadd.f32 0.0, %v3158
  %v3160 = vpop.f32.mrb[0].mxu0
  %3161 = vmatprep.mubr.f32.mxu0 0.0
  %3162 = vmatmul.mubr.f32.gmra.mrb[0].mxu0 %v3090
  %v3163 = vpop.f32.mrb[0].mxu0
  %v3164 = vadd.f32 0.0, %v3163
  %v3165 = vpop.f32.mrb[0].mxu0
  %3166 = vdwg.mxu0
  %v3167 = vadd.f32 %v3081, %v3159
  %v3168 = vadd.f32 %v3082, %v3164
  %s3169 = scalar_lea.vmem %s4, 208
  %v3170 = vld [vmem:[%s3169] sm:$0xff]
  %v3171 = vld [vmem:[%s3169 + $0x8] sm:$0xff]
  %v3173 = vsel %vm692, %v3170, 0
  %v3176 = vsel %vm692, %v3171, 0
  %3178 = vmatprep.subr.mxu0 0.0
  %3179 = vmatpush1.msra.mxu0 %v2667
  %3180 = vmatprep.subr.mxu0 0.0
  %3181 = vmatpush1.msra.mxu0 %v2673
  %3182 = vmatprep.subr.mxu0 0.0
  %3183 = vmatpush1.msra.mxu0 0.0
  %3184 = vmatprep.subr.mxu0 0.0
  %3185 = vmatpush1.msra.mxu0 0.0
  %3186 = vmatprep.subr.mxu0 0.0
  %3187 = vmatpush1.msra.mxu0 0.0
  %3188 = vmatprep.subr.mxu0 0.0
  %3189 = vmatpush1.msra.mxu0 0.0
  %3190 = vmatprep.subr.mxu0 0.0
  %3191 = vmatpush1.msra.mxu0 0.0
  %3192 = vmatprep.subr.mxu0 0.0
  %3193 = vmatpush1.msra.mxu0 0.0
  %3194 = vmatprep.subr.mxu0 0.0
  %3195 = vmatpush1.msra.mxu0 0.0
  %3196 = vmatprep.subr.mxu0 0.0
  %3197 = vmatpush1.msra.mxu0 0.0
  %3198 = vmatprep.subr.mxu0 0.0
  %3199 = vmatpush1.msra.mxu0 0.0
  %3200 = vmatprep.subr.mxu0 0.0
  %3201 = vmatpush1.msra.mxu0 0.0
  %3202 = vmatprep.subr.mxu0 0.0
  %3203 = vmatpush1.msra.mxu0 0.0
  %3204 = vmatprep.subr.mxu0 0.0
  %3205 = vmatpush1.msra.mxu0 0.0
  %3206 = vmatprep.subr.mxu0 0.0
  %3207 = vmatpush1.msra.mxu0 0.0
  %3208 = vmatprep.subr.mxu0 0.0
  %3209 = vmatpush1.msra.mxu0 0.0
  %3210 = vmatprep.subr.mxu0 0.0
  %3211 = vmatpush1.msra.mxu0 0.0
  %3212 = vmatprep.subr.mxu0 0.0
  %3213 = vmatpush1.msra.mxu0 0.0
  %3214 = vmatprep.subr.mxu0 0.0
  %3215 = vmatpush1.msra.mxu0 0.0
  %3216 = vmatprep.subr.mxu0 0.0
  %3217 = vmatpush1.msra.mxu0 0.0
  %3218 = vmatprep.subr.mxu0 0.0
  %3219 = vmatpush1.msra.mxu0 0.0
  %3220 = vmatprep.subr.mxu0 0.0
  %3221 = vmatpush1.msra.mxu0 0.0
  %3222 = vmatprep.subr.mxu0 0.0
  %3223 = vmatpush1.msra.mxu0 0.0
  %3224 = vmatprep.subr.mxu0 0.0
  %3225 = vmatpush1.msra.mxu0 0.0
  %3226 = vmatprep.subr.mxu0 0.0
  %3227 = vmatpush1.msra.mxu0 0.0
  %3228 = vmatprep.subr.mxu0 0.0
  %3229 = vmatpush1.msra.mxu0 0.0
  %3230 = vmatprep.subr.mxu0 0.0
  %3231 = vmatpush1.msra.mxu0 0.0
  %3232 = vmatprep.subr.mxu0 0.0
  %3233 = vmatpush1.msra.mxu0 0.0
  %3234 = vmatprep.subr.mxu0 0.0
  %3235 = vmatpush1.msra.mxu0 0.0
  %3236 = vmatprep.subr.mxu0 0.0
  %3237 = vmatpush1.msra.mxu0 0.0
  %3238 = vmatprep.subr.mxu0 0.0
  %3239 = vmatpush1.msra.mxu0 0.0
  %3240 = vmatprep.subr.mxu0 0.0
  %3241 = vmatpush1.msra.mxu0 0.0
  %3242 = vmatprep.mubr.f32.mxu0 0.0
  %3243 = vmatmul.mubr.f32.gmra.mrb[0].mxu0 %v3173
  %v3244 = vpop.f32.mrb[0].mxu0
  %v3245 = vadd.f32 0.0, %v3244
  %v3246 = vpop.f32.mrb[0].mxu0
  %3247 = vmatprep.mubr.f32.mxu0 0.0
  %3248 = vmatmul.mubr.f32.gmra.mrb[0].mxu0 %v3176
  %v3249 = vpop.f32.mrb[0].mxu0
  %v3250 = vadd.f32 0.0, %v3249
  %v3251 = vpop.f32.mrb[0].mxu0
  %3252 = vdwg.mxu0
  %v3253 = vadd.f32 %v3167, %v3245
  %v3254 = vadd.f32 %v3168, %v3250
  %s3255 = scalar_lea.vmem %s4, 224
  %v3256 = vld [vmem:[%s3255] sm:$0xff]
  %v3257 = vld [vmem:[%s3255 + $0x8] sm:$0xff]
  %v3259 = vsel %vm692, %v3256, 0
  %v3262 = vsel %vm692, %v3257, 0
  %3264 = vmatprep.subr.mxu0 0.0
  %3265 = vmatpush1.msra.mxu0 %v2669
  %3266 = vmatprep.subr.mxu0 0.0
  %3267 = vmatpush1.msra.mxu0 %v2675
  %3268 = vmatprep.subr.mxu0 0.0
  %3269 = vmatpush1.msra.mxu0 0.0
  %3270 = vmatprep.subr.mxu0 0.0
  %3271 = vmatpush1.msra.mxu0 0.0
  %3272 = vmatprep.subr.mxu0 0.0
  %3273 = vmatpush1.msra.mxu0 0.0
  %3274 = vmatprep.subr.mxu0 0.0
  %3275 = vmatpush1.msra.mxu0 0.0
  %3276 = vmatprep.subr.mxu0 0.0
  %3277 = vmatpush1.msra.mxu0 0.0
  %3278 = vmatprep.subr.mxu0 0.0
  %3279 = vmatpush1.msra.mxu0 0.0
  %3280 = vmatprep.subr.mxu0 0.0
  %3281 = vmatpush1.msra.mxu0 0.0
  %3282 = vmatprep.subr.mxu0 0.0
  %3283 = vmatpush1.msra.mxu0 0.0
  %3284 = vmatprep.subr.mxu0 0.0
  %3285 = vmatpush1.msra.mxu0 0.0
  %3286 = vmatprep.subr.mxu0 0.0
  %3287 = vmatpush1.msra.mxu0 0.0
  %3288 = vmatprep.subr.mxu0 0.0
  %3289 = vmatpush1.msra.mxu0 0.0
  %3290 = vmatprep.subr.mxu0 0.0
  %3291 = vmatpush1.msra.mxu0 0.0
  %3292 = vmatprep.subr.mxu0 0.0
  %3293 = vmatpush1.msra.mxu0 0.0
  %3294 = vmatprep.subr.mxu0 0.0
  %3295 = vmatpush1.msra.mxu0 0.0
  %3296 = vmatprep.subr.mxu0 0.0
  %3297 = vmatpush1.msra.mxu0 0.0
  %3298 = vmatprep.subr.mxu0 0.0
  %3299 = vmatpush1.msra.mxu0 0.0
  %3300 = vmatprep.subr.mxu0 0.0
  %3301 = vmatpush1.msra.mxu0 0.0
  %3302 = vmatprep.subr.mxu0 0.0
  %3303 = vmatpush1.msra.mxu0 0.0
  %3304 = vmatprep.subr.mxu0 0.0
  %3305 = vmatpush1.msra.mxu0 0.0
  %3306 = vmatprep.subr.mxu0 0.0
  %3307 = vmatpush1.msra.mxu0 0.0
  %3308 = vmatprep.subr.mxu0 0.0
  %3309 = vmatpush1.msra.mxu0 0.0
  %3310 = vmatprep.subr.mxu0 0.0
  %3311 = vmatpush1.msra.mxu0 0.0
  %3312 = vmatprep.subr.mxu0 0.0
  %3313 = vmatpush1.msra.mxu0 0.0
  %3314 = vmatprep.subr.mxu0 0.0
  %3315 = vmatpush1.msra.mxu0 0.0
  %3316 = vmatprep.subr.mxu0 0.0
  %3317 = vmatpush1.msra.mxu0 0.0
  %3318 = vmatprep.subr.mxu0 0.0
  %3319 = vmatpush1.msra.mxu0 0.0
  %3320 = vmatprep.subr.mxu0 0.0
  %3321 = vmatpush1.msra.mxu0 0.0
  %3322 = vmatprep.subr.mxu0 0.0
  %3323 = vmatpush1.msra.mxu0 0.0
  %3324 = vmatprep.subr.mxu0 0.0
  %3325 = vmatpush1.msra.mxu0 0.0
  %3326 = vmatprep.subr.mxu0 0.0
  %3327 = vmatpush1.msra.mxu0 0.0
  %3328 = vmatprep.mubr.f32.mxu0 0.0
  %3329 = vmatmul.mubr.f32.gmra.mrb[0].mxu0 %v3259
  %v3330 = vpop.f32.mrb[0].mxu0
  %v3331 = vadd.f32 0.0, %v3330
  %v3332 = vpop.f32.mrb[0].mxu0
  %3333 = vmatprep.mubr.f32.mxu0 0.0
  %3334 = vmatmul.mubr.f32.gmra.mrb[0].mxu0 %v3262
  %v3335 = vpop.f32.mrb[0].mxu0
  %v3336 = vadd.f32 0.0, %v3335
  %v3337 = vpop.f32.mrb[0].mxu0
  %3338 = vdwg.mxu0
  %v3339 = vadd.f32 %v3253, %v3331
  %v3340 = vadd.f32 %v3254, %v3336
  %s3341 = scalar_lea.vmem %s4, 240
  %v3342 = vld [vmem:[%s3341] sm:$0xff]
  %v3343 = vld [vmem:[%s3341 + $0x8] sm:$0xff]
  %v3345 = vsel %vm692, %v3342, 0
  %v3348 = vsel %vm692, %v3343, 0
  %3350 = vmatprep.subr.mxu0 0.0
  %3351 = vmatpush1.msra.mxu0 %v2744
  %3352 = vmatprep.subr.mxu0 0.0
  %3353 = vmatpush1.msra.mxu0 %v2750
  %3354 = vmatprep.subr.mxu0 0.0
  %3355 = vmatpush1.msra.mxu0 0.0
  %3356 = vmatprep.subr.mxu0 0.0
  %3357 = vmatpush1.msra.mxu0 0.0
  %3358 = vmatprep.subr.mxu0 0.0
  %3359 = vmatpush1.msra.mxu0 0.0
  %3360 = vmatprep.subr.mxu0 0.0
  %3361 = vmatpush1.msra.mxu0 0.0
  %3362 = vmatprep.subr.mxu0 0.0
  %3363 = vmatpush1.msra.mxu0 0.0
  %3364 = vmatprep.subr.mxu0 0.0
  %3365 = vmatpush1.msra.mxu0 0.0
  %3366 = vmatprep.subr.mxu0 0.0
  %3367 = vmatpush1.msra.mxu0 0.0
  %3368 = vmatprep.subr.mxu0 0.0
  %3369 = vmatpush1.msra.mxu0 0.0
  %3370 = vmatprep.subr.mxu0 0.0
  %3371 = vmatpush1.msra.mxu0 0.0
  %3372 = vmatprep.subr.mxu0 0.0
  %3373 = vmatpush1.msra.mxu0 0.0
  %3374 = vmatprep.subr.mxu0 0.0
  %3375 = vmatpush1.msra.mxu0 0.0
  %3376 = vmatprep.subr.mxu0 0.0
  %3377 = vmatpush1.msra.mxu0 0.0
  %3378 = vmatprep.subr.mxu0 0.0
  %3379 = vmatpush1.msra.mxu0 0.0
  %3380 = vmatprep.subr.mxu0 0.0
  %3381 = vmatpush1.msra.mxu0 0.0
  %3382 = vmatprep.subr.mxu0 0.0
  %3383 = vmatpush1.msra.mxu0 0.0
  %3384 = vmatprep.subr.mxu0 0.0
  %3385 = vmatpush1.msra.mxu0 0.0
  %3386 = vmatprep.subr.mxu0 0.0
  %3387 = vmatpush1.msra.mxu0 0.0
  %3388 = vmatprep.subr.mxu0 0.0
  %3389 = vmatpush1.msra.mxu0 0.0
  %3390 = vmatprep.subr.mxu0 0.0
  %3391 = vmatpush1.msra.mxu0 0.0
  %3392 = vmatprep.subr.mxu0 0.0
  %3393 = vmatpush1.msra.mxu0 0.0
  %3394 = vmatprep.subr.mxu0 0.0
  %3395 = vmatpush1.msra.mxu0 0.0
  %3396 = vmatprep.subr.mxu0 0.0
  %3397 = vmatpush1.msra.mxu0 0.0
  %3398 = vmatprep.subr.mxu0 0.0
  %3399 = vmatpush1.msra.mxu0 0.0
  %3400 = vmatprep.subr.mxu0 0.0
  %3401 = vmatpush1.msra.mxu0 0.0
  %3402 = vmatprep.subr.mxu0 0.0
  %3403 = vmatpush1.msra.mxu0 0.0
  %3404 = vmatprep.subr.mxu0 0.0
  %3405 = vmatpush1.msra.mxu0 0.0
  %3406 = vmatprep.subr.mxu0 0.0
  %3407 = vmatpush1.msra.mxu0 0.0
  %3408 = vmatprep.subr.mxu0 0.0
  %3409 = vmatpush1.msra.mxu0 0.0
  %3410 = vmatprep.subr.mxu0 0.0
  %3411 = vmatpush1.msra.mxu0 0.0
  %3412 = vmatprep.subr.mxu0 0.0
  %3413 = vmatpush1.msra.mxu0 0.0
  %3414 = vmatprep.mubr.f32.mxu0 0.0
  %3415 = vmatmul.mubr.f32.gmra.mrb[0].mxu0 %v3345
  %v3416 = vpop.f32.mrb[0].mxu0
  %v3417 = vadd.f32 0.0, %v3416
  %v3418 = vpop.f32.mrb[0].mxu0
  %3419 = vmatprep.mubr.f32.mxu0 0.0
  %3420 = vmatmul.mubr.f32.gmra.mrb[0].mxu0 %v3348
  %v3421 = vpop.f32.mrb[0].mxu0
  %v3422 = vadd.f32 0.0, %v3421
  %v3423 = vpop.f32.mrb[0].mxu0
  %3424 = vdwg.mxu0
  %v3425 = vadd.f32 %v3339, %v3417
  %v3426 = vadd.f32 %v3340, %v3422
  %s3427 = scalar_lea.vmem %s4, 256
  %v3428 = vld [vmem:[%s3427] sm:$0xff]
  %v3429 = vld [vmem:[%s3427 + $0x8] sm:$0xff]
  %v3431 = vsel %vm692, %v3428, 0
  %v3434 = vsel %vm692, %v3429, 0
  %3436 = vmatprep.subr.mxu0 0.0
  %3437 = vmatpush1.msra.mxu0 %v2746
  %3438 = vmatprep.subr.mxu0 0.0
  %3439 = vmatpush1.msra.mxu0 %v2752
  %3440 = vmatprep.subr.mxu0 0.0
  %3441 = vmatpush1.msra.mxu0 0.0
  %3442 = vmatprep.subr.mxu0 0.0
  %3443 = vmatpush1.msra.mxu0 0.0
  %3444 = vmatprep.subr.mxu0 0.0
  %3445 = vmatpush1.msra.mxu0 0.0
  %3446 = vmatprep.subr.mxu0 0.0
  %3447 = vmatpush1.msra.mxu0 0.0
  %3448 = vmatprep.subr.mxu0 0.0
  %3449 = vmatpush1.msra.mxu0 0.0
  %3450 = vmatprep.subr.mxu0 0.0
  %3451 = vmatpush1.msra.mxu0 0.0
  %3452 = vmatprep.subr.mxu0 0.0
  %3453 = vmatpush1.msra.mxu0 0.0
  %3454 = vmatprep.subr.mxu0 0.0
  %3455 = vmatpush1.msra.mxu0 0.0
  %3456 = vmatprep.subr.mxu0 0.0
  %3457 = vmatpush1.msra.mxu0 0.0
  %3458 = vmatprep.subr.mxu0 0.0
  %3459 = vmatpush1.msra.mxu0 0.0
  %3460 = vmatprep.subr.mxu0 0.0
  %3461 = vmatpush1.msra.mxu0 0.0
  %3462 = vmatprep.subr.mxu0 0.0
  %3463 = vmatpush1.msra.mxu0 0.0
  %3464 = vmatprep.subr.mxu0 0.0
  %3465 = vmatpush1.msra.mxu0 0.0
  %3466 = vmatprep.subr.mxu0 0.0
  %3467 = vmatpush1.msra.mxu0 0.0
  %3468 = vmatprep.subr.mxu0 0.0
  %3469 = vmatpush1.msra.mxu0 0.0
  %3470 = vmatprep.subr.mxu0 0.0
  %3471 = vmatpush1.msra.mxu0 0.0
  %3472 = vmatprep.subr.mxu0 0.0
  %3473 = vmatpush1.msra.mxu0 0.0
  %3474 = vmatprep.subr.mxu0 0.0
  %3475 = vmatpush1.msra.mxu0 0.0
  %3476 = vmatprep.subr.mxu0 0.0
  %3477 = vmatpush1.msra.mxu0 0.0
  %3478 = vmatprep.subr.mxu0 0.0
  %3479 = vmatpush1.msra.mxu0 0.0
  %3480 = vmatprep.subr.mxu0 0.0
  %3481 = vmatpush1.msra.mxu0 0.0
  %3482 = vmatprep.subr.mxu0 0.0
  %3483 = vmatpush1.msra.mxu0 0.0
  %3484 = vmatprep.subr.mxu0 0.0
  %3485 = vmatpush1.msra.mxu0 0.0
  %3486 = vmatprep.subr.mxu0 0.0
  %3487 = vmatpush1.msra.mxu0 0.0
  %3488 = vmatprep.subr.mxu0 0.0
  %3489 = vmatpush1.msra.mxu0 0.0
  %3490 = vmatprep.subr.mxu0 0.0
  %3491 = vmatpush1.msra.mxu0 0.0
  %3492 = vmatprep.subr.mxu0 0.0
  %3493 = vmatpush1.msra.mxu0 0.0
  %3494 = vmatprep.subr.mxu0 0.0
  %3495 = vmatpush1.msra.mxu0 0.0
  %3496 = vmatprep.subr.mxu0 0.0
  %3497 = vmatpush1.msra.mxu0 0.0
  %3498 = vmatprep.subr.mxu0 0.0
  %3499 = vmatpush1.msra.mxu0 0.0
  %3500 = vmatprep.mubr.f32.mxu0 0.0
  %3501 = vmatmul.mubr.f32.gmra.mrb[0].mxu0 %v3431
  %v3502 = vpop.f32.mrb[0].mxu0
  %v3503 = vadd.f32 0.0, %v3502
  %v3504 = vpop.f32.mrb[0].mxu0
  %3505 = vmatprep.mubr.f32.mxu0 0.0
  %3506 = vmatmul.mubr.f32.gmra.mrb[0].mxu0 %v3434
  %v3507 = vpop.f32.mrb[0].mxu0
  %v3508 = vadd.f32 0.0, %v3507
  %v3509 = vpop.f32.mrb[0].mxu0
  %3510 = vdwg.mxu0
  %v3511 = vadd.f32 %v3425, %v3503
  %v3512 = vadd.f32 %v3426, %v3508
  %s3513 = scalar_lea.vmem %s4, 272
  %v3514 = vld [vmem:[%s3513] sm:$0xff]
  %v3515 = vld [vmem:[%s3513 + $0x8] sm:$0xff]
  %v3517 = vsel %vm692, %v3514, 0
  %v3520 = vsel %vm692, %v3515, 0
  %3522 = vmatprep.subr.mxu0 0.0
  %3523 = vmatpush1.msra.mxu0 %v2821
  %3524 = vmatprep.subr.mxu0 0.0
  %3525 = vmatpush1.msra.mxu0 %v2826
  %3526 = vmatprep.subr.mxu0 0.0
  %3527 = vmatpush1.msra.mxu0 0.0
  %3528 = vmatprep.subr.mxu0 0.0
  %3529 = vmatpush1.msra.mxu0 0.0
  %3530 = vmatprep.subr.mxu0 0.0
  %3531 = vmatpush1.msra.mxu0 0.0
  %3532 = vmatprep.subr.mxu0 0.0
  %3533 = vmatpush1.msra.mxu0 0.0
  %3534 = vmatprep.subr.mxu0 0.0
  %3535 = vmatpush1.msra.mxu0 0.0
  %3536 = vmatprep.subr.mxu0 0.0
  %3537 = vmatpush1.msra.mxu0 0.0
  %3538 = vmatprep.subr.mxu0 0.0
  %3539 = vmatpush1.msra.mxu0 0.0
  %3540 = vmatprep.subr.mxu0 0.0
  %3541 = vmatpush1.msra.mxu0 0.0
  %3542 = vmatprep.subr.mxu0 0.0
  %3543 = vmatpush1.msra.mxu0 0.0
  %3544 = vmatprep.subr.mxu0 0.0
  %3545 = vmatpush1.msra.mxu0 0.0
  %3546 = vmatprep.subr.mxu0 0.0
  %3547 = vmatpush1.msra.mxu0 0.0
  %3548 = vmatprep.subr.mxu0 0.0
  %3549 = vmatpush1.msra.mxu0 0.0
  %3550 = vmatprep.subr.mxu0 0.0
  %3551 = vmatpush1.msra.mxu0 0.0
  %3552 = vmatprep.subr.mxu0 0.0
  %3553 = vmatpush1.msra.mxu0 0.0
  %3554 = vmatprep.subr.mxu0 0.0
  %3555 = vmatpush1.msra.mxu0 0.0
  %3556 = vmatprep.subr.mxu0 0.0
  %3557 = vmatpush1.msra.mxu0 0.0
  %3558 = vmatprep.subr.mxu0 0.0
  %3559 = vmatpush1.msra.mxu0 0.0
  %3560 = vmatprep.subr.mxu0 0.0
  %3561 = vmatpush1.msra.mxu0 0.0
  %3562 = vmatprep.subr.mxu0 0.0
  %3563 = vmatpush1.msra.mxu0 0.0
  %3564 = vmatprep.subr.mxu0 0.0
  %3565 = vmatpush1.msra.mxu0 0.0
  %3566 = vmatprep.subr.mxu0 0.0
  %3567 = vmatpush1.msra.mxu0 0.0
  %3568 = vmatprep.subr.mxu0 0.0
  %3569 = vmatpush1.msra.mxu0 0.0
  %3570 = vmatprep.subr.mxu0 0.0
  %3571 = vmatpush1.msra.mxu0 0.0
  %3572 = vmatprep.subr.mxu0 0.0
  %3573 = vmatpush1.msra.mxu0 0.0
  %3574 = vmatprep.subr.mxu0 0.0
  %3575 = vmatpush1.msra.mxu0 0.0
  %3576 = vmatprep.subr.mxu0 0.0
  %3577 = vmatpush1.msra.mxu0 0.0
  %3578 = vmatprep.subr.mxu0 0.0
  %3579 = vmatpush1.msra.mxu0 0.0
  %3580 = vmatprep.subr.mxu0 0.0
  %3581 = vmatpush1.msra.mxu0 0.0
  %3582 = vmatprep.subr.mxu0 0.0
  %3583 = vmatpush1.msra.mxu0 0.0
  %3584 = vmatprep.subr.mxu0 0.0
  %3585 = vmatpush1.msra.mxu0 0.0
  %3586 = vmatprep.mubr.f32.mxu0 0.0
  %3587 = vmatmul.mubr.f32.gmra.mrb[0].mxu0 %v3517
  %v3588 = vpop.f32.mrb[0].mxu0
  %v3589 = vadd.f32 0.0, %v3588
  %v3590 = vpop.f32.mrb[0].mxu0
  %3591 = vmatprep.mubr.f32.mxu0 0.0
  %3592 = vmatmul.mubr.f32.gmra.mrb[0].mxu0 %v3520
  %v3593 = vpop.f32.mrb[0].mxu0
  %v3594 = vadd.f32 0.0, %v3593
  %v3595 = vpop.f32.mrb[0].mxu0
  %3596 = vdwg.mxu0
  %v3597 = vadd.f32 %v3511, %v3589
  %v3598 = vadd.f32 %v3512, %v3594
  %s3599 = scalar_lea.vmem %s5, 16
  %v3600 = vld [vmem:[%s3599] sm:$0xff]
  %v3601 = vld [vmem:[%s3599 + $0x8] sm:$0xff]
  %3603 = vset.pattern.permute.xlu0 0
  %3604 = vperm.xlu0 %3603, %v3600
  %v3605 = vpop.permute.xlu0 %3604
  %3608 = vset.pattern.permute.xlu0 0
  %3609 = vperm.xlu0 %3608, %v3601
  %v3610 = vpop.permute.xlu0 %3609
  %v3612 = vmul.f32 %v3597, %v3605
  %v3613 = vmul.f32 %v3598, %v3610
  %s3614 = scalar_lea.vmem %s6, 16
  %v3615 = vld [vmem:[%s3614] sm:$0xff]
  %v3616 = vld [vmem:[%s3614 + $0x8] sm:$0xff]
  %3618 = vset.pattern.permute.xlu0 0
  %3619 = vperm.xlu0 %3618, %v3615
  %v3620 = vpop.permute.xlu0 %3619
  %3623 = vset.pattern.permute.xlu0 0
  %3624 = vperm.xlu0 %3623, %v3616
  %v3625 = vpop.permute.xlu0 %3624
  %v3627 = vadd.f32 %v3612, %v3620
  %v3628 = vadd.f32 %v3613, %v3625
  %s3629 = scalar_lea.vmem %s7, 2
  %v3630 = vld [vmem:[%s3629] sm:$0x3]
  %s3631 = scalar_lea.vmem %s8, 16
  %v3632 = vld [vmem:[%s3631] sm:$0xff]
  %v3633 = vld [vmem:[%s3631 + $0x8] sm:$0xff]
  %v3634 = vsel %vm1488, %v3627, 0.0
  %3635 = vadd.xlane.f32.xlu0 %v3634
  %v3636 = vpop.xlane.xlu0 %3635
  %v3637 = vsel %vm1488, %v3628, 0.0
  %3638 = vadd.xlane.f32.xlu0 %v3637
  %v3639 = vpop.xlane.xlu0 %3638
  %v3640 = vmul.f32 %v3636, %v1495
  %v3641 = vmul.f32 %v3639, %v1495
  %v3642 = vsel %vm1488, %v3627, -inf
  %3643 = vmax.xlane.f32.xlu0 %v3642
  %v3644 = vpop.xlane.xlu0 %3643
  %v3645 = vsel %vm1488, %v3628, -inf
  %3646 = vmax.xlane.f32.xlu0 %v3645
  %v3647 = vpop.xlane.xlu0 %3646
  %v3649 = vsel %vm692, %v3630, 0
  %3651 = vmatprep.subr.mxu0 0.0
  %3652 = vmatpush1.msra.mxu0 %v3640
  %3653 = vmatprep.subr.mxu0 0.0
  %3654 = vmatpush1.msra.mxu0 %v3641
  %3655 = vmatprep.subr.mxu0 0.0
  %3656 = vmatpush1.msra.mxu0 0.0
  %3657 = vmatprep.subr.mxu0 0.0
  %3658 = vmatpush1.msra.mxu0 0.0
  %3659 = vmatprep.subr.mxu0 0.0
  %3660 = vmatpush1.msra.mxu0 0.0
  %3661 = vmatprep.subr.mxu0 0.0
  %3662 = vmatpush1.msra.mxu0 0.0
  %3663 = vmatprep.subr.mxu0 0.0
  %3664 = vmatpush1.msra.mxu0 0.0
  %3665 = vmatprep.subr.mxu0 0.0
  %3666 = vmatpush1.msra.mxu0 0.0
  %3667 = vmatprep.subr.mxu0 0.0
  %3668 = vmatpush1.msra.mxu0 0.0
  %3669 = vmatprep.subr.mxu0 0.0
  %3670 = vmatpush1.msra.mxu0 0.0
  %3671 = vmatprep.subr.mxu0 0.0
  %3672 = vmatpush1.msra.mxu0 0.0
  %3673 = vmatprep.subr.mxu0 0.0
  %3674 = vmatpush1.msra.mxu0 0.0
  %3675 = vmatprep.subr.mxu0 0.0
  %3676 = vmatpush1.msra.mxu0 0.0
  %3677 = vmatprep.subr.mxu0 0.0
  %3678 = vmatpush1.msra.mxu0 0.0
  %3679 = vmatprep.subr.mxu0 0.0
  %3680 = vmatpush1.msra.mxu0 0.0
  %3681 = vmatprep.subr.mxu0 0.0
  %3682 = vmatpush1.msra.mxu0 0.0
  %3683 = vmatprep.subr.mxu0 0.0
  %3684 = vmatpush1.msra.mxu0 0.0
  %3685 = vmatprep.subr.mxu0 0.0
  %3686 = vmatpush1.msra.mxu0 0.0
  %3687 = vmatprep.subr.mxu0 0.0
  %3688 = vmatpush1.msra.mxu0 0.0
  %3689 = vmatprep.subr.mxu0 0.0
  %3690 = vmatpush1.msra.mxu0 0.0
  %3691 = vmatprep.subr.mxu0 0.0
  %3692 = vmatpush1.msra.mxu0 0.0
  %3693 = vmatprep.subr.mxu0 0.0
  %3694 = vmatpush1.msra.mxu0 0.0
  %3695 = vmatprep.subr.mxu0 0.0
  %3696 = vmatpush1.msra.mxu0 0.0
  %3697 = vmatprep.subr.mxu0 0.0
  %3698 = vmatpush1.msra.mxu0 0.0
  %3699 = vmatprep.subr.mxu0 0.0
  %3700 = vmatpush1.msra.mxu0 0.0
  %3701 = vmatprep.subr.mxu0 0.0
  %3702 = vmatpush1.msra.mxu0 0.0
  %3703 = vmatprep.subr.mxu0 0.0
  %3704 = vmatpush1.msra.mxu0 0.0
  %3705 = vmatprep.subr.mxu0 0.0
  %3706 = vmatpush1.msra.mxu0 0.0
  %3707 = vmatprep.subr.mxu0 0.0
  %3708 = vmatpush1.msra.mxu0 0.0
  %3709 = vmatprep.subr.mxu0 0.0
  %3710 = vmatpush1.msra.mxu0 0.0
  %3711 = vmatprep.subr.mxu0 0.0
  %3712 = vmatpush1.msra.mxu0 0.0
  %3713 = vmatprep.subr.mxu0 0.0
  %3714 = vmatpush1.msra.mxu0 0.0
  %3715 = vmatprep.mubr.f32.mxu0 0.0
  %3716 = vmatmul.mubr.f32.gmra.mrb[0].mxu0 %v3649
  %v3717 = vpop.f32.mrb[0].mxu0
  %v3718 = vadd.f32 0.0, %v3717
  %v3719 = vpop.f32.mrb[0].mxu0
  %3720 = vdwg.mxu0
  %v3721 = vmax.f32 %v3718, 0.0
  %3722 = vmatprep.subr.mxu0 0.0
  %3723 = vmatpush1.msra.mxu0 %v3644
  %3724 = vmatprep.subr.mxu0 0.0
  %3725 = vmatpush1.msra.mxu0 %v3647
  %3726 = vmatprep.subr.mxu0 0.0
  %3727 = vmatpush1.msra.mxu0 0.0
  %3728 = vmatprep.subr.mxu0 0.0
  %3729 = vmatpush1.msra.mxu0 0.0
  %3730 = vmatprep.subr.mxu0 0.0
  %3731 = vmatpush1.msra.mxu0 0.0
  %3732 = vmatprep.subr.mxu0 0.0
  %3733 = vmatpush1.msra.mxu0 0.0
  %3734 = vmatprep.subr.mxu0 0.0
  %3735 = vmatpush1.msra.mxu0 0.0
  %3736 = vmatprep.subr.mxu0 0.0
  %3737 = vmatpush1.msra.mxu0 0.0
  %3738 = vmatprep.subr.mxu0 0.0
  %3739 = vmatpush1.msra.mxu0 0.0
  %3740 = vmatprep.subr.mxu0 0.0
  %3741 = vmatpush1.msra.mxu0 0.0
  %3742 = vmatprep.subr.mxu0 0.0
  %3743 = vmatpush1.msra.mxu0 0.0
  %3744 = vmatprep.subr.mxu0 0.0
  %3745 = vmatpush1.msra.mxu0 0.0
  %3746 = vmatprep.subr.mxu0 0.0
  %3747 = vmatpush1.msra.mxu0 0.0
  %3748 = vmatprep.subr.mxu0 0.0
  %3749 = vmatpush1.msra.mxu0 0.0
  %3750 = vmatprep.subr.mxu0 0.0
  %3751 = vmatpush1.msra.mxu0 0.0
  %3752 = vmatprep.subr.mxu0 0.0
  %3753 = vmatpush1.msra.mxu0 0.0
  %3754 = vmatprep.subr.mxu0 0.0
  %3755 = vmatpush1.msra.mxu0 0.0
  %3756 = vmatprep.subr.mxu0 0.0
  %3757 = vmatpush1.msra.mxu0 0.0
  %3758 = vmatprep.subr.mxu0 0.0
  %3759 = vmatpush1.msra.mxu0 0.0
  %3760 = vmatprep.subr.mxu0 0.0
  %3761 = vmatpush1.msra.mxu0 0.0
  %3762 = vmatprep.subr.mxu0 0.0
  %3763 = vmatpush1.msra.mxu0 0.0
  %3764 = vmatprep.subr.mxu0 0.0
  %3765 = vmatpush1.msra.mxu0 0.0
  %3766 = vmatprep.subr.mxu0 0.0
  %3767 = vmatpush1.msra.mxu0 0.0
  %3768 = vmatprep.subr.mxu0 0.0
  %3769 = vmatpush1.msra.mxu0 0.0
  %3770 = vmatprep.subr.mxu0 0.0
  %3771 = vmatpush1.msra.mxu0 0.0
  %3772 = vmatprep.subr.mxu0 0.0
  %3773 = vmatpush1.msra.mxu0 0.0
  %3774 = vmatprep.subr.mxu0 0.0
  %3775 = vmatpush1.msra.mxu0 0.0
  %3776 = vmatprep.subr.mxu0 0.0
  %3777 = vmatpush1.msra.mxu0 0.0
  %3778 = vmatprep.subr.mxu0 0.0
  %3779 = vmatpush1.msra.mxu0 0.0
  %3780 = vmatprep.subr.mxu0 0.0
  %3781 = vmatpush1.msra.mxu0 0.0
  %3782 = vmatprep.subr.mxu0 0.0
  %3783 = vmatpush1.msra.mxu0 0.0
  %3784 = vmatprep.subr.mxu0 0.0
  %3785 = vmatpush1.msra.mxu0 0.0
  %3786 = vmatprep.mubr.f32.mxu0 0.0
  %3787 = vmatmul.mubr.f32.gmra.mrb[0].mxu0 %v3649
  %v3788 = vpop.f32.mrb[0].mxu0
  %v3789 = vadd.f32 0.0, %v3788
  %v3790 = vpop.f32.mrb[0].mxu0
  %3791 = vdwg.mxu0
  %v3792 = vmax.f32 %v3789, 0.0
  %v3794 = vsel %vm1649, %v3632, 0
  %v3797 = vsel %vm1649, %v3633, 0
  %v3800 = vsel %vm80, %v3792, 0
  %3802 = vmatprep.subr.mxu0 0.0
  %3803 = vmatpush1.msra.mxu0 %v3800
  %3804 = vmatprep.subr.mxu0 0.0
  %3805 = vmatpush1.msra.mxu0 0.0
  %3806 = vmatprep.subr.mxu0 0.0
  %3807 = vmatpush1.msra.mxu0 0.0
  %3808 = vmatprep.subr.mxu0 0.0
  %3809 = vmatpush1.msra.mxu0 0.0
  %3810 = vmatprep.subr.mxu0 0.0
  %3811 = vmatpush1.msra.mxu0 0.0
  %3812 = vmatprep.subr.mxu0 0.0
  %3813 = vmatpush1.msra.mxu0 0.0
  %3814 = vmatprep.subr.mxu0 0.0
  %3815 = vmatpush1.msra.mxu0 0.0
  %3816 = vmatprep.subr.mxu0 0.0
  %3817 = vmatpush1.msra.mxu0 0.0
  %3818 = vmatprep.subr.mxu0 0.0
  %3819 = vmatpush1.msra.mxu0 0.0
  %3820 = vmatprep.subr.mxu0 0.0
  %3821 = vmatpush1.msra.mxu0 0.0
  %3822 = vmatprep.subr.mxu0 0.0
  %3823 = vmatpush1.msra.mxu0 0.0
  %3824 = vmatprep.subr.mxu0 0.0
  %3825 = vmatpush1.msra.mxu0 0.0
  %3826 = vmatprep.subr.mxu0 0.0
  %3827 = vmatpush1.msra.mxu0 0.0
  %3828 = vmatprep.subr.mxu0 0.0
  %3829 = vmatpush1.msra.mxu0 0.0
  %3830 = vmatprep.subr.mxu0 0.0
  %3831 = vmatpush1.msra.mxu0 0.0
  %3832 = vmatprep.subr.mxu0 0.0
  %3833 = vmatpush1.msra.mxu0 0.0
  %3834 = vmatprep.subr.mxu0 0.0
  %3835 = vmatpush1.msra.mxu0 0.0
  %3836 = vmatprep.subr.mxu0 0.0
  %3837 = vmatpush1.msra.mxu0 0.0
  %3838 = vmatprep.subr.mxu0 0.0
  %3839 = vmatpush1.msra.mxu0 0.0
  %3840 = vmatprep.subr.mxu0 0.0
  %3841 = vmatpush1.msra.mxu0 0.0
  %3842 = vmatprep.subr.mxu0 0.0
  %3843 = vmatpush1.msra.mxu0 0.0
  %3844 = vmatprep.subr.mxu0 0.0
  %3845 = vmatpush1.msra.mxu0 0.0
  %3846 = vmatprep.subr.mxu0 0.0
  %3847 = vmatpush1.msra.mxu0 0.0
  %3848 = vmatprep.subr.mxu0 0.0
  %3849 = vmatpush1.msra.mxu0 0.0
  %3850 = vmatprep.subr.mxu0 0.0
  %3851 = vmatpush1.msra.mxu0 0.0
  %3852 = vmatprep.subr.mxu0 0.0
  %3853 = vmatpush1.msra.mxu0 0.0
  %3854 = vmatprep.subr.mxu0 0.0
  %3855 = vmatpush1.msra.mxu0 0.0
  %3856 = vmatprep.subr.mxu0 0.0
  %3857 = vmatpush1.msra.mxu0 0.0
  %3858 = vmatprep.subr.mxu0 0.0
  %3859 = vmatpush1.msra.mxu0 0.0
  %3860 = vmatprep.subr.mxu0 0.0
  %3861 = vmatpush1.msra.mxu0 0.0
  %3862 = vmatprep.subr.mxu0 0.0
  %3863 = vmatpush1.msra.mxu0 0.0
  %3864 = vmatprep.subr.mxu0 0.0
  %3865 = vmatpush1.msra.mxu0 0.0
  %3866 = vmatprep.mubr.f32.mxu0 0.0
  %3867 = vmatmul.mubr.f32.gmra.mrb[0].mxu0 %v3794
  %v3868 = vpop.f32.mrb[0].mxu0
  %v3869 = vadd.f32 0.0, %v3868
  %v3870 = vpop.f32.mrb[0].mxu0
  %3871 = vmatprep.mubr.f32.mxu0 0.0
  %3872 = vmatmul.mubr.f32.gmra.mrb[0].mxu0 %v3797
  %v3873 = vpop.f32.mrb[0].mxu0
  %v3874 = vadd.f32 0.0, %v3873
  %v3875 = vpop.f32.mrb[0].mxu0
  %3876 = vdwg.mxu0
  %v3878 = vsel %vm80, %v3721, 0
  %3880 = vmatprep.subr.mxu0 0.0
  %3881 = vmatpush1.msra.mxu0 %v3878
  %3882 = vmatprep.subr.mxu0 0.0
  %3883 = vmatpush1.msra.mxu0 0.0
  %3884 = vmatprep.subr.mxu0 0.0
  %3885 = vmatpush1.msra.mxu0 0.0
  %3886 = vmatprep.subr.mxu0 0.0
  %3887 = vmatpush1.msra.mxu0 0.0
  %3888 = vmatprep.subr.mxu0 0.0
  %3889 = vmatpush1.msra.mxu0 0.0
  %3890 = vmatprep.subr.mxu0 0.0
  %3891 = vmatpush1.msra.mxu0 0.0
  %3892 = vmatprep.subr.mxu0 0.0
  %3893 = vmatpush1.msra.mxu0 0.0
  %3894 = vmatprep.subr.mxu0 0.0
  %3895 = vmatpush1.msra.mxu0 0.0
  %3896 = vmatprep.subr.mxu0 0.0
  %3897 = vmatpush1.msra.mxu0 0.0
  %3898 = vmatprep.subr.mxu0 0.0
  %3899 = vmatpush1.msra.mxu0 0.0
  %3900 = vmatprep.subr.mxu0 0.0
  %3901 = vmatpush1.msra.mxu0 0.0
  %3902 = vmatprep.subr.mxu0 0.0
  %3903 = vmatpush1.msra.mxu0 0.0
  %3904 = vmatprep.subr.mxu0 0.0
  %3905 = vmatpush1.msra.mxu0 0.0
  %3906 = vmatprep.subr.mxu0 0.0
  %3907 = vmatpush1.msra.mxu0 0.0
  %3908 = vmatprep.subr.mxu0 0.0
  %3909 = vmatpush1.msra.mxu0 0.0
  %3910 = vmatprep.subr.mxu0 0.0
  %3911 = vmatpush1.msra.mxu0 0.0
  %3912 = vmatprep.subr.mxu0 0.0
  %3913 = vmatpush1.msra.mxu0 0.0
  %3914 = vmatprep.subr.mxu0 0.0
  %3915 = vmatpush1.msra.mxu0 0.0
  %3916 = vmatprep.subr.mxu0 0.0
  %3917 = vmatpush1.msra.mxu0 0.0
  %3918 = vmatprep.subr.mxu0 0.0
  %3919 = vmatpush1.msra.mxu0 0.0
  %3920 = vmatprep.subr.mxu0 0.0
  %3921 = vmatpush1.msra.mxu0 0.0
  %3922 = vmatprep.subr.mxu0 0.0
  %3923 = vmatpush1.msra.mxu0 0.0
  %3924 = vmatprep.subr.mxu0 0.0
  %3925 = vmatpush1.msra.mxu0 0.0
  %3926 = vmatprep.subr.mxu0 0.0
  %3927 = vmatpush1.msra.mxu0 0.0
  %3928 = vmatprep.subr.mxu0 0.0
  %3929 = vmatpush1.msra.mxu0 0.0
  %3930 = vmatprep.subr.mxu0 0.0
  %3931 = vmatpush1.msra.mxu0 0.0
  %3932 = vmatprep.subr.mxu0 0.0
  %3933 = vmatpush1.msra.mxu0 0.0
  %3934 = vmatprep.subr.mxu0 0.0
  %3935 = vmatpush1.msra.mxu0 0.0
  %3936 = vmatprep.subr.mxu0 0.0
  %3937 = vmatpush1.msra.mxu0 0.0
  %3938 = vmatprep.subr.mxu0 0.0
  %3939 = vmatpush1.msra.mxu0 0.0
  %3940 = vmatprep.subr.mxu0 0.0
  %3941 = vmatpush1.msra.mxu0 0.0
  %3942 = vmatprep.subr.mxu0 0.0
  %3943 = vmatpush1.msra.mxu0 0.0
  %3944 = vmatprep.mubr.f32.mxu0 0.0
  %3945 = vmatmul.mubr.f32.gmra.mrb[0].mxu0 %v3794
  %v3946 = vpop.f32.mrb[0].mxu0
  %v3947 = vadd.f32 %v3869, %v3946
  %v3948 = vpop.f32.mrb[0].mxu0
  %3949 = vmatprep.mubr.f32.mxu0 0.0
  %3950 = vmatmul.mubr.f32.gmra.mrb[0].mxu0 %v3797
  %v3951 = vpop.f32.mrb[0].mxu0
  %v3952 = vadd.f32 %v3874, %v3951
  %v3953 = vpop.f32.mrb[0].mxu0
  %3954 = vdwg.mxu0
  %v3955 = vand.u32 2147483647, %v3947
  %v3956 = vand.u32 2147483647, %v3952
  %v3957 = vsub.f32 0.0, %v3955
  %v3958 = vsub.f32 0.0, %v3956
  %v3959 = vmul.f32 %v3957, 1.442695
  %v3960 = vpow.pop %v3959
  %v3961 = vmul.f32 %v3958, 1.442695
  %v3962 = vpow.pop %v3961
  %vm3963 = vcmp.ge.f32.partialorder %v3947, 0.0
  %vm3964 = vcmp.ge.f32.partialorder %v3952, 0.0
  %v3965 = vadd.f32 %v3960, 1.0
  %v3966 = vadd.f32 %v3962, 1.0
  %v3967 = vrcp.pop %v3965
  %v3968 = vmul.f32 1.0, %v3967
  %v3969 = vrcp.pop %v3966
  %v3970 = vmul.f32 1.0, %v3969
  %v3971 = vmul.f32 %v3960, %v3967
  %v3972 = vmul.f32 %v3962, %v3969
  %v3973 = vsel %vm3963, %v3968, %v3971
  %v3974 = vsel %vm3964, %v3970, %v3972
  %3976 = vset.pattern.permute.xlu0 0
  %3977 = vperm.xlu0 %3976, %v3973
  %v3978 = vpop.permute.xlu0 %3977
  %3981 = vset.pattern.permute.xlu0 0
  %3982 = vperm.xlu0 %3981, %v3974
  %v3983 = vpop.permute.xlu0 %3982
  %v3985 = vmul.f32 %v3978, %v1845
  %v3986 = vmul.f32 %v3983, %v1845
  %3989 = vrot.lane.b32.xlu0 %v3627, 64
  %v3990 = vpop.permute.xlu0 %3989
  %3991 = vrot.lane.b32.xlu0 %v3628, 64
  %v3992 = vpop.permute.xlu0 %3991
  %v3995 = vsel %vm1488, %v3990, 0.0
  %3996 = vadd.xlane.f32.xlu0 %v3995
  %v3997 = vpop.xlane.xlu0 %3996
  %v3998 = vsel %vm1488, %v3992, 0.0
  %3999 = vadd.xlane.f32.xlu0 %v3998
  %v4000 = vpop.xlane.xlu0 %3999
  %v4001 = vmul.f32 %v3997, %v1495
  %v4002 = vmul.f32 %v4000, %v1495
  %v4003 = vsel %vm1864, %v3627, -inf
  %4004 = vmax.xlane.f32.xlu0 %v4003
  %v4005 = vpop.xlane.xlu0 %4004
  %v4006 = vsel %vm1864, %v3628, -inf
  %4007 = vmax.xlane.f32.xlu0 %v4006
  %v4008 = vpop.xlane.xlu0 %4007
  %4009 = vmatprep.subr.mxu0 0.0
  %4010 = vmatpush1.msra.mxu0 %v4001
  %4011 = vmatprep.subr.mxu0 0.0
  %4012 = vmatpush1.msra.mxu0 %v4002
  %4013 = vmatprep.subr.mxu0 0.0
  %4014 = vmatpush1.msra.mxu0 0.0
  %4015 = vmatprep.subr.mxu0 0.0
  %4016 = vmatpush1.msra.mxu0 0.0
  %4017 = vmatprep.subr.mxu0 0.0
  %4018 = vmatpush1.msra.mxu0 0.0
  %4019 = vmatprep.subr.mxu0 0.0
  %4020 = vmatpush1.msra.mxu0 0.0
  %4021 = vmatprep.subr.mxu0 0.0
  %4022 = vmatpush1.msra.mxu0 0.0
  %4023 = vmatprep.subr.mxu0 0.0
  %4024 = vmatpush1.msra.mxu0 0.0
  %4025 = vmatprep.subr.mxu0 0.0
  %4026 = vmatpush1.msra.mxu0 0.0
  %4027 = vmatprep.subr.mxu0 0.0
  %4028 = vmatpush1.msra.mxu0 0.0
  %4029 = vmatprep.subr.mxu0 0.0
  %4030 = vmatpush1.msra.mxu0 0.0
  %4031 = vmatprep.subr.mxu0 0.0
  %4032 = vmatpush1.msra.mxu0 0.0
  %4033 = vmatprep.subr.mxu0 0.0
  %4034 = vmatpush1.msra.mxu0 0.0
  %4035 = vmatprep.subr.mxu0 0.0
  %4036 = vmatpush1.msra.mxu0 0.0
  %4037 = vmatprep.subr.mxu0 0.0
  %4038 = vmatpush1.msra.mxu0 0.0
  %4039 = vmatprep.subr.mxu0 0.0
  %4040 = vmatpush1.msra.mxu0 0.0
  %4041 = vmatprep.subr.mxu0 0.0
  %4042 = vmatpush1.msra.mxu0 0.0
  %4043 = vmatprep.subr.mxu0 0.0
  %4044 = vmatpush1.msra.mxu0 0.0
  %4045 = vmatprep.subr.mxu0 0.0
  %4046 = vmatpush1.msra.mxu0 0.0
  %4047 = vmatprep.subr.mxu0 0.0
  %4048 = vmatpush1.msra.mxu0 0.0
  %4049 = vmatprep.subr.mxu0 0.0
  %4050 = vmatpush1.msra.mxu0 0.0
  %4051 = vmatprep.subr.mxu0 0.0
  %4052 = vmatpush1.msra.mxu0 0.0
  %4053 = vmatprep.subr.mxu0 0.0
  %4054 = vmatpush1.msra.mxu0 0.0
  %4055 = vmatprep.subr.mxu0 0.0
  %4056 = vmatpush1.msra.mxu0 0.0
  %4057 = vmatprep.subr.mxu0 0.0
  %4058 = vmatpush1.msra.mxu0 0.0
  %4059 = vmatprep.subr.mxu0 0.0
  %4060 = vmatpush1.msra.mxu0 0.0
  %4061 = vmatprep.subr.mxu0 0.0
  %4062 = vmatpush1.msra.mxu0 0.0
  %4063 = vmatprep.subr.mxu0 0.0
  %4064 = vmatpush1.msra.mxu0 0.0
  %4065 = vmatprep.subr.mxu0 0.0
  %4066 = vmatpush1.msra.mxu0 0.0
  %4067 = vmatprep.subr.mxu0 0.0
  %4068 = vmatpush1.msra.mxu0 0.0
  %4069 = vmatprep.subr.mxu0 0.0
  %4070 = vmatpush1.msra.mxu0 0.0
  %4071 = vmatprep.subr.mxu0 0.0
  %4072 = vmatpush1.msra.mxu0 0.0
  %4073 = vmatprep.mubr.f32.mxu0 0.0
  %4074 = vmatmul.mubr.f32.gmra.mrb[0].mxu0 %v3649
  %v4075 = vpop.f32.mrb[0].mxu0
  %v4076 = vadd.f32 0.0, %v4075
  %v4077 = vpop.f32.mrb[0].mxu0
  %4078 = vdwg.mxu0
  %v4079 = vmax.f32 %v4076, 0.0
  %4080 = vmatprep.subr.mxu0 0.0
  %4081 = vmatpush1.msra.mxu0 %v4005
  %4082 = vmatprep.subr.mxu0 0.0
  %4083 = vmatpush1.msra.mxu0 %v4008
  %4084 = vmatprep.subr.mxu0 0.0
  %4085 = vmatpush1.msra.mxu0 0.0
  %4086 = vmatprep.subr.mxu0 0.0
  %4087 = vmatpush1.msra.mxu0 0.0
  %4088 = vmatprep.subr.mxu0 0.0
  %4089 = vmatpush1.msra.mxu0 0.0
  %4090 = vmatprep.subr.mxu0 0.0
  %4091 = vmatpush1.msra.mxu0 0.0
  %4092 = vmatprep.subr.mxu0 0.0
  %4093 = vmatpush1.msra.mxu0 0.0
  %4094 = vmatprep.subr.mxu0 0.0
  %4095 = vmatpush1.msra.mxu0 0.0
  %4096 = vmatprep.subr.mxu0 0.0
  %4097 = vmatpush1.msra.mxu0 0.0
  %4098 = vmatprep.subr.mxu0 0.0
  %4099 = vmatpush1.msra.mxu0 0.0
  %4100 = vmatprep.subr.mxu0 0.0
  %4101 = vmatpush1.msra.mxu0 0.0
  %4102 = vmatprep.subr.mxu0 0.0
  %4103 = vmatpush1.msra.mxu0 0.0
  %4104 = vmatprep.subr.mxu0 0.0
  %4105 = vmatpush1.msra.mxu0 0.0
  %4106 = vmatprep.subr.mxu0 0.0
  %4107 = vmatpush1.msra.mxu0 0.0
  %4108 = vmatprep.subr.mxu0 0.0
  %4109 = vmatpush1.msra.mxu0 0.0
  %4110 = vmatprep.subr.mxu0 0.0
  %4111 = vmatpush1.msra.mxu0 0.0
  %4112 = vmatprep.subr.mxu0 0.0
  %4113 = vmatpush1.msra.mxu0 0.0
  %4114 = vmatprep.subr.mxu0 0.0
  %4115 = vmatpush1.msra.mxu0 0.0
  %4116 = vmatprep.subr.mxu0 0.0
  %4117 = vmatpush1.msra.mxu0 0.0
  %4118 = vmatprep.subr.mxu0 0.0
  %4119 = vmatpush1.msra.mxu0 0.0
  %4120 = vmatprep.subr.mxu0 0.0
  %4121 = vmatpush1.msra.mxu0 0.0
  %4122 = vmatprep.subr.mxu0 0.0
  %4123 = vmatpush1.msra.mxu0 0.0
  %4124 = vmatprep.subr.mxu0 0.0
  %4125 = vmatpush1.msra.mxu0 0.0
  %4126 = vmatprep.subr.mxu0 0.0
  %4127 = vmatpush1.msra.mxu0 0.0
  %4128 = vmatprep.subr.mxu0 0.0
  %4129 = vmatpush1.msra.mxu0 0.0
  %4130 = vmatprep.subr.mxu0 0.0
  %4131 = vmatpush1.msra.mxu0 0.0
  %4132 = vmatprep.subr.mxu0 0.0
  %4133 = vmatpush1.msra.mxu0 0.0
  %4134 = vmatprep.subr.mxu0 0.0
  %4135 = vmatpush1.msra.mxu0 0.0
  %4136 = vmatprep.subr.mxu0 0.0
  %4137 = vmatpush1.msra.mxu0 0.0
  %4138 = vmatprep.subr.mxu0 0.0
  %4139 = vmatpush1.msra.mxu0 0.0
  %4140 = vmatprep.subr.mxu0 0.0
  %4141 = vmatpush1.msra.mxu0 0.0
  %4142 = vmatprep.subr.mxu0 0.0
  %4143 = vmatpush1.msra.mxu0 0.0
  %4144 = vmatprep.mubr.f32.mxu0 0.0
  %4145 = vmatmul.mubr.f32.gmra.mrb[0].mxu0 %v3649
  %v4146 = vpop.f32.mrb[0].mxu0
  %v4147 = vadd.f32 0.0, %v4146
  %v4148 = vpop.f32.mrb[0].mxu0
  %4149 = vdwg.mxu0
  %v4150 = vmax.f32 %v4147, 0.0
  %v4152 = vsel %vm80, %v4150, 0
  %4154 = vmatprep.subr.mxu0 0.0
  %4155 = vmatpush1.msra.mxu0 %v4152
  %4156 = vmatprep.subr.mxu0 0.0
  %4157 = vmatpush1.msra.mxu0 0.0
  %4158 = vmatprep.subr.mxu0 0.0
  %4159 = vmatpush1.msra.mxu0 0.0
  %4160 = vmatprep.subr.mxu0 0.0
  %4161 = vmatpush1.msra.mxu0 0.0
  %4162 = vmatprep.subr.mxu0 0.0
  %4163 = vmatpush1.msra.mxu0 0.0
  %4164 = vmatprep.subr.mxu0 0.0
  %4165 = vmatpush1.msra.mxu0 0.0
  %4166 = vmatprep.subr.mxu0 0.0
  %4167 = vmatpush1.msra.mxu0 0.0
  %4168 = vmatprep.subr.mxu0 0.0
  %4169 = vmatpush1.msra.mxu0 0.0
  %4170 = vmatprep.subr.mxu0 0.0
  %4171 = vmatpush1.msra.mxu0 0.0
  %4172 = vmatprep.subr.mxu0 0.0
  %4173 = vmatpush1.msra.mxu0 0.0
  %4174 = vmatprep.subr.mxu0 0.0
  %4175 = vmatpush1.msra.mxu0 0.0
  %4176 = vmatprep.subr.mxu0 0.0
  %4177 = vmatpush1.msra.mxu0 0.0
  %4178 = vmatprep.subr.mxu0 0.0
  %4179 = vmatpush1.msra.mxu0 0.0
  %4180 = vmatprep.subr.mxu0 0.0
  %4181 = vmatpush1.msra.mxu0 0.0
  %4182 = vmatprep.subr.mxu0 0.0
  %4183 = vmatpush1.msra.mxu0 0.0
  %4184 = vmatprep.subr.mxu0 0.0
  %4185 = vmatpush1.msra.mxu0 0.0
  %4186 = vmatprep.subr.mxu0 0.0
  %4187 = vmatpush1.msra.mxu0 0.0
  %4188 = vmatprep.subr.mxu0 0.0
  %4189 = vmatpush1.msra.mxu0 0.0
  %4190 = vmatprep.subr.mxu0 0.0
  %4191 = vmatpush1.msra.mxu0 0.0
  %4192 = vmatprep.subr.mxu0 0.0
  %4193 = vmatpush1.msra.mxu0 0.0
  %4194 = vmatprep.subr.mxu0 0.0
  %4195 = vmatpush1.msra.mxu0 0.0
  %4196 = vmatprep.subr.mxu0 0.0
  %4197 = vmatpush1.msra.mxu0 0.0
  %4198 = vmatprep.subr.mxu0 0.0
  %4199 = vmatpush1.msra.mxu0 0.0
  %4200 = vmatprep.subr.mxu0 0.0
  %4201 = vmatpush1.msra.mxu0 0.0
  %4202 = vmatprep.subr.mxu0 0.0
  %4203 = vmatpush1.msra.mxu0 0.0
  %4204 = vmatprep.subr.mxu0 0.0
  %4205 = vmatpush1.msra.mxu0 0.0
  %4206 = vmatprep.subr.mxu0 0.0
  %4207 = vmatpush1.msra.mxu0 0.0
  %4208 = vmatprep.subr.mxu0 0.0
  %4209 = vmatpush1.msra.mxu0 0.0
  %4210 = vmatprep.subr.mxu0 0.0
  %4211 = vmatpush1.msra.mxu0 0.0
  %4212 = vmatprep.subr.mxu0 0.0
  %4213 = vmatpush1.msra.mxu0 0.0
  %4214 = vmatprep.subr.mxu0 0.0
  %4215 = vmatpush1.msra.mxu0 0.0
  %4216 = vmatprep.subr.mxu0 0.0
  %4217 = vmatpush1.msra.mxu0 0.0
  %4218 = vmatprep.mubr.f32.mxu0 0.0
  %4219 = vmatmul.mubr.f32.gmra.mrb[0].mxu0 %v3794
  %v4220 = vpop.f32.mrb[0].mxu0
  %v4221 = vadd.f32 0.0, %v4220
  %v4222 = vpop.f32.mrb[0].mxu0
  %4223 = vmatprep.mubr.f32.mxu0 0.0
  %4224 = vmatmul.mubr.f32.gmra.mrb[0].mxu0 %v3797
  %v4225 = vpop.f32.mrb[0].mxu0
  %v4226 = vadd.f32 0.0, %v4225
  %v4227 = vpop.f32.mrb[0].mxu0
  %4228 = vdwg.mxu0
  %v4230 = vsel %vm80, %v4079, 0
  %4232 = vmatprep.subr.mxu0 0.0
  %4233 = vmatpush1.msra.mxu0 %v4230
  %4234 = vmatprep.subr.mxu0 0.0
  %4235 = vmatpush1.msra.mxu0 0.0
  %4236 = vmatprep.subr.mxu0 0.0
  %4237 = vmatpush1.msra.mxu0 0.0
  %4238 = vmatprep.subr.mxu0 0.0
  %4239 = vmatpush1.msra.mxu0 0.0
  %4240 = vmatprep.subr.mxu0 0.0
  %4241 = vmatpush1.msra.mxu0 0.0
  %4242 = vmatprep.subr.mxu0 0.0
  %4243 = vmatpush1.msra.mxu0 0.0
  %4244 = vmatprep.subr.mxu0 0.0
  %4245 = vmatpush1.msra.mxu0 0.0
  %4246 = vmatprep.subr.mxu0 0.0
  %4247 = vmatpush1.msra.mxu0 0.0
  %4248 = vmatprep.subr.mxu0 0.0
  %4249 = vmatpush1.msra.mxu0 0.0
  %4250 = vmatprep.subr.mxu0 0.0
  %4251 = vmatpush1.msra.mxu0 0.0
  %4252 = vmatprep.subr.mxu0 0.0
  %4253 = vmatpush1.msra.mxu0 0.0
  %4254 = vmatprep.subr.mxu0 0.0
  %4255 = vmatpush1.msra.mxu0 0.0
  %4256 = vmatprep.subr.mxu0 0.0
  %4257 = vmatpush1.msra.mxu0 0.0
  %4258 = vmatprep.subr.mxu0 0.0
  %4259 = vmatpush1.msra.mxu0 0.0
  %4260 = vmatprep.subr.mxu0 0.0
  %4261 = vmatpush1.msra.mxu0 0.0
  %4262 = vmatprep.subr.mxu0 0.0
  %4263 = vmatpush1.msra.mxu0 0.0
  %4264 = vmatprep.subr.mxu0 0.0
  %4265 = vmatpush1.msra.mxu0 0.0
  %4266 = vmatprep.subr.mxu0 0.0
  %4267 = vmatpush1.msra.mxu0 0.0
  %4268 = vmatprep.subr.mxu0 0.0
  %4269 = vmatpush1.msra.mxu0 0.0
  %4270 = vmatprep.subr.mxu0 0.0
  %4271 = vmatpush1.msra.mxu0 0.0
  %4272 = vmatprep.subr.mxu0 0.0
  %4273 = vmatpush1.msra.mxu0 0.0
  %4274 = vmatprep.subr.mxu0 0.0
  %4275 = vmatpush1.msra.mxu0 0.0
  %4276 = vmatprep.subr.mxu0 0.0
  %4277 = vmatpush1.msra.mxu0 0.0
  %4278 = vmatprep.subr.mxu0 0.0
  %4279 = vmatpush1.msra.mxu0 0.0
  %4280 = vmatprep.subr.mxu0 0.0
  %4281 = vmatpush1.msra.mxu0 0.0
  %4282 = vmatprep.subr.mxu0 0.0
  %4283 = vmatpush1.msra.mxu0 0.0
  %4284 = vmatprep.subr.mxu0 0.0
  %4285 = vmatpush1.msra.mxu0 0.0
  %4286 = vmatprep.subr.mxu0 0.0
  %4287 = vmatpush1.msra.mxu0 0.0
  %4288 = vmatprep.subr.mxu0 0.0
  %4289 = vmatpush1.msra.mxu0 0.0
  %4290 = vmatprep.subr.mxu0 0.0
  %4291 = vmatpush1.msra.mxu0 0.0
  %4292 = vmatprep.subr.mxu0 0.0
  %4293 = vmatpush1.msra.mxu0 0.0
  %4294 = vmatprep.subr.mxu0 0.0
  %4295 = vmatpush1.msra.mxu0 0.0
  %4296 = vmatprep.mubr.f32.mxu0 0.0
  %4297 = vmatmul.mubr.f32.gmra.mrb[0].mxu0 %v3794
  %v4298 = vpop.f32.mrb[0].mxu0
  %v4299 = vadd.f32 %v4221, %v4298
  %v4300 = vpop.f32.mrb[0].mxu0
  %4301 = vmatprep.mubr.f32.mxu0 0.0
  %4302 = vmatmul.mubr.f32.gmra.mrb[0].mxu0 %v3797
  %v4303 = vpop.f32.mrb[0].mxu0
  %v4304 = vadd.f32 %v4226, %v4303
  %v4305 = vpop.f32.mrb[0].mxu0
  %4306 = vdwg.mxu0
  %v4307 = vand.u32 2147483647, %v4299
  %v4308 = vand.u32 2147483647, %v4304
  %v4309 = vsub.f32 0.0, %v4307
  %v4310 = vsub.f32 0.0, %v4308
  %v4311 = vmul.f32 %v4309, 1.442695
  %v4312 = vpow.pop %v4311
  %v4313 = vmul.f32 %v4310, 1.442695
  %v4314 = vpow.pop %v4313
  %vm4315 = vcmp.ge.f32.partialorder %v4299, 0.0
  %vm4316 = vcmp.ge.f32.partialorder %v4304, 0.0
  %v4317 = vadd.f32 %v4312, 1.0
  %v4318 = vadd.f32 %v4314, 1.0
  %v4319 = vrcp.pop %v4317
  %v4320 = vmul.f32 1.0, %v4319
  %v4321 = vrcp.pop %v4318
  %v4322 = vmul.f32 1.0, %v4321
  %v4323 = vmul.f32 %v4312, %v4319
  %v4324 = vmul.f32 %v4314, %v4321
  %v4325 = vsel %vm4315, %v4320, %v4323
  %v4326 = vsel %vm4316, %v4322, %v4324
  %4328 = vset.pattern.permute.xlu0 0
  %4329 = vperm.xlu0 %4328, %v4325
  %v4330 = vpop.permute.xlu0 %4329
  %4333 = vset.pattern.permute.xlu0 0
  %4334 = vperm.xlu0 %4333, %v4326
  %v4335 = vpop.permute.xlu0 %4334
  %v4337 = vmul.f32 %v4330, %v2202
  %v4338 = vmul.f32 %v4335, %v2202
  %v4339 = vadd.f32 %v3985, %v4337
  %v4340 = vadd.f32 %v3986, %v4338
  %v4341 = vsub.f32 %v4339, 1.0
  %v4342 = vsub.f32 %v4340, 1.0
  %v4343 = vmul.f32 %v4341, 0.042
  %v4344 = vmul.f32 %v4342, 0.042
  %v4345 = vadd.f32 %v4343, 1.0
  %v4346 = vadd.f32 %v4344, 1.0
  %v4347 = vmul.f32 %v3627, %v4345
  %v4348 = vmul.f32 %v3628, %v4346
  %v4349 = vadd.f32 %v4347, %v4348
  %v4350 = vrot.slane %v4349, 4
  %v4351 = vadd.f32 %v4349, %v4350
  %v4352 = vrot.slane %v4351, 2
  %v4353 = vadd.f32 %v4351, %v4352
  %v4354 = vrot.slane %v4353, 1
  %v4355 = vadd.f32 %v4353, %v4354
  %v4356 = vmul.f32 %v4355, %v2222
  %v4357 = vmax.f32 %v4347, %v4348
  %v4358 = vrot.slane %v4357, 4
  %v4359 = vmax.f32 %v4357, %v4358
  %v4360 = vrot.slane %v4359, 2
  %v4361 = vmax.f32 %v4359, %v4360
  %v4362 = vrot.slane %v4361, 1
  %v4363 = vmax.f32 %v4361, %v4362
  %s4364 = scalar_lea.vmem %s9, 128
  %v4365 = vld [vmem:[%s4364] sm:$0xff]
  %v4366 = vld [vmem:[%s4364 + $0x8] sm:$0xff]
  %v4367 = vld [vmem:[%s4364 + $0x10] sm:$0xff]
  %v4368 = vld [vmem:[%s4364 + $0x18] sm:$0xff]
  %v4369 = vld [vmem:[%s4364 + $0x20] sm:$0xff]
  %v4370 = vld [vmem:[%s4364 + $0x28] sm:$0xff]
  %v4371 = vld [vmem:[%s4364 + $0x30] sm:$0xff]
  %v4372 = vld [vmem:[%s4364 + $0x38] sm:$0xff]
  %v4373 = vld [vmem:[%s4364 + $0x40] sm:$0xff]
  %v4374 = vld [vmem:[%s4364 + $0x48] sm:$0xff]
  %v4375 = vld [vmem:[%s4364 + $0x50] sm:$0xff]
  %v4376 = vld [vmem:[%s4364 + $0x58] sm:$0xff]
  %v4377 = vld [vmem:[%s4364 + $0x60] sm:$0xff]
  %v4378 = vld [vmem:[%s4364 + $0x68] sm:$0xff]
  %v4379 = vld [vmem:[%s4364 + $0x70] sm:$0xff]
  %v4380 = vld [vmem:[%s4364 + $0x78] sm:$0xff]
  %s4381 = scalar_lea.vmem %s10, 128
  %v4382 = vld [vmem:[%s4381] sm:$0xff]
  %v4383 = vld [vmem:[%s4381 + $0x8] sm:$0xff]
  %v4384 = vld [vmem:[%s4381 + $0x10] sm:$0xff]
  %v4385 = vld [vmem:[%s4381 + $0x18] sm:$0xff]
  %v4386 = vld [vmem:[%s4381 + $0x20] sm:$0xff]
  %v4387 = vld [vmem:[%s4381 + $0x28] sm:$0xff]
  %v4388 = vld [vmem:[%s4381 + $0x30] sm:$0xff]
  %v4389 = vld [vmem:[%s4381 + $0x38] sm:$0xff]
  %v4390 = vld [vmem:[%s4381 + $0x40] sm:$0xff]
  %v4391 = vld [vmem:[%s4381 + $0x48] sm:$0xff]
  %v4392 = vld [vmem:[%s4381 + $0x50] sm:$0xff]
  %v4393 = vld [vmem:[%s4381 + $0x58] sm:$0xff]
  %v4394 = vld [vmem:[%s4381 + $0x60] sm:$0xff]
  %v4395 = vld [vmem:[%s4381 + $0x68] sm:$0xff]
  %v4396 = vld [vmem:[%s4381 + $0x70] sm:$0xff]
  %v4397 = vld [vmem:[%s4381 + $0x78] sm:$0xff]
  %4398 = vmatprep.subr.mxu0 0.0
  %4399 = vmatpush1.msra.mxu0 %v4382
  %4400 = vmatprep.subr.mxu0 0.0
  %4401 = vmatpush1.msra.mxu0 %v4383
  %4402 = vmatprep.subr.mxu0 0.0
  %4403 = vmatpush1.msra.mxu0 %v4384
  %4404 = vmatprep.subr.mxu0 0.0
  %4405 = vmatpush1.msra.mxu0 %v4385
  %4406 = vmatprep.subr.mxu0 0.0
  %4407 = vmatpush1.msra.mxu0 %v4386
  %4408 = vmatprep.subr.mxu0 0.0
  %4409 = vmatpush1.msra.mxu0 %v4387
  %4410 = vmatprep.subr.mxu0 0.0
  %4411 = vmatpush1.msra.mxu0 %v4388
  %4412 = vmatprep.subr.mxu0 0.0
  %4413 = vmatpush1.msra.mxu0 %v4389
  %4414 = vmatprep.subr.mxu0 0.0
  %4415 = vmatpush1.msra.mxu0 %v4390
  %4416 = vmatprep.subr.mxu0 0.0
  %4417 = vmatpush1.msra.mxu0 %v4391
  %4418 = vmatprep.subr.mxu0 0.0
  %4419 = vmatpush1.msra.mxu0 %v4392
  %4420 = vmatprep.subr.mxu0 0.0
  %4421 = vmatpush1.msra.mxu0 %v4393
  %4422 = vmatprep.subr.mxu0 0.0
  %4423 = vmatpush1.msra.mxu0 %v4394
  %4424 = vmatprep.subr.mxu0 0.0
  %4425 = vmatpush1.msra.mxu0 %v4395
  %4426 = vmatprep.subr.mxu0 0.0
  %4427 = vmatpush1.msra.mxu0 %v4396
  %4428 = vmatprep.subr.mxu0 0.0
  %4429 = vmatpush1.msra.mxu0 %v4397
  %4430 = vmatprep.subr.mxu0 0.0
  %4431 = vmatpush1.msra.mxu0 0.0
  %4432 = vmatprep.subr.mxu0 0.0
  %4433 = vmatpush1.msra.mxu0 0.0
  %4434 = vmatprep.subr.mxu0 0.0
  %4435 = vmatpush1.msra.mxu0 0.0
  %4436 = vmatprep.subr.mxu0 0.0
  %4437 = vmatpush1.msra.mxu0 0.0
  %4438 = vmatprep.subr.mxu0 0.0
  %4439 = vmatpush1.msra.mxu0 0.0
  %4440 = vmatprep.subr.mxu0 0.0
  %4441 = vmatpush1.msra.mxu0 0.0
  %4442 = vmatprep.subr.mxu0 0.0
  %4443 = vmatpush1.msra.mxu0 0.0
  %4444 = vmatprep.subr.mxu0 0.0
  %4445 = vmatpush1.msra.mxu0 0.0
  %4446 = vmatprep.subr.mxu0 0.0
  %4447 = vmatpush1.msra.mxu0 0.0
  %4448 = vmatprep.subr.mxu0 0.0
  %4449 = vmatpush1.msra.mxu0 0.0
  %4450 = vmatprep.subr.mxu0 0.0
  %4451 = vmatpush1.msra.mxu0 0.0
  %4452 = vmatprep.subr.mxu0 0.0
  %4453 = vmatpush1.msra.mxu0 0.0
  %4454 = vmatprep.subr.mxu0 0.0
  %4455 = vmatpush1.msra.mxu0 0.0
  %4456 = vmatprep.subr.mxu0 0.0
  %4457 = vmatpush1.msra.mxu0 0.0
  %4458 = vmatprep.subr.mxu0 0.0
  %4459 = vmatpush1.msra.mxu0 0.0
  %4460 = vmatprep.subr.mxu0 0.0
  %4461 = vmatpush1.msra.mxu0 0.0
  %4462 = vmatprep.mubr.f32.mxu0 0.0
  %4463 = vmatmul.mubr.f32.gmra.mrb[0].mxu0 %v4363
  %v4464 = vpop.f32.mrb[0].mxu0
  %v4465 = vadd.f32 0.0, %v4464
  %v4466 = vpop.f32.mrb[0].mxu0
  %4467 = vdwg.mxu0
  %4468 = vmatprep.subr.mxu0 0.0
  %4469 = vmatpush1.msra.mxu0 %v4365
  %4470 = vmatprep.subr.mxu0 0.0
  %4471 = vmatpush1.msra.mxu0 %v4366
  %4472 = vmatprep.subr.mxu0 0.0
  %4473 = vmatpush1.msra.mxu0 %v4367
  %4474 = vmatprep.subr.mxu0 0.0
  %4475 = vmatpush1.msra.mxu0 %v4368
  %4476 = vmatprep.subr.mxu0 0.0
  %4477 = vmatpush1.msra.mxu0 %v4369
  %4478 = vmatprep.subr.mxu0 0.0
  %4479 = vmatpush1.msra.mxu0 %v4370
  %4480 = vmatprep.subr.mxu0 0.0
  %4481 = vmatpush1.msra.mxu0 %v4371
  %4482 = vmatprep.subr.mxu0 0.0
  %4483 = vmatpush1.msra.mxu0 %v4372
  %4484 = vmatprep.subr.mxu0 0.0
  %4485 = vmatpush1.msra.mxu0 %v4373
  %4486 = vmatprep.subr.mxu0 0.0
  %4487 = vmatpush1.msra.mxu0 %v4374
  %4488 = vmatprep.subr.mxu0 0.0
  %4489 = vmatpush1.msra.mxu0 %v4375
  %4490 = vmatprep.subr.mxu0 0.0
  %4491 = vmatpush1.msra.mxu0 %v4376
  %4492 = vmatprep.subr.mxu0 0.0
  %4493 = vmatpush1.msra.mxu0 %v4377
  %4494 = vmatprep.subr.mxu0 0.0
  %4495 = vmatpush1.msra.mxu0 %v4378
  %4496 = vmatprep.subr.mxu0 0.0
  %4497 = vmatpush1.msra.mxu0 %v4379
  %4498 = vmatprep.subr.mxu0 0.0
  %4499 = vmatpush1.msra.mxu0 %v4380
  %4500 = vmatprep.subr.mxu0 0.0
  %4501 = vmatpush1.msra.mxu0 0.0
  %4502 = vmatprep.subr.mxu0 0.0
  %4503 = vmatpush1.msra.mxu0 0.0
  %4504 = vmatprep.subr.mxu0 0.0
  %4505 = vmatpush1.msra.mxu0 0.0
  %4506 = vmatprep.subr.mxu0 0.0
  %4507 = vmatpush1.msra.mxu0 0.0
  %4508 = vmatprep.subr.mxu0 0.0
  %4509 = vmatpush1.msra.mxu0 0.0
  %4510 = vmatprep.subr.mxu0 0.0
  %4511 = vmatpush1.msra.mxu0 0.0
  %4512 = vmatprep.subr.mxu0 0.0
  %4513 = vmatpush1.msra.mxu0 0.0
  %4514 = vmatprep.subr.mxu0 0.0
  %4515 = vmatpush1.msra.mxu0 0.0
  %4516 = vmatprep.subr.mxu0 0.0
  %4517 = vmatpush1.msra.mxu0 0.0
  %4518 = vmatprep.subr.mxu0 0.0
  %4519 = vmatpush1.msra.mxu0 0.0
  %4520 = vmatprep.subr.mxu0 0.0
  %4521 = vmatpush1.msra.mxu0 0.0
  %4522 = vmatprep.subr.mxu0 0.0
  %4523 = vmatpush1.msra.mxu0 0.0
  %4524 = vmatprep.subr.mxu0 0.0
  %4525 = vmatpush1.msra.mxu0 0.0
  %4526 = vmatprep.subr.mxu0 0.0
  %4527 = vmatpush1.msra.mxu0 0.0
  %4528 = vmatprep.subr.mxu0 0.0
  %4529 = vmatpush1.msra.mxu0 0.0
  %4530 = vmatprep.subr.mxu0 0.0
  %4531 = vmatpush1.msra.mxu0 0.0
  %4532 = vmatprep.mubr.f32.mxu0 0.0
  %4533 = vmatmul.mubr.f32.gmra.mrb[0].mxu0 %v4356
  %v4534 = vpop.f32.mrb[0].mxu0
  %v4535 = vadd.f32 %v4465, %v4534
  %v4536 = vpop.f32.mrb[0].mxu0
  %4537 = vdwg.mxu0
  %v4538 = vand.u32 2147483647, %v4535
  %v4539 = vsub.f32 0.0, %v4538
  %v4540 = vmul.f32 %v4539, 1.442695
  %v4541 = vpow.pop %v4540
  %vm4542 = vcmp.ge.f32.partialorder %v4535, 0.0
  %v4543 = vadd.f32 %v4541, 1.0
  %v4544 = vrcp.pop %v4543
  %v4545 = vmul.f32 1.0, %v4544
  %v4546 = vmul.f32 %v4541, %v4544
  %v4547 = vsel %vm4542, %v4545, %v4546
  %v4548 = vsub.f32 %v4547, 1.0
  %v4549 = vmul.f32 %v4548, 0.0625
  %v4550 = vadd.f32 %v4549, 1.0
  %v4551 = vlaneseq
  %v4552 = vshrl.u32 %v4551, 7
  %v4553 = vsub.s32 0, %v4552
  %v4554 = vrot.slane %v4550, %v4553
  %v4555 = vmul.f32 %v4347, %v4554
  %v4556 = vmul.f32 %v4348, %v4554
  %v4557 = vadd.f32 %v2444, %v4555
  %v4558 = vadd.f32 %v2445, %v4556
  %v4559 = vand.u32 2147483647, %v4557
  %v4560 = vand.u32 2147483647, %v4558
  %v4561 = vsub.f32 0.0, %v4559
  %v4562 = vsub.f32 0.0, %v4560
  %v4563 = vmul.f32 %v4561, 1.442695
  %v4564 = vpow.pop %v4563
  %v4565 = vmul.f32 %v4562, 1.442695
  %v4566 = vpow.pop %v4565
  %vm4567 = vcmp.ge.f32.partialorder %v4557, 0.0
  %vm4568 = vcmp.ge.f32.partialorder %v4558, 0.0
  %v4569 = vadd.f32 %v4564, 1.0
  %v4570 = vadd.f32 %v4566, 1.0
  %v4571 = vrcp.pop %v4569
  %v4572 = vmul.f32 1.0, %v4571
  %v4573 = vrcp.pop %v4570
  %v4574 = vmul.f32 1.0, %v4573
  %v4575 = vmul.f32 %v4564, %v4571
  %v4576 = vmul.f32 %v4566, %v4573
  %v4577 = vsel %vm4567, %v4572, %v4575
  %v4578 = vsel %vm4568, %v4574, %v4576
  %v4579 = vmul.f32 %v4557, %v4577
  %v4580 = vmul.f32 %v4558, %v4578
  %v4581 = vld [vmem:[%s11] sm:$0xff]
  %v4582 = vld [vmem:[%s11 + $0x8] sm:$0xff]
  %v4583 = vld [vmem:[%s11 + $0x10] sm:$0xff]
  %v4584 = vld [vmem:[%s11 + $0x18] sm:$0xff]
  %v4585 = vld [vmem:[%s11 + $0x20] sm:$0xff]
  %v4586 = vld [vmem:[%s11 + $0x28] sm:$0xff]
  %v4587 = vld [vmem:[%s11 + $0x30] sm:$0xff]
  %v4588 = vld [vmem:[%s11 + $0x38] sm:$0xff]
  %v4589 = vld [vmem:[%s11 + $0x40] sm:$0xff]
  %v4590 = vld [vmem:[%s11 + $0x48] sm:$0xff]
  %v4591 = vld [vmem:[%s11 + $0x50] sm:$0xff]
  %v4592 = vld [vmem:[%s11 + $0x58] sm:$0xff]
  %v4593 = vld [vmem:[%s11 + $0x60] sm:$0xff]
  %v4594 = vld [vmem:[%s11 + $0x68] sm:$0xff]
  %v4595 = vld [vmem:[%s11 + $0x70] sm:$0xff]
  %v4596 = vld [vmem:[%s11 + $0x78] sm:$0xff]
  %v4597 = vld [vmem:[%s11 + $0x80] sm:$0xff]
  %v4598 = vld [vmem:[%s11 + $0x88] sm:$0xff]
  %v4599 = vld [vmem:[%s11 + $0x90] sm:$0xff]
  %v4600 = vld [vmem:[%s11 + $0x98] sm:$0xff]
  %v4601 = vld [vmem:[%s11 + $0xa0] sm:$0xff]
  %v4602 = vld [vmem:[%s11 + $0xa8] sm:$0xff]
  %v4603 = vld [vmem:[%s11 + $0xb0] sm:$0xff]
  %v4604 = vld [vmem:[%s11 + $0xb8] sm:$0xff]
  %v4605 = vld [vmem:[%s11 + $0xc0] sm:$0xff]
  %v4606 = vld [vmem:[%s11 + $0xc8] sm:$0xff]
  %v4607 = vld [vmem:[%s11 + $0xd0] sm:$0xff]
  %v4608 = vld [vmem:[%s11 + $0xd8] sm:$0xff]
  %v4609 = vld [vmem:[%s11 + $0xe0] sm:$0xff]
  %v4610 = vld [vmem:[%s11 + $0xe8] sm:$0xff]
  %v4611 = vld [vmem:[%s11 + $0xf0] sm:$0xff]
  %v4612 = vld [vmem:[%s11 + $0xf8] sm:$0xff]
  %v4613 = vld [vmem:[%s11 + $0x100] sm:$0xff]
  %v4614 = vld [vmem:[%s11 + $0x108] sm:$0xff]
  %v4615 = vld [vmem:[%s11 + $0x110] sm:$0xff]
  %v4616 = vld [vmem:[%s11 + $0x118] sm:$0xff]
  %v4617 = vld [vmem:[%s11 + $0x120] sm:$0xff]
  %v4618 = vld [vmem:[%s11 + $0x128] sm:$0xff]
  %v4619 = vld [vmem:[%s11 + $0x130] sm:$0xff]
  %v4620 = vld [vmem:[%s11 + $0x138] sm:$0xff]
  %v4621 = vld [vmem:[%s11 + $0x140] sm:$0xff]
  %v4622 = vld [vmem:[%s11 + $0x148] sm:$0xff]
  %v4623 = vld [vmem:[%s11 + $0x150] sm:$0xff]
  %v4624 = vld [vmem:[%s11 + $0x158] sm:$0xff]
  %v4625 = vld [vmem:[%s11 + $0x160] sm:$0xff]
  %v4626 = vld [vmem:[%s11 + $0x168] sm:$0xff]
  %v4627 = vld [vmem:[%s11 + $0x170] sm:$0xff]
  %v4628 = vld [vmem:[%s11 + $0x178] sm:$0xff]
  %v4629 = vld [vmem:[%s11 + $0x180] sm:$0xff]
  %v4630 = vld [vmem:[%s11 + $0x188] sm:$0xff]
  %v4631 = vld [vmem:[%s11 + $0x190] sm:$0xff]
  %v4632 = vld [vmem:[%s11 + $0x198] sm:$0xff]
  %v4633 = vld [vmem:[%s11 + $0x1a0] sm:$0xff]
  %v4634 = vld [vmem:[%s11 + $0x1a8] sm:$0xff]
  %v4635 = vld [vmem:[%s11 + $0x1b0] sm:$0xff]
  %v4636 = vld [vmem:[%s11 + $0x1b8] sm:$0xff]
  %v4637 = vld [vmem:[%s11 + $0x1c0] sm:$0xff]
  %v4638 = vld [vmem:[%s11 + $0x1c8] sm:$0xff]
  %v4639 = vld [vmem:[%s11 + $0x1d0] sm:$0xff]
  %v4640 = vld [vmem:[%s11 + $0x1d8] sm:$0xff]
  %v4641 = vld [vmem:[%s11 + $0x1e0] sm:$0xff]
  %v4642 = vld [vmem:[%s11 + $0x1e8] sm:$0xff]
  %v4643 = vld [vmem:[%s11 + $0x1f0] sm:$0xff]
  %v4644 = vld [vmem:[%s11 + $0x1f8] sm:$0xff]
  %v4645 = vld [vmem:[%s11 + $0x200] sm:$0xff]
  %v4646 = vld [vmem:[%s11 + $0x208] sm:$0xff]
  %v4647 = vld [vmem:[%s11 + $0x210] sm:$0xff]
  %v4648 = vld [vmem:[%s11 + $0x218] sm:$0xff]
  %v4649 = vld [vmem:[%s11 + $0x220] sm:$0xff]
  %v4650 = vld [vmem:[%s11 + $0x228] sm:$0xff]
  %v4651 = vld [vmem:[%s11 + $0x230] sm:$0xff]
  %v4652 = vld [vmem:[%s11 + $0x238] sm:$0xff]
  %v4653 = vld [vmem:[%s11 + $0x240] sm:$0xff]
  %v4654 = vld [vmem:[%s11 + $0x248] sm:$0xff]
  %v4655 = vld [vmem:[%s11 + $0x250] sm:$0xff]
  %v4656 = vld [vmem:[%s11 + $0x258] sm:$0xff]
  %v4657 = vld [vmem:[%s11 + $0x260] sm:$0xff]
  %v4658 = vld [vmem:[%s11 + $0x268] sm:$0xff]
  %v4659 = vld [vmem:[%s11 + $0x270] sm:$0xff]
  %v4660 = vld [vmem:[%s11 + $0x278] sm:$0xff]
  %v4661 = vld [vmem:[%s11 + $0x280] sm:$0xff]
  %v4662 = vld [vmem:[%s11 + $0x288] sm:$0xff]
  %v4663 = vld [vmem:[%s11 + $0x290] sm:$0xff]
  %v4664 = vld [vmem:[%s11 + $0x298] sm:$0xff]
  %v4665 = vld [vmem:[%s11 + $0x2a0] sm:$0xff]
  %v4666 = vld [vmem:[%s11 + $0x2a8] sm:$0xff]
  %v4667 = vld [vmem:[%s11 + $0x2b0] sm:$0xff]
  %v4668 = vld [vmem:[%s11 + $0x2b8] sm:$0xff]
  %v4669 = vld [vmem:[%s11 + $0x2c0] sm:$0xff]
  %v4670 = vld [vmem:[%s11 + $0x2c8] sm:$0xff]
  %v4671 = vld [vmem:[%s11 + $0x2d0] sm:$0xff]
  %v4672 = vld [vmem:[%s11 + $0x2d8] sm:$0xff]
  %v4673 = vld [vmem:[%s11 + $0x2e0] sm:$0xff]
  %v4674 = vld [vmem:[%s11 + $0x2e8] sm:$0xff]
  %v4675 = vld [vmem:[%s11 + $0x2f0] sm:$0xff]
  %v4676 = vld [vmem:[%s11 + $0x2f8] sm:$0xff]
  %v4677 = vld [vmem:[%s11 + $0x300] sm:$0xff]
  %v4678 = vld [vmem:[%s11 + $0x308] sm:$0xff]
  %v4679 = vld [vmem:[%s11 + $0x310] sm:$0xff]
  %v4680 = vld [vmem:[%s11 + $0x318] sm:$0xff]
  %v4681 = vld [vmem:[%s11 + $0x320] sm:$0xff]
  %v4682 = vld [vmem:[%s11 + $0x328] sm:$0xff]
  %v4683 = vld [vmem:[%s11 + $0x330] sm:$0xff]
  %v4684 = vld [vmem:[%s11 + $0x338] sm:$0xff]
  %v4685 = vld [vmem:[%s11 + $0x340] sm:$0xff]
  %v4686 = vld [vmem:[%s11 + $0x348] sm:$0xff]
  %v4687 = vld [vmem:[%s11 + $0x350] sm:$0xff]
  %v4688 = vld [vmem:[%s11 + $0x358] sm:$0xff]
  %v4689 = vld [vmem:[%s11 + $0x360] sm:$0xff]
  %v4690 = vld [vmem:[%s11 + $0x368] sm:$0xff]
  %v4691 = vld [vmem:[%s11 + $0x370] sm:$0xff]
  %v4692 = vld [vmem:[%s11 + $0x378] sm:$0xff]
  %v4693 = vld [vmem:[%s11 + $0x380] sm:$0xff]
  %v4694 = vld [vmem:[%s11 + $0x388] sm:$0xff]
  %v4695 = vld [vmem:[%s11 + $0x390] sm:$0xff]
  %v4696 = vld [vmem:[%s11 + $0x398] sm:$0xff]
  %v4697 = vld [vmem:[%s11 + $0x3a0] sm:$0xff]
  %v4698 = vld [vmem:[%s11 + $0x3a8] sm:$0xff]
  %v4699 = vld [vmem:[%s11 + $0x3b0] sm:$0xff]
  %v4700 = vld [vmem:[%s11 + $0x3b8] sm:$0xff]
  %v4701 = vld [vmem:[%s11 + $0x3c0] sm:$0xff]
  %v4702 = vld [vmem:[%s11 + $0x3c8] sm:$0xff]
  %v4703 = vld [vmem:[%s11 + $0x3d0] sm:$0xff]
  %v4704 = vld [vmem:[%s11 + $0x3d8] sm:$0xff]
  %v4705 = vld [vmem:[%s11 + $0x3e0] sm:$0xff]
  %v4706 = vld [vmem:[%s11 + $0x3e8] sm:$0xff]
  %v4707 = vld [vmem:[%s11 + $0x3f0] sm:$0xff]
  %v4708 = vld [vmem:[%s11 + $0x3f8] sm:$0xff]
  %v4709 = vld [vmem:[%s11 + $0x400] sm:$0xff]
  %v4710 = vld [vmem:[%s11 + $0x408] sm:$0xff]
  %v4711 = vld [vmem:[%s11 + $0x410] sm:$0xff]
  %v4712 = vld [vmem:[%s11 + $0x418] sm:$0xff]
  %v4713 = vld [vmem:[%s11 + $0x420] sm:$0xff]
  %v4714 = vld [vmem:[%s11 + $0x428] sm:$0xff]
  %v4715 = vld [vmem:[%s11 + $0x430] sm:$0xff]
  %v4716 = vld [vmem:[%s11 + $0x438] sm:$0xff]
  %v4717 = vld [vmem:[%s11 + $0x440] sm:$0xff]
  %v4718 = vld [vmem:[%s11 + $0x448] sm:$0xff]
  %v4719 = vld [vmem:[%s11 + $0x450] sm:$0xff]
  %v4720 = vld [vmem:[%s11 + $0x458] sm:$0xff]
  %v4721 = vld [vmem:[%s11 + $0x460] sm:$0xff]
  %v4722 = vld [vmem:[%s11 + $0x468] sm:$0xff]
  %v4723 = vld [vmem:[%s11 + $0x470] sm:$0xff]
  %v4724 = vld [vmem:[%s11 + $0x478] sm:$0xff]
  %4725 = vmatprep.subr.mxu0 %v4582
  %4726 = vmatpush1.msra.mxu0 %v4581
  %4727 = vmatprep.subr.mxu0 %v4591
  %4728 = vmatpush1.msra.mxu0 %v4590
  %4729 = vmatprep.subr.mxu0 %v4600
  %4730 = vmatpush1.msra.mxu0 %v4599
  %4731 = vmatprep.subr.mxu0 %v4609
  %4732 = vmatpush1.msra.mxu0 %v4608
  %4733 = vmatprep.subr.mxu0 %v4618
  %4734 = vmatpush1.msra.mxu0 %v4617
  %4735 = vmatprep.subr.mxu0 %v4627
  %4736 = vmatpush1.msra.mxu0 %v4626
  %4737 = vmatprep.subr.mxu0 %v4636
  %4738 = vmatpush1.msra.mxu0 %v4635
  %4739 = vmatprep.subr.mxu0 %v4645
  %4740 = vmatpush1.msra.mxu0 %v4644
  %4741 = vmatprep.subr.mxu0 %v4654
  %4742 = vmatpush1.msra.mxu0 %v4653
  %4743 = vmatprep.subr.mxu0 %v4663
  %4744 = vmatpush1.msra.mxu0 %v4662
  %4745 = vmatprep.subr.mxu0 %v4672
  %4746 = vmatpush1.msra.mxu0 %v4671
  %4747 = vmatprep.subr.mxu0 %v4681
  %4748 = vmatpush1.msra.mxu0 %v4680
  %4749 = vmatprep.subr.mxu0 %v4690
  %4750 = vmatpush1.msra.mxu0 %v4689
  %4751 = vmatprep.subr.mxu0 %v4699
  %4752 = vmatpush1.msra.mxu0 %v4698
  %4753 = vmatprep.subr.mxu0 %v4708
  %4754 = vmatpush1.msra.mxu0 %v4707
  %4755 = vmatprep.subr.mxu0 %v4717
  %4756 = vmatpush1.msra.mxu0 %v4716
  %4757 = vmatprep.subr.mxu0 0.0
  %4758 = vmatpush1.msra.mxu0 0.0
  %4759 = vmatprep.subr.mxu0 0.0
  %4760 = vmatpush1.msra.mxu0 0.0
  %4761 = vmatprep.subr.mxu0 0.0
  %4762 = vmatpush1.msra.mxu0 0.0
  %4763 = vmatprep.subr.mxu0 0.0
  %4764 = vmatpush1.msra.mxu0 0.0
  %4765 = vmatprep.subr.mxu0 0.0
  %4766 = vmatpush1.msra.mxu0 0.0
  %4767 = vmatprep.subr.mxu0 0.0
  %4768 = vmatpush1.msra.mxu0 0.0
  %4769 = vmatprep.subr.mxu0 0.0
  %4770 = vmatpush1.msra.mxu0 0.0
  %4771 = vmatprep.subr.mxu0 0.0
  %4772 = vmatpush1.msra.mxu0 0.0
  %4773 = vmatprep.subr.mxu0 0.0
  %4774 = vmatpush1.msra.mxu0 0.0
  %4775 = vmatprep.subr.mxu0 0.0
  %4776 = vmatpush1.msra.mxu0 0.0
  %4777 = vmatprep.subr.mxu0 0.0
  %4778 = vmatpush1.msra.mxu0 0.0
  %4779 = vmatprep.subr.mxu0 0.0
  %4780 = vmatpush1.msra.mxu0 0.0
  %4781 = vmatprep.subr.mxu0 0.0
  %4782 = vmatpush1.msra.mxu0 0.0
  %4783 = vmatprep.subr.mxu0 0.0
  %4784 = vmatpush1.msra.mxu0 0.0
  %4785 = vmatprep.subr.mxu0 0.0
  %4786 = vmatpush1.msra.mxu0 0.0
  %4787 = vmatprep.subr.mxu0 0.0
  %4788 = vmatpush1.msra.mxu0 0.0
  %4789 = vmatprep.mubr.f32.mxu0 0.0
  %4790 = vmatmul.mubr.f32.gmra.mrb[0].mxu0 %v4579
  %v4791 = vpop.f32.mrb[0].mxu0
  %v4792 = vadd.f32 0.0, %v4791
  %v4793 = vpop.f32.mrb[0].mxu0
  %v4794 = vadd.f32 0.0, %v4793
  %4795 = vmatprep.mubr.f32.mxu0 0.0
  %4796 = vmatmul.mubr.f32.gmra.mrb[0].mxu0 %v4580
  %v4797 = vpop.f32.mrb[0].mxu0
  %v4798 = vadd.f32 0.0, %v4797
  %v4799 = vpop.f32.mrb[0].mxu0
  %v4800 = vadd.f32 0.0, %v4799
  %4801 = vdwg.mxu0
  %4802 = vmatprep.subr.mxu0 %v4584
  %4803 = vmatpush1.msra.mxu0 %v4583
  %4804 = vmatprep.subr.mxu0 %v4593
  %4805 = vmatpush1.msra.mxu0 %v4592
  %4806 = vmatprep.subr.mxu0 %v4602
  %4807 = vmatpush1.msra.mxu0 %v4601
  %4808 = vmatprep.subr.mxu0 %v4611
  %4809 = vmatpush1.msra.mxu0 %v4610
  %4810 = vmatprep.subr.mxu0 %v4620
  %4811 = vmatpush1.msra.mxu0 %v4619
  %4812 = vmatprep.subr.mxu0 %v4629
  %4813 = vmatpush1.msra.mxu0 %v4628
  %4814 = vmatprep.subr.mxu0 %v4638
  %4815 = vmatpush1.msra.mxu0 %v4637
  %4816 = vmatprep.subr.mxu0 %v4647
  %4817 = vmatpush1.msra.mxu0 %v4646
  %4818 = vmatprep.subr.mxu0 %v4656
  %4819 = vmatpush1.msra.mxu0 %v4655
  %4820 = vmatprep.subr.mxu0 %v4665
  %4821 = vmatpush1.msra.mxu0 %v4664
  %4822 = vmatprep.subr.mxu0 %v4674
  %4823 = vmatpush1.msra.mxu0 %v4673
  %4824 = vmatprep.subr.mxu0 %v4683
  %4825 = vmatpush1.msra.mxu0 %v4682
  %4826 = vmatprep.subr.mxu0 %v4692
  %4827 = vmatpush1.msra.mxu0 %v4691
  %4828 = vmatprep.subr.mxu0 %v4701
  %4829 = vmatpush1.msra.mxu0 %v4700
  %4830 = vmatprep.subr.mxu0 %v4710
  %4831 = vmatpush1.msra.mxu0 %v4709
  %4832 = vmatprep.subr.mxu0 %v4719
  %4833 = vmatpush1.msra.mxu0 %v4718
  %4834 = vmatprep.subr.mxu0 0.0
  %4835 = vmatpush1.msra.mxu0 0.0
  %4836 = vmatprep.subr.mxu0 0.0
  %4837 = vmatpush1.msra.mxu0 0.0
  %4838 = vmatprep.subr.mxu0 0.0
  %4839 = vmatpush1.msra.mxu0 0.0
  %4840 = vmatprep.subr.mxu0 0.0
  %4841 = vmatpush1.msra.mxu0 0.0
  %4842 = vmatprep.subr.mxu0 0.0
  %4843 = vmatpush1.msra.mxu0 0.0
  %4844 = vmatprep.subr.mxu0 0.0
  %4845 = vmatpush1.msra.mxu0 0.0
  %4846 = vmatprep.subr.mxu0 0.0
  %4847 = vmatpush1.msra.mxu0 0.0
  %4848 = vmatprep.subr.mxu0 0.0
  %4849 = vmatpush1.msra.mxu0 0.0
  %4850 = vmatprep.subr.mxu0 0.0
  %4851 = vmatpush1.msra.mxu0 0.0
  %4852 = vmatprep.subr.mxu0 0.0
  %4853 = vmatpush1.msra.mxu0 0.0
  %4854 = vmatprep.subr.mxu0 0.0
  %4855 = vmatpush1.msra.mxu0 0.0
  %4856 = vmatprep.subr.mxu0 0.0
  %4857 = vmatpush1.msra.mxu0 0.0
  %4858 = vmatprep.subr.mxu0 0.0
  %4859 = vmatpush1.msra.mxu0 0.0
  %4860 = vmatprep.subr.mxu0 0.0
  %4861 = vmatpush1.msra.mxu0 0.0
  %4862 = vmatprep.subr.mxu0 0.0
  %4863 = vmatpush1.msra.mxu0 0.0
  %4864 = vmatprep.subr.mxu0 0.0
  %4865 = vmatpush1.msra.mxu0 0.0
  %4866 = vmatprep.mubr.f32.mxu0 0.0
  %4867 = vmatmul.mubr.f32.gmra.mrb[0].mxu0 %v4579
  %v4868 = vpop.f32.mrb[0].mxu0
  %v4869 = vadd.f32 0.0, %v4868
  %v4870 = vpop.f32.mrb[0].mxu0
  %v4871 = vadd.f32 0.0, %v4870
  %4872 = vmatprep.mubr.f32.mxu0 0.0
  %4873 = vmatmul.mubr.f32.gmra.mrb[0].mxu0 %v4580
  %v4874 = vpop.f32.mrb[0].mxu0
  %v4875 = vadd.f32 0.0, %v4874
  %v4876 = vpop.f32.mrb[0].mxu0
  %v4877 = vadd.f32 0.0, %v4876
  %4878 = vdwg.mxu0
  %4879 = vmatprep.subr.mxu0 %v4586
  %4880 = vmatpush1.msra.mxu0 %v4585
  %4881 = vmatprep.subr.mxu0 %v4595
  %4882 = vmatpush1.msra.mxu0 %v4594
  %4883 = vmatprep.subr.mxu0 %v4604
  %4884 = vmatpush1.msra.mxu0 %v4603
  %4885 = vmatprep.subr.mxu0 %v4613
  %4886 = vmatpush1.msra.mxu0 %v4612
  %4887 = vmatprep.subr.mxu0 %v4622
  %4888 = vmatpush1.msra.mxu0 %v4621
  %4889 = vmatprep.subr.mxu0 %v4631
  %4890 = vmatpush1.msra.mxu0 %v4630
  %4891 = vmatprep.subr.mxu0 %v4640
  %4892 = vmatpush1.msra.mxu0 %v4639
  %4893 = vmatprep.subr.mxu0 %v4649
  %4894 = vmatpush1.msra.mxu0 %v4648
  %4895 = vmatprep.subr.mxu0 %v4658
  %4896 = vmatpush1.msra.mxu0 %v4657
  %4897 = vmatprep.subr.mxu0 %v4667
  %4898 = vmatpush1.msra.mxu0 %v4666
  %4899 = vmatprep.subr.mxu0 %v4676
  %4900 = vmatpush1.msra.mxu0 %v4675
  %4901 = vmatprep.subr.mxu0 %v4685
  %4902 = vmatpush1.msra.mxu0 %v4684
  %4903 = vmatprep.subr.mxu0 %v4694
  %4904 = vmatpush1.msra.mxu0 %v4693
  %4905 = vmatprep.subr.mxu0 %v4703
  %4906 = vmatpush1.msra.mxu0 %v4702
  %4907 = vmatprep.subr.mxu0 %v4712
  %4908 = vmatpush1.msra.mxu0 %v4711
  %4909 = vmatprep.subr.mxu0 %v4721
  %4910 = vmatpush1.msra.mxu0 %v4720
  %4911 = vmatprep.subr.mxu0 0.0
  %4912 = vmatpush1.msra.mxu0 0.0
  %4913 = vmatprep.subr.mxu0 0.0
  %4914 = vmatpush1.msra.mxu0 0.0
  %4915 = vmatprep.subr.mxu0 0.0
  %4916 = vmatpush1.msra.mxu0 0.0
  %4917 = vmatprep.subr.mxu0 0.0
  %4918 = vmatpush1.msra.mxu0 0.0
  %4919 = vmatprep.subr.mxu0 0.0
  %4920 = vmatpush1.msra.mxu0 0.0
  %4921 = vmatprep.subr.mxu0 0.0
  %4922 = vmatpush1.msra.mxu0 0.0
  %4923 = vmatprep.subr.mxu0 0.0
  %4924 = vmatpush1.msra.mxu0 0.0
  %4925 = vmatprep.subr.mxu0 0.0
  %4926 = vmatpush1.msra.mxu0 0.0
  %4927 = vmatprep.subr.mxu0 0.0
  %4928 = vmatpush1.msra.mxu0 0.0
  %4929 = vmatprep.subr.mxu0 0.0
  %4930 = vmatpush1.msra.mxu0 0.0
  %4931 = vmatprep.subr.mxu0 0.0
  %4932 = vmatpush1.msra.mxu0 0.0
  %4933 = vmatprep.subr.mxu0 0.0
  %4934 = vmatpush1.msra.mxu0 0.0
  %4935 = vmatprep.subr.mxu0 0.0
  %4936 = vmatpush1.msra.mxu0 0.0
  %4937 = vmatprep.subr.mxu0 0.0
  %4938 = vmatpush1.msra.mxu0 0.0
  %4939 = vmatprep.subr.mxu0 0.0
  %4940 = vmatpush1.msra.mxu0 0.0
  %4941 = vmatprep.subr.mxu0 0.0
  %4942 = vmatpush1.msra.mxu0 0.0
  %4943 = vmatprep.mubr.f32.mxu0 0.0
  %4944 = vmatmul.mubr.f32.gmra.mrb[0].mxu0 %v4579
  %v4945 = vpop.f32.mrb[0].mxu0
  %v4946 = vadd.f32 0.0, %v4945
  %v4947 = vpop.f32.mrb[0].mxu0
  %v4948 = vadd.f32 0.0, %v4947
  %4949 = vmatprep.mubr.f32.mxu0 0.0
  %4950 = vmatmul.mubr.f32.gmra.mrb[0].mxu0 %v4580
  %v4951 = vpop.f32.mrb[0].mxu0
  %v4952 = vadd.f32 0.0, %v4951
  %v4953 = vpop.f32.mrb[0].mxu0
  %v4954 = vadd.f32 0.0, %v4953
  %4955 = vdwg.mxu0
  %4956 = vmatprep.subr.mxu0 %v4588
  %4957 = vmatpush1.msra.mxu0 %v4587
  %4958 = vmatprep.subr.mxu0 %v4597
  %4959 = vmatpush1.msra.mxu0 %v4596
  %4960 = vmatprep.subr.mxu0 %v4606
  %4961 = vmatpush1.msra.mxu0 %v4605
  %4962 = vmatprep.subr.mxu0 %v4615
  %4963 = vmatpush1.msra.mxu0 %v4614
  %4964 = vmatprep.subr.mxu0 %v4624
  %4965 = vmatpush1.msra.mxu0 %v4623
  %4966 = vmatprep.subr.mxu0 %v4633
  %4967 = vmatpush1.msra.mxu0 %v4632
  %4968 = vmatprep.subr.mxu0 %v4642
  %4969 = vmatpush1.msra.mxu0 %v4641
  %4970 = vmatprep.subr.mxu0 %v4651
  %4971 = vmatpush1.msra.mxu0 %v4650
  %4972 = vmatprep.subr.mxu0 %v4660
  %4973 = vmatpush1.msra.mxu0 %v4659
  %4974 = vmatprep.subr.mxu0 %v4669
  %4975 = vmatpush1.msra.mxu0 %v4668
  %4976 = vmatprep.subr.mxu0 %v4678
  %4977 = vmatpush1.msra.mxu0 %v4677
  %4978 = vmatprep.subr.mxu0 %v4687
  %4979 = vmatpush1.msra.mxu0 %v4686
  %4980 = vmatprep.subr.mxu0 %v4696
  %4981 = vmatpush1.msra.mxu0 %v4695
  %4982 = vmatprep.subr.mxu0 %v4705
  %4983 = vmatpush1.msra.mxu0 %v4704
  %4984 = vmatprep.subr.mxu0 %v4714
  %4985 = vmatpush1.msra.mxu0 %v4713
  %4986 = vmatprep.subr.mxu0 %v4723
  %4987 = vmatpush1.msra.mxu0 %v4722
  %4988 = vmatprep.subr.mxu0 0.0
  %4989 = vmatpush1.msra.mxu0 0.0
  %4990 = vmatprep.subr.mxu0 0.0
  %4991 = vmatpush1.msra.mxu0 0.0
  %4992 = vmatprep.subr.mxu0 0.0
  %4993 = vmatpush1.msra.mxu0 0.0
  %4994 = vmatprep.subr.mxu0 0.0
  %4995 = vmatpush1.msra.mxu0 0.0
  %4996 = vmatprep.subr.mxu0 0.0
  %4997 = vmatpush1.msra.mxu0 0.0
  %4998 = vmatprep.subr.mxu0 0.0
  %4999 = vmatpush1.msra.mxu0 0.0
  %5000 = vmatprep.subr.mxu0 0.0
  %5001 = vmatpush1.msra.mxu0 0.0
  %5002 = vmatprep.subr.mxu0 0.0
  %5003 = vmatpush1.msra.mxu0 0.0
  %5004 = vmatprep.subr.mxu0 0.0
  %5005 = vmatpush1.msra.mxu0 0.0
  %5006 = vmatprep.subr.mxu0 0.0
  %5007 = vmatpush1.msra.mxu0 0.0
  %5008 = vmatprep.subr.mxu0 0.0
  %5009 = vmatpush1.msra.mxu0 0.0
  %5010 = vmatprep.subr.mxu0 0.0
  %5011 = vmatpush1.msra.mxu0 0.0
  %5012 = vmatprep.subr.mxu0 0.0
  %5013 = vmatpush1.msra.mxu0 0.0
  %5014 = vmatprep.subr.mxu0 0.0
  %5015 = vmatpush1.msra.mxu0 0.0
  %5016 = vmatprep.subr.mxu0 0.0
  %5017 = vmatpush1.msra.mxu0 0.0
  %5018 = vmatprep.subr.mxu0 0.0
  %5019 = vmatpush1.msra.mxu0 0.0
  %5020 = vmatprep.mubr.f32.mxu0 0.0
  %5021 = vmatmul.mubr.f32.gmra.mrb[0].mxu0 %v4579
  %v5022 = vpop.f32.mrb[0].mxu0
  %v5023 = vadd.f32 0.0, %v5022
  %v5024 = vpop.f32.mrb[0].mxu0
  %v5025 = vadd.f32 0.0, %v5024
  %5026 = vmatprep.mubr.f32.mxu0 0.0
  %5027 = vmatmul.mubr.f32.gmra.mrb[0].mxu0 %v4580
  %v5028 = vpop.f32.mrb[0].mxu0
  %v5029 = vadd.f32 0.0, %v5028
  %v5030 = vpop.f32.mrb[0].mxu0
  %v5031 = vadd.f32 0.0, %v5030
  %5032 = vdwg.mxu0
  %5033 = vmatprep.subr.mxu0 0.0
  %5034 = vmatpush1.msra.mxu0 %v4589
  %5035 = vmatprep.subr.mxu0 0.0
  %5036 = vmatpush1.msra.mxu0 %v4598
  %5037 = vmatprep.subr.mxu0 0.0
  %5038 = vmatpush1.msra.mxu0 %v4607
  %5039 = vmatprep.subr.mxu0 0.0
  %5040 = vmatpush1.msra.mxu0 %v4616
  %5041 = vmatprep.subr.mxu0 0.0
  %5042 = vmatpush1.msra.mxu0 %v4625
  %5043 = vmatprep.subr.mxu0 0.0
  %5044 = vmatpush1.msra.mxu0 %v4634
  %5045 = vmatprep.subr.mxu0 0.0
  %5046 = vmatpush1.msra.mxu0 %v4643
  %5047 = vmatprep.subr.mxu0 0.0
  %5048 = vmatpush1.msra.mxu0 %v4652
  %5049 = vmatprep.subr.mxu0 0.0
  %5050 = vmatpush1.msra.mxu0 %v4661
  %5051 = vmatprep.subr.mxu0 0.0
  %5052 = vmatpush1.msra.mxu0 %v4670
  %5053 = vmatprep.subr.mxu0 0.0
  %5054 = vmatpush1.msra.mxu0 %v4679
  %5055 = vmatprep.subr.mxu0 0.0
  %5056 = vmatpush1.msra.mxu0 %v4688
  %5057 = vmatprep.subr.mxu0 0.0
  %5058 = vmatpush1.msra.mxu0 %v4697
  %5059 = vmatprep.subr.mxu0 0.0
  %5060 = vmatpush1.msra.mxu0 %v4706
  %5061 = vmatprep.subr.mxu0 0.0
  %5062 = vmatpush1.msra.mxu0 %v4715
  %5063 = vmatprep.subr.mxu0 0.0
  %5064 = vmatpush1.msra.mxu0 %v4724
  %5065 = vmatprep.subr.mxu0 0.0
  %5066 = vmatpush1.msra.mxu0 0.0
  %5067 = vmatprep.subr.mxu0 0.0
  %5068 = vmatpush1.msra.mxu0 0.0
  %5069 = vmatprep.subr.mxu0 0.0
  %5070 = vmatpush1.msra.mxu0 0.0
  %5071 = vmatprep.subr.mxu0 0.0
  %5072 = vmatpush1.msra.mxu0 0.0
  %5073 = vmatprep.subr.mxu0 0.0
  %5074 = vmatpush1.msra.mxu0 0.0
  %5075 = vmatprep.subr.mxu0 0.0
  %5076 = vmatpush1.msra.mxu0 0.0
  %5077 = vmatprep.subr.mxu0 0.0
  %5078 = vmatpush1.msra.mxu0 0.0
  %5079 = vmatprep.subr.mxu0 0.0
  %5080 = vmatpush1.msra.mxu0 0.0
  %5081 = vmatprep.subr.mxu0 0.0
  %5082 = vmatpush1.msra.mxu0 0.0
  %5083 = vmatprep.subr.mxu0 0.0
  %5084 = vmatpush1.msra.mxu0 0.0
  %5085 = vmatprep.subr.mxu0 0.0
  %5086 = vmatpush1.msra.mxu0 0.0
  %5087 = vmatprep.subr.mxu0 0.0
  %5088 = vmatpush1.msra.mxu0 0.0
  %5089 = vmatprep.subr.mxu0 0.0
  %5090 = vmatpush1.msra.mxu0 0.0
  %5091 = vmatprep.subr.mxu0 0.0
  %5092 = vmatpush1.msra.mxu0 0.0
  %5093 = vmatprep.subr.mxu0 0.0
  %5094 = vmatpush1.msra.mxu0 0.0
  %5095 = vmatprep.subr.mxu0 0.0
  %5096 = vmatpush1.msra.mxu0 0.0
  %5097 = vmatprep.mubr.f32.mxu0 0.0
  %5098 = vmatmul.mubr.f32.gmra.mrb[0].mxu0 %v4579
  %v5099 = vpop.f32.mrb[0].mxu0
  %v5100 = vadd.f32 0.0, %v5099
  %v5101 = vpop.f32.mrb[0].mxu0
  %5102 = vmatprep.mubr.f32.mxu0 0.0
  %5103 = vmatmul.mubr.f32.gmra.mrb[0].mxu0 %v4580
  %v5104 = vpop.f32.mrb[0].mxu0
  %v5105 = vadd.f32 0.0, %v5104
  %v5106 = vpop.f32.mrb[0].mxu0
  %5107 = vdwg.mxu0
  %v5108 = vld [vmem:[%s12] sm:$0x1]
  %s5109 = scalar_lea.vmem %s12, 1
  %v5110 = vld [vmem:[%s5109] sm:$0x1]
  %v5112 = vsel %vm692, %v5110, 0
  %5114 = vmatprep.subr.mxu0 0.0
  %5115 = vmatpush1.msra.mxu0 %v4794
  %5116 = vmatprep.subr.mxu0 0.0
  %5117 = vmatpush1.msra.mxu0 %v4800
  %5118 = vmatprep.subr.mxu0 0.0
  %5119 = vmatpush1.msra.mxu0 0.0
  %5120 = vmatprep.subr.mxu0 0.0
  %5121 = vmatpush1.msra.mxu0 0.0
  %5122 = vmatprep.subr.mxu0 0.0
  %5123 = vmatpush1.msra.mxu0 0.0
  %5124 = vmatprep.subr.mxu0 0.0
  %5125 = vmatpush1.msra.mxu0 0.0
  %5126 = vmatprep.subr.mxu0 0.0
  %5127 = vmatpush1.msra.mxu0 0.0
  %5128 = vmatprep.subr.mxu0 0.0
  %5129 = vmatpush1.msra.mxu0 0.0
  %5130 = vmatprep.subr.mxu0 0.0
  %5131 = vmatpush1.msra.mxu0 0.0
  %5132 = vmatprep.subr.mxu0 0.0
  %5133 = vmatpush1.msra.mxu0 0.0
  %5134 = vmatprep.subr.mxu0 0.0
  %5135 = vmatpush1.msra.mxu0 0.0
  %5136 = vmatprep.subr.mxu0 0.0
  %5137 = vmatpush1.msra.mxu0 0.0
  %5138 = vmatprep.subr.mxu0 0.0
  %5139 = vmatpush1.msra.mxu0 0.0
  %5140 = vmatprep.subr.mxu0 0.0
  %5141 = vmatpush1.msra.mxu0 0.0
  %5142 = vmatprep.subr.mxu0 0.0
  %5143 = vmatpush1.msra.mxu0 0.0
  %5144 = vmatprep.subr.mxu0 0.0
  %5145 = vmatpush1.msra.mxu0 0.0
  %5146 = vmatprep.subr.mxu0 0.0
  %5147 = vmatpush1.msra.mxu0 0.0
  %5148 = vmatprep.subr.mxu0 0.0
  %5149 = vmatpush1.msra.mxu0 0.0
  %5150 = vmatprep.subr.mxu0 0.0
  %5151 = vmatpush1.msra.mxu0 0.0
  %5152 = vmatprep.subr.mxu0 0.0
  %5153 = vmatpush1.msra.mxu0 0.0
  %5154 = vmatprep.subr.mxu0 0.0
  %5155 = vmatpush1.msra.mxu0 0.0
  %5156 = vmatprep.subr.mxu0 0.0
  %5157 = vmatpush1.msra.mxu0 0.0
  %5158 = vmatprep.subr.mxu0 0.0
  %5159 = vmatpush1.msra.mxu0 0.0
  %5160 = vmatprep.subr.mxu0 0.0
  %5161 = vmatpush1.msra.mxu0 0.0
  %5162 = vmatprep.subr.mxu0 0.0
  %5163 = vmatpush1.msra.mxu0 0.0
  %5164 = vmatprep.subr.mxu0 0.0
  %5165 = vmatpush1.msra.mxu0 0.0
  %5166 = vmatprep.subr.mxu0 0.0
  %5167 = vmatpush1.msra.mxu0 0.0
  %5168 = vmatprep.subr.mxu0 0.0
  %5169 = vmatpush1.msra.mxu0 0.0
  %5170 = vmatprep.subr.mxu0 0.0
  %5171 = vmatpush1.msra.mxu0 0.0
  %5172 = vmatprep.subr.mxu0 0.0
  %5173 = vmatpush1.msra.mxu0 0.0
  %5174 = vmatprep.subr.mxu0 0.0
  %5175 = vmatpush1.msra.mxu0 0.0
  %5176 = vmatprep.subr.mxu0 0.0
  %5177 = vmatpush1.msra.mxu0 0.0
  %5178 = vmatprep.mubr.f32.mxu0 0.0
  %5179 = vmatmul.mubr.f32.gmra.mrb[0].mxu0 %v5112
  %v5180 = vpop.f32.mrb[0].mxu0
  %v5181 = vadd.f32 0.0, %v5180
  %v5182 = vpop.f32.mrb[0].mxu0
  %5183 = vdwg.mxu0
  %v5185 = vsel %vm692, %v5108, 0
  %5187 = vmatprep.subr.mxu0 0.0
  %5188 = vmatpush1.msra.mxu0 %v4792
  %5189 = vmatprep.subr.mxu0 0.0
  %5190 = vmatpush1.msra.mxu0 %v4798
  %5191 = vmatprep.subr.mxu0 0.0
  %5192 = vmatpush1.msra.mxu0 0.0
  %5193 = vmatprep.subr.mxu0 0.0
  %5194 = vmatpush1.msra.mxu0 0.0
  %5195 = vmatprep.subr.mxu0 0.0
  %5196 = vmatpush1.msra.mxu0 0.0
  %5197 = vmatprep.subr.mxu0 0.0
  %5198 = vmatpush1.msra.mxu0 0.0
  %5199 = vmatprep.subr.mxu0 0.0
  %5200 = vmatpush1.msra.mxu0 0.0
  %5201 = vmatprep.subr.mxu0 0.0
  %5202 = vmatpush1.msra.mxu0 0.0
  %5203 = vmatprep.subr.mxu0 0.0
  %5204 = vmatpush1.msra.mxu0 0.0
  %5205 = vmatprep.subr.mxu0 0.0
  %5206 = vmatpush1.msra.mxu0 0.0
  %5207 = vmatprep.subr.mxu0 0.0
  %5208 = vmatpush1.msra.mxu0 0.0
  %5209 = vmatprep.subr.mxu0 0.0
  %5210 = vmatpush1.msra.mxu0 0.0
  %5211 = vmatprep.subr.mxu0 0.0
  %5212 = vmatpush1.msra.mxu0 0.0
  %5213 = vmatprep.subr.mxu0 0.0
  %5214 = vmatpush1.msra.mxu0 0.0
  %5215 = vmatprep.subr.mxu0 0.0
  %5216 = vmatpush1.msra.mxu0 0.0
  %5217 = vmatprep.subr.mxu0 0.0
  %5218 = vmatpush1.msra.mxu0 0.0
  %5219 = vmatprep.subr.mxu0 0.0
  %5220 = vmatpush1.msra.mxu0 0.0
  %5221 = vmatprep.subr.mxu0 0.0
  %5222 = vmatpush1.msra.mxu0 0.0
  %5223 = vmatprep.subr.mxu0 0.0
  %5224 = vmatpush1.msra.mxu0 0.0
  %5225 = vmatprep.subr.mxu0 0.0
  %5226 = vmatpush1.msra.mxu0 0.0
  %5227 = vmatprep.subr.mxu0 0.0
  %5228 = vmatpush1.msra.mxu0 0.0
  %5229 = vmatprep.subr.mxu0 0.0
  %5230 = vmatpush1.msra.mxu0 0.0
  %5231 = vmatprep.subr.mxu0 0.0
  %5232 = vmatpush1.msra.mxu0 0.0
  %5233 = vmatprep.subr.mxu0 0.0
  %5234 = vmatpush1.msra.mxu0 0.0
  %5235 = vmatprep.subr.mxu0 0.0
  %5236 = vmatpush1.msra.mxu0 0.0
  %5237 = vmatprep.subr.mxu0 0.0
  %5238 = vmatpush1.msra.mxu0 0.0
  %5239 = vmatprep.subr.mxu0 0.0
  %5240 = vmatpush1.msra.mxu0 0.0
  %5241 = vmatprep.subr.mxu0 0.0
  %5242 = vmatpush1.msra.mxu0 0.0
  %5243 = vmatprep.subr.mxu0 0.0
  %5244 = vmatpush1.msra.mxu0 0.0
  %5245 = vmatprep.subr.mxu0 0.0
  %5246 = vmatpush1.msra.mxu0 0.0
  %5247 = vmatprep.subr.mxu0 0.0
  %5248 = vmatpush1.msra.mxu0 0.0
  %5249 = vmatprep.subr.mxu0 0.0
  %5250 = vmatpush1.msra.mxu0 0.0
  %5251 = vmatprep.mubr.f32.mxu0 0.0
  %5252 = vmatmul.mubr.f32.gmra.mrb[0].mxu0 %v5185
  %v5253 = vpop.f32.mrb[0].mxu0
  %v5254 = vadd.f32 %v5181, %v5253
  %v5255 = vpop.f32.mrb[0].mxu0
  %5256 = vdwg.mxu0
  %s5257 = scalar_lea.vmem %s12, 2
  %v5258 = vld [vmem:[%s5257] sm:$0x1]
  %v5260 = vsel %vm692, %v5258, 0
  %5262 = vmatprep.subr.mxu0 0.0
  %5263 = vmatpush1.msra.mxu0 %v4869
  %5264 = vmatprep.subr.mxu0 0.0
  %5265 = vmatpush1.msra.mxu0 %v4875
  %5266 = vmatprep.subr.mxu0 0.0
  %5267 = vmatpush1.msra.mxu0 0.0
  %5268 = vmatprep.subr.mxu0 0.0
  %5269 = vmatpush1.msra.mxu0 0.0
  %5270 = vmatprep.subr.mxu0 0.0
  %5271 = vmatpush1.msra.mxu0 0.0
  %5272 = vmatprep.subr.mxu0 0.0
  %5273 = vmatpush1.msra.mxu0 0.0
  %5274 = vmatprep.subr.mxu0 0.0
  %5275 = vmatpush1.msra.mxu0 0.0
  %5276 = vmatprep.subr.mxu0 0.0
  %5277 = vmatpush1.msra.mxu0 0.0
  %5278 = vmatprep.subr.mxu0 0.0
  %5279 = vmatpush1.msra.mxu0 0.0
  %5280 = vmatprep.subr.mxu0 0.0
  %5281 = vmatpush1.msra.mxu0 0.0
  %5282 = vmatprep.subr.mxu0 0.0
  %5283 = vmatpush1.msra.mxu0 0.0
  %5284 = vmatprep.subr.mxu0 0.0
  %5285 = vmatpush1.msra.mxu0 0.0
  %5286 = vmatprep.subr.mxu0 0.0
  %5287 = vmatpush1.msra.mxu0 0.0
  %5288 = vmatprep.subr.mxu0 0.0
  %5289 = vmatpush1.msra.mxu0 0.0
  %5290 = vmatprep.subr.mxu0 0.0
  %5291 = vmatpush1.msra.mxu0 0.0
  %5292 = vmatprep.subr.mxu0 0.0
  %5293 = vmatpush1.msra.mxu0 0.0
  %5294 = vmatprep.subr.mxu0 0.0
  %5295 = vmatpush1.msra.mxu0 0.0
  %5296 = vmatprep.subr.mxu0 0.0
  %5297 = vmatpush1.msra.mxu0 0.0
  %5298 = vmatprep.subr.mxu0 0.0
  %5299 = vmatpush1.msra.mxu0 0.0
  %5300 = vmatprep.subr.mxu0 0.0
  %5301 = vmatpush1.msra.mxu0 0.0
  %5302 = vmatprep.subr.mxu0 0.0
  %5303 = vmatpush1.msra.mxu0 0.0
  %5304 = vmatprep.subr.mxu0 0.0
  %5305 = vmatpush1.msra.mxu0 0.0
  %5306 = vmatprep.subr.mxu0 0.0
  %5307 = vmatpush1.msra.mxu0 0.0
  %5308 = vmatprep.subr.mxu0 0.0
  %5309 = vmatpush1.msra.mxu0 0.0
  %5310 = vmatprep.subr.mxu0 0.0
  %5311 = vmatpush1.msra.mxu0 0.0
  %5312 = vmatprep.subr.mxu0 0.0
  %5313 = vmatpush1.msra.mxu0 0.0
  %5314 = vmatprep.subr.mxu0 0.0
  %5315 = vmatpush1.msra.mxu0 0.0
  %5316 = vmatprep.subr.mxu0 0.0
  %5317 = vmatpush1.msra.mxu0 0.0
  %5318 = vmatprep.subr.mxu0 0.0
  %5319 = vmatpush1.msra.mxu0 0.0
  %5320 = vmatprep.subr.mxu0 0.0
  %5321 = vmatpush1.msra.mxu0 0.0
  %5322 = vmatprep.subr.mxu0 0.0
  %5323 = vmatpush1.msra.mxu0 0.0
  %5324 = vmatprep.subr.mxu0 0.0
  %5325 = vmatpush1.msra.mxu0 0.0
  %5326 = vmatprep.mubr.f32.mxu0 0.0
  %5327 = vmatmul.mubr.f32.gmra.mrb[0].mxu0 %v5260
  %v5328 = vpop.f32.mrb[0].mxu0
  %v5329 = vadd.f32 0.0, %v5328
  %v5330 = vpop.f32.mrb[0].mxu0
  %5331 = vdwg.mxu0
  %v5332 = vadd.f32 %v5254, %v5329
  %s5333 = scalar_lea.vmem %s12, 3
  %v5334 = vld [vmem:[%s5333] sm:$0x1]
  %v5336 = vsel %vm692, %v5334, 0
  %5338 = vmatprep.subr.mxu0 0.0
  %5339 = vmatpush1.msra.mxu0 %v4871
  %5340 = vmatprep.subr.mxu0 0.0
  %5341 = vmatpush1.msra.mxu0 %v4877
  %5342 = vmatprep.subr.mxu0 0.0
  %5343 = vmatpush1.msra.mxu0 0.0
  %5344 = vmatprep.subr.mxu0 0.0
  %5345 = vmatpush1.msra.mxu0 0.0
  %5346 = vmatprep.subr.mxu0 0.0
  %5347 = vmatpush1.msra.mxu0 0.0
  %5348 = vmatprep.subr.mxu0 0.0
  %5349 = vmatpush1.msra.mxu0 0.0
  %5350 = vmatprep.subr.mxu0 0.0
  %5351 = vmatpush1.msra.mxu0 0.0
  %5352 = vmatprep.subr.mxu0 0.0
  %5353 = vmatpush1.msra.mxu0 0.0
  %5354 = vmatprep.subr.mxu0 0.0
  %5355 = vmatpush1.msra.mxu0 0.0
  %5356 = vmatprep.subr.mxu0 0.0
  %5357 = vmatpush1.msra.mxu0 0.0
  %5358 = vmatprep.subr.mxu0 0.0
  %5359 = vmatpush1.msra.mxu0 0.0
  %5360 = vmatprep.subr.mxu0 0.0
  %5361 = vmatpush1.msra.mxu0 0.0
  %5362 = vmatprep.subr.mxu0 0.0
  %5363 = vmatpush1.msra.mxu0 0.0
  %5364 = vmatprep.subr.mxu0 0.0
  %5365 = vmatpush1.msra.mxu0 0.0
  %5366 = vmatprep.subr.mxu0 0.0
  %5367 = vmatpush1.msra.mxu0 0.0
  %5368 = vmatprep.subr.mxu0 0.0
  %5369 = vmatpush1.msra.mxu0 0.0
  %5370 = vmatprep.subr.mxu0 0.0
  %5371 = vmatpush1.msra.mxu0 0.0
  %5372 = vmatprep.subr.mxu0 0.0
  %5373 = vmatpush1.msra.mxu0 0.0
  %5374 = vmatprep.subr.mxu0 0.0
  %5375 = vmatpush1.msra.mxu0 0.0
  %5376 = vmatprep.subr.mxu0 0.0
  %5377 = vmatpush1.msra.mxu0 0.0
  %5378 = vmatprep.subr.mxu0 0.0
  %5379 = vmatpush1.msra.mxu0 0.0
  %5380 = vmatprep.subr.mxu0 0.0
  %5381 = vmatpush1.msra.mxu0 0.0
  %5382 = vmatprep.subr.mxu0 0.0
  %5383 = vmatpush1.msra.mxu0 0.0
  %5384 = vmatprep.subr.mxu0 0.0
  %5385 = vmatpush1.msra.mxu0 0.0
  %5386 = vmatprep.subr.mxu0 0.0
  %5387 = vmatpush1.msra.mxu0 0.0
  %5388 = vmatprep.subr.mxu0 0.0
  %5389 = vmatpush1.msra.mxu0 0.0
  %5390 = vmatprep.subr.mxu0 0.0
  %5391 = vmatpush1.msra.mxu0 0.0
  %5392 = vmatprep.subr.mxu0 0.0
  %5393 = vmatpush1.msra.mxu0 0.0
  %5394 = vmatprep.subr.mxu0 0.0
  %5395 = vmatpush1.msra.mxu0 0.0
  %5396 = vmatprep.subr.mxu0 0.0
  %5397 = vmatpush1.msra.mxu0 0.0
  %5398 = vmatprep.subr.mxu0 0.0
  %5399 = vmatpush1.msra.mxu0 0.0
  %5400 = vmatprep.subr.mxu0 0.0
  %5401 = vmatpush1.msra.mxu0 0.0
  %5402 = vmatprep.mubr.f32.mxu0 0.0
  %5403 = vmatmul.mubr.f32.gmra.mrb[0].mxu0 %v5336
  %v5404 = vpop.f32.mrb[0].mxu0
  %v5405 = vadd.f32 0.0, %v5404
  %v5406 = vpop.f32.mrb[0].mxu0
  %5407 = vdwg.mxu0
  %v5408 = vadd.f32 %v5332, %v5405
  %s5409 = scalar_lea.vmem %s12, 4
  %v5410 = vld [vmem:[%s5409] sm:$0x1]
  %v5412 = vsel %vm692, %v5410, 0
  %5414 = vmatprep.subr.mxu0 0.0
  %5415 = vmatpush1.msra.mxu0 %v4946
  %5416 = vmatprep.subr.mxu0 0.0
  %5417 = vmatpush1.msra.mxu0 %v4952
  %5418 = vmatprep.subr.mxu0 0.0
  %5419 = vmatpush1.msra.mxu0 0.0
  %5420 = vmatprep.subr.mxu0 0.0
  %5421 = vmatpush1.msra.mxu0 0.0
  %5422 = vmatprep.subr.mxu0 0.0
  %5423 = vmatpush1.msra.mxu0 0.0
  %5424 = vmatprep.subr.mxu0 0.0
  %5425 = vmatpush1.msra.mxu0 0.0
  %5426 = vmatprep.subr.mxu0 0.0
  %5427 = vmatpush1.msra.mxu0 0.0
  %5428 = vmatprep.subr.mxu0 0.0
  %5429 = vmatpush1.msra.mxu0 0.0
  %5430 = vmatprep.subr.mxu0 0.0
  %5431 = vmatpush1.msra.mxu0 0.0
  %5432 = vmatprep.subr.mxu0 0.0
  %5433 = vmatpush1.msra.mxu0 0.0
  %5434 = vmatprep.subr.mxu0 0.0
  %5435 = vmatpush1.msra.mxu0 0.0
  %5436 = vmatprep.subr.mxu0 0.0
  %5437 = vmatpush1.msra.mxu0 0.0
  %5438 = vmatprep.subr.mxu0 0.0
  %5439 = vmatpush1.msra.mxu0 0.0
  %5440 = vmatprep.subr.mxu0 0.0
  %5441 = vmatpush1.msra.mxu0 0.0
  %5442 = vmatprep.subr.mxu0 0.0
  %5443 = vmatpush1.msra.mxu0 0.0
  %5444 = vmatprep.subr.mxu0 0.0
  %5445 = vmatpush1.msra.mxu0 0.0
  %5446 = vmatprep.subr.mxu0 0.0
  %5447 = vmatpush1.msra.mxu0 0.0
  %5448 = vmatprep.subr.mxu0 0.0
  %5449 = vmatpush1.msra.mxu0 0.0
  %5450 = vmatprep.subr.mxu0 0.0
  %5451 = vmatpush1.msra.mxu0 0.0
  %5452 = vmatprep.subr.mxu0 0.0
  %5453 = vmatpush1.msra.mxu0 0.0
  %5454 = vmatprep.subr.mxu0 0.0
  %5455 = vmatpush1.msra.mxu0 0.0
  %5456 = vmatprep.subr.mxu0 0.0
  %5457 = vmatpush1.msra.mxu0 0.0
  %5458 = vmatprep.subr.mxu0 0.0
  %5459 = vmatpush1.msra.mxu0 0.0
  %5460 = vmatprep.subr.mxu0 0.0
  %5461 = vmatpush1.msra.mxu0 0.0
  %5462 = vmatprep.subr.mxu0 0.0
  %5463 = vmatpush1.msra.mxu0 0.0
  %5464 = vmatprep.subr.mxu0 0.0
  %5465 = vmatpush1.msra.mxu0 0.0
  %5466 = vmatprep.subr.mxu0 0.0
  %5467 = vmatpush1.msra.mxu0 0.0
  %5468 = vmatprep.subr.mxu0 0.0
  %5469 = vmatpush1.msra.mxu0 0.0
  %5470 = vmatprep.subr.mxu0 0.0
  %5471 = vmatpush1.msra.mxu0 0.0
  %5472 = vmatprep.subr.mxu0 0.0
  %5473 = vmatpush1.msra.mxu0 0.0
  %5474 = vmatprep.subr.mxu0 0.0
  %5475 = vmatpush1.msra.mxu0 0.0
  %5476 = vmatprep.subr.mxu0 0.0
  %5477 = vmatpush1.msra.mxu0 0.0
  %5478 = vmatprep.mubr.f32.mxu0 0.0
  %5479 = vmatmul.mubr.f32.gmra.mrb[0].mxu0 %v5412
  %v5480 = vpop.f32.mrb[0].mxu0
  %v5481 = vadd.f32 0.0, %v5480
  %v5482 = vpop.f32.mrb[0].mxu0
  %5483 = vdwg.mxu0
  %v5484 = vadd.f32 %v5408, %v5481
  %s5485 = scalar_lea.vmem %s12, 5
  %v5486 = vld [vmem:[%s5485] sm:$0x1]
  %v5488 = vsel %vm692, %v5486, 0
  %5490 = vmatprep.subr.mxu0 0.0
  %5491 = vmatpush1.msra.mxu0 %v4948
  %5492 = vmatprep.subr.mxu0 0.0
  %5493 = vmatpush1.msra.mxu0 %v4954
  %5494 = vmatprep.subr.mxu0 0.0
  %5495 = vmatpush1.msra.mxu0 0.0
  %5496 = vmatprep.subr.mxu0 0.0
  %5497 = vmatpush1.msra.mxu0 0.0
  %5498 = vmatprep.subr.mxu0 0.0
  %5499 = vmatpush1.msra.mxu0 0.0
  %5500 = vmatprep.subr.mxu0 0.0
  %5501 = vmatpush1.msra.mxu0 0.0
  %5502 = vmatprep.subr.mxu0 0.0
  %5503 = vmatpush1.msra.mxu0 0.0
  %5504 = vmatprep.subr.mxu0 0.0
  %5505 = vmatpush1.msra.mxu0 0.0
  %5506 = vmatprep.subr.mxu0 0.0
  %5507 = vmatpush1.msra.mxu0 0.0
  %5508 = vmatprep.subr.mxu0 0.0
  %5509 = vmatpush1.msra.mxu0 0.0
  %5510 = vmatprep.subr.mxu0 0.0
  %5511 = vmatpush1.msra.mxu0 0.0
  %5512 = vmatprep.subr.mxu0 0.0
  %5513 = vmatpush1.msra.mxu0 0.0
  %5514 = vmatprep.subr.mxu0 0.0
  %5515 = vmatpush1.msra.mxu0 0.0
  %5516 = vmatprep.subr.mxu0 0.0
  %5517 = vmatpush1.msra.mxu0 0.0
  %5518 = vmatprep.subr.mxu0 0.0
  %5519 = vmatpush1.msra.mxu0 0.0
  %5520 = vmatprep.subr.mxu0 0.0
  %5521 = vmatpush1.msra.mxu0 0.0
  %5522 = vmatprep.subr.mxu0 0.0
  %5523 = vmatpush1.msra.mxu0 0.0
  %5524 = vmatprep.subr.mxu0 0.0
  %5525 = vmatpush1.msra.mxu0 0.0
  %5526 = vmatprep.subr.mxu0 0.0
  %5527 = vmatpush1.msra.mxu0 0.0
  %5528 = vmatprep.subr.mxu0 0.0
  %5529 = vmatpush1.msra.mxu0 0.0
  %5530 = vmatprep.subr.mxu0 0.0
  %5531 = vmatpush1.msra.mxu0 0.0
  %5532 = vmatprep.subr.mxu0 0.0
  %5533 = vmatpush1.msra.mxu0 0.0
  %5534 = vmatprep.subr.mxu0 0.0
  %5535 = vmatpush1.msra.mxu0 0.0
  %5536 = vmatprep.subr.mxu0 0.0
  %5537 = vmatpush1.msra.mxu0 0.0
  %5538 = vmatprep.subr.mxu0 0.0
  %5539 = vmatpush1.msra.mxu0 0.0
  %5540 = vmatprep.subr.mxu0 0.0
  %5541 = vmatpush1.msra.mxu0 0.0
  %5542 = vmatprep.subr.mxu0 0.0
  %5543 = vmatpush1.msra.mxu0 0.0
  %5544 = vmatprep.subr.mxu0 0.0
  %5545 = vmatpush1.msra.mxu0 0.0
  %5546 = vmatprep.subr.mxu0 0.0
  %5547 = vmatpush1.msra.mxu0 0.0
  %5548 = vmatprep.subr.mxu0 0.0
  %5549 = vmatpush1.msra.mxu0 0.0
  %5550 = vmatprep.subr.mxu0 0.0
  %5551 = vmatpush1.msra.mxu0 0.0
  %5552 = vmatprep.subr.mxu0 0.0
  %5553 = vmatpush1.msra.mxu0 0.0
  %5554 = vmatprep.mubr.f32.mxu0 0.0
  %5555 = vmatmul.mubr.f32.gmra.mrb[0].mxu0 %v5488
  %v5556 = vpop.f32.mrb[0].mxu0
  %v5557 = vadd.f32 0.0, %v5556
  %v5558 = vpop.f32.mrb[0].mxu0
  %5559 = vdwg.mxu0
  %v5560 = vadd.f32 %v5484, %v5557
  %s5561 = scalar_lea.vmem %s12, 6
  %v5562 = vld [vmem:[%s5561] sm:$0x1]
  %v5564 = vsel %vm692, %v5562, 0
  %5566 = vmatprep.subr.mxu0 0.0
  %5567 = vmatpush1.msra.mxu0 %v5023
  %5568 = vmatprep.subr.mxu0 0.0
  %5569 = vmatpush1.msra.mxu0 %v5029
  %5570 = vmatprep.subr.mxu0 0.0
  %5571 = vmatpush1.msra.mxu0 0.0
  %5572 = vmatprep.subr.mxu0 0.0
  %5573 = vmatpush1.msra.mxu0 0.0
  %5574 = vmatprep.subr.mxu0 0.0
  %5575 = vmatpush1.msra.mxu0 0.0
  %5576 = vmatprep.subr.mxu0 0.0
  %5577 = vmatpush1.msra.mxu0 0.0
  %5578 = vmatprep.subr.mxu0 0.0
  %5579 = vmatpush1.msra.mxu0 0.0
  %5580 = vmatprep.subr.mxu0 0.0
  %5581 = vmatpush1.msra.mxu0 0.0
  %5582 = vmatprep.subr.mxu0 0.0
  %5583 = vmatpush1.msra.mxu0 0.0
  %5584 = vmatprep.subr.mxu0 0.0
  %5585 = vmatpush1.msra.mxu0 0.0
  %5586 = vmatprep.subr.mxu0 0.0
  %5587 = vmatpush1.msra.mxu0 0.0
  %5588 = vmatprep.subr.mxu0 0.0
  %5589 = vmatpush1.msra.mxu0 0.0
  %5590 = vmatprep.subr.mxu0 0.0
  %5591 = vmatpush1.msra.mxu0 0.0
  %5592 = vmatprep.subr.mxu0 0.0
  %5593 = vmatpush1.msra.mxu0 0.0
  %5594 = vmatprep.subr.mxu0 0.0
  %5595 = vmatpush1.msra.mxu0 0.0
  %5596 = vmatprep.subr.mxu0 0.0
  %5597 = vmatpush1.msra.mxu0 0.0
  %5598 = vmatprep.subr.mxu0 0.0
  %5599 = vmatpush1.msra.mxu0 0.0
  %5600 = vmatprep.subr.mxu0 0.0
  %5601 = vmatpush1.msra.mxu0 0.0
  %5602 = vmatprep.subr.mxu0 0.0
  %5603 = vmatpush1.msra.mxu0 0.0
  %5604 = vmatprep.subr.mxu0 0.0
  %5605 = vmatpush1.msra.mxu0 0.0
  %5606 = vmatprep.subr.mxu0 0.0
  %5607 = vmatpush1.msra.mxu0 0.0
  %5608 = vmatprep.subr.mxu0 0.0
  %5609 = vmatpush1.msra.mxu0 0.0
  %5610 = vmatprep.subr.mxu0 0.0
  %5611 = vmatpush1.msra.mxu0 0.0
  %5612 = vmatprep.subr.mxu0 0.0
  %5613 = vmatpush1.msra.mxu0 0.0
  %5614 = vmatprep.subr.mxu0 0.0
  %5615 = vmatpush1.msra.mxu0 0.0
  %5616 = vmatprep.subr.mxu0 0.0
  %5617 = vmatpush1.msra.mxu0 0.0
  %5618 = vmatprep.subr.mxu0 0.0
  %5619 = vmatpush1.msra.mxu0 0.0
  %5620 = vmatprep.subr.mxu0 0.0
  %5621 = vmatpush1.msra.mxu0 0.0
  %5622 = vmatprep.subr.mxu0 0.0
  %5623 = vmatpush1.msra.mxu0 0.0
  %5624 = vmatprep.subr.mxu0 0.0
  %5625 = vmatpush1.msra.mxu0 0.0
  %5626 = vmatprep.subr.mxu0 0.0
  %5627 = vmatpush1.msra.mxu0 0.0
  %5628 = vmatprep.subr.mxu0 0.0
  %5629 = vmatpush1.msra.mxu0 0.0
  %5630 = vmatprep.mubr.f32.mxu0 0.0
  %5631 = vmatmul.mubr.f32.gmra.mrb[0].mxu0 %v5564
  %v5632 = vpop.f32.mrb[0].mxu0
  %v5633 = vadd.f32 0.0, %v5632
  %v5634 = vpop.f32.mrb[0].mxu0
  %5635 = vdwg.mxu0
  %v5636 = vadd.f32 %v5560, %v5633
  %s5637 = scalar_lea.vmem %s12, 7
  %v5638 = vld [vmem:[%s5637] sm:$0x1]
  %v5640 = vsel %vm692, %v5638, 0
  %5642 = vmatprep.subr.mxu0 0.0
  %5643 = vmatpush1.msra.mxu0 %v5025
  %5644 = vmatprep.subr.mxu0 0.0
  %5645 = vmatpush1.msra.mxu0 %v5031
  %5646 = vmatprep.subr.mxu0 0.0
  %5647 = vmatpush1.msra.mxu0 0.0
  %5648 = vmatprep.subr.mxu0 0.0
  %5649 = vmatpush1.msra.mxu0 0.0
  %5650 = vmatprep.subr.mxu0 0.0
  %5651 = vmatpush1.msra.mxu0 0.0
  %5652 = vmatprep.subr.mxu0 0.0
  %5653 = vmatpush1.msra.mxu0 0.0
  %5654 = vmatprep.subr.mxu0 0.0
  %5655 = vmatpush1.msra.mxu0 0.0
  %5656 = vmatprep.subr.mxu0 0.0
  %5657 = vmatpush1.msra.mxu0 0.0
  %5658 = vmatprep.subr.mxu0 0.0
  %5659 = vmatpush1.msra.mxu0 0.0
  %5660 = vmatprep.subr.mxu0 0.0
  %5661 = vmatpush1.msra.mxu0 0.0
  %5662 = vmatprep.subr.mxu0 0.0
  %5663 = vmatpush1.msra.mxu0 0.0
  %5664 = vmatprep.subr.mxu0 0.0
  %5665 = vmatpush1.msra.mxu0 0.0
  %5666 = vmatprep.subr.mxu0 0.0
  %5667 = vmatpush1.msra.mxu0 0.0
  %5668 = vmatprep.subr.mxu0 0.0
  %5669 = vmatpush1.msra.mxu0 0.0
  %5670 = vmatprep.subr.mxu0 0.0
  %5671 = vmatpush1.msra.mxu0 0.0
  %5672 = vmatprep.subr.mxu0 0.0
  %5673 = vmatpush1.msra.mxu0 0.0
  %5674 = vmatprep.subr.mxu0 0.0
  %5675 = vmatpush1.msra.mxu0 0.0
  %5676 = vmatprep.subr.mxu0 0.0
  %5677 = vmatpush1.msra.mxu0 0.0
  %5678 = vmatprep.subr.mxu0 0.0
  %5679 = vmatpush1.msra.mxu0 0.0
  %5680 = vmatprep.subr.mxu0 0.0
  %5681 = vmatpush1.msra.mxu0 0.0
  %5682 = vmatprep.subr.mxu0 0.0
  %5683 = vmatpush1.msra.mxu0 0.0
  %5684 = vmatprep.subr.mxu0 0.0
  %5685 = vmatpush1.msra.mxu0 0.0
  %5686 = vmatprep.subr.mxu0 0.0
  %5687 = vmatpush1.msra.mxu0 0.0
  %5688 = vmatprep.subr.mxu0 0.0
  %5689 = vmatpush1.msra.mxu0 0.0
  %5690 = vmatprep.subr.mxu0 0.0
  %5691 = vmatpush1.msra.mxu0 0.0
  %5692 = vmatprep.subr.mxu0 0.0
  %5693 = vmatpush1.msra.mxu0 0.0
  %5694 = vmatprep.subr.mxu0 0.0
  %5695 = vmatpush1.msra.mxu0 0.0
  %5696 = vmatprep.subr.mxu0 0.0
  %5697 = vmatpush1.msra.mxu0 0.0
  %5698 = vmatprep.subr.mxu0 0.0
  %5699 = vmatpush1.msra.mxu0 0.0
  %5700 = vmatprep.subr.mxu0 0.0
  %5701 = vmatpush1.msra.mxu0 0.0
  %5702 = vmatprep.subr.mxu0 0.0
  %5703 = vmatpush1.msra.mxu0 0.0
  %5704 = vmatprep.subr.mxu0 0.0
  %5705 = vmatpush1.msra.mxu0 0.0
  %5706 = vmatprep.mubr.f32.mxu0 0.0
  %5707 = vmatmul.mubr.f32.gmra.mrb[0].mxu0 %v5640
  %v5708 = vpop.f32.mrb[0].mxu0
  %v5709 = vadd.f32 0.0, %v5708
  %v5710 = vpop.f32.mrb[0].mxu0
  %5711 = vdwg.mxu0
  %v5712 = vadd.f32 %v5636, %v5709
  %s5713 = scalar_lea.vmem %s12, 8
  %v5714 = vld [vmem:[%s5713] sm:$0x1]
  %v5716 = vsel %vm692, %v5714, 0
  %5718 = vmatprep.subr.mxu0 0.0
  %5719 = vmatpush1.msra.mxu0 %v5100
  %5720 = vmatprep.subr.mxu0 0.0
  %5721 = vmatpush1.msra.mxu0 %v5105
  %5722 = vmatprep.subr.mxu0 0.0
  %5723 = vmatpush1.msra.mxu0 0.0
  %5724 = vmatprep.subr.mxu0 0.0
  %5725 = vmatpush1.msra.mxu0 0.0
  %5726 = vmatprep.subr.mxu0 0.0
  %5727 = vmatpush1.msra.mxu0 0.0
  %5728 = vmatprep.subr.mxu0 0.0
  %5729 = vmatpush1.msra.mxu0 0.0
  %5730 = vmatprep.subr.mxu0 0.0
  %5731 = vmatpush1.msra.mxu0 0.0
  %5732 = vmatprep.subr.mxu0 0.0
  %5733 = vmatpush1.msra.mxu0 0.0
  %5734 = vmatprep.subr.mxu0 0.0
  %5735 = vmatpush1.msra.mxu0 0.0
  %5736 = vmatprep.subr.mxu0 0.0
  %5737 = vmatpush1.msra.mxu0 0.0
  %5738 = vmatprep.subr.mxu0 0.0
  %5739 = vmatpush1.msra.mxu0 0.0
  %5740 = vmatprep.subr.mxu0 0.0
  %5741 = vmatpush1.msra.mxu0 0.0
  %5742 = vmatprep.subr.mxu0 0.0
  %5743 = vmatpush1.msra.mxu0 0.0
  %5744 = vmatprep.subr.mxu0 0.0
  %5745 = vmatpush1.msra.mxu0 0.0
  %5746 = vmatprep.subr.mxu0 0.0
  %5747 = vmatpush1.msra.mxu0 0.0
  %5748 = vmatprep.subr.mxu0 0.0
  %5749 = vmatpush1.msra.mxu0 0.0
  %5750 = vmatprep.subr.mxu0 0.0
  %5751 = vmatpush1.msra.mxu0 0.0
  %5752 = vmatprep.subr.mxu0 0.0
  %5753 = vmatpush1.msra.mxu0 0.0
  %5754 = vmatprep.subr.mxu0 0.0
  %5755 = vmatpush1.msra.mxu0 0.0
  %5756 = vmatprep.subr.mxu0 0.0
  %5757 = vmatpush1.msra.mxu0 0.0
  %5758 = vmatprep.subr.mxu0 0.0
  %5759 = vmatpush1.msra.mxu0 0.0
  %5760 = vmatprep.subr.mxu0 0.0
  %5761 = vmatpush1.msra.mxu0 0.0
  %5762 = vmatprep.subr.mxu0 0.0
  %5763 = vmatpush1.msra.mxu0 0.0
  %5764 = vmatprep.subr.mxu0 0.0
  %5765 = vmatpush1.msra.mxu0 0.0
  %5766 = vmatprep.subr.mxu0 0.0
  %5767 = vmatpush1.msra.mxu0 0.0
  %5768 = vmatprep.subr.mxu0 0.0
  %5769 = vmatpush1.msra.mxu0 0.0
  %5770 = vmatprep.subr.mxu0 0.0
  %5771 = vmatpush1.msra.mxu0 0.0
  %5772 = vmatprep.subr.mxu0 0.0
  %5773 = vmatpush1.msra.mxu0 0.0
  %5774 = vmatprep.subr.mxu0 0.0
  %5775 = vmatpush1.msra.mxu0 0.0
  %5776 = vmatprep.subr.mxu0 0.0
  %5777 = vmatpush1.msra.mxu0 0.0
  %5778 = vmatprep.subr.mxu0 0.0
  %5779 = vmatpush1.msra.mxu0 0.0
  %5780 = vmatprep.subr.mxu0 0.0
  %5781 = vmatpush1.msra.mxu0 0.0
  %5782 = vmatprep.mubr.f32.mxu0 0.0
  %5783 = vmatmul.mubr.f32.gmra.mrb[0].mxu0 %v5716
  %v5784 = vpop.f32.mrb[0].mxu0
  %v5785 = vadd.f32 0.0, %v5784
  %v5786 = vpop.f32.mrb[0].mxu0
  %5787 = vdwg.mxu0
  %v5788 = vadd.f32 %v5712, %v5785
  %v5789 = vld [vmem:[%s16] sm:$0x1]
  %v5790 = vadd.f32 %v5788, %v5789
  %v5791 = vld [vmem:[%s15] sm:$0x1]
  %v5792 = vld [vmem:[%s13] sm:$0xff]
  %v5793 = vld [vmem:[%s13 + $0x8] sm:$0xff]
  %v5794 = vld [vmem:[%s13 + $0x10] sm:$0xff]
  %v5795 = vld [vmem:[%s13 + $0x18] sm:$0xff]
  %v5796 = vld [vmem:[%s13 + $0x20] sm:$0xff]
  %v5797 = vld [vmem:[%s13 + $0x28] sm:$0xff]
  %v5798 = vld [vmem:[%s13 + $0x30] sm:$0xff]
  %v5799 = vld [vmem:[%s13 + $0x38] sm:$0xff]
  %v5800 = vld [vmem:[%s13 + $0x40] sm:$0xff]
  %v5801 = vld [vmem:[%s13 + $0x48] sm:$0xff]
  %v5802 = vld [vmem:[%s13 + $0x50] sm:$0xff]
  %v5803 = vld [vmem:[%s13 + $0x58] sm:$0xff]
  %v5804 = vld [vmem:[%s13 + $0x60] sm:$0xff]
  %v5805 = vld [vmem:[%s13 + $0x68] sm:$0xff]
  %v5806 = vld [vmem:[%s13 + $0x70] sm:$0xff]
  %v5807 = vld [vmem:[%s13 + $0x78] sm:$0xff]
  %5808 = vmatprep.subr.mxu0 0.0
  %5809 = vmatpush1.msra.mxu0 %v5792
  %5810 = vmatprep.subr.mxu0 0.0
  %5811 = vmatpush1.msra.mxu0 %v5793
  %5812 = vmatprep.subr.mxu0 0.0
  %5813 = vmatpush1.msra.mxu0 %v5794
  %5814 = vmatprep.subr.mxu0 0.0
  %5815 = vmatpush1.msra.mxu0 %v5795
  %5816 = vmatprep.subr.mxu0 0.0
  %5817 = vmatpush1.msra.mxu0 %v5796
  %5818 = vmatprep.subr.mxu0 0.0
  %5819 = vmatpush1.msra.mxu0 %v5797
  %5820 = vmatprep.subr.mxu0 0.0
  %5821 = vmatpush1.msra.mxu0 %v5798
  %5822 = vmatprep.subr.mxu0 0.0
  %5823 = vmatpush1.msra.mxu0 %v5799
  %5824 = vmatprep.subr.mxu0 0.0
  %5825 = vmatpush1.msra.mxu0 %v5800
  %5826 = vmatprep.subr.mxu0 0.0
  %5827 = vmatpush1.msra.mxu0 %v5801
  %5828 = vmatprep.subr.mxu0 0.0
  %5829 = vmatpush1.msra.mxu0 %v5802
  %5830 = vmatprep.subr.mxu0 0.0
  %5831 = vmatpush1.msra.mxu0 %v5803
  %5832 = vmatprep.subr.mxu0 0.0
  %5833 = vmatpush1.msra.mxu0 %v5804
  %5834 = vmatprep.subr.mxu0 0.0
  %5835 = vmatpush1.msra.mxu0 %v5805
  %5836 = vmatprep.subr.mxu0 0.0
  %5837 = vmatpush1.msra.mxu0 %v5806
  %5838 = vmatprep.subr.mxu0 0.0
  %5839 = vmatpush1.msra.mxu0 %v5807
  %5840 = vmatprep.subr.mxu0 0.0
  %5841 = vmatpush1.msra.mxu0 0.0
  %5842 = vmatprep.subr.mxu0 0.0
  %5843 = vmatpush1.msra.mxu0 0.0
  %5844 = vmatprep.subr.mxu0 0.0
  %5845 = vmatpush1.msra.mxu0 0.0
  %5846 = vmatprep.subr.mxu0 0.0
  %5847 = vmatpush1.msra.mxu0 0.0
  %5848 = vmatprep.subr.mxu0 0.0
  %5849 = vmatpush1.msra.mxu0 0.0
  %5850 = vmatprep.subr.mxu0 0.0
  %5851 = vmatpush1.msra.mxu0 0.0
  %5852 = vmatprep.subr.mxu0 0.0
  %5853 = vmatpush1.msra.mxu0 0.0
  %5854 = vmatprep.subr.mxu0 0.0
  %5855 = vmatpush1.msra.mxu0 0.0
  %5856 = vmatprep.subr.mxu0 0.0
  %5857 = vmatpush1.msra.mxu0 0.0
  %5858 = vmatprep.subr.mxu0 0.0
  %5859 = vmatpush1.msra.mxu0 0.0
  %5860 = vmatprep.subr.mxu0 0.0
  %5861 = vmatpush1.msra.mxu0 0.0
  %5862 = vmatprep.subr.mxu0 0.0
  %5863 = vmatpush1.msra.mxu0 0.0
  %5864 = vmatprep.subr.mxu0 0.0
  %5865 = vmatpush1.msra.mxu0 0.0
  %5866 = vmatprep.subr.mxu0 0.0
  %5867 = vmatpush1.msra.mxu0 0.0
  %5868 = vmatprep.subr.mxu0 0.0
  %5869 = vmatpush1.msra.mxu0 0.0
  %5870 = vmatprep.subr.mxu0 0.0
  %5871 = vmatpush1.msra.mxu0 0.0
  %5872 = vmatprep.mubr.f32.mxu0 0.0
  %5873 = vmatmul.mubr.f32.gmra.mrb[0].mxu0 %v5791
  %v5874 = vpop.f32.mrb[0].mxu0
  %v5875 = vadd.f32 0.0, %v5874
  %v5876 = vpop.f32.mrb[0].mxu0
  %5877 = vdwg.mxu0
  %v5878 = vsub.f32 %v5875, 1.0
  %v5879 = vmul.f32 %v5878, 1000.0
  %v5880 = vtanh.pop %v5879
  %v5881 = vmul.f32 %v5880, 10.0
  %v5882 = vmul.f32 %v5881, 1.442695
  %v5883 = vpow.pop %v5882
  %v5885 = vsel %vm1649, %v5883, 0
  %v5888 = vsel %vm80, %v159, 0
  %5890 = vmatprep.subr.mxu0 0.0
  %5891 = vmatpush1.msra.mxu0 %v5888
  %5892 = vmatprep.subr.mxu0 0.0
  %5893 = vmatpush1.msra.mxu0 0.0
  %5894 = vmatprep.subr.mxu0 0.0
  %5895 = vmatpush1.msra.mxu0 0.0
  %5896 = vmatprep.subr.mxu0 0.0
  %5897 = vmatpush1.msra.mxu0 0.0
  %5898 = vmatprep.subr.mxu0 0.0
  %5899 = vmatpush1.msra.mxu0 0.0
  %5900 = vmatprep.subr.mxu0 0.0
  %5901 = vmatpush1.msra.mxu0 0.0
  %5902 = vmatprep.subr.mxu0 0.0
  %5903 = vmatpush1.msra.mxu0 0.0
  %5904 = vmatprep.subr.mxu0 0.0
  %5905 = vmatpush1.msra.mxu0 0.0
  %5906 = vmatprep.subr.mxu0 0.0
  %5907 = vmatpush1.msra.mxu0 0.0
  %5908 = vmatprep.subr.mxu0 0.0
  %5909 = vmatpush1.msra.mxu0 0.0
  %5910 = vmatprep.subr.mxu0 0.0
  %5911 = vmatpush1.msra.mxu0 0.0
  %5912 = vmatprep.subr.mxu0 0.0
  %5913 = vmatpush1.msra.mxu0 0.0
  %5914 = vmatprep.subr.mxu0 0.0
  %5915 = vmatpush1.msra.mxu0 0.0
  %5916 = vmatprep.subr.mxu0 0.0
  %5917 = vmatpush1.msra.mxu0 0.0
  %5918 = vmatprep.subr.mxu0 0.0
  %5919 = vmatpush1.msra.mxu0 0.0
  %5920 = vmatprep.subr.mxu0 0.0
  %5921 = vmatpush1.msra.mxu0 0.0
  %5922 = vmatprep.subr.mxu0 0.0
  %5923 = vmatpush1.msra.mxu0 0.0
  %5924 = vmatprep.subr.mxu0 0.0
  %5925 = vmatpush1.msra.mxu0 0.0
  %5926 = vmatprep.subr.mxu0 0.0
  %5927 = vmatpush1.msra.mxu0 0.0
  %5928 = vmatprep.subr.mxu0 0.0
  %5929 = vmatpush1.msra.mxu0 0.0
  %5930 = vmatprep.subr.mxu0 0.0
  %5931 = vmatpush1.msra.mxu0 0.0
  %5932 = vmatprep.subr.mxu0 0.0
  %5933 = vmatpush1.msra.mxu0 0.0
  %5934 = vmatprep.subr.mxu0 0.0
  %5935 = vmatpush1.msra.mxu0 0.0
  %5936 = vmatprep.subr.mxu0 0.0
  %5937 = vmatpush1.msra.mxu0 0.0
  %5938 = vmatprep.subr.mxu0 0.0
  %5939 = vmatpush1.msra.mxu0 0.0
  %5940 = vmatprep.subr.mxu0 0.0
  %5941 = vmatpush1.msra.mxu0 0.0
  %5942 = vmatprep.subr.mxu0 0.0
  %5943 = vmatpush1.msra.mxu0 0.0
  %5944 = vmatprep.subr.mxu0 0.0
  %5945 = vmatpush1.msra.mxu0 0.0
  %5946 = vmatprep.subr.mxu0 0.0
  %5947 = vmatpush1.msra.mxu0 0.0
  %5948 = vmatprep.subr.mxu0 0.0
  %5949 = vmatpush1.msra.mxu0 0.0
  %5950 = vmatprep.subr.mxu0 0.0
  %5951 = vmatpush1.msra.mxu0 0.0
  %5952 = vmatprep.subr.mxu0 0.0
  %5953 = vmatpush1.msra.mxu0 0.0
  %5954 = vmatprep.mubr.f32.mxu0 0.0
  %5955 = vmatmul.mubr.f32.gmra.mrb[0].mxu0 %v5885
  %v5956 = vpop.f32.mrb[0].mxu0
  %v5957 = vadd.f32 0.0, %v5956
  %v5958 = vpop.f32.mrb[0].mxu0
  %5959 = vdwg.mxu0
  %v5960 = vsub.f32 %v5957, 1.0
  %v5961 = vmul.f32 %v5791, %v5960
  %v5962 = vsub.f32 %v5790, %v5961
  %5963 = vst [vmem:[%s17] sm:$0x1] %v5962
  // Predicated region
  $region70: #{conv_forward.1} parent=0 // pred_check
    _
  $region71: #{conv_forward.1} parent=0 // pred_check_branch
    %5965 = sbr.rel (0) target = $region73
  $region72: #{conv_forward.1} parent=0 // pred_region
    _
  $region73: #{conv_forward.1} parent=0 // pred_fallthru
    _
  // Predicated region
  $region74: #{conv_forward.1} parent=0 // pred_check
    _
  $region75: #{conv_forward.1} parent=0 // pred_check_branch
    %5967 = sbr.rel (0) target = $region77
  $region76: #{conv_forward.1} parent=0 // pred_region
    _
  $region77: #{conv_forward.1} parent=0 // pred_fallthru
    _

</llo_original>
